<compile_context>
chip_gen: v7x
topology: tpu7x:2x2x1
jax: 0.10.0
libtpu: 0.0.40
codegen_flags: <defaults>
</compile_context>

<pallas_src>
import functools

import jax
import jax.numpy as jnp
from jax.experimental import pallas as pl
from jax.experimental.pallas import tpu as pltpu


# ---------------------------------------------------------------------------
# Pallas kernel: fused (transposed im2col-matmul) conv + BN scale/shift + act
# ---------------------------------------------------------------------------
def _conv_mm_kernel(w_ref, p_ref, ss_ref, o_ref, *, act):
    # w_ref:  (Cout, K)   bf16 flattened conv weight
    # p_ref:  (K, tm)     bf16 transposed im2col patches tile (M on lanes)
    # ss_ref: (Cout, 2)   f32 folded BN (scale, shift)
    # o_ref:  (Cout, tm)  layer output tile
    y = jnp.dot(w_ref[...], p_ref[...], preferred_element_type=jnp.float32)
    ss = ss_ref[...]
    y = y * ss[:, 0:1] + ss[:, 1:2]          # BN (or identity) in f32
    if act == "leaky":
        y = jnp.where(y >= 0.0, y, 0.2 * y)  # LeakyReLU(0.2)
    elif act == "sigmoid":
        y = 1.0 / (1.0 + jnp.exp(-y))
    o_ref[...] = y.astype(o_ref.dtype)


def fused_conv_bn_act(w_flat, patches_t, ss, act, out_dtype):
    """w_flat: (Cout, K) bf16, patches_t: (K, M) bf16, ss: (Cout, 2) f32."""
    cout, K = w_flat.shape
    K2, M = patches_t.shape
    assert K == K2, (K, K2)
    # 2 parallel grid steps on the big layers (feeds both v7x TensorCores),
    # a single step otherwise (per-step overhead dominates for tiny tiles).
    nm = 2 if (M >= 2048 and (M // 2) % 128 == 0) else 1
    tm = M // nm
    return pl.pallas_call(
        functools.partial(_conv_mm_kernel, act=act),
        out_shape=jax.ShapeDtypeStruct((cout, M), out_dtype),
        grid_spec=pltpu.PrefetchScalarGridSpec(
            num_scalar_prefetch=0,
            grid=(nm,),
            in_specs=[
                pl.BlockSpec((cout, K), lambda i: (0, 0)),
                pl.BlockSpec((K, tm), lambda i: (0, i)),
                pl.BlockSpec((cout, 2), lambda i: (0, 0)),
            ],
            out_specs=pl.BlockSpec((cout, tm), lambda i: (0, i)),
        ),
        compiler_params=pltpu.CompilerParams(
            dimension_semantics=("parallel",)),
    )(w_flat, patches_t, ss)


# ---------------------------------------------------------------------------
# Plain-JAX glue: transposed im2col (channel-major activations)
# ---------------------------------------------------------------------------
def im2col_t(x, kh, kw, stride, pad):
    """x: (C, N, H, W) -> patches_T (kh*kw*C, N*OH*OW), K ordered (kh, kw, c)."""
    C, N, H, W = x.shape
    xp = jnp.pad(x, ((0, 0), (0, 0), (pad, pad), (pad, pad)))
    OH = (H + 2 * pad - kh) // stride + 1
    OW = (W + 2 * pad - kw) // stride + 1
    cols = []
    for i in range(kh):
        for j in range(kw):
            cols.append(
                xp[:, :, i:i + stride * OH:stride, j:j + stride * OW:stride])
    p = jnp.stack(cols, axis=0)                  # (kh*kw, C, N, OH, OW)
    p = p.reshape(kh * kw * C, N * OH * OW)      # (K, M), M on lanes
    return p, OH, OW


# ---------------------------------------------------------------------------
# Parameter construction (deterministic, DCGAN-style init, weights pre-flattened)
# ---------------------------------------------------------------------------
def layer_specs(nc, ndf):
    # (cin, cout, kernel, stride, pad, has_bn)
    return [
        (nc,       ndf,      4, 2, 1, False),
        (ndf,      ndf * 2,  6, 2, 2, True),
        (ndf * 2,  ndf * 4,  6, 2, 2, True),
        (ndf * 4,  ndf * 8,  6, 2, 2, True),
        (ndf * 8,  ndf * 10, 6, 2, 2, True),
        (ndf * 10, 1,        4, 1, 0, False),
    ]


def init_params(key, nc, ndf):
    params = []
    for (cin, cout, k, s, p, has_bn) in layer_specs(nc, ndf):
        key, kw_, kg, kb = jax.random.split(key, 4)
        w = jax.random.normal(kw_, (cout, cin, k, k), jnp.float32) * 0.02
        if has_bn:
            gamma = 1.0 + 0.1 * jax.random.normal(kg, (cout,), jnp.float32)
            beta = 0.1 * jax.random.normal(kb, (cout,), jnp.float32)
            running_mean = jnp.zeros((cout,), jnp.float32)
            running_var = jnp.ones((cout,), jnp.float32)
            eps = 1e-5
            scale = gamma / jnp.sqrt(running_var + eps)
            shift = beta - running_mean * scale
        else:
            scale = jnp.ones((cout,), jnp.float32)
            shift = jnp.zeros((cout,), jnp.float32)
        # Hoisted out of the forward pass: bf16 weight flattened to (Cout, K)
        # matching the (kh, kw, c) ordering of im2col_t, plus packed BN params.
        w_flat = jnp.transpose(w, (0, 2, 3, 1)).reshape(cout, k * k * cin)
        params.append(dict(
            w_flat=w_flat.astype(jnp.bfloat16),
            ss=jnp.stack([scale, shift], axis=1),   # (Cout, 2) f32
            k=k, s=s, p=p, cout=cout,
        ))
    return params


# ---------------------------------------------------------------------------
# Forward pass
# ---------------------------------------------------------------------------
def discriminator_forward(x_nchw, params):
    N = x_nchw.shape[0]
    # NCHW -> channel-major (C, N, H, W), bf16 inputs for the MXU.
    x = jnp.transpose(x_nchw, (1, 0, 2, 3)).astype(jnp.bfloat16)
    n_layers = len(params)
    for li, prm in enumerate(params):
        k, s, p, cout = prm["k"], prm["s"], prm["p"], prm["cout"]
        patches_t, OH, OW = im2col_t(x, k, k, s, p)      # (K, N*OH*OW) bf16
        last = li == n_layers - 1
        y = fused_conv_bn_act(
            prm["w_flat"], patches_t, prm["ss"],
            act="sigmoid" if last else "leaky",
            out_dtype=jnp.float32 if last else jnp.bfloat16,
        )                                                 # (Cout, N*OH*OW)
        x = y.reshape(cout, N, OH, OW)
    return jnp.transpose(x, (1, 0, 2, 3))                 # -> (N, 1, 1, 1)


if __name__ == "__main__":
    # Discriminator(ngpu=1, ndf=8, nc=1); 128x128 input so the final 4x4/stride-1
    # conv collapses the map to 1x1 (standard DCGAN geometry: 128->64->...->4->1).
    ngpu, ndf, nc = 1, 8, 1
    N, H, W = 2, 128, 128

    key = jax.random.PRNGKey(0)
    kx, kp = jax.random.split(key)
    x = jax.random.normal(kx, (N, nc, H, W), jnp.float32)
    params = init_params(kp, nc, ndf)

    fwd = jax.jit(lambda xin: discriminator_forward(xin, params))
    out = jax.block_until_ready(fwd(x))
    assert out.shape == (N, 1, 1, 1), out.shape
    assert bool(jnp.all((out >= 0.0) & (out <= 1.0)))
    print("KERNEL_OK")
</pallas_src>

<mosaic_0001>
module attributes {stable_mosaic.version = 11 : i64} {
  func.func @_conv_mm_kernel(%arg0: i32, %arg1: memref<8x16xbf16, #tpu.memory_space<vmem>>, %arg2: memref<16x4096xbf16, #tpu.memory_space<vmem>>, %arg3: memref<8x2xf32, #tpu.memory_space<vmem>>, %arg4: memref<8x4096xbf16, #tpu.memory_space<vmem>>) attributes {dimension_semantics = [#tpu.dimension_semantics<parallel>], iteration_bounds = array<i64: 2>, scalar_prefetch = 0 : i64, scratch_operands = 0 : i64, tpu.core_type = #tpu.core_type<tc>, window_params = [{pipeline_mode = #tpu.pipeline_mode<synchronous>, transform_indices = @transform_0, window_bounds = array<i64: 8, 16>}, {transform_indices = @transform_1, window_bounds = array<i64: 16, 4096>}, {pipeline_mode = #tpu.pipeline_mode<synchronous>, transform_indices = @transform_2, window_bounds = array<i64: 8, 2>}, {transform_indices = @transform_3, window_bounds = array<i64: 8, 4096>}]} {
    %c0 = arith.constant 0 : index
    %c0_0 = arith.constant 0 : index
    %0 = vector.load %arg1[%c0, %c0_0] : memref<8x16xbf16, #tpu.memory_space<vmem>>, vector<8x16xbf16>
    %c0_1 = arith.constant 0 : index
    %c0_2 = arith.constant 0 : index
    %1 = vector.load %arg2[%c0_1, %c0_2] : memref<16x4096xbf16, #tpu.memory_space<vmem>>, vector<16x4096xbf16>
    %cst = arith.constant dense<0.000000e+00> : vector<8x4096xf32>
    %2 = tpu.matmul %0, %1, %cst {dimension_numbers = #tpu.dot_dimension_numbers<[1], [0], [0], [1], [0, 0, 1, 1], [], []>} : vector<8x16xbf16>, vector<16x4096xbf16>, vector<8x4096xf32> -> vector<8x4096xf32>
    %c0_3 = arith.constant 0 : index
    %c0_4 = arith.constant 0 : index
    %3 = vector.load %arg3[%c0_3, %c0_4] : memref<8x2xf32, #tpu.memory_space<vmem>>, vector<8x2xf32>
    %4 = vector.extract_strided_slice %3 {offsets = [0, 0], sizes = [8, 1], strides = [1, 1]} : vector<8x2xf32> to vector<8x1xf32>
    %5 = vector.broadcast %4 : vector<8x1xf32> to vector<8x4096xf32>
    %6 = arith.mulf %2, %5 : vector<8x4096xf32>
    %7 = vector.extract_strided_slice %3 {offsets = [0, 1], sizes = [8, 1], strides = [1, 1]} : vector<8x2xf32> to vector<8x1xf32>
    %8 = vector.broadcast %7 : vector<8x1xf32> to vector<8x4096xf32>
    %9 = arith.addf %6, %8 : vector<8x4096xf32>
    %cst_5 = arith.constant 0.000000e+00 : f32
    %10 = vector.broadcast %cst_5 : f32 to vector<8x4096xf32>
    %11 = arith.cmpf oge, %9, %10 : vector<8x4096xf32>
    %cst_6 = arith.constant 2.000000e-01 : f32
    %12 = vector.broadcast %cst_6 : f32 to vector<8x4096xf32>
    %13 = arith.mulf %12, %9 : vector<8x4096xf32>
    %14 = arith.select %11, %9, %13 : vector<8x4096xi1>, vector<8x4096xf32>
    %15 = arith.truncf %14 : vector<8x4096xf32> to vector<8x4096xbf16>
    %c0_7 = arith.constant 0 : index
    %c0_8 = arith.constant 0 : index
    %16 = vector.load %arg4[%c0_7, %c0_8] : memref<8x4096xbf16, #tpu.memory_space<vmem>>, vector<8x4096xbf16>
    tpu.vector_store %arg4[%c0_7, %c0_8], %15 {strides = array<i32>} : memref<8x4096xbf16, #tpu.memory_space<vmem>>, vector<8x4096xbf16>,
    return
  }
  func.func @transform_0(%arg0: i32) -> (i32, i32) {
    %c0_i32 = arith.constant 0 : i32
    %c0_i32_0 = arith.constant 0 : i32
    %c0_i32_1 = arith.constant 0 : i32
    return %c0_i32, %c0_i32_0 : i32, i32
  }
  func.func @transform_1(%arg0: i32) -> (i32, i32) {
    %c0_i32 = arith.constant 0 : i32
    %c0_i32_0 = arith.constant 0 : i32
    return %c0_i32, %arg0 : i32, i32
  }
  func.func @transform_2(%arg0: i32) -> (i32, i32) {
    %c0_i32 = arith.constant 0 : i32
    %c0_i32_0 = arith.constant 0 : i32
    %c0_i32_1 = arith.constant 0 : i32
    return %c0_i32, %c0_i32_0 : i32, i32
  }
  func.func @transform_3(%arg0: i32) -> (i32, i32) {
    %c0_i32 = arith.constant 0 : i32
    %c0_i32_0 = arith.constant 0 : i32
    return %c0_i32, %arg0 : i32, i32
  }
}

module attributes {stable_mosaic.version = 11 : i64} {
  func.func @_conv_mm_kernel(%arg0: i32, %arg1: memref<16x288xbf16, #tpu.memory_space<vmem>>, %arg2: memref<288x1024xbf16, #tpu.memory_space<vmem>>, %arg3: memref<16x2xf32, #tpu.memory_space<vmem>>, %arg4: memref<16x1024xbf16, #tpu.memory_space<vmem>>) attributes {dimension_semantics = [#tpu.dimension_semantics<parallel>], iteration_bounds = array<i64: 2>, scalar_prefetch = 0 : i64, scratch_operands = 0 : i64, tpu.core_type = #tpu.core_type<tc>, window_params = [{pipeline_mode = #tpu.pipeline_mode<synchronous>, transform_indices = @transform_0, window_bounds = array<i64: 16, 288>}, {transform_indices = @transform_1, window_bounds = array<i64: 288, 1024>}, {pipeline_mode = #tpu.pipeline_mode<synchronous>, transform_indices = @transform_2, window_bounds = array<i64: 16, 2>}, {transform_indices = @transform_3, window_bounds = array<i64: 16, 1024>}]} {
    %c0 = arith.constant 0 : index
    %c0_0 = arith.constant 0 : index
    %0 = vector.load %arg1[%c0, %c0_0] : memref<16x288xbf16, #tpu.memory_space<vmem>>, vector<16x288xbf16>
    %c0_1 = arith.constant 0 : index
    %c0_2 = arith.constant 0 : index
    %1 = vector.load %arg2[%c0_1, %c0_2] : memref<288x1024xbf16, #tpu.memory_space<vmem>>, vector<288x1024xbf16>
    %cst = arith.constant dense<0.000000e+00> : vector<16x1024xf32>
    %2 = tpu.matmul %0, %1, %cst {dimension_numbers = #tpu.dot_dimension_numbers<[1], [0], [0], [1], [0, 0, 1, 1], [], []>} : vector<16x288xbf16>, vector<288x1024xbf16>, vector<16x1024xf32> -> vector<16x1024xf32>
    %c0_3 = arith.constant 0 : index
    %c0_4 = arith.constant 0 : index
    %3 = vector.load %arg3[%c0_3, %c0_4] : memref<16x2xf32, #tpu.memory_space<vmem>>, vector<16x2xf32>
    %4 = vector.extract_strided_slice %3 {offsets = [0, 0], sizes = [16, 1], strides = [1, 1]} : vector<16x2xf32> to vector<16x1xf32>
    %5 = vector.broadcast %4 : vector<16x1xf32> to vector<16x1024xf32>
    %6 = arith.mulf %2, %5 : vector<16x1024xf32>
    %7 = vector.extract_strided_slice %3 {offsets = [0, 1], sizes = [16, 1], strides = [1, 1]} : vector<16x2xf32> to vector<16x1xf32>
    %8 = vector.broadcast %7 : vector<16x1xf32> to vector<16x1024xf32>
    %9 = arith.addf %6, %8 : vector<16x1024xf32>
    %cst_5 = arith.constant 0.000000e+00 : f32
    %10 = vector.broadcast %cst_5 : f32 to vector<16x1024xf32>
    %11 = arith.cmpf oge, %9, %10 : vector<16x1024xf32>
    %cst_6 = arith.constant 2.000000e-01 : f32
    %12 = vector.broadcast %cst_6 : f32 to vector<16x1024xf32>
    %13 = arith.mulf %12, %9 : vector<16x1024xf32>
    %14 = arith.select %11, %9, %13 : vector<16x1024xi1>, vector<16x1024xf32>
    %15 = arith.truncf %14 : vector<16x1024xf32> to vector<16x1024xbf16>
    %c0_7 = arith.constant 0 : index
    %c0_8 = arith.constant 0 : index
    %16 = vector.load %arg4[%c0_7, %c0_8] : memref<16x1024xbf16, #tpu.memory_space<vmem>>, vector<16x1024xbf16>
    tpu.vector_store %arg4[%c0_7, %c0_8], %15 {strides = array<i32>} : memref<16x1024xbf16, #tpu.memory_space<vmem>>, vector<16x1024xbf16>,
    return
  }
  func.func @transform_0(%arg0: i32) -> (i32, i32) {
    %c0_i32 = arith.constant 0 : i32
    %c0_i32_0 = arith.constant 0 : i32
    %c0_i32_1 = arith.constant 0 : i32
    return %c0_i32, %c0_i32_0 : i32, i32
  }
  func.func @transform_1(%arg0: i32) -> (i32, i32) {
    %c0_i32 = arith.constant 0 : i32
    %c0_i32_0 = arith.constant 0 : i32
    return %c0_i32, %arg0 : i32, i32
  }
  func.func @transform_2(%arg0: i32) -> (i32, i32) {
    %c0_i32 = arith.constant 0 : i32
    %c0_i32_0 = arith.constant 0 : i32
    %c0_i32_1 = arith.constant 0 : i32
    return %c0_i32, %c0_i32_0 : i32, i32
  }
  func.func @transform_3(%arg0: i32) -> (i32, i32) {
    %c0_i32 = arith.constant 0 : i32
    %c0_i32_0 = arith.constant 0 : i32
    return %c0_i32, %arg0 : i32, i32
  }
}

module attributes {stable_mosaic.version = 11 : i64} {
  func.func @_conv_mm_kernel(%arg0: i32, %arg1: memref<32x576xbf16, #tpu.memory_space<vmem>>, %arg2: memref<576x512xbf16, #tpu.memory_space<vmem>>, %arg3: memref<32x2xf32, #tpu.memory_space<vmem>>, %arg4: memref<32x512xbf16, #tpu.memory_space<vmem>>) attributes {dimension_semantics = [#tpu.dimension_semantics<parallel>], iteration_bounds = array<i64: 1>, scalar_prefetch = 0 : i64, scratch_operands = 0 : i64, tpu.core_type = #tpu.core_type<tc>, window_params = [{pipeline_mode = #tpu.pipeline_mode<synchronous>, transform_indices = @transform_0, window_bounds = array<i64: 32, 576>}, {transform_indices = @transform_1, window_bounds = array<i64: 576, 512>}, {pipeline_mode = #tpu.pipeline_mode<synchronous>, transform_indices = @transform_2, window_bounds = array<i64: 32, 2>}, {transform_indices = @transform_3, window_bounds = array<i64: 32, 512>}]} {
    %c0 = arith.constant 0 : index
    %c0_0 = arith.constant 0 : index
    %0 = vector.load %arg1[%c0, %c0_0] : memref<32x576xbf16, #tpu.memory_space<vmem>>, vector<32x576xbf16>
    %c0_1 = arith.constant 0 : index
    %c0_2 = arith.constant 0 : index
    %1 = vector.load %arg2[%c0_1, %c0_2] : memref<576x512xbf16, #tpu.memory_space<vmem>>, vector<576x512xbf16>
    %cst = arith.constant dense<0.000000e+00> : vector<32x512xf32>
    %2 = tpu.matmul %0, %1, %cst {dimension_numbers = #tpu.dot_dimension_numbers<[1], [0], [0], [1], [0, 0, 1, 1], [], []>} : vector<32x576xbf16>, vector<576x512xbf16>, vector<32x512xf32> -> vector<32x512xf32>
    %c0_3 = arith.constant 0 : index
    %c0_4 = arith.constant 0 : index
    %3 = vector.load %arg3[%c0_3, %c0_4] : memref<32x2xf32, #tpu.memory_space<vmem>>, vector<32x2xf32>
    %4 = vector.extract_strided_slice %3 {offsets = [0, 0], sizes = [32, 1], strides = [1, 1]} : vector<32x2xf32> to vector<32x1xf32>
    %5 = vector.broadcast %4 : vector<32x1xf32> to vector<32x512xf32>
    %6 = arith.mulf %2, %5 : vector<32x512xf32>
    %7 = vector.extract_strided_slice %3 {offsets = [0, 1], sizes = [32, 1], strides = [1, 1]} : vector<32x2xf32> to vector<32x1xf32>
    %8 = vector.broadcast %7 : vector<32x1xf32> to vector<32x512xf32>
    %9 = arith.addf %6, %8 : vector<32x512xf32>
    %cst_5 = arith.constant 0.000000e+00 : f32
    %10 = vector.broadcast %cst_5 : f32 to vector<32x512xf32>
    %11 = arith.cmpf oge, %9, %10 : vector<32x512xf32>
    %cst_6 = arith.constant 2.000000e-01 : f32
    %12 = vector.broadcast %cst_6 : f32 to vector<32x512xf32>
    %13 = arith.mulf %12, %9 : vector<32x512xf32>
    %14 = arith.select %11, %9, %13 : vector<32x512xi1>, vector<32x512xf32>
    %15 = arith.truncf %14 : vector<32x512xf32> to vector<32x512xbf16>
    %c0_7 = arith.constant 0 : index
    %c0_8 = arith.constant 0 : index
    %16 = vector.load %arg4[%c0_7, %c0_8] : memref<32x512xbf16, #tpu.memory_space<vmem>>, vector<32x512xbf16>
    tpu.vector_store %arg4[%c0_7, %c0_8], %15 {strides = array<i32>} : memref<32x512xbf16, #tpu.memory_space<vmem>>, vector<32x512xbf16>,
    return
  }
  func.func @transform_0(%arg0: i32) -> (i32, i32) {
    %c0_i32 = arith.constant 0 : i32
    %c0_i32_0 = arith.constant 0 : i32
    %c0_i32_1 = arith.constant 0 : i32
    return %c0_i32, %c0_i32_0 : i32, i32
  }
  func.func @transform_1(%arg0: i32) -> (i32, i32) {
    %c0_i32 = arith.constant 0 : i32
    %c0_i32_0 = arith.constant 0 : i32
    return %c0_i32, %arg0 : i32, i32
  }
  func.func @transform_2(%arg0: i32) -> (i32, i32) {
    %c0_i32 = arith.constant 0 : i32
    %c0_i32_0 = arith.constant 0 : i32
    %c0_i32_1 = arith.constant 0 : i32
    return %c0_i32, %c0_i32_0 : i32, i32
  }
  func.func @transform_3(%arg0: i32) -> (i32, i32) {
    %c0_i32 = arith.constant 0 : i32
    %c0_i32_0 = arith.constant 0 : i32
    return %c0_i32, %arg0 : i32, i32
  }
}

module attributes {stable_mosaic.version = 11 : i64} {
  func.func @_conv_mm_kernel(%arg0: i32, %arg1: memref<64x1152xbf16, #tpu.memory_space<vmem>>, %arg2: memref<1152x128xbf16, #tpu.memory_space<vmem>>, %arg3: memref<64x2xf32, #tpu.memory_space<vmem>>, %arg4: memref<64x128xbf16, #tpu.memory_space<vmem>>) attributes {dimension_semantics = [#tpu.dimension_semantics<parallel>], iteration_bounds = array<i64: 1>, scalar_prefetch = 0 : i64, scratch_operands = 0 : i64, tpu.core_type = #tpu.core_type<tc>, window_params = [{pipeline_mode = #tpu.pipeline_mode<synchronous>, transform_indices = @transform_0, window_bounds = array<i64: 64, 1152>}, {transform_indices = @transform_1, window_bounds = array<i64: 1152, 128>}, {pipeline_mode = #tpu.pipeline_mode<synchronous>, transform_indices = @transform_2, window_bounds = array<i64: 64, 2>}, {transform_indices = @transform_3, window_bounds = array<i64: 64, 128>}]} {
    %c0 = arith.constant 0 : index
    %c0_0 = arith.constant 0 : index
    %0 = vector.load %arg1[%c0, %c0_0] : memref<64x1152xbf16, #tpu.memory_space<vmem>>, vector<64x1152xbf16>
    %c0_1 = arith.constant 0 : index
    %c0_2 = arith.constant 0 : index
    %1 = vector.load %arg2[%c0_1, %c0_2] : memref<1152x128xbf16, #tpu.memory_space<vmem>>, vector<1152x128xbf16>
    %cst = arith.constant dense<0.000000e+00> : vector<64x128xf32>
    %2 = tpu.matmul %0, %1, %cst {dimension_numbers = #tpu.dot_dimension_numbers<[1], [0], [0], [1], [0, 0, 1, 1], [], []>} : vector<64x1152xbf16>, vector<1152x128xbf16>, vector<64x128xf32> -> vector<64x128xf32>
    %c0_3 = arith.constant 0 : index
    %c0_4 = arith.constant 0 : index
    %3 = vector.load %arg3[%c0_3, %c0_4] : memref<64x2xf32, #tpu.memory_space<vmem>>, vector<64x2xf32>
    %4 = vector.extract_strided_slice %3 {offsets = [0, 0], sizes = [64, 1], strides = [1, 1]} : vector<64x2xf32> to vector<64x1xf32>
    %5 = vector.broadcast %4 : vector<64x1xf32> to vector<64x128xf32>
    %6 = arith.mulf %2, %5 : vector<64x128xf32>
    %7 = vector.extract_strided_slice %3 {offsets = [0, 1], sizes = [64, 1], strides = [1, 1]} : vector<64x2xf32> to vector<64x1xf32>
    %8 = vector.broadcast %7 : vector<64x1xf32> to vector<64x128xf32>
    %9 = arith.addf %6, %8 : vector<64x128xf32>
    %cst_5 = arith.constant 0.000000e+00 : f32
    %10 = vector.broadcast %cst_5 : f32 to vector<64x128xf32>
    %11 = arith.cmpf oge, %9, %10 : vector<64x128xf32>
    %cst_6 = arith.constant 2.000000e-01 : f32
    %12 = vector.broadcast %cst_6 : f32 to vector<64x128xf32>
    %13 = arith.mulf %12, %9 : vector<64x128xf32>
    %14 = arith.select %11, %9, %13 : vector<64x128xi1>, vector<64x128xf32>
    %15 = arith.truncf %14 : vector<64x128xf32> to vector<64x128xbf16>
    %c0_7 = arith.constant 0 : index
    %c0_8 = arith.constant 0 : index
    %16 = vector.load %arg4[%c0_7, %c0_8] : memref<64x128xbf16, #tpu.memory_space<vmem>>, vector<64x128xbf16>
    tpu.vector_store %arg4[%c0_7, %c0_8], %15 {strides = array<i32>} : memref<64x128xbf16, #tpu.memory_space<vmem>>, vector<64x128xbf16>,
    return
  }
  func.func @transform_0(%arg0: i32) -> (i32, i32) {
    %c0_i32 = arith.constant 0 : i32
    %c0_i32_0 = arith.constant 0 : i32
    %c0_i32_1 = arith.constant 0 : i32
    return %c0_i32, %c0_i32_0 : i32, i32
  }
  func.func @transform_1(%arg0: i32) -> (i32, i32) {
    %c0_i32 = arith.constant 0 : i32
    %c0_i32_0 = arith.constant 0 : i32
    return %c0_i32, %arg0 : i32, i32
  }
  func.func @transform_2(%arg0: i32) -> (i32, i32) {
    %c0_i32 = arith.constant 0 : i32
    %c0_i32_0 = arith.constant 0 : i32
    %c0_i32_1 = arith.constant 0 : i32
    return %c0_i32, %c0_i32_0 : i32, i32
  }
  func.func @transform_3(%arg0: i32) -> (i32, i32) {
    %c0_i32 = arith.constant 0 : i32
    %c0_i32_0 = arith.constant 0 : i32
    return %c0_i32, %arg0 : i32, i32
  }
}

module attributes {stable_mosaic.version = 11 : i64} {
  func.func @_conv_mm_kernel(%arg0: i32, %arg1: memref<80x2304xbf16, #tpu.memory_space<vmem>>, %arg2: memref<2304x32xbf16, #tpu.memory_space<vmem>>, %arg3: memref<80x2xf32, #tpu.memory_space<vmem>>, %arg4: memref<80x32xbf16, #tpu.memory_space<vmem>>) attributes {dimension_semantics = [#tpu.dimension_semantics<parallel>], iteration_bounds = array<i64: 1>, scalar_prefetch = 0 : i64, scratch_operands = 0 : i64, tpu.core_type = #tpu.core_type<tc>, window_params = [{pipeline_mode = #tpu.pipeline_mode<synchronous>, transform_indices = @transform_0, window_bounds = array<i64: 80, 2304>}, {transform_indices = @transform_1, window_bounds = array<i64: 2304, 32>}, {pipeline_mode = #tpu.pipeline_mode<synchronous>, transform_indices = @transform_2, window_bounds = array<i64: 80, 2>}, {transform_indices = @transform_3, window_bounds = array<i64: 80, 32>}]} {
    %c0 = arith.constant 0 : index
    %c0_0 = arith.constant 0 : index
    %0 = vector.load %arg1[%c0, %c0_0] : memref<80x2304xbf16, #tpu.memory_space<vmem>>, vector<80x2304xbf16>
    %c0_1 = arith.constant 0 : index
    %c0_2 = arith.constant 0 : index
    %1 = vector.load %arg2[%c0_1, %c0_2] : memref<2304x32xbf16, #tpu.memory_space<vmem>>, vector<2304x32xbf16>
    %cst = arith.constant dense<0.000000e+00> : vector<80x32xf32>
    %2 = tpu.matmul %0, %1, %cst {dimension_numbers = #tpu.dot_dimension_numbers<[1], [0], [0], [1], [0, 0, 1, 1], [], []>} : vector<80x2304xbf16>, vector<2304x32xbf16>, vector<80x32xf32> -> vector<80x32xf32>
    %c0_3 = arith.constant 0 : index
    %c0_4 = arith.constant 0 : index
    %3 = vector.load %arg3[%c0_3, %c0_4] : memref<80x2xf32, #tpu.memory_space<vmem>>, vector<80x2xf32>
    %4 = vector.extract_strided_slice %3 {offsets = [0, 0], sizes = [80, 1], strides = [1, 1]} : vector<80x2xf32> to vector<80x1xf32>
    %5 = vector.broadcast %4 : vector<80x1xf32> to vector<80x32xf32>
    %6 = arith.mulf %2, %5 : vector<80x32xf32>
    %7 = vector.extract_strided_slice %3 {offsets = [0, 1], sizes = [80, 1], strides = [1, 1]} : vector<80x2xf32> to vector<80x1xf32>
    %8 = vector.broadcast %7 : vector<80x1xf32> to vector<80x32xf32>
    %9 = arith.addf %6, %8 : vector<80x32xf32>
    %cst_5 = arith.constant 0.000000e+00 : f32
    %10 = vector.broadcast %cst_5 : f32 to vector<80x32xf32>
    %11 = arith.cmpf oge, %9, %10 : vector<80x32xf32>
    %cst_6 = arith.constant 2.000000e-01 : f32
    %12 = vector.broadcast %cst_6 : f32 to vector<80x32xf32>
    %13 = arith.mulf %12, %9 : vector<80x32xf32>
    %14 = arith.select %11, %9, %13 : vector<80x32xi1>, vector<80x32xf32>
    %15 = arith.truncf %14 : vector<80x32xf32> to vector<80x32xbf16>
    %c0_7 = arith.constant 0 : index
    %c0_8 = arith.constant 0 : index
    %16 = vector.load %arg4[%c0_7, %c0_8] : memref<80x32xbf16, #tpu.memory_space<vmem>>, vector<80x32xbf16>
    tpu.vector_store %arg4[%c0_7, %c0_8], %15 {strides = array<i32>} : memref<80x32xbf16, #tpu.memory_space<vmem>>, vector<80x32xbf16>,
    return
  }
  func.func @transform_0(%arg0: i32) -> (i32, i32) {
    %c0_i32 = arith.constant 0 : i32
    %c0_i32_0 = arith.constant 0 : i32
    %c0_i32_1 = arith.constant 0 : i32
    return %c0_i32, %c0_i32_0 : i32, i32
  }
  func.func @transform_1(%arg0: i32) -> (i32, i32) {
    %c0_i32 = arith.constant 0 : i32
    %c0_i32_0 = arith.constant 0 : i32
    return %c0_i32, %arg0 : i32, i32
  }
  func.func @transform_2(%arg0: i32) -> (i32, i32) {
    %c0_i32 = arith.constant 0 : i32
    %c0_i32_0 = arith.constant 0 : i32
    %c0_i32_1 = arith.constant 0 : i32
    return %c0_i32, %c0_i32_0 : i32, i32
  }
  func.func @transform_3(%arg0: i32) -> (i32, i32) {
    %c0_i32 = arith.constant 0 : i32
    %c0_i32_0 = arith.constant 0 : i32
    return %c0_i32, %arg0 : i32, i32
  }
}

module attributes {stable_mosaic.version = 11 : i64} {
  func.func @_conv_mm_kernel(%arg0: i32, %arg1: memref<1x1280xbf16, #tpu.memory_space<vmem>>, %arg2: memref<1280x2xbf16, #tpu.memory_space<vmem>>, %arg3: memref<1x2xf32, #tpu.memory_space<vmem>>, %arg4: memref<1x2xf32, #tpu.memory_space<vmem>>) attributes {dimension_semantics = [#tpu.dimension_semantics<parallel>], iteration_bounds = array<i64: 1>, scalar_prefetch = 0 : i64, scratch_operands = 0 : i64, tpu.core_type = #tpu.core_type<tc>, window_params = [{pipeline_mode = #tpu.pipeline_mode<synchronous>, transform_indices = @transform_0, window_bounds = array<i64: 1, 1280>}, {transform_indices = @transform_1, window_bounds = array<i64: 1280, 2>}, {pipeline_mode = #tpu.pipeline_mode<synchronous>, transform_indices = @transform_2, window_bounds = array<i64: 1, 2>}, {transform_indices = @transform_3, window_bounds = array<i64: 1, 2>}]} {
    %c0 = arith.constant 0 : index
    %c0_0 = arith.constant 0 : index
    %0 = vector.load %arg1[%c0, %c0_0] : memref<1x1280xbf16, #tpu.memory_space<vmem>>, vector<1x1280xbf16>
    %c0_1 = arith.constant 0 : index
    %c0_2 = arith.constant 0 : index
    %1 = vector.load %arg2[%c0_1, %c0_2] : memref<1280x2xbf16, #tpu.memory_space<vmem>>, vector<1280x2xbf16>
    %cst = arith.constant dense<0.000000e+00> : vector<1x2xf32>
    %2 = tpu.matmul %0, %1, %cst {dimension_numbers = #tpu.dot_dimension_numbers<[1], [0], [0], [1], [0, 0, 1, 1], [], []>} : vector<1x1280xbf16>, vector<1280x2xbf16>, vector<1x2xf32> -> vector<1x2xf32>
    %c0_3 = arith.constant 0 : index
    %c0_4 = arith.constant 0 : index
    %3 = vector.load %arg3[%c0_3, %c0_4] : memref<1x2xf32, #tpu.memory_space<vmem>>, vector<1x2xf32>
    %4 = vector.extract_strided_slice %3 {offsets = [0, 0], sizes = [1, 1], strides = [1, 1]} : vector<1x2xf32> to vector<1x1xf32>
    %5 = vector.broadcast %4 : vector<1x1xf32> to vector<1x2xf32>
    %6 = arith.mulf %2, %5 : vector<1x2xf32>
    %7 = vector.extract_strided_slice %3 {offsets = [0, 1], sizes = [1, 1], strides = [1, 1]} : vector<1x2xf32> to vector<1x1xf32>
    %8 = vector.broadcast %7 : vector<1x1xf32> to vector<1x2xf32>
    %9 = arith.addf %6, %8 : vector<1x2xf32>
    %cst_5 = arith.constant 0.000000e+00 : f32
    %10 = vector.broadcast %cst_5 : f32 to vector<1x2xf32>
    %11 = arith.subf %10, %9 : vector<1x2xf32>
    %12 = math.exp %11 : vector<1x2xf32>
    %cst_6 = arith.constant 1.000000e+00 : f32
    %13 = vector.broadcast %cst_6 : f32 to vector<1x2xf32>
    %14 = arith.addf %13, %12 : vector<1x2xf32>
    %cst_7 = arith.constant 1.000000e+00 : f32
    %15 = vector.broadcast %cst_7 : f32 to vector<1x2xf32>
    %16 = arith.divf %15, %14 : vector<1x2xf32>
    %c0_8 = arith.constant 0 : index
    %c0_9 = arith.constant 0 : index
    %17 = vector.load %arg4[%c0_8, %c0_9] : memref<1x2xf32, #tpu.memory_space<vmem>>, vector<1x2xf32>
    tpu.vector_store %arg4[%c0_8, %c0_9], %16 {strides = array<i32>} : memref<1x2xf32, #tpu.memory_space<vmem>>, vector<1x2xf32>,
    return
  }
  func.func @transform_0(%arg0: i32) -> (i32, i32) {
    %c0_i32 = arith.constant 0 : i32
    %c0_i32_0 = arith.constant 0 : i32
    %c0_i32_1 = arith.constant 0 : i32
    return %c0_i32, %c0_i32_0 : i32, i32
  }
  func.func @transform_1(%arg0: i32) -> (i32, i32) {
    %c0_i32 = arith.constant 0 : i32
    %c0_i32_0 = arith.constant 0 : i32
    return %c0_i32, %arg0 : i32, i32
  }
  func.func @transform_2(%arg0: i32) -> (i32, i32) {
    %c0_i32 = arith.constant 0 : i32
    %c0_i32_0 = arith.constant 0 : i32
    %c0_i32_1 = arith.constant 0 : i32
    return %c0_i32, %c0_i32_0 : i32, i32
  }
  func.func @transform_3(%arg0: i32) -> (i32, i32) {
    %c0_i32 = arith.constant 0 : i32
    %c0_i32_0 = arith.constant 0 : i32
    return %c0_i32, %arg0 : i32, i32
  }
}

</mosaic_0001>

<llo_original>
// kernel: _lambda_.6
$region0: #{_lambda_.6}
  #allocation0 [shape = 'u32[]', space=smem, size = 0x4, offset = 0x4, fixed_abs, tag = 'smem constant byte address 0x4 - core index']
  #allocation1 [shape = 'u32[144,128]{1,0:T(1,128)}', space=vmem, size = 0x12000, scoped, tag = 'internal scratch']
  %s0 = inlined_call_operand.hbm [shape: bf16[8,16], index: 0, kind: input, shape index: {}]
  %s1 = inlined_call_operand.vmem [shape: bf16[16,8192], index: 1, kind: input, shape index: {}]
  %s2 = inlined_call_operand.hbm [shape: f32[8,2], index: 2, kind: input, shape index: {}]
  %s3 = inlined_call_operand.vmem [shape: bf16[8,8192], index: 3, kind: output, shape index: {}]
  %s4 = sld [smem:[#allocation0]]
  $region76: #{_lambda_.6} parent=0
    _
  %s6 = ssub.s32 1, %s4
  %s7 = scalar_select 0, %s6, %s4
  $region1: #{_lambda_.6} parent=0
    #allocation2 [shape = 'u8[2048]{0}', space=vmem, size = 0x800, scoped, tag = 'input window, operand 0, single buffered']
    #allocation3 [shape = 's32[2]{0}', space=sflag, size = 0x8, scoped, tag = 'scoped memory for _lambda_.6']
    #allocation4 [shape = 'u8[262144]{0}', space=vmem, size = 0x40000, scoped, tag = 'input window, operand 1']
    #allocation5 [shape = 'u8[4096]{0}', space=vmem, size = 0x1000, scoped, tag = 'input window, operand 2, single buffered']
    #allocation6 [shape = 's32[1]{0}', space=sflag, size = 0x4, scoped, tag = 'scoped memory for _lambda_.6']
    %8 = vsyncpa [#allocation3], 0
    %9 = vsyncpa [#allocation6], 0
    loop: start=0, step=1, limit=4
    $region2: #{_lambda_.6} parent=1 // loop_pre_header
      _
    $region3: #{_lambda_.6} parent=1 // loop_header
      %s11 = sphi 0, %s15
      %p12 = scmp.ge.s32.totalorder %s11, 4
      %s19 = sphi 0, %s19
      %s21 = sphi 0, %s19
      %s22 = sphi 0, %s21
      %s36 = sphi 0, %s22
      %s42 = sphi 0, %s44
      %s45 = sphi 0, %s42
      %s46 = sphi 0, %s45
      %s62 = sphi 0, %s46
      %s66 = sphi 0, %s66
      %s68 = sphi 0, %s66
      %s69 = sphi 0, %s68
      %s83 = sphi 0, %s69
      %s89 = sphi 0, %s91
      %s92 = sphi 0, %s89
      %s93 = sphi 0, %s92
      %s109 = sphi 0, %s93
    $region4: #{_lambda_.6} parent=1 // loop_header_branch
      %14 = sbr.rel (%p12) target = $region8
    $region5: #{_lambda_.6} parent=1 // loop_body
      %s16 = ssub.s32 %s11, 1
      %s17 = ssub.s32 %s11, 2
      %s18 = sadd.s32 %s11, 1
      %s20 = sadd.s32 %s19, 1
      %p23 = scmp.eq.s32.totalorder %s11, 1
      %p24 = scmp.ne.s32.totalorder %s19, %s21
      %p25 = scmp.eq.s32.totalorder %s11, 0
      %p26 = por %p24, %p25
      %p27 = scmp.ne.s32.totalorder %s19, %s21
      %p28 = scmp.eq.s32.totalorder %s16, 1
      %p29 = por %p27, %p28
      %p30 = scmp.ne.s32.totalorder %s21, %s22
      %p31 = scmp.eq.s32.totalorder %s16, 0
      %p32 = por %p30, %p31
      %p33 = scmp.ne.s32.totalorder %s21, %s22
      %p34 = scmp.eq.s32.totalorder %s17, 1
      %p35 = por %p33, %p34
      %p37 = scmp.ne.s32.totalorder %s22, %s36
      %p38 = scmp.eq.s32.totalorder %s17, 0
      %p39 = por %p37, %p38
      %s40 = ssub.s32 %s11, %s18
      %p41 = scmp.eq.s32.totalorder %s40, 0
      %s43 = sadd.s32 %s42, 1
      %s44 = scalar_select %p41, %s42, %s43
      %p47 = pneg %p41
      %p48 = scmp.eq.s32.totalorder %s11, 1
      %p49 = por %p47, %p48
      %p50 = scmp.ne.s32.totalorder %s42, %s45
      %p51 = scmp.eq.s32.totalorder %s11, 0
      %p52 = por %p50, %p51
      %p53 = scmp.ne.s32.totalorder %s42, %s45
      %p54 = scmp.eq.s32.totalorder %s16, 1
      %p55 = por %p53, %p54
      %p56 = scmp.ne.s32.totalorder %s45, %s46
      %p57 = scmp.eq.s32.totalorder %s16, 0
      %p58 = por %p56, %p57
      %p59 = scmp.ne.s32.totalorder %s45, %s46
      %p60 = scmp.eq.s32.totalorder %s17, 1
      %p61 = por %p59, %p60
      %p63 = scmp.ne.s32.totalorder %s46, %s62
      %p64 = scmp.eq.s32.totalorder %s17, 0
      %p65 = por %p63, %p64
      %s67 = sadd.s32 %s66, 1
      %p70 = scmp.eq.s32.totalorder %s11, 1
      %p71 = scmp.ne.s32.totalorder %s66, %s68
      %p72 = scmp.eq.s32.totalorder %s11, 0
      %p73 = por %p71, %p72
      %p74 = scmp.ne.s32.totalorder %s66, %s68
      %p75 = scmp.eq.s32.totalorder %s16, 1
      %p76 = por %p74, %p75
      %p77 = scmp.ne.s32.totalorder %s68, %s69
      %p78 = scmp.eq.s32.totalorder %s16, 0
      %p79 = por %p77, %p78
      %p80 = scmp.ne.s32.totalorder %s68, %s69
      %p81 = scmp.eq.s32.totalorder %s17, 1
      %p82 = por %p80, %p81
      %p84 = scmp.ne.s32.totalorder %s69, %s83
      %p85 = scmp.eq.s32.totalorder %s17, 0
      %p86 = por %p84, %p85
      %s87 = ssub.s32 %s11, %s18
      %p88 = scmp.eq.s32.totalorder %s87, 0
      %s90 = sadd.s32 %s89, 1
      %s91 = scalar_select %p88, %s89, %s90
      %p94 = pneg %p88
      %p95 = scmp.eq.s32.totalorder %s11, 1
      %p96 = por %p94, %p95
      %p97 = scmp.ne.s32.totalorder %s89, %s92
      %p98 = scmp.eq.s32.totalorder %s11, 0
      %p99 = por %p97, %p98
      %p100 = scmp.ne.s32.totalorder %s89, %s92
      %p101 = scmp.eq.s32.totalorder %s16, 1
      %p102 = por %p100, %p101
      %p103 = scmp.ne.s32.totalorder %s92, %s93
      %p104 = scmp.eq.s32.totalorder %s16, 0
      %p105 = por %p103, %p104
      %p106 = scmp.ne.s32.totalorder %s92, %s93
      %p107 = scmp.eq.s32.totalorder %s17, 1
      %p108 = por %p106, %p107
      %p110 = scmp.ne.s32.totalorder %s93, %s109
      %p111 = scmp.eq.s32.totalorder %s17, 0
      %p112 = por %p110, %p111
      %p113 = scmp.le.s32.totalorder 1, %s11
      %p114 = scmp.lt.s32.totalorder %s11, 3
      %p115 = pnand %p113, %p114
      %p116 = pneg %p115
      // Predicated region
      $region9: #{_lambda_.6} parent=5 // pred_check
        _
      $region10: #{_lambda_.6} parent=5 // pred_check_branch
        %118 = sbr.rel (%p115) target = $region12
      $region11: #{_lambda_.6} parent=5 // pred_region
        %s119 = ssub.s32 %s11, 1
        // Predicated region
        $region13: #{_lambda_.6} parent=11 // pred_check
          %p120 = pneg %p32
        $region14: #{_lambda_.6} parent=11 // pred_check_branch
          %122 = sbr.rel (%p120) target = $region16
        $region15: #{_lambda_.6} parent=11 // pred_region
          %s124 = ssub.s32 64, 64
          %125 = vsyncadd [#allocation3], %s124
          %s127 = sshll.u32 [#allocation2], 4
          %s128 = int_to_ptr.vmem [resolvable:$true] %s127
          %130 = dma.hbm_to_vmem [thread:$0]  %s0, 64, %s128, [#allocation3]
        $region16: #{_lambda_.6} parent=11 // pred_fallthru
          _
        // Predicated region
        $region17: #{_lambda_.6} parent=11 // pred_check
          %p131 = pneg %p79
        $region18: #{_lambda_.6} parent=11 // pred_check_branch
          %133 = sbr.rel (%p131) target = $region20
        $region19: #{_lambda_.6} parent=11 // pred_region
          %s135 = ssub.s32 128, 128
          %136 = vsyncadd [#allocation6], %s135
          %s138 = sshll.u32 [#allocation5], 4
          %s139 = int_to_ptr.vmem [resolvable:$true] %s138
          %141 = dma.hbm_to_vmem [thread:$0]  %s2, 128, %s139, [#allocation6]
        $region20: #{_lambda_.6} parent=11 // pred_fallthru
          _
      $region12: #{_lambda_.6} parent=5 // pred_fallthru
        _
      %p142 = scmp.lt.s32.totalorder %s11, 2
      // Predicated region
      $region21: #{_lambda_.6} parent=5 // pred_check
        %p143 = pneg %p142
      $region22: #{_lambda_.6} parent=5 // pred_check_branch
        %145 = sbr.rel (%p143) target = $region24
      $region23: #{_lambda_.6} parent=5 // pred_region
        // Predicated region
        $region25: #{_lambda_.6} parent=23 // pred_check
          %p146 = pneg %p52
        $region26: #{_lambda_.6} parent=23 // pred_check_branch
          %148 = sbr.rel (%p146) target = $region28
        $region27: #{_lambda_.6} parent=23 // pred_region
          %s149 = sand.u32 %s42, 1
          %s150 = sand.u32 %s42, 1
          %s151 = smul.addr %s150, 256
          %s152 = scalar_lea.vmem [#allocation4], %s151
          %s153 = smul.u32 32, %s11
          %s154 = smul.addr %s153, 4
          %s155 = scalar_lea.vmem %s1, %s154
          // Predicated region
          $region29: #{_lambda_.6} parent=27 // pred_check
            _
          $region30: #{_lambda_.6} parent=27 // pred_check_branch
            %157 = sbr.rel (0) target = $region32
          $region31: #{_lambda_.6} parent=27 // pred_region
            // Predicated region
            $region33: #{_lambda_.6} parent=31 // pred_check
              _
            $region34: #{_lambda_.6} parent=31 // pred_check_branch
              %159 = sbr.rel (0) target = $region36
            $region35: #{_lambda_.6} parent=31 // pred_region
              loop: start=0, step=1, limit=1
              $region37: #{_lambda_.6} parent=35 // loop_pre_header
                _
              $region38: #{_lambda_.6} parent=35 // loop_header
                %s161 = sphi 0, %s165
                %p162 = scmp.ge.s32.totalorder %s161, 1
                %s166 = sphi %s155, %s155
                %s167 = sphi %s152, %s152
              $region39: #{_lambda_.6} parent=35 // loop_header_branch
                %164 = sbr.rel (%p162) target = $region43
              $region40: #{_lambda_.6} parent=35 // loop_body
                %v168 = vld [vmem:[%s166] sm:$0xff]
                %169 = vst [vmem:[%s167] sm:$0xff] %v168
                %v170 = vld [vmem:[%s166 + $0x8] sm:$0xff]
                %171 = vst [vmem:[%s167 + $0x8] sm:$0xff] %v170
                %v172 = vld [vmem:[%s166 + $0x10] sm:$0xff]
                %173 = vst [vmem:[%s167 + $0x10] sm:$0xff] %v172
                %v174 = vld [vmem:[%s166 + $0x18] sm:$0xff]
                %175 = vst [vmem:[%s167 + $0x18] sm:$0xff] %v174
                %v176 = vld [vmem:[%s166 + $0x20] sm:$0xff]
                %177 = vst [vmem:[%s167 + $0x20] sm:$0xff] %v176
                %v178 = vld [vmem:[%s166 + $0x28] sm:$0xff]
                %179 = vst [vmem:[%s167 + $0x28] sm:$0xff] %v178
                %v180 = vld [vmem:[%s166 + $0x30] sm:$0xff]
                %181 = vst [vmem:[%s167 + $0x30] sm:$0xff] %v180
                %v182 = vld [vmem:[%s166 + $0x38] sm:$0xff]
                %183 = vst [vmem:[%s167 + $0x38] sm:$0xff] %v182
                %v184 = vld [vmem:[%s166 + $0x40] sm:$0xff]
                %185 = vst [vmem:[%s167 + $0x40] sm:$0xff] %v184
                %v186 = vld [vmem:[%s166 + $0x48] sm:$0xff]
                %187 = vst [vmem:[%s167 + $0x48] sm:$0xff] %v186
                %v188 = vld [vmem:[%s166 + $0x50] sm:$0xff]
                %189 = vst [vmem:[%s167 + $0x50] sm:$0xff] %v188
                %v190 = vld [vmem:[%s166 + $0x58] sm:$0xff]
                %191 = vst [vmem:[%s167 + $0x58] sm:$0xff] %v190
                %v192 = vld [vmem:[%s166 + $0x60] sm:$0xff]
                %193 = vst [vmem:[%s167 + $0x60] sm:$0xff] %v192
                %v194 = vld [vmem:[%s166 + $0x68] sm:$0xff]
                %195 = vst [vmem:[%s167 + $0x68] sm:$0xff] %v194
                %v196 = vld [vmem:[%s166 + $0x70] sm:$0xff]
                %197 = vst [vmem:[%s167 + $0x70] sm:$0xff] %v196
                %v198 = vld [vmem:[%s166 + $0x78] sm:$0xff]
                %199 = vst [vmem:[%s167 + $0x78] sm:$0xff] %v198
                %v200 = vld [vmem:[%s166 + $0x100] sm:$0xff]
                %201 = vst [vmem:[%s167 + $0x80] sm:$0xff] %v200
                %v202 = vld [vmem:[%s166 + $0x108] sm:$0xff]
                %203 = vst [vmem:[%s167 + $0x88] sm:$0xff] %v202
                %v204 = vld [vmem:[%s166 + $0x110] sm:$0xff]
                %205 = vst [vmem:[%s167 + $0x90] sm:$0xff] %v204
                %v206 = vld [vmem:[%s166 + $0x118] sm:$0xff]
                %207 = vst [vmem:[%s167 + $0x98] sm:$0xff] %v206
                %v208 = vld [vmem:[%s166 + $0x120] sm:$0xff]
                %209 = vst [vmem:[%s167 + $0xa0] sm:$0xff] %v208
                %v210 = vld [vmem:[%s166 + $0x128] sm:$0xff]
                %211 = vst [vmem:[%s167 + $0xa8] sm:$0xff] %v210
                %v212 = vld [vmem:[%s166 + $0x130] sm:$0xff]
                %213 = vst [vmem:[%s167 + $0xb0] sm:$0xff] %v212
                %v214 = vld [vmem:[%s166 + $0x138] sm:$0xff]
                %215 = vst [vmem:[%s167 + $0xb8] sm:$0xff] %v214
                %v216 = vld [vmem:[%s166 + $0x140] sm:$0xff]
                %217 = vst [vmem:[%s167 + $0xc0] sm:$0xff] %v216
                %v218 = vld [vmem:[%s166 + $0x148] sm:$0xff]
                %219 = vst [vmem:[%s167 + $0xc8] sm:$0xff] %v218
                %v220 = vld [vmem:[%s166 + $0x150] sm:$0xff]
                %221 = vst [vmem:[%s167 + $0xd0] sm:$0xff] %v220
                %v222 = vld [vmem:[%s166 + $0x158] sm:$0xff]
                %223 = vst [vmem:[%s167 + $0xd8] sm:$0xff] %v222
                %v224 = vld [vmem:[%s166 + $0x160] sm:$0xff]
                %225 = vst [vmem:[%s167 + $0xe0] sm:$0xff] %v224
                %v226 = vld [vmem:[%s166 + $0x168] sm:$0xff]
                %227 = vst [vmem:[%s167 + $0xe8] sm:$0xff] %v226
                %v228 = vld [vmem:[%s166 + $0x170] sm:$0xff]
                %229 = vst [vmem:[%s167 + $0xf0] sm:$0xff] %v228
                %v230 = vld [vmem:[%s166 + $0x178] sm:$0xff]
                %231 = vst [vmem:[%s167 + $0xf8] sm:$0xff] %v230
              $region41: #{_lambda_.6} parent=35 // loop_footer
                %s165 = sadd.s32 1, %s161
              $region42: #{_lambda_.6} parent=35 // loop_footer_branch
                %160 = sbr.rel target = $region38
              $region43: #{_lambda_.6} parent=35 // loop_exit
                _
            $region36: #{_lambda_.6} parent=31 // pred_fallthru
              _
            // Predicated region
            $region44: #{_lambda_.6} parent=31 // pred_check
              _
            $region45: #{_lambda_.6} parent=31 // pred_check_branch
              %233 = sbr.rel target = $region47
            $region46: #{_lambda_.6} parent=31 // pred_region
              _
            $region47: #{_lambda_.6} parent=31 // pred_fallthru
              _
          $region32: #{_lambda_.6} parent=27 // pred_fallthru
            _
          %234 = vnop
        $region28: #{_lambda_.6} parent=23 // pred_fallthru
          _
      $region24: #{_lambda_.6} parent=5 // pred_fallthru
        _
      %p235 = scmp.le.s32.totalorder 1, %s11
      %p236 = scmp.lt.s32.totalorder %s11, 3
      %p237 = pnand %p235, %p236
      %p238 = pneg %p237
      // Predicated region
      $region48: #{_lambda_.6} parent=5 // pred_check
        _
      $region49: #{_lambda_.6} parent=5 // pred_check_branch
        %240 = sbr.rel (%p237) target = $region51
      $region50: #{_lambda_.6} parent=5 // pred_region
        %s241 = ssub.s32 %s11, 1
        // Predicated region
        $region52: #{_lambda_.6} parent=50 // pred_check
          %p242 = pneg %p32
        $region53: #{_lambda_.6} parent=50 // pred_check_branch
          %244 = sbr.rel (%p242) target = $region55
        $region54: #{_lambda_.6} parent=50 // pred_region
          %245 = dma.done [#allocation3], 64
        $region55: #{_lambda_.6} parent=50 // pred_fallthru
          _
        %s246 = sand.u32 %s45, 1
        %s247 = sand.u32 %s45, 1
        %s248 = smul.addr %s247, 256
        %s249 = scalar_lea.vmem [#allocation4], %s248
        // Predicated region
        $region56: #{_lambda_.6} parent=50 // pred_check
          %p250 = pneg %p58
        $region57: #{_lambda_.6} parent=50 // pred_check_branch
          %252 = sbr.rel (%p250) target = $region59
        $region58: #{_lambda_.6} parent=50 // pred_region
          _
        $region59: #{_lambda_.6} parent=50 // pred_fallthru
          _
        // Predicated region
        $region60: #{_lambda_.6} parent=50 // pred_check
          %p253 = pneg %p79
        $region61: #{_lambda_.6} parent=50 // pred_check_branch
          %255 = sbr.rel (%p253) target = $region63
        $region62: #{_lambda_.6} parent=50 // pred_region
          %256 = dma.done [#allocation6], 128
        $region63: #{_lambda_.6} parent=50 // pred_fallthru
          _
        %p257 = pneg %p32
        %p258 = pneg %p29
        %s259 = sand.u32 %s45, 1
        %s260 = sand.u32 %s45, 1
        %s261 = smul.addr %s260, 256
        %s262 = scalar_lea.vmem [#allocation4], %s261
        %p263 = pneg %p58
        %p264 = pneg %p55
        %p265 = pneg %p79
        %p266 = pneg %p76
        %p267 = pneg %p105
        %p268 = pneg %p102
        %s269 = smul.u32 32, %s16
        %p270 = scmp.lt.s32.totalorder %s269, 63
        %s271 = scalar_select %p270, %s269, 63
        %s272 = smul.addr %s271, 4
        %s273 = scalar_lea.vmem %s3, %s272
        %s274 = smul.u32 32, %s16
        %s275 = smul.u32 32, %s16
        %p276 = scmp.lt.s32.totalorder %s275, 63
        %s277 = scalar_select %p276, %s275, 63
        %s278 = smul.addr %s277, 4
        %s279 = scalar_lea.vmem %s3, %s278
        %s280 = smul.u32 32, %s16
        %v282 = vld [vmem:[#allocation2] sm:$0xf]
        %v283 = vld [vmem:[%s249] sm:$0xff]
        %v284 = vld [vmem:[%s249 + $0x8] sm:$0xff]
        %v285 = vld [vmem:[%s249 + $0x10] sm:$0xff]
        %v286 = vld [vmem:[%s249 + $0x18] sm:$0xff]
        %v287 = vld [vmem:[%s249 + $0x20] sm:$0xff]
        %v288 = vld [vmem:[%s249 + $0x28] sm:$0xff]
        %v289 = vld [vmem:[%s249 + $0x30] sm:$0xff]
        %v290 = vld [vmem:[%s249 + $0x38] sm:$0xff]
        %v291 = vld [vmem:[%s249 + $0x40] sm:$0xff]
        %v292 = vld [vmem:[%s249 + $0x48] sm:$0xff]
        %v293 = vld [vmem:[%s249 + $0x50] sm:$0xff]
        %v294 = vld [vmem:[%s249 + $0x58] sm:$0xff]
        %v295 = vld [vmem:[%s249 + $0x60] sm:$0xff]
        %v296 = vld [vmem:[%s249 + $0x68] sm:$0xff]
        %v297 = vld [vmem:[%s249 + $0x70] sm:$0xff]
        %v298 = vld [vmem:[%s249 + $0x78] sm:$0xff]
        %v299 = vld [vmem:[%s249 + $0x80] sm:$0xff]
        %v300 = vld [vmem:[%s249 + $0x88] sm:$0xff]
        %v301 = vld [vmem:[%s249 + $0x90] sm:$0xff]
        %v302 = vld [vmem:[%s249 + $0x98] sm:$0xff]
        %v303 = vld [vmem:[%s249 + $0xa0] sm:$0xff]
        %v304 = vld [vmem:[%s249 + $0xa8] sm:$0xff]
        %v305 = vld [vmem:[%s249 + $0xb0] sm:$0xff]
        %v306 = vld [vmem:[%s249 + $0xb8] sm:$0xff]
        %v307 = vld [vmem:[%s249 + $0xc0] sm:$0xff]
        %v308 = vld [vmem:[%s249 + $0xc8] sm:$0xff]
        %v309 = vld [vmem:[%s249 + $0xd0] sm:$0xff]
        %v310 = vld [vmem:[%s249 + $0xd8] sm:$0xff]
        %v311 = vld [vmem:[%s249 + $0xe0] sm:$0xff]
        %v312 = vld [vmem:[%s249 + $0xe8] sm:$0xff]
        %v313 = vld [vmem:[%s249 + $0xf0] sm:$0xff]
        %v314 = vld [vmem:[%s249 + $0xf8] sm:$0xff]
        %v347 = vunpack.c.l.b16 %v283
        %v348 = vunpack.c.h.b16 %v283
        %v349 = vunpack.c.l.b16 %v284
        %v350 = vunpack.c.h.b16 %v284
        %v351 = vunpack.c.l.b16 %v285
        %v352 = vunpack.c.h.b16 %v285
        %v353 = vunpack.c.l.b16 %v286
        %v354 = vunpack.c.h.b16 %v286
        %v355 = vunpack.c.l.b16 %v287
        %v356 = vunpack.c.h.b16 %v287
        %v357 = vunpack.c.l.b16 %v288
        %v358 = vunpack.c.h.b16 %v288
        %v359 = vunpack.c.l.b16 %v289
        %v360 = vunpack.c.h.b16 %v289
        %v361 = vunpack.c.l.b16 %v290
        %v362 = vunpack.c.h.b16 %v290
        %v363 = vunpack.c.l.b16 %v291
        %v364 = vunpack.c.h.b16 %v291
        %v365 = vunpack.c.l.b16 %v292
        %v366 = vunpack.c.h.b16 %v292
        %v367 = vunpack.c.l.b16 %v293
        %v368 = vunpack.c.h.b16 %v293
        %v369 = vunpack.c.l.b16 %v294
        %v370 = vunpack.c.h.b16 %v294
        %v371 = vunpack.c.l.b16 %v295
        %v372 = vunpack.c.h.b16 %v295
        %v373 = vunpack.c.l.b16 %v296
        %v374 = vunpack.c.h.b16 %v296
        %v375 = vunpack.c.l.b16 %v297
        %v376 = vunpack.c.h.b16 %v297
        %v377 = vunpack.c.l.b16 %v298
        %v378 = vunpack.c.h.b16 %v298
        %v379 = vunpack.c.l.b16 %v299
        %v380 = vunpack.c.h.b16 %v299
        %v381 = vunpack.c.l.b16 %v300
        %v382 = vunpack.c.h.b16 %v300
        %v383 = vunpack.c.l.b16 %v301
        %v384 = vunpack.c.h.b16 %v301
        %v385 = vunpack.c.l.b16 %v302
        %v386 = vunpack.c.h.b16 %v302
        %v387 = vunpack.c.l.b16 %v303
        %v388 = vunpack.c.h.b16 %v303
        %v389 = vunpack.c.l.b16 %v304
        %v390 = vunpack.c.h.b16 %v304
        %v391 = vunpack.c.l.b16 %v305
        %v392 = vunpack.c.h.b16 %v305
        %v393 = vunpack.c.l.b16 %v306
        %v394 = vunpack.c.h.b16 %v306
        %v395 = vunpack.c.l.b16 %v307
        %v396 = vunpack.c.h.b16 %v307
        %v397 = vunpack.c.l.b16 %v308
        %v398 = vunpack.c.h.b16 %v308
        %v399 = vunpack.c.l.b16 %v309
        %v400 = vunpack.c.h.b16 %v309
        %v401 = vunpack.c.l.b16 %v310
        %v402 = vunpack.c.h.b16 %v310
        %v403 = vunpack.c.l.b16 %v311
        %v404 = vunpack.c.h.b16 %v311
        %v405 = vunpack.c.l.b16 %v312
        %v406 = vunpack.c.h.b16 %v312
        %v407 = vunpack.c.l.b16 %v313
        %v408 = vunpack.c.h.b16 %v313
        %v409 = vunpack.c.l.b16 %v314
        %v410 = vunpack.c.h.b16 %v314
        %v411 = vpack.c.b16 %v379, %v347
        %v412 = vpack.c.b16 %v380, %v348
        %v413 = vpack.c.b16 %v381, %v349
        %v414 = vpack.c.b16 %v382, %v350
        %v415 = vpack.c.b16 %v383, %v351
        %v416 = vpack.c.b16 %v384, %v352
        %v417 = vpack.c.b16 %v385, %v353
        %v418 = vpack.c.b16 %v386, %v354
        %v419 = vpack.c.b16 %v387, %v355
        %v420 = vpack.c.b16 %v388, %v356
        %v421 = vpack.c.b16 %v389, %v357
        %v422 = vpack.c.b16 %v390, %v358
        %v423 = vpack.c.b16 %v391, %v359
        %v424 = vpack.c.b16 %v392, %v360
        %v425 = vpack.c.b16 %v393, %v361
        %v426 = vpack.c.b16 %v394, %v362
        %v427 = vpack.c.b16 %v395, %v363
        %v428 = vpack.c.b16 %v396, %v364
        %v429 = vpack.c.b16 %v397, %v365
        %v430 = vpack.c.b16 %v398, %v366
        %v431 = vpack.c.b16 %v399, %v367
        %v432 = vpack.c.b16 %v400, %v368
        %v433 = vpack.c.b16 %v401, %v369
        %v434 = vpack.c.b16 %v402, %v370
        %v435 = vpack.c.b16 %v403, %v371
        %v436 = vpack.c.b16 %v404, %v372
        %v437 = vpack.c.b16 %v405, %v373
        %v438 = vpack.c.b16 %v406, %v374
        %v439 = vpack.c.b16 %v407, %v375
        %v440 = vpack.c.b16 %v408, %v376
        %v441 = vpack.c.b16 %v409, %v377
        %v442 = vpack.c.b16 %v410, %v378
        %vm475 = vcmask 130048
        %v477 = vsel %vm475, %v282, 0
        %479 = vmatprep.subr.bf16.mxu0 %v412
        %480 = vmatpush1.bf16.msra.mxu0 %v411
        %481 = vmatprep.subr.bf16.mxu0 0
        %482 = vmatpush1.bf16.msra.mxu0 0
        %483 = vmatprep.subr.bf16.mxu0 0
        %484 = vmatpush1.bf16.msra.mxu0 0
        %485 = vmatprep.subr.bf16.mxu0 0
        %486 = vmatpush1.bf16.msra.mxu0 0
        %487 = vmatprep.subr.bf16.mxu0 0
        %488 = vmatpush1.bf16.msra.mxu0 0
        %489 = vmatprep.subr.bf16.mxu0 0
        %490 = vmatpush1.bf16.msra.mxu0 0
        %491 = vmatprep.subr.bf16.mxu0 0
        %492 = vmatpush1.bf16.msra.mxu0 0
        %493 = vmatprep.subr.bf16.mxu0 0
        %494 = vmatpush1.bf16.msra.mxu0 0
        %495 = vmatprep.subr.bf16.mxu0 0
        %496 = vmatpush1.bf16.msra.mxu0 0
        %497 = vmatprep.subr.bf16.mxu0 0
        %498 = vmatpush1.bf16.msra.mxu0 0
        %499 = vmatprep.subr.bf16.mxu0 0
        %500 = vmatpush1.bf16.msra.mxu0 0
        %501 = vmatprep.subr.bf16.mxu0 0
        %502 = vmatpush1.bf16.msra.mxu0 0
        %503 = vmatprep.subr.bf16.mxu0 0
        %504 = vmatpush1.bf16.msra.mxu0 0
        %505 = vmatprep.subr.bf16.mxu0 0
        %506 = vmatpush1.bf16.msra.mxu0 0
        %507 = vmatprep.subr.bf16.mxu0 0
        %508 = vmatpush1.bf16.msra.mxu0 0
        %509 = vmatprep.subr.bf16.mxu0 0
        %510 = vmatpush1.bf16.msra.mxu0 0
        %511 = vmatprep.mubr.bf16.mxu0 0
        %512 = vmatmul.mubr.bf16.gmra.mrb[0].mxu0 %v477
        %v513 = vpop.f32.mrb[0].mxu0
        %v514 = vadd.f32 0.0, %v513
        %v515 = vpop.f32.mrb[0].mxu0
        %v516 = vadd.f32 0.0, %v515
        %v517 = vpop.f32.mrb[0].mxu0
        %v518 = vpop.f32.mrb[0].mxu0
        %519 = vdwg.mxu0
        %520 = vmatprep.subr.bf16.mxu0 %v414
        %521 = vmatpush1.bf16.msra.mxu0 %v413
        %522 = vmatprep.subr.bf16.mxu0 0
        %523 = vmatpush1.bf16.msra.mxu0 0
        %524 = vmatprep.subr.bf16.mxu0 0
        %525 = vmatpush1.bf16.msra.mxu0 0
        %526 = vmatprep.subr.bf16.mxu0 0
        %527 = vmatpush1.bf16.msra.mxu0 0
        %528 = vmatprep.subr.bf16.mxu0 0
        %529 = vmatpush1.bf16.msra.mxu0 0
        %530 = vmatprep.subr.bf16.mxu0 0
        %531 = vmatpush1.bf16.msra.mxu0 0
        %532 = vmatprep.subr.bf16.mxu0 0
        %533 = vmatpush1.bf16.msra.mxu0 0
        %534 = vmatprep.subr.bf16.mxu0 0
        %535 = vmatpush1.bf16.msra.mxu0 0
        %536 = vmatprep.subr.bf16.mxu0 0
        %537 = vmatpush1.bf16.msra.mxu0 0
        %538 = vmatprep.subr.bf16.mxu0 0
        %539 = vmatpush1.bf16.msra.mxu0 0
        %540 = vmatprep.subr.bf16.mxu0 0
        %541 = vmatpush1.bf16.msra.mxu0 0
        %542 = vmatprep.subr.bf16.mxu0 0
        %543 = vmatpush1.bf16.msra.mxu0 0
        %544 = vmatprep.subr.bf16.mxu0 0
        %545 = vmatpush1.bf16.msra.mxu0 0
        %546 = vmatprep.subr.bf16.mxu0 0
        %547 = vmatpush1.bf16.msra.mxu0 0
        %548 = vmatprep.subr.bf16.mxu0 0
        %549 = vmatpush1.bf16.msra.mxu0 0
        %550 = vmatprep.subr.bf16.mxu0 0
        %551 = vmatpush1.bf16.msra.mxu0 0
        %552 = vmatprep.mubr.bf16.mxu0 0
        %553 = vmatmul.mubr.bf16.gmra.mrb[0].mxu0 %v477
        %v554 = vpop.f32.mrb[0].mxu0
        %v555 = vadd.f32 0.0, %v554
        %v556 = vpop.f32.mrb[0].mxu0
        %v557 = vadd.f32 0.0, %v556
        %v558 = vpop.f32.mrb[0].mxu0
        %v559 = vpop.f32.mrb[0].mxu0
        %560 = vdwg.mxu0
        %561 = vmatprep.subr.bf16.mxu0 %v416
        %562 = vmatpush1.bf16.msra.mxu0 %v415
        %563 = vmatprep.subr.bf16.mxu0 0
        %564 = vmatpush1.bf16.msra.mxu0 0
        %565 = vmatprep.subr.bf16.mxu0 0
        %566 = vmatpush1.bf16.msra.mxu0 0
        %567 = vmatprep.subr.bf16.mxu0 0
        %568 = vmatpush1.bf16.msra.mxu0 0
        %569 = vmatprep.subr.bf16.mxu0 0
        %570 = vmatpush1.bf16.msra.mxu0 0
        %571 = vmatprep.subr.bf16.mxu0 0
        %572 = vmatpush1.bf16.msra.mxu0 0
        %573 = vmatprep.subr.bf16.mxu0 0
        %574 = vmatpush1.bf16.msra.mxu0 0
        %575 = vmatprep.subr.bf16.mxu0 0
        %576 = vmatpush1.bf16.msra.mxu0 0
        %577 = vmatprep.subr.bf16.mxu0 0
        %578 = vmatpush1.bf16.msra.mxu0 0
        %579 = vmatprep.subr.bf16.mxu0 0
        %580 = vmatpush1.bf16.msra.mxu0 0
        %581 = vmatprep.subr.bf16.mxu0 0
        %582 = vmatpush1.bf16.msra.mxu0 0
        %583 = vmatprep.subr.bf16.mxu0 0
        %584 = vmatpush1.bf16.msra.mxu0 0
        %585 = vmatprep.subr.bf16.mxu0 0
        %586 = vmatpush1.bf16.msra.mxu0 0
        %587 = vmatprep.subr.bf16.mxu0 0
        %588 = vmatpush1.bf16.msra.mxu0 0
        %589 = vmatprep.subr.bf16.mxu0 0
        %590 = vmatpush1.bf16.msra.mxu0 0
        %591 = vmatprep.subr.bf16.mxu0 0
        %592 = vmatpush1.bf16.msra.mxu0 0
        %593 = vmatprep.mubr.bf16.mxu0 0
        %594 = vmatmul.mubr.bf16.gmra.mrb[0].mxu0 %v477
        %v595 = vpop.f32.mrb[0].mxu0
        %v596 = vadd.f32 0.0, %v595
        %v597 = vpop.f32.mrb[0].mxu0
        %v598 = vadd.f32 0.0, %v597
        %v599 = vpop.f32.mrb[0].mxu0
        %v600 = vpop.f32.mrb[0].mxu0
        %601 = vdwg.mxu0
        %602 = vmatprep.subr.bf16.mxu0 %v418
        %603 = vmatpush1.bf16.msra.mxu0 %v417
        %604 = vmatprep.subr.bf16.mxu0 0
        %605 = vmatpush1.bf16.msra.mxu0 0
        %606 = vmatprep.subr.bf16.mxu0 0
        %607 = vmatpush1.bf16.msra.mxu0 0
        %608 = vmatprep.subr.bf16.mxu0 0
        %609 = vmatpush1.bf16.msra.mxu0 0
        %610 = vmatprep.subr.bf16.mxu0 0
        %611 = vmatpush1.bf16.msra.mxu0 0
        %612 = vmatprep.subr.bf16.mxu0 0
        %613 = vmatpush1.bf16.msra.mxu0 0
        %614 = vmatprep.subr.bf16.mxu0 0
        %615 = vmatpush1.bf16.msra.mxu0 0
        %616 = vmatprep.subr.bf16.mxu0 0
        %617 = vmatpush1.bf16.msra.mxu0 0
        %618 = vmatprep.subr.bf16.mxu0 0
        %619 = vmatpush1.bf16.msra.mxu0 0
        %620 = vmatprep.subr.bf16.mxu0 0
        %621 = vmatpush1.bf16.msra.mxu0 0
        %622 = vmatprep.subr.bf16.mxu0 0
        %623 = vmatpush1.bf16.msra.mxu0 0
        %624 = vmatprep.subr.bf16.mxu0 0
        %625 = vmatpush1.bf16.msra.mxu0 0
        %626 = vmatprep.subr.bf16.mxu0 0
        %627 = vmatpush1.bf16.msra.mxu0 0
        %628 = vmatprep.subr.bf16.mxu0 0
        %629 = vmatpush1.bf16.msra.mxu0 0
        %630 = vmatprep.subr.bf16.mxu0 0
        %631 = vmatpush1.bf16.msra.mxu0 0
        %632 = vmatprep.subr.bf16.mxu0 0
        %633 = vmatpush1.bf16.msra.mxu0 0
        %634 = vmatprep.mubr.bf16.mxu0 0
        %635 = vmatmul.mubr.bf16.gmra.mrb[0].mxu0 %v477
        %v636 = vpop.f32.mrb[0].mxu0
        %v637 = vadd.f32 0.0, %v636
        %v638 = vpop.f32.mrb[0].mxu0
        %v639 = vadd.f32 0.0, %v638
        %v640 = vpop.f32.mrb[0].mxu0
        %v641 = vpop.f32.mrb[0].mxu0
        %642 = vdwg.mxu0
        %643 = vmatprep.subr.bf16.mxu0 %v420
        %644 = vmatpush1.bf16.msra.mxu0 %v419
        %645 = vmatprep.subr.bf16.mxu0 0
        %646 = vmatpush1.bf16.msra.mxu0 0
        %647 = vmatprep.subr.bf16.mxu0 0
        %648 = vmatpush1.bf16.msra.mxu0 0
        %649 = vmatprep.subr.bf16.mxu0 0
        %650 = vmatpush1.bf16.msra.mxu0 0
        %651 = vmatprep.subr.bf16.mxu0 0
        %652 = vmatpush1.bf16.msra.mxu0 0
        %653 = vmatprep.subr.bf16.mxu0 0
        %654 = vmatpush1.bf16.msra.mxu0 0
        %655 = vmatprep.subr.bf16.mxu0 0
        %656 = vmatpush1.bf16.msra.mxu0 0
        %657 = vmatprep.subr.bf16.mxu0 0
        %658 = vmatpush1.bf16.msra.mxu0 0
        %659 = vmatprep.subr.bf16.mxu0 0
        %660 = vmatpush1.bf16.msra.mxu0 0
        %661 = vmatprep.subr.bf16.mxu0 0
        %662 = vmatpush1.bf16.msra.mxu0 0
        %663 = vmatprep.subr.bf16.mxu0 0
        %664 = vmatpush1.bf16.msra.mxu0 0
        %665 = vmatprep.subr.bf16.mxu0 0
        %666 = vmatpush1.bf16.msra.mxu0 0
        %667 = vmatprep.subr.bf16.mxu0 0
        %668 = vmatpush1.bf16.msra.mxu0 0
        %669 = vmatprep.subr.bf16.mxu0 0
        %670 = vmatpush1.bf16.msra.mxu0 0
        %671 = vmatprep.subr.bf16.mxu0 0
        %672 = vmatpush1.bf16.msra.mxu0 0
        %673 = vmatprep.subr.bf16.mxu0 0
        %674 = vmatpush1.bf16.msra.mxu0 0
        %675 = vmatprep.mubr.bf16.mxu0 0
        %676 = vmatmul.mubr.bf16.gmra.mrb[0].mxu0 %v477
        %v677 = vpop.f32.mrb[0].mxu0
        %v678 = vadd.f32 0.0, %v677
        %v679 = vpop.f32.mrb[0].mxu0
        %v680 = vadd.f32 0.0, %v679
        %v681 = vpop.f32.mrb[0].mxu0
        %v682 = vpop.f32.mrb[0].mxu0
        %683 = vdwg.mxu0
        %684 = vmatprep.subr.bf16.mxu0 %v422
        %685 = vmatpush1.bf16.msra.mxu0 %v421
        %686 = vmatprep.subr.bf16.mxu0 0
        %687 = vmatpush1.bf16.msra.mxu0 0
        %688 = vmatprep.subr.bf16.mxu0 0
        %689 = vmatpush1.bf16.msra.mxu0 0
        %690 = vmatprep.subr.bf16.mxu0 0
        %691 = vmatpush1.bf16.msra.mxu0 0
        %692 = vmatprep.subr.bf16.mxu0 0
        %693 = vmatpush1.bf16.msra.mxu0 0
        %694 = vmatprep.subr.bf16.mxu0 0
        %695 = vmatpush1.bf16.msra.mxu0 0
        %696 = vmatprep.subr.bf16.mxu0 0
        %697 = vmatpush1.bf16.msra.mxu0 0
        %698 = vmatprep.subr.bf16.mxu0 0
        %699 = vmatpush1.bf16.msra.mxu0 0
        %700 = vmatprep.subr.bf16.mxu0 0
        %701 = vmatpush1.bf16.msra.mxu0 0
        %702 = vmatprep.subr.bf16.mxu0 0
        %703 = vmatpush1.bf16.msra.mxu0 0
        %704 = vmatprep.subr.bf16.mxu0 0
        %705 = vmatpush1.bf16.msra.mxu0 0
        %706 = vmatprep.subr.bf16.mxu0 0
        %707 = vmatpush1.bf16.msra.mxu0 0
        %708 = vmatprep.subr.bf16.mxu0 0
        %709 = vmatpush1.bf16.msra.mxu0 0
        %710 = vmatprep.subr.bf16.mxu0 0
        %711 = vmatpush1.bf16.msra.mxu0 0
        %712 = vmatprep.subr.bf16.mxu0 0
        %713 = vmatpush1.bf16.msra.mxu0 0
        %714 = vmatprep.subr.bf16.mxu0 0
        %715 = vmatpush1.bf16.msra.mxu0 0
        %716 = vmatprep.mubr.bf16.mxu0 0
        %717 = vmatmul.mubr.bf16.gmra.mrb[0].mxu0 %v477
        %v718 = vpop.f32.mrb[0].mxu0
        %v719 = vadd.f32 0.0, %v718
        %v720 = vpop.f32.mrb[0].mxu0
        %v721 = vadd.f32 0.0, %v720
        %v722 = vpop.f32.mrb[0].mxu0
        %v723 = vpop.f32.mrb[0].mxu0
        %724 = vdwg.mxu0
        %725 = vmatprep.subr.bf16.mxu0 %v424
        %726 = vmatpush1.bf16.msra.mxu0 %v423
        %727 = vmatprep.subr.bf16.mxu0 0
        %728 = vmatpush1.bf16.msra.mxu0 0
        %729 = vmatprep.subr.bf16.mxu0 0
        %730 = vmatpush1.bf16.msra.mxu0 0
        %731 = vmatprep.subr.bf16.mxu0 0
        %732 = vmatpush1.bf16.msra.mxu0 0
        %733 = vmatprep.subr.bf16.mxu0 0
        %734 = vmatpush1.bf16.msra.mxu0 0
        %735 = vmatprep.subr.bf16.mxu0 0
        %736 = vmatpush1.bf16.msra.mxu0 0
        %737 = vmatprep.subr.bf16.mxu0 0
        %738 = vmatpush1.bf16.msra.mxu0 0
        %739 = vmatprep.subr.bf16.mxu0 0
        %740 = vmatpush1.bf16.msra.mxu0 0
        %741 = vmatprep.subr.bf16.mxu0 0
        %742 = vmatpush1.bf16.msra.mxu0 0
        %743 = vmatprep.subr.bf16.mxu0 0
        %744 = vmatpush1.bf16.msra.mxu0 0
        %745 = vmatprep.subr.bf16.mxu0 0
        %746 = vmatpush1.bf16.msra.mxu0 0
        %747 = vmatprep.subr.bf16.mxu0 0
        %748 = vmatpush1.bf16.msra.mxu0 0
        %749 = vmatprep.subr.bf16.mxu0 0
        %750 = vmatpush1.bf16.msra.mxu0 0
        %751 = vmatprep.subr.bf16.mxu0 0
        %752 = vmatpush1.bf16.msra.mxu0 0
        %753 = vmatprep.subr.bf16.mxu0 0
        %754 = vmatpush1.bf16.msra.mxu0 0
        %755 = vmatprep.subr.bf16.mxu0 0
        %756 = vmatpush1.bf16.msra.mxu0 0
        %757 = vmatprep.mubr.bf16.mxu0 0
        %758 = vmatmul.mubr.bf16.gmra.mrb[0].mxu0 %v477
        %v759 = vpop.f32.mrb[0].mxu0
        %v760 = vadd.f32 0.0, %v759
        %v761 = vpop.f32.mrb[0].mxu0
        %v762 = vadd.f32 0.0, %v761
        %v763 = vpop.f32.mrb[0].mxu0
        %v764 = vpop.f32.mrb[0].mxu0
        %765 = vdwg.mxu0
        %766 = vmatprep.subr.bf16.mxu0 %v426
        %767 = vmatpush1.bf16.msra.mxu0 %v425
        %768 = vmatprep.subr.bf16.mxu0 0
        %769 = vmatpush1.bf16.msra.mxu0 0
        %770 = vmatprep.subr.bf16.mxu0 0
        %771 = vmatpush1.bf16.msra.mxu0 0
        %772 = vmatprep.subr.bf16.mxu0 0
        %773 = vmatpush1.bf16.msra.mxu0 0
        %774 = vmatprep.subr.bf16.mxu0 0
        %775 = vmatpush1.bf16.msra.mxu0 0
        %776 = vmatprep.subr.bf16.mxu0 0
        %777 = vmatpush1.bf16.msra.mxu0 0
        %778 = vmatprep.subr.bf16.mxu0 0
        %779 = vmatpush1.bf16.msra.mxu0 0
        %780 = vmatprep.subr.bf16.mxu0 0
        %781 = vmatpush1.bf16.msra.mxu0 0
        %782 = vmatprep.subr.bf16.mxu0 0
        %783 = vmatpush1.bf16.msra.mxu0 0
        %784 = vmatprep.subr.bf16.mxu0 0
        %785 = vmatpush1.bf16.msra.mxu0 0
        %786 = vmatprep.subr.bf16.mxu0 0
        %787 = vmatpush1.bf16.msra.mxu0 0
        %788 = vmatprep.subr.bf16.mxu0 0
        %789 = vmatpush1.bf16.msra.mxu0 0
        %790 = vmatprep.subr.bf16.mxu0 0
        %791 = vmatpush1.bf16.msra.mxu0 0
        %792 = vmatprep.subr.bf16.mxu0 0
        %793 = vmatpush1.bf16.msra.mxu0 0
        %794 = vmatprep.subr.bf16.mxu0 0
        %795 = vmatpush1.bf16.msra.mxu0 0
        %796 = vmatprep.subr.bf16.mxu0 0
        %797 = vmatpush1.bf16.msra.mxu0 0
        %798 = vmatprep.mubr.bf16.mxu0 0
        %799 = vmatmul.mubr.bf16.gmra.mrb[0].mxu0 %v477
        %v800 = vpop.f32.mrb[0].mxu0
        %v801 = vadd.f32 0.0, %v800
        %v802 = vpop.f32.mrb[0].mxu0
        %v803 = vadd.f32 0.0, %v802
        %v804 = vpop.f32.mrb[0].mxu0
        %v805 = vpop.f32.mrb[0].mxu0
        %806 = vdwg.mxu0
        %807 = vmatprep.subr.bf16.mxu0 %v428
        %808 = vmatpush1.bf16.msra.mxu0 %v427
        %809 = vmatprep.subr.bf16.mxu0 0
        %810 = vmatpush1.bf16.msra.mxu0 0
        %811 = vmatprep.subr.bf16.mxu0 0
        %812 = vmatpush1.bf16.msra.mxu0 0
        %813 = vmatprep.subr.bf16.mxu0 0
        %814 = vmatpush1.bf16.msra.mxu0 0
        %815 = vmatprep.subr.bf16.mxu0 0
        %816 = vmatpush1.bf16.msra.mxu0 0
        %817 = vmatprep.subr.bf16.mxu0 0
        %818 = vmatpush1.bf16.msra.mxu0 0
        %819 = vmatprep.subr.bf16.mxu0 0
        %820 = vmatpush1.bf16.msra.mxu0 0
        %821 = vmatprep.subr.bf16.mxu0 0
        %822 = vmatpush1.bf16.msra.mxu0 0
        %823 = vmatprep.subr.bf16.mxu0 0
        %824 = vmatpush1.bf16.msra.mxu0 0
        %825 = vmatprep.subr.bf16.mxu0 0
        %826 = vmatpush1.bf16.msra.mxu0 0
        %827 = vmatprep.subr.bf16.mxu0 0
        %828 = vmatpush1.bf16.msra.mxu0 0
        %829 = vmatprep.subr.bf16.mxu0 0
        %830 = vmatpush1.bf16.msra.mxu0 0
        %831 = vmatprep.subr.bf16.mxu0 0
        %832 = vmatpush1.bf16.msra.mxu0 0
        %833 = vmatprep.subr.bf16.mxu0 0
        %834 = vmatpush1.bf16.msra.mxu0 0
        %835 = vmatprep.subr.bf16.mxu0 0
        %836 = vmatpush1.bf16.msra.mxu0 0
        %837 = vmatprep.subr.bf16.mxu0 0
        %838 = vmatpush1.bf16.msra.mxu0 0
        %839 = vmatprep.mubr.bf16.mxu0 0
        %840 = vmatmul.mubr.bf16.gmra.mrb[0].mxu0 %v477
        %v841 = vpop.f32.mrb[0].mxu0
        %v842 = vadd.f32 0.0, %v841
        %v843 = vpop.f32.mrb[0].mxu0
        %v844 = vadd.f32 0.0, %v843
        %v845 = vpop.f32.mrb[0].mxu0
        %v846 = vpop.f32.mrb[0].mxu0
        %847 = vdwg.mxu0
        %848 = vmatprep.subr.bf16.mxu0 %v430
        %849 = vmatpush1.bf16.msra.mxu0 %v429
        %850 = vmatprep.subr.bf16.mxu0 0
        %851 = vmatpush1.bf16.msra.mxu0 0
        %852 = vmatprep.subr.bf16.mxu0 0
        %853 = vmatpush1.bf16.msra.mxu0 0
        %854 = vmatprep.subr.bf16.mxu0 0
        %855 = vmatpush1.bf16.msra.mxu0 0
        %856 = vmatprep.subr.bf16.mxu0 0
        %857 = vmatpush1.bf16.msra.mxu0 0
        %858 = vmatprep.subr.bf16.mxu0 0
        %859 = vmatpush1.bf16.msra.mxu0 0
        %860 = vmatprep.subr.bf16.mxu0 0
        %861 = vmatpush1.bf16.msra.mxu0 0
        %862 = vmatprep.subr.bf16.mxu0 0
        %863 = vmatpush1.bf16.msra.mxu0 0
        %864 = vmatprep.subr.bf16.mxu0 0
        %865 = vmatpush1.bf16.msra.mxu0 0
        %866 = vmatprep.subr.bf16.mxu0 0
        %867 = vmatpush1.bf16.msra.mxu0 0
        %868 = vmatprep.subr.bf16.mxu0 0
        %869 = vmatpush1.bf16.msra.mxu0 0
        %870 = vmatprep.subr.bf16.mxu0 0
        %871 = vmatpush1.bf16.msra.mxu0 0
        %872 = vmatprep.subr.bf16.mxu0 0
        %873 = vmatpush1.bf16.msra.mxu0 0
        %874 = vmatprep.subr.bf16.mxu0 0
        %875 = vmatpush1.bf16.msra.mxu0 0
        %876 = vmatprep.subr.bf16.mxu0 0
        %877 = vmatpush1.bf16.msra.mxu0 0
        %878 = vmatprep.subr.bf16.mxu0 0
        %879 = vmatpush1.bf16.msra.mxu0 0
        %880 = vmatprep.mubr.bf16.mxu0 0
        %881 = vmatmul.mubr.bf16.gmra.mrb[0].mxu0 %v477
        %v882 = vpop.f32.mrb[0].mxu0
        %v883 = vadd.f32 0.0, %v882
        %v884 = vpop.f32.mrb[0].mxu0
        %v885 = vadd.f32 0.0, %v884
        %v886 = vpop.f32.mrb[0].mxu0
        %v887 = vpop.f32.mrb[0].mxu0
        %888 = vdwg.mxu0
        %889 = vmatprep.subr.bf16.mxu0 %v432
        %890 = vmatpush1.bf16.msra.mxu0 %v431
        %891 = vmatprep.subr.bf16.mxu0 0
        %892 = vmatpush1.bf16.msra.mxu0 0
        %893 = vmatprep.subr.bf16.mxu0 0
        %894 = vmatpush1.bf16.msra.mxu0 0
        %895 = vmatprep.subr.bf16.mxu0 0
        %896 = vmatpush1.bf16.msra.mxu0 0
        %897 = vmatprep.subr.bf16.mxu0 0
        %898 = vmatpush1.bf16.msra.mxu0 0
        %899 = vmatprep.subr.bf16.mxu0 0
        %900 = vmatpush1.bf16.msra.mxu0 0
        %901 = vmatprep.subr.bf16.mxu0 0
        %902 = vmatpush1.bf16.msra.mxu0 0
        %903 = vmatprep.subr.bf16.mxu0 0
        %904 = vmatpush1.bf16.msra.mxu0 0
        %905 = vmatprep.subr.bf16.mxu0 0
        %906 = vmatpush1.bf16.msra.mxu0 0
        %907 = vmatprep.subr.bf16.mxu0 0
        %908 = vmatpush1.bf16.msra.mxu0 0
        %909 = vmatprep.subr.bf16.mxu0 0
        %910 = vmatpush1.bf16.msra.mxu0 0
        %911 = vmatprep.subr.bf16.mxu0 0
        %912 = vmatpush1.bf16.msra.mxu0 0
        %913 = vmatprep.subr.bf16.mxu0 0
        %914 = vmatpush1.bf16.msra.mxu0 0
        %915 = vmatprep.subr.bf16.mxu0 0
        %916 = vmatpush1.bf16.msra.mxu0 0
        %917 = vmatprep.subr.bf16.mxu0 0
        %918 = vmatpush1.bf16.msra.mxu0 0
        %919 = vmatprep.subr.bf16.mxu0 0
        %920 = vmatpush1.bf16.msra.mxu0 0
        %921 = vmatprep.mubr.bf16.mxu0 0
        %922 = vmatmul.mubr.bf16.gmra.mrb[0].mxu0 %v477
        %v923 = vpop.f32.mrb[0].mxu0
        %v924 = vadd.f32 0.0, %v923
        %v925 = vpop.f32.mrb[0].mxu0
        %v926 = vadd.f32 0.0, %v925
        %v927 = vpop.f32.mrb[0].mxu0
        %v928 = vpop.f32.mrb[0].mxu0
        %929 = vdwg.mxu0
        %930 = vmatprep.subr.bf16.mxu0 %v434
        %931 = vmatpush1.bf16.msra.mxu0 %v433
        %932 = vmatprep.subr.bf16.mxu0 0
        %933 = vmatpush1.bf16.msra.mxu0 0
        %934 = vmatprep.subr.bf16.mxu0 0
        %935 = vmatpush1.bf16.msra.mxu0 0
        %936 = vmatprep.subr.bf16.mxu0 0
        %937 = vmatpush1.bf16.msra.mxu0 0
        %938 = vmatprep.subr.bf16.mxu0 0
        %939 = vmatpush1.bf16.msra.mxu0 0
        %940 = vmatprep.subr.bf16.mxu0 0
        %941 = vmatpush1.bf16.msra.mxu0 0
        %942 = vmatprep.subr.bf16.mxu0 0
        %943 = vmatpush1.bf16.msra.mxu0 0
        %944 = vmatprep.subr.bf16.mxu0 0
        %945 = vmatpush1.bf16.msra.mxu0 0
        %946 = vmatprep.subr.bf16.mxu0 0
        %947 = vmatpush1.bf16.msra.mxu0 0
        %948 = vmatprep.subr.bf16.mxu0 0
        %949 = vmatpush1.bf16.msra.mxu0 0
        %950 = vmatprep.subr.bf16.mxu0 0
        %951 = vmatpush1.bf16.msra.mxu0 0
        %952 = vmatprep.subr.bf16.mxu0 0
        %953 = vmatpush1.bf16.msra.mxu0 0
        %954 = vmatprep.subr.bf16.mxu0 0
        %955 = vmatpush1.bf16.msra.mxu0 0
        %956 = vmatprep.subr.bf16.mxu0 0
        %957 = vmatpush1.bf16.msra.mxu0 0
        %958 = vmatprep.subr.bf16.mxu0 0
        %959 = vmatpush1.bf16.msra.mxu0 0
        %960 = vmatprep.subr.bf16.mxu0 0
        %961 = vmatpush1.bf16.msra.mxu0 0
        %962 = vmatprep.mubr.bf16.mxu0 0
        %963 = vmatmul.mubr.bf16.gmra.mrb[0].mxu0 %v477
        %v964 = vpop.f32.mrb[0].mxu0
        %v965 = vadd.f32 0.0, %v964
        %v966 = vpop.f32.mrb[0].mxu0
        %v967 = vadd.f32 0.0, %v966
        %v968 = vpop.f32.mrb[0].mxu0
        %v969 = vpop.f32.mrb[0].mxu0
        %970 = vdwg.mxu0
        %971 = vmatprep.subr.bf16.mxu0 %v436
        %972 = vmatpush1.bf16.msra.mxu0 %v435
        %973 = vmatprep.subr.bf16.mxu0 0
        %974 = vmatpush1.bf16.msra.mxu0 0
        %975 = vmatprep.subr.bf16.mxu0 0
        %976 = vmatpush1.bf16.msra.mxu0 0
        %977 = vmatprep.subr.bf16.mxu0 0
        %978 = vmatpush1.bf16.msra.mxu0 0
        %979 = vmatprep.subr.bf16.mxu0 0
        %980 = vmatpush1.bf16.msra.mxu0 0
        %981 = vmatprep.subr.bf16.mxu0 0
        %982 = vmatpush1.bf16.msra.mxu0 0
        %983 = vmatprep.subr.bf16.mxu0 0
        %984 = vmatpush1.bf16.msra.mxu0 0
        %985 = vmatprep.subr.bf16.mxu0 0
        %986 = vmatpush1.bf16.msra.mxu0 0
        %987 = vmatprep.subr.bf16.mxu0 0
        %988 = vmatpush1.bf16.msra.mxu0 0
        %989 = vmatprep.subr.bf16.mxu0 0
        %990 = vmatpush1.bf16.msra.mxu0 0
        %991 = vmatprep.subr.bf16.mxu0 0
        %992 = vmatpush1.bf16.msra.mxu0 0
        %993 = vmatprep.subr.bf16.mxu0 0
        %994 = vmatpush1.bf16.msra.mxu0 0
        %995 = vmatprep.subr.bf16.mxu0 0
        %996 = vmatpush1.bf16.msra.mxu0 0
        %997 = vmatprep.subr.bf16.mxu0 0
        %998 = vmatpush1.bf16.msra.mxu0 0
        %999 = vmatprep.subr.bf16.mxu0 0
        %1000 = vmatpush1.bf16.msra.mxu0 0
        %1001 = vmatprep.subr.bf16.mxu0 0
        %1002 = vmatpush1.bf16.msra.mxu0 0
        %1003 = vmatprep.mubr.bf16.mxu0 0
        %1004 = vmatmul.mubr.bf16.gmra.mrb[0].mxu0 %v477
        %v1005 = vpop.f32.mrb[0].mxu0
        %v1006 = vadd.f32 0.0, %v1005
        %v1007 = vpop.f32.mrb[0].mxu0
        %v1008 = vadd.f32 0.0, %v1007
        %v1009 = vpop.f32.mrb[0].mxu0
        %v1010 = vpop.f32.mrb[0].mxu0
        %1011 = vdwg.mxu0
        %1012 = vmatprep.subr.bf16.mxu0 %v438
        %1013 = vmatpush1.bf16.msra.mxu0 %v437
        %1014 = vmatprep.subr.bf16.mxu0 0
        %1015 = vmatpush1.bf16.msra.mxu0 0
        %1016 = vmatprep.subr.bf16.mxu0 0
        %1017 = vmatpush1.bf16.msra.mxu0 0
        %1018 = vmatprep.subr.bf16.mxu0 0
        %1019 = vmatpush1.bf16.msra.mxu0 0
        %1020 = vmatprep.subr.bf16.mxu0 0
        %1021 = vmatpush1.bf16.msra.mxu0 0
        %1022 = vmatprep.subr.bf16.mxu0 0
        %1023 = vmatpush1.bf16.msra.mxu0 0
        %1024 = vmatprep.subr.bf16.mxu0 0
        %1025 = vmatpush1.bf16.msra.mxu0 0
        %1026 = vmatprep.subr.bf16.mxu0 0
        %1027 = vmatpush1.bf16.msra.mxu0 0
        %1028 = vmatprep.subr.bf16.mxu0 0
        %1029 = vmatpush1.bf16.msra.mxu0 0
        %1030 = vmatprep.subr.bf16.mxu0 0
        %1031 = vmatpush1.bf16.msra.mxu0 0
        %1032 = vmatprep.subr.bf16.mxu0 0
        %1033 = vmatpush1.bf16.msra.mxu0 0
        %1034 = vmatprep.subr.bf16.mxu0 0
        %1035 = vmatpush1.bf16.msra.mxu0 0
        %1036 = vmatprep.subr.bf16.mxu0 0
        %1037 = vmatpush1.bf16.msra.mxu0 0
        %1038 = vmatprep.subr.bf16.mxu0 0
        %1039 = vmatpush1.bf16.msra.mxu0 0
        %1040 = vmatprep.subr.bf16.mxu0 0
        %1041 = vmatpush1.bf16.msra.mxu0 0
        %1042 = vmatprep.subr.bf16.mxu0 0
        %1043 = vmatpush1.bf16.msra.mxu0 0
        %1044 = vmatprep.mubr.bf16.mxu0 0
        %1045 = vmatmul.mubr.bf16.gmra.mrb[0].mxu0 %v477
        %v1046 = vpop.f32.mrb[0].mxu0
        %v1047 = vadd.f32 0.0, %v1046
        %v1048 = vpop.f32.mrb[0].mxu0
        %v1049 = vadd.f32 0.0, %v1048
        %v1050 = vpop.f32.mrb[0].mxu0
        %v1051 = vpop.f32.mrb[0].mxu0
        %1052 = vdwg.mxu0
        %1053 = vmatprep.subr.bf16.mxu0 %v440
        %1054 = vmatpush1.bf16.msra.mxu0 %v439
        %1055 = vmatprep.subr.bf16.mxu0 0
        %1056 = vmatpush1.bf16.msra.mxu0 0
        %1057 = vmatprep.subr.bf16.mxu0 0
        %1058 = vmatpush1.bf16.msra.mxu0 0
        %1059 = vmatprep.subr.bf16.mxu0 0
        %1060 = vmatpush1.bf16.msra.mxu0 0
        %1061 = vmatprep.subr.bf16.mxu0 0
        %1062 = vmatpush1.bf16.msra.mxu0 0
        %1063 = vmatprep.subr.bf16.mxu0 0
        %1064 = vmatpush1.bf16.msra.mxu0 0
        %1065 = vmatprep.subr.bf16.mxu0 0
        %1066 = vmatpush1.bf16.msra.mxu0 0
        %1067 = vmatprep.subr.bf16.mxu0 0
        %1068 = vmatpush1.bf16.msra.mxu0 0
        %1069 = vmatprep.subr.bf16.mxu0 0
        %1070 = vmatpush1.bf16.msra.mxu0 0
        %1071 = vmatprep.subr.bf16.mxu0 0
        %1072 = vmatpush1.bf16.msra.mxu0 0
        %1073 = vmatprep.subr.bf16.mxu0 0
        %1074 = vmatpush1.bf16.msra.mxu0 0
        %1075 = vmatprep.subr.bf16.mxu0 0
        %1076 = vmatpush1.bf16.msra.mxu0 0
        %1077 = vmatprep.subr.bf16.mxu0 0
        %1078 = vmatpush1.bf16.msra.mxu0 0
        %1079 = vmatprep.subr.bf16.mxu0 0
        %1080 = vmatpush1.bf16.msra.mxu0 0
        %1081 = vmatprep.subr.bf16.mxu0 0
        %1082 = vmatpush1.bf16.msra.mxu0 0
        %1083 = vmatprep.subr.bf16.mxu0 0
        %1084 = vmatpush1.bf16.msra.mxu0 0
        %1085 = vmatprep.mubr.bf16.mxu0 0
        %1086 = vmatmul.mubr.bf16.gmra.mrb[0].mxu0 %v477
        %v1087 = vpop.f32.mrb[0].mxu0
        %v1088 = vadd.f32 0.0, %v1087
        %v1089 = vpop.f32.mrb[0].mxu0
        %v1090 = vadd.f32 0.0, %v1089
        %v1091 = vpop.f32.mrb[0].mxu0
        %v1092 = vpop.f32.mrb[0].mxu0
        %1093 = vdwg.mxu0
        %1094 = vmatprep.subr.bf16.mxu0 %v442
        %1095 = vmatpush1.bf16.msra.mxu0 %v441
        %1096 = vmatprep.subr.bf16.mxu0 0
        %1097 = vmatpush1.bf16.msra.mxu0 0
        %1098 = vmatprep.subr.bf16.mxu0 0
        %1099 = vmatpush1.bf16.msra.mxu0 0
        %1100 = vmatprep.subr.bf16.mxu0 0
        %1101 = vmatpush1.bf16.msra.mxu0 0
        %1102 = vmatprep.subr.bf16.mxu0 0
        %1103 = vmatpush1.bf16.msra.mxu0 0
        %1104 = vmatprep.subr.bf16.mxu0 0
        %1105 = vmatpush1.bf16.msra.mxu0 0
        %1106 = vmatprep.subr.bf16.mxu0 0
        %1107 = vmatpush1.bf16.msra.mxu0 0
        %1108 = vmatprep.subr.bf16.mxu0 0
        %1109 = vmatpush1.bf16.msra.mxu0 0
        %1110 = vmatprep.subr.bf16.mxu0 0
        %1111 = vmatpush1.bf16.msra.mxu0 0
        %1112 = vmatprep.subr.bf16.mxu0 0
        %1113 = vmatpush1.bf16.msra.mxu0 0
        %1114 = vmatprep.subr.bf16.mxu0 0
        %1115 = vmatpush1.bf16.msra.mxu0 0
        %1116 = vmatprep.subr.bf16.mxu0 0
        %1117 = vmatpush1.bf16.msra.mxu0 0
        %1118 = vmatprep.subr.bf16.mxu0 0
        %1119 = vmatpush1.bf16.msra.mxu0 0
        %1120 = vmatprep.subr.bf16.mxu0 0
        %1121 = vmatpush1.bf16.msra.mxu0 0
        %1122 = vmatprep.subr.bf16.mxu0 0
        %1123 = vmatpush1.bf16.msra.mxu0 0
        %1124 = vmatprep.subr.bf16.mxu0 0
        %1125 = vmatpush1.bf16.msra.mxu0 0
        %1126 = vmatprep.mubr.bf16.mxu0 0
        %1127 = vmatmul.mubr.bf16.gmra.mrb[0].mxu0 %v477
        %v1128 = vpop.f32.mrb[0].mxu0
        %v1129 = vadd.f32 0.0, %v1128
        %v1130 = vpop.f32.mrb[0].mxu0
        %v1131 = vadd.f32 0.0, %v1130
        %v1132 = vpop.f32.mrb[0].mxu0
        %v1133 = vpop.f32.mrb[0].mxu0
        %1134 = vdwg.mxu0
        %v1135 = vld [vmem:[#allocation5] sm:$0xff]
        %1137 = vset.pattern.permute.xlu0 0
        %1138 = vperm.xlu0 %1137, %v1135
        %v1139 = vpop.permute.xlu0 %1138
        %v1141 = vmul.f32 %v514, %v1139
        %v1142 = vmul.f32 %v516, %v1139
        %v1143 = vmul.f32 %v555, %v1139
        %v1144 = vmul.f32 %v557, %v1139
        %v1145 = vmul.f32 %v596, %v1139
        %v1146 = vmul.f32 %v598, %v1139
        %v1147 = vmul.f32 %v637, %v1139
        %v1148 = vmul.f32 %v639, %v1139
        %v1149 = vmul.f32 %v678, %v1139
        %v1150 = vmul.f32 %v680, %v1139
        %v1151 = vmul.f32 %v719, %v1139
        %v1152 = vmul.f32 %v721, %v1139
        %v1153 = vmul.f32 %v760, %v1139
        %v1154 = vmul.f32 %v762, %v1139
        %v1155 = vmul.f32 %v801, %v1139
        %v1156 = vmul.f32 %v803, %v1139
        %v1157 = vmul.f32 %v842, %v1139
        %v1158 = vmul.f32 %v844, %v1139
        %v1159 = vmul.f32 %v883, %v1139
        %v1160 = vmul.f32 %v885, %v1139
        %v1161 = vmul.f32 %v924, %v1139
        %v1162 = vmul.f32 %v926, %v1139
        %v1163 = vmul.f32 %v965, %v1139
        %v1164 = vmul.f32 %v967, %v1139
        %v1165 = vmul.f32 %v1006, %v1139
        %v1166 = vmul.f32 %v1008, %v1139
        %v1167 = vmul.f32 %v1047, %v1139
        %v1168 = vmul.f32 %v1049, %v1139
        %v1169 = vmul.f32 %v1088, %v1139
        %v1170 = vmul.f32 %v1090, %v1139
        %v1171 = vmul.f32 %v1129, %v1139
        %v1172 = vmul.f32 %v1131, %v1139
        %1173 = vset.pattern.permute.xlu0 1
        %1174 = vperm.xlu0 %1173, %v1135
        %v1175 = vpop.permute.xlu0 %1174
        %v1177 = vadd.f32 %v1141, %v1175
        %v1178 = vadd.f32 %v1142, %v1175
        %v1179 = vadd.f32 %v1143, %v1175
        %v1180 = vadd.f32 %v1144, %v1175
        %v1181 = vadd.f32 %v1145, %v1175
        %v1182 = vadd.f32 %v1146, %v1175
        %v1183 = vadd.f32 %v1147, %v1175
        %v1184 = vadd.f32 %v1148, %v1175
        %v1185 = vadd.f32 %v1149, %v1175
        %v1186 = vadd.f32 %v1150, %v1175
        %v1187 = vadd.f32 %v1151, %v1175
        %v1188 = vadd.f32 %v1152, %v1175
        %v1189 = vadd.f32 %v1153, %v1175
        %v1190 = vadd.f32 %v1154, %v1175
        %v1191 = vadd.f32 %v1155, %v1175
        %v1192 = vadd.f32 %v1156, %v1175
        %v1193 = vadd.f32 %v1157, %v1175
        %v1194 = vadd.f32 %v1158, %v1175
        %v1195 = vadd.f32 %v1159, %v1175
        %v1196 = vadd.f32 %v1160, %v1175
        %v1197 = vadd.f32 %v1161, %v1175
        %v1198 = vadd.f32 %v1162, %v1175
        %v1199 = vadd.f32 %v1163, %v1175
        %v1200 = vadd.f32 %v1164, %v1175
        %v1201 = vadd.f32 %v1165, %v1175
        %v1202 = vadd.f32 %v1166, %v1175
        %v1203 = vadd.f32 %v1167, %v1175
        %v1204 = vadd.f32 %v1168, %v1175
        %v1205 = vadd.f32 %v1169, %v1175
        %v1206 = vadd.f32 %v1170, %v1175
        %v1207 = vadd.f32 %v1171, %v1175
        %v1208 = vadd.f32 %v1172, %v1175
        %vm1209 = vcmp.ge.f32.partialorder %v1177, 0.0
        %vm1210 = vcmp.ge.f32.partialorder %v1178, 0.0
        %vm1211 = vcmp.ge.f32.partialorder %v1179, 0.0
        %vm1212 = vcmp.ge.f32.partialorder %v1180, 0.0
        %vm1213 = vcmp.ge.f32.partialorder %v1181, 0.0
        %vm1214 = vcmp.ge.f32.partialorder %v1182, 0.0
        %vm1215 = vcmp.ge.f32.partialorder %v1183, 0.0
        %vm1216 = vcmp.ge.f32.partialorder %v1184, 0.0
        %vm1217 = vcmp.ge.f32.partialorder %v1185, 0.0
        %vm1218 = vcmp.ge.f32.partialorder %v1186, 0.0
        %vm1219 = vcmp.ge.f32.partialorder %v1187, 0.0
        %vm1220 = vcmp.ge.f32.partialorder %v1188, 0.0
        %vm1221 = vcmp.ge.f32.partialorder %v1189, 0.0
        %vm1222 = vcmp.ge.f32.partialorder %v1190, 0.0
        %vm1223 = vcmp.ge.f32.partialorder %v1191, 0.0
        %vm1224 = vcmp.ge.f32.partialorder %v1192, 0.0
        %vm1225 = vcmp.ge.f32.partialorder %v1193, 0.0
        %vm1226 = vcmp.ge.f32.partialorder %v1194, 0.0
        %vm1227 = vcmp.ge.f32.partialorder %v1195, 0.0
        %vm1228 = vcmp.ge.f32.partialorder %v1196, 0.0
        %vm1229 = vcmp.ge.f32.partialorder %v1197, 0.0
        %vm1230 = vcmp.ge.f32.partialorder %v1198, 0.0
        %vm1231 = vcmp.ge.f32.partialorder %v1199, 0.0
        %vm1232 = vcmp.ge.f32.partialorder %v1200, 0.0
        %vm1233 = vcmp.ge.f32.partialorder %v1201, 0.0
        %vm1234 = vcmp.ge.f32.partialorder %v1202, 0.0
        %vm1235 = vcmp.ge.f32.partialorder %v1203, 0.0
        %vm1236 = vcmp.ge.f32.partialorder %v1204, 0.0
        %vm1237 = vcmp.ge.f32.partialorder %v1205, 0.0
        %vm1238 = vcmp.ge.f32.partialorder %v1206, 0.0
        %vm1239 = vcmp.ge.f32.partialorder %v1207, 0.0
        %vm1240 = vcmp.ge.f32.partialorder %v1208, 0.0
        %v1241 = vmul.f32 %v1177, 0.2
        %v1242 = vmul.f32 %v1178, 0.2
        %v1243 = vmul.f32 %v1179, 0.2
        %v1244 = vmul.f32 %v1180, 0.2
        %v1245 = vmul.f32 %v1181, 0.2
        %v1246 = vmul.f32 %v1182, 0.2
        %v1247 = vmul.f32 %v1183, 0.2
        %v1248 = vmul.f32 %v1184, 0.2
        %v1249 = vmul.f32 %v1185, 0.2
        %v1250 = vmul.f32 %v1186, 0.2
        %v1251 = vmul.f32 %v1187, 0.2
        %v1252 = vmul.f32 %v1188, 0.2
        %v1253 = vmul.f32 %v1189, 0.2
        %v1254 = vmul.f32 %v1190, 0.2
        %v1255 = vmul.f32 %v1191, 0.2
        %v1256 = vmul.f32 %v1192, 0.2
        %v1257 = vmul.f32 %v1193, 0.2
        %v1258 = vmul.f32 %v1194, 0.2
        %v1259 = vmul.f32 %v1195, 0.2
        %v1260 = vmul.f32 %v1196, 0.2
        %v1261 = vmul.f32 %v1197, 0.2
        %v1262 = vmul.f32 %v1198, 0.2
        %v1263 = vmul.f32 %v1199, 0.2
        %v1264 = vmul.f32 %v1200, 0.2
        %v1265 = vmul.f32 %v1201, 0.2
        %v1266 = vmul.f32 %v1202, 0.2
        %v1267 = vmul.f32 %v1203, 0.2
        %v1268 = vmul.f32 %v1204, 0.2
        %v1269 = vmul.f32 %v1205, 0.2
        %v1270 = vmul.f32 %v1206, 0.2
        %v1271 = vmul.f32 %v1207, 0.2
        %v1272 = vmul.f32 %v1208, 0.2
        %v1273 = vsel %vm1209, %v1177, %v1241
        %v1274 = vsel %vm1210, %v1178, %v1242
        %v1275 = vsel %vm1211, %v1179, %v1243
        %v1276 = vsel %vm1212, %v1180, %v1244
        %v1277 = vsel %vm1213, %v1181, %v1245
        %v1278 = vsel %vm1214, %v1182, %v1246
        %v1279 = vsel %vm1215, %v1183, %v1247
        %v1280 = vsel %vm1216, %v1184, %v1248
        %v1281 = vsel %vm1217, %v1185, %v1249
        %v1282 = vsel %vm1218, %v1186, %v1250
        %v1283 = vsel %vm1219, %v1187, %v1251
        %v1284 = vsel %vm1220, %v1188, %v1252
        %v1285 = vsel %vm1221, %v1189, %v1253
        %v1286 = vsel %vm1222, %v1190, %v1254
        %v1287 = vsel %vm1223, %v1191, %v1255
        %v1288 = vsel %vm1224, %v1192, %v1256
        %v1289 = vsel %vm1225, %v1193, %v1257
        %v1290 = vsel %vm1226, %v1194, %v1258
        %v1291 = vsel %vm1227, %v1195, %v1259
        %v1292 = vsel %vm1228, %v1196, %v1260
        %v1293 = vsel %vm1229, %v1197, %v1261
        %v1294 = vsel %vm1230, %v1198, %v1262
        %v1295 = vsel %vm1231, %v1199, %v1263
        %v1296 = vsel %vm1232, %v1200, %v1264
        %v1297 = vsel %vm1233, %v1201, %v1265
        %v1298 = vsel %vm1234, %v1202, %v1266
        %v1299 = vsel %vm1235, %v1203, %v1267
        %v1300 = vsel %vm1236, %v1204, %v1268
        %v1301 = vsel %vm1237, %v1205, %v1269
        %v1302 = vsel %vm1238, %v1206, %v1270
        %v1303 = vsel %vm1239, %v1207, %v1271
        %v1304 = vsel %vm1240, %v1208, %v1272
        %v1305 = vpack.c.bf16 %v1273, %v1273
        %v1306 = vpack.c.bf16 %v1274, %v1274
        %v1307 = vpack.c.bf16 %v1275, %v1275
        %v1308 = vpack.c.bf16 %v1276, %v1276
        %v1309 = vpack.c.bf16 %v1277, %v1277
        %v1310 = vpack.c.bf16 %v1278, %v1278
        %v1311 = vpack.c.bf16 %v1279, %v1279
        %v1312 = vpack.c.bf16 %v1280, %v1280
        %v1313 = vpack.c.bf16 %v1281, %v1281
        %v1314 = vpack.c.bf16 %v1282, %v1282
        %v1315 = vpack.c.bf16 %v1283, %v1283
        %v1316 = vpack.c.bf16 %v1284, %v1284
        %v1317 = vpack.c.bf16 %v1285, %v1285
        %v1318 = vpack.c.bf16 %v1286, %v1286
        %v1319 = vpack.c.bf16 %v1287, %v1287
        %v1320 = vpack.c.bf16 %v1288, %v1288
        %v1321 = vpack.c.bf16 %v1289, %v1289
        %v1322 = vpack.c.bf16 %v1290, %v1290
        %v1323 = vpack.c.bf16 %v1291, %v1291
        %v1324 = vpack.c.bf16 %v1292, %v1292
        %v1325 = vpack.c.bf16 %v1293, %v1293
        %v1326 = vpack.c.bf16 %v1294, %v1294
        %v1327 = vpack.c.bf16 %v1295, %v1295
        %v1328 = vpack.c.bf16 %v1296, %v1296
        %v1329 = vpack.c.bf16 %v1297, %v1297
        %v1330 = vpack.c.bf16 %v1298, %v1298
        %v1331 = vpack.c.bf16 %v1299, %v1299
        %v1332 = vpack.c.bf16 %v1300, %v1300
        %v1333 = vpack.c.bf16 %v1301, %v1301
        %v1334 = vpack.c.bf16 %v1302, %v1302
        %v1335 = vpack.c.bf16 %v1303, %v1303
        %v1336 = vpack.c.bf16 %v1304, %v1304
        %v1369 = vunpack.c.l.b16 %v1305
        %v1370 = vunpack.c.l.b16 %v1306
        %v1371 = vunpack.c.l.b16 %v1307
        %v1372 = vunpack.c.l.b16 %v1308
        %v1373 = vunpack.c.l.b16 %v1309
        %v1374 = vunpack.c.l.b16 %v1310
        %v1375 = vunpack.c.l.b16 %v1311
        %v1376 = vunpack.c.l.b16 %v1312
        %v1377 = vunpack.c.l.b16 %v1313
        %v1378 = vunpack.c.l.b16 %v1314
        %v1379 = vunpack.c.l.b16 %v1315
        %v1380 = vunpack.c.l.b16 %v1316
        %v1381 = vunpack.c.l.b16 %v1317
        %v1382 = vunpack.c.l.b16 %v1318
        %v1383 = vunpack.c.l.b16 %v1319
        %v1384 = vunpack.c.l.b16 %v1320
        %v1385 = vunpack.c.l.b16 %v1321
        %v1386 = vunpack.c.l.b16 %v1322
        %v1387 = vunpack.c.l.b16 %v1323
        %v1388 = vunpack.c.l.b16 %v1324
        %v1389 = vunpack.c.l.b16 %v1325
        %v1390 = vunpack.c.l.b16 %v1326
        %v1391 = vunpack.c.l.b16 %v1327
        %v1392 = vunpack.c.l.b16 %v1328
        %v1393 = vunpack.c.l.b16 %v1329
        %v1394 = vunpack.c.l.b16 %v1330
        %v1395 = vunpack.c.l.b16 %v1331
        %v1396 = vunpack.c.l.b16 %v1332
        %v1397 = vunpack.c.l.b16 %v1333
        %v1398 = vunpack.c.l.b16 %v1334
        %v1399 = vunpack.c.l.b16 %v1335
        %v1400 = vunpack.c.l.b16 %v1336
        %v1401 = vpack.c.b16 %v1370, %v1369
        %v1402 = vpack.c.b16 %v1372, %v1371
        %v1403 = vpack.c.b16 %v1374, %v1373
        %v1404 = vpack.c.b16 %v1376, %v1375
        %v1405 = vpack.c.b16 %v1378, %v1377
        %v1406 = vpack.c.b16 %v1380, %v1379
        %v1407 = vpack.c.b16 %v1382, %v1381
        %v1408 = vpack.c.b16 %v1384, %v1383
        %v1409 = vpack.c.b16 %v1386, %v1385
        %v1410 = vpack.c.b16 %v1388, %v1387
        %v1411 = vpack.c.b16 %v1390, %v1389
        %v1412 = vpack.c.b16 %v1392, %v1391
        %v1413 = vpack.c.b16 %v1394, %v1393
        %v1414 = vpack.c.b16 %v1396, %v1395
        %v1415 = vpack.c.b16 %v1398, %v1397
        %v1416 = vpack.c.b16 %v1400, %v1399
        %1433 = vst [vmem:[%s279] sm:$0xff] %v1401
        %1434 = vst [vmem:[%s279 + $0x8] sm:$0xff] %v1402
        %1435 = vst [vmem:[%s279 + $0x10] sm:$0xff] %v1403
        %1436 = vst [vmem:[%s279 + $0x18] sm:$0xff] %v1404
        %1437 = vst [vmem:[%s279 + $0x20] sm:$0xff] %v1405
        %1438 = vst [vmem:[%s279 + $0x28] sm:$0xff] %v1406
        %1439 = vst [vmem:[%s279 + $0x30] sm:$0xff] %v1407
        %1440 = vst [vmem:[%s279 + $0x38] sm:$0xff] %v1408
        %1441 = vst [vmem:[%s279 + $0x40] sm:$0xff] %v1409
        %1442 = vst [vmem:[%s279 + $0x48] sm:$0xff] %v1410
        %1443 = vst [vmem:[%s279 + $0x50] sm:$0xff] %v1411
        %1444 = vst [vmem:[%s279 + $0x58] sm:$0xff] %v1412
        %1445 = vst [vmem:[%s279 + $0x60] sm:$0xff] %v1413
        %1446 = vst [vmem:[%s279 + $0x68] sm:$0xff] %v1414
        %1447 = vst [vmem:[%s279 + $0x70] sm:$0xff] %v1415
        %1448 = vst [vmem:[%s279 + $0x78] sm:$0xff] %v1416
        %s1449 = smul.u32 32, %s16
        %p1450 = scmp.lt.s32.totalorder %s1449, 63
        %s1451 = scalar_select %p1450, %s1449, 63
        %s1452 = smul.addr %s1451, 4
        %s1453 = scalar_lea.vmem %s3, %s1452
        // Predicated region
        $region64: #{_lambda_.6} parent=50 // pred_check
          %p1454 = pneg %p102
        $region65: #{_lambda_.6} parent=50 // pred_check_branch
          %1456 = sbr.rel (%p1454) target = $region67
        $region66: #{_lambda_.6} parent=50 // pred_region
          %s1457 = smul.u32 32, %s16
        $region67: #{_lambda_.6} parent=50 // pred_fallthru
          _
      $region51: #{_lambda_.6} parent=5 // pred_fallthru
        _
      %p1458 = scmp.le.s32.totalorder 2, %s11
      // Predicated region
      $region68: #{_lambda_.6} parent=5 // pred_check
        %p1459 = pneg %p1458
      $region69: #{_lambda_.6} parent=5 // pred_check_branch
        %1461 = sbr.rel (%p1459) target = $region71
      $region70: #{_lambda_.6} parent=5 // pred_region
        %s1462 = ssub.s32 %s11, 2
        // Predicated region
        $region72: #{_lambda_.6} parent=70 // pred_check
          %p1463 = pneg %p108
        $region73: #{_lambda_.6} parent=70 // pred_check_branch
          %1465 = sbr.rel (%p1463) target = $region75
        $region74: #{_lambda_.6} parent=70 // pred_region
          %s1466 = smul.u32 32, %s17
          %p1467 = scmp.lt.s32.totalorder %s1466, 63
          %s1468 = scalar_select %p1467, %s1466, 63
          %s1469 = smul.addr %s1468, 4
          %s1470 = scalar_lea.vmem %s3, %s1469
        $region75: #{_lambda_.6} parent=70 // pred_fallthru
          _
      $region71: #{_lambda_.6} parent=5 // pred_fallthru
        _
    $region6: #{_lambda_.6} parent=1 // loop_footer
      %s15 = sadd.s32 1, %s11
    $region7: #{_lambda_.6} parent=1 // loop_footer_branch
      %10 = sbr.rel target = $region3
    $region8: #{_lambda_.6} parent=1 // loop_exit
      _
    %1471 = vsyncpa [#allocation3], 1
    %s1472 = scalar_lea.sflag [#allocation3], 1
    %1473 = vsyncpa %s1472, 1
    %1474 = vsyncpa [#allocation6], 1

// kernel: _lambda_.7
$region0: #{_lambda_.7}
  #allocation0 [shape = 'u32[]', space=smem, size = 0x4, offset = 0x4, fixed_abs, tag = 'smem constant byte address 0x4 - core index']
  #allocation1 [shape = 'u32[144,128]{1,0:T(1,128)}', space=vmem, size = 0x12000, scoped, tag = 'internal scratch']
  %s0 = inlined_call_operand.vmem [shape: bf16[16,288], index: 0, kind: input, shape index: {}]
  %s1 = inlined_call_operand.vmem [shape: bf16[288,2048], index: 1, kind: input, shape index: {}]
  %s2 = inlined_call_operand.vmem [shape: f32[16,2], index: 2, kind: input, shape index: {}]
  %s3 = inlined_call_operand.vmem [shape: bf16[16,2048], index: 3, kind: output, shape index: {}]
  %s4 = sld [smem:[#allocation0]]
  $region87: #{_lambda_.7} parent=0
    _
  %s6 = ssub.s32 1, %s4
  %s7 = scalar_select 0, %s6, %s4
  $region1: #{_lambda_.7} parent=0
    #allocation2 [shape = 'u8[1179648]{0}', space=vmem, size = 0x120000, scoped, tag = 'input window, operand 1']
    #allocation3 [shape = 'u8[65536]{0}', space=vmem, size = 0x10000, scoped, tag = 'output window, operand 0']
    loop: start=0, step=1, limit=4
    $region2: #{_lambda_.7} parent=1 // loop_pre_header
      _
    $region3: #{_lambda_.7} parent=1 // loop_header
      %s9 = sphi 0, %s13
      %p10 = scmp.ge.s32.totalorder %s9, 4
      %s17 = sphi 0, %s17
      %s19 = sphi 0, %s17
      %s20 = sphi 0, %s19
      %s34 = sphi 0, %s20
      %s40 = sphi 0, %s42
      %s43 = sphi 0, %s40
      %s44 = sphi 0, %s43
      %s60 = sphi 0, %s44
      %s64 = sphi 0, %s64
      %s66 = sphi 0, %s64
      %s67 = sphi 0, %s66
      %s81 = sphi 0, %s67
      %s87 = sphi 0, %s89
      %s90 = sphi 0, %s87
      %s91 = sphi 0, %s90
      %s107 = sphi 0, %s91
    $region4: #{_lambda_.7} parent=1 // loop_header_branch
      %12 = sbr.rel (%p10) target = $region8
    $region5: #{_lambda_.7} parent=1 // loop_body
      %s14 = ssub.s32 %s9, 1
      %s15 = ssub.s32 %s9, 2
      %s16 = sadd.s32 %s9, 1
      %s18 = sadd.s32 %s17, 1
      %p21 = scmp.eq.s32.totalorder %s9, 1
      %p22 = scmp.ne.s32.totalorder %s17, %s19
      %p23 = scmp.eq.s32.totalorder %s9, 0
      %p24 = por %p22, %p23
      %p25 = scmp.ne.s32.totalorder %s17, %s19
      %p26 = scmp.eq.s32.totalorder %s14, 1
      %p27 = por %p25, %p26
      %p28 = scmp.ne.s32.totalorder %s19, %s20
      %p29 = scmp.eq.s32.totalorder %s14, 0
      %p30 = por %p28, %p29
      %p31 = scmp.ne.s32.totalorder %s19, %s20
      %p32 = scmp.eq.s32.totalorder %s15, 1
      %p33 = por %p31, %p32
      %p35 = scmp.ne.s32.totalorder %s20, %s34
      %p36 = scmp.eq.s32.totalorder %s15, 0
      %p37 = por %p35, %p36
      %s38 = ssub.s32 %s9, %s16
      %p39 = scmp.eq.s32.totalorder %s38, 0
      %s41 = sadd.s32 %s40, 1
      %s42 = scalar_select %p39, %s40, %s41
      %p45 = pneg %p39
      %p46 = scmp.eq.s32.totalorder %s9, 1
      %p47 = por %p45, %p46
      %p48 = scmp.ne.s32.totalorder %s40, %s43
      %p49 = scmp.eq.s32.totalorder %s9, 0
      %p50 = por %p48, %p49
      %p51 = scmp.ne.s32.totalorder %s40, %s43
      %p52 = scmp.eq.s32.totalorder %s14, 1
      %p53 = por %p51, %p52
      %p54 = scmp.ne.s32.totalorder %s43, %s44
      %p55 = scmp.eq.s32.totalorder %s14, 0
      %p56 = por %p54, %p55
      %p57 = scmp.ne.s32.totalorder %s43, %s44
      %p58 = scmp.eq.s32.totalorder %s15, 1
      %p59 = por %p57, %p58
      %p61 = scmp.ne.s32.totalorder %s44, %s60
      %p62 = scmp.eq.s32.totalorder %s15, 0
      %p63 = por %p61, %p62
      %s65 = sadd.s32 %s64, 1
      %p68 = scmp.eq.s32.totalorder %s9, 1
      %p69 = scmp.ne.s32.totalorder %s64, %s66
      %p70 = scmp.eq.s32.totalorder %s9, 0
      %p71 = por %p69, %p70
      %p72 = scmp.ne.s32.totalorder %s64, %s66
      %p73 = scmp.eq.s32.totalorder %s14, 1
      %p74 = por %p72, %p73
      %p75 = scmp.ne.s32.totalorder %s66, %s67
      %p76 = scmp.eq.s32.totalorder %s14, 0
      %p77 = por %p75, %p76
      %p78 = scmp.ne.s32.totalorder %s66, %s67
      %p79 = scmp.eq.s32.totalorder %s15, 1
      %p80 = por %p78, %p79
      %p82 = scmp.ne.s32.totalorder %s67, %s81
      %p83 = scmp.eq.s32.totalorder %s15, 0
      %p84 = por %p82, %p83
      %s85 = ssub.s32 %s9, %s16
      %p86 = scmp.eq.s32.totalorder %s85, 0
      %s88 = sadd.s32 %s87, 1
      %s89 = scalar_select %p86, %s87, %s88
      %p92 = pneg %p86
      %p93 = scmp.eq.s32.totalorder %s9, 1
      %p94 = por %p92, %p93
      %p95 = scmp.ne.s32.totalorder %s87, %s90
      %p96 = scmp.eq.s32.totalorder %s9, 0
      %p97 = por %p95, %p96
      %p98 = scmp.ne.s32.totalorder %s87, %s90
      %p99 = scmp.eq.s32.totalorder %s14, 1
      %p100 = por %p98, %p99
      %p101 = scmp.ne.s32.totalorder %s90, %s91
      %p102 = scmp.eq.s32.totalorder %s14, 0
      %p103 = por %p101, %p102
      %p104 = scmp.ne.s32.totalorder %s90, %s91
      %p105 = scmp.eq.s32.totalorder %s15, 1
      %p106 = por %p104, %p105
      %p108 = scmp.ne.s32.totalorder %s91, %s107
      %p109 = scmp.eq.s32.totalorder %s15, 0
      %p110 = por %p108, %p109
      %p111 = scmp.le.s32.totalorder 1, %s9
      %p112 = scmp.lt.s32.totalorder %s9, 3
      %p113 = pnand %p111, %p112
      %p114 = pneg %p113
      // Predicated region
      $region9: #{_lambda_.7} parent=5 // pred_check
        _
      $region10: #{_lambda_.7} parent=5 // pred_check_branch
        %116 = sbr.rel (%p113) target = $region12
      $region11: #{_lambda_.7} parent=5 // pred_region
        %s117 = ssub.s32 %s9, 1
        // Predicated region
        $region13: #{_lambda_.7} parent=11 // pred_check
          %p118 = pneg %p30
        $region14: #{_lambda_.7} parent=11 // pred_check_branch
          %120 = sbr.rel (%p118) target = $region16
        $region15: #{_lambda_.7} parent=11 // pred_region
          _
        $region16: #{_lambda_.7} parent=11 // pred_fallthru
          _
        // Predicated region
        $region17: #{_lambda_.7} parent=11 // pred_check
          %p121 = pneg %p77
        $region18: #{_lambda_.7} parent=11 // pred_check_branch
          %123 = sbr.rel (%p121) target = $region20
        $region19: #{_lambda_.7} parent=11 // pred_region
          _
        $region20: #{_lambda_.7} parent=11 // pred_fallthru
          _
      $region12: #{_lambda_.7} parent=5 // pred_fallthru
        _
      %p124 = scmp.lt.s32.totalorder %s9, 2
      // Predicated region
      $region21: #{_lambda_.7} parent=5 // pred_check
        %p125 = pneg %p124
      $region22: #{_lambda_.7} parent=5 // pred_check_branch
        %127 = sbr.rel (%p125) target = $region24
      $region23: #{_lambda_.7} parent=5 // pred_region
        // Predicated region
        $region25: #{_lambda_.7} parent=23 // pred_check
          %p128 = pneg %p50
        $region26: #{_lambda_.7} parent=23 // pred_check_branch
          %130 = sbr.rel (%p128) target = $region28
        $region27: #{_lambda_.7} parent=23 // pred_region
          %s131 = sand.u32 %s40, 1
          %s132 = sand.u32 %s40, 1
          %s133 = smul.addr %s132, 1152
          %s134 = scalar_lea.vmem [#allocation2], %s133
          %s135 = smul.u32 8, %s9
          %s136 = smul.addr %s135, 4
          %s137 = scalar_lea.vmem %s1, %s136
          // Predicated region
          $region29: #{_lambda_.7} parent=27 // pred_check
            _
          $region30: #{_lambda_.7} parent=27 // pred_check_branch
            %139 = sbr.rel (0) target = $region32
          $region31: #{_lambda_.7} parent=27 // pred_region
            // Predicated region
            $region33: #{_lambda_.7} parent=31 // pred_check
              _
            $region34: #{_lambda_.7} parent=31 // pred_check_branch
              %141 = sbr.rel (0) target = $region36
            $region35: #{_lambda_.7} parent=31 // pred_region
              loop: start=0, step=1, limit=1
              $region37: #{_lambda_.7} parent=35 // loop_pre_header
                _
              $region38: #{_lambda_.7} parent=35 // loop_header
                %s143 = sphi 0, %s147
                %p144 = scmp.ge.s32.totalorder %s143, 1
                %s148 = sphi %s137, %s137
                %s149 = sphi %s134, %s134
              $region39: #{_lambda_.7} parent=35 // loop_header_branch
                %146 = sbr.rel (%p144) target = $region43
              $region40: #{_lambda_.7} parent=35 // loop_body
                %v150 = vld [vmem:[%s148] sm:$0xff]
                %151 = vst [vmem:[%s149] sm:$0xff] %v150
                %v152 = vld [vmem:[%s148 + $0x8] sm:$0xff]
                %153 = vst [vmem:[%s149 + $0x8] sm:$0xff] %v152
                %v154 = vld [vmem:[%s148 + $0x10] sm:$0xff]
                %155 = vst [vmem:[%s149 + $0x10] sm:$0xff] %v154
                %v156 = vld [vmem:[%s148 + $0x18] sm:$0xff]
                %157 = vst [vmem:[%s149 + $0x18] sm:$0xff] %v156
                %v158 = vld [vmem:[%s148 + $0x40] sm:$0xff]
                %159 = vst [vmem:[%s149 + $0x20] sm:$0xff] %v158
                %v160 = vld [vmem:[%s148 + $0x48] sm:$0xff]
                %161 = vst [vmem:[%s149 + $0x28] sm:$0xff] %v160
                %v162 = vld [vmem:[%s148 + $0x50] sm:$0xff]
                %163 = vst [vmem:[%s149 + $0x30] sm:$0xff] %v162
                %v164 = vld [vmem:[%s148 + $0x58] sm:$0xff]
                %165 = vst [vmem:[%s149 + $0x38] sm:$0xff] %v164
                %v166 = vld [vmem:[%s148 + $0x80] sm:$0xff]
                %167 = vst [vmem:[%s149 + $0x40] sm:$0xff] %v166
                %v168 = vld [vmem:[%s148 + $0x88] sm:$0xff]
                %169 = vst [vmem:[%s149 + $0x48] sm:$0xff] %v168
                %v170 = vld [vmem:[%s148 + $0x90] sm:$0xff]
                %171 = vst [vmem:[%s149 + $0x50] sm:$0xff] %v170
                %v172 = vld [vmem:[%s148 + $0x98] sm:$0xff]
                %173 = vst [vmem:[%s149 + $0x58] sm:$0xff] %v172
                %v174 = vld [vmem:[%s148 + $0xc0] sm:$0xff]
                %175 = vst [vmem:[%s149 + $0x60] sm:$0xff] %v174
                %v176 = vld [vmem:[%s148 + $0xc8] sm:$0xff]
                %177 = vst [vmem:[%s149 + $0x68] sm:$0xff] %v176
                %v178 = vld [vmem:[%s148 + $0xd0] sm:$0xff]
                %179 = vst [vmem:[%s149 + $0x70] sm:$0xff] %v178
                %v180 = vld [vmem:[%s148 + $0xd8] sm:$0xff]
                %181 = vst [vmem:[%s149 + $0x78] sm:$0xff] %v180
                %v182 = vld [vmem:[%s148 + $0x100] sm:$0xff]
                %183 = vst [vmem:[%s149 + $0x80] sm:$0xff] %v182
                %v184 = vld [vmem:[%s148 + $0x108] sm:$0xff]
                %185 = vst [vmem:[%s149 + $0x88] sm:$0xff] %v184
                %v186 = vld [vmem:[%s148 + $0x110] sm:$0xff]
                %187 = vst [vmem:[%s149 + $0x90] sm:$0xff] %v186
                %v188 = vld [vmem:[%s148 + $0x118] sm:$0xff]
                %189 = vst [vmem:[%s149 + $0x98] sm:$0xff] %v188
                %v190 = vld [vmem:[%s148 + $0x140] sm:$0xff]
                %191 = vst [vmem:[%s149 + $0xa0] sm:$0xff] %v190
                %v192 = vld [vmem:[%s148 + $0x148] sm:$0xff]
                %193 = vst [vmem:[%s149 + $0xa8] sm:$0xff] %v192
                %v194 = vld [vmem:[%s148 + $0x150] sm:$0xff]
                %195 = vst [vmem:[%s149 + $0xb0] sm:$0xff] %v194
                %v196 = vld [vmem:[%s148 + $0x158] sm:$0xff]
                %197 = vst [vmem:[%s149 + $0xb8] sm:$0xff] %v196
                %v198 = vld [vmem:[%s148 + $0x180] sm:$0xff]
                %199 = vst [vmem:[%s149 + $0xc0] sm:$0xff] %v198
                %v200 = vld [vmem:[%s148 + $0x188] sm:$0xff]
                %201 = vst [vmem:[%s149 + $0xc8] sm:$0xff] %v200
                %v202 = vld [vmem:[%s148 + $0x190] sm:$0xff]
                %203 = vst [vmem:[%s149 + $0xd0] sm:$0xff] %v202
                %v204 = vld [vmem:[%s148 + $0x198] sm:$0xff]
                %205 = vst [vmem:[%s149 + $0xd8] sm:$0xff] %v204
                %v206 = vld [vmem:[%s148 + $0x1c0] sm:$0xff]
                %207 = vst [vmem:[%s149 + $0xe0] sm:$0xff] %v206
                %v208 = vld [vmem:[%s148 + $0x1c8] sm:$0xff]
                %209 = vst [vmem:[%s149 + $0xe8] sm:$0xff] %v208
                %v210 = vld [vmem:[%s148 + $0x1d0] sm:$0xff]
                %211 = vst [vmem:[%s149 + $0xf0] sm:$0xff] %v210
                %v212 = vld [vmem:[%s148 + $0x1d8] sm:$0xff]
                %213 = vst [vmem:[%s149 + $0xf8] sm:$0xff] %v212
                %v214 = vld [vmem:[%s148 + $0x200] sm:$0xff]
                %215 = vst [vmem:[%s149 + $0x100] sm:$0xff] %v214
                %v216 = vld [vmem:[%s148 + $0x208] sm:$0xff]
                %217 = vst [vmem:[%s149 + $0x108] sm:$0xff] %v216
                %v218 = vld [vmem:[%s148 + $0x210] sm:$0xff]
                %219 = vst [vmem:[%s149 + $0x110] sm:$0xff] %v218
                %v220 = vld [vmem:[%s148 + $0x218] sm:$0xff]
                %221 = vst [vmem:[%s149 + $0x118] sm:$0xff] %v220
                %v222 = vld [vmem:[%s148 + $0x240] sm:$0xff]
                %223 = vst [vmem:[%s149 + $0x120] sm:$0xff] %v222
                %v224 = vld [vmem:[%s148 + $0x248] sm:$0xff]
                %225 = vst [vmem:[%s149 + $0x128] sm:$0xff] %v224
                %v226 = vld [vmem:[%s148 + $0x250] sm:$0xff]
                %227 = vst [vmem:[%s149 + $0x130] sm:$0xff] %v226
                %v228 = vld [vmem:[%s148 + $0x258] sm:$0xff]
                %229 = vst [vmem:[%s149 + $0x138] sm:$0xff] %v228
                %v230 = vld [vmem:[%s148 + $0x280] sm:$0xff]
                %231 = vst [vmem:[%s149 + $0x140] sm:$0xff] %v230
                %v232 = vld [vmem:[%s148 + $0x288] sm:$0xff]
                %233 = vst [vmem:[%s149 + $0x148] sm:$0xff] %v232
                %v234 = vld [vmem:[%s148 + $0x290] sm:$0xff]
                %235 = vst [vmem:[%s149 + $0x150] sm:$0xff] %v234
                %v236 = vld [vmem:[%s148 + $0x298] sm:$0xff]
                %237 = vst [vmem:[%s149 + $0x158] sm:$0xff] %v236
                %v238 = vld [vmem:[%s148 + $0x2c0] sm:$0xff]
                %239 = vst [vmem:[%s149 + $0x160] sm:$0xff] %v238
                %v240 = vld [vmem:[%s148 + $0x2c8] sm:$0xff]
                %241 = vst [vmem:[%s149 + $0x168] sm:$0xff] %v240
                %v242 = vld [vmem:[%s148 + $0x2d0] sm:$0xff]
                %243 = vst [vmem:[%s149 + $0x170] sm:$0xff] %v242
                %v244 = vld [vmem:[%s148 + $0x2d8] sm:$0xff]
                %245 = vst [vmem:[%s149 + $0x178] sm:$0xff] %v244
                %v246 = vld [vmem:[%s148 + $0x300] sm:$0xff]
                %247 = vst [vmem:[%s149 + $0x180] sm:$0xff] %v246
                %v248 = vld [vmem:[%s148 + $0x308] sm:$0xff]
                %249 = vst [vmem:[%s149 + $0x188] sm:$0xff] %v248
                %v250 = vld [vmem:[%s148 + $0x310] sm:$0xff]
                %251 = vst [vmem:[%s149 + $0x190] sm:$0xff] %v250
                %v252 = vld [vmem:[%s148 + $0x318] sm:$0xff]
                %253 = vst [vmem:[%s149 + $0x198] sm:$0xff] %v252
                %v254 = vld [vmem:[%s148 + $0x340] sm:$0xff]
                %255 = vst [vmem:[%s149 + $0x1a0] sm:$0xff] %v254
                %v256 = vld [vmem:[%s148 + $0x348] sm:$0xff]
                %257 = vst [vmem:[%s149 + $0x1a8] sm:$0xff] %v256
                %v258 = vld [vmem:[%s148 + $0x350] sm:$0xff]
                %259 = vst [vmem:[%s149 + $0x1b0] sm:$0xff] %v258
                %v260 = vld [vmem:[%s148 + $0x358] sm:$0xff]
                %261 = vst [vmem:[%s149 + $0x1b8] sm:$0xff] %v260
                %v262 = vld [vmem:[%s148 + $0x380] sm:$0xff]
                %263 = vst [vmem:[%s149 + $0x1c0] sm:$0xff] %v262
                %v264 = vld [vmem:[%s148 + $0x388] sm:$0xff]
                %265 = vst [vmem:[%s149 + $0x1c8] sm:$0xff] %v264
                %v266 = vld [vmem:[%s148 + $0x390] sm:$0xff]
                %267 = vst [vmem:[%s149 + $0x1d0] sm:$0xff] %v266
                %v268 = vld [vmem:[%s148 + $0x398] sm:$0xff]
                %269 = vst [vmem:[%s149 + $0x1d8] sm:$0xff] %v268
                %v270 = vld [vmem:[%s148 + $0x3c0] sm:$0xff]
                %271 = vst [vmem:[%s149 + $0x1e0] sm:$0xff] %v270
                %v272 = vld [vmem:[%s148 + $0x3c8] sm:$0xff]
                %273 = vst [vmem:[%s149 + $0x1e8] sm:$0xff] %v272
                %v274 = vld [vmem:[%s148 + $0x3d0] sm:$0xff]
                %275 = vst [vmem:[%s149 + $0x1f0] sm:$0xff] %v274
                %v276 = vld [vmem:[%s148 + $0x3d8] sm:$0xff]
                %277 = vst [vmem:[%s149 + $0x1f8] sm:$0xff] %v276
                %v278 = vld [vmem:[%s148 + $0x400] sm:$0xff]
                %279 = vst [vmem:[%s149 + $0x200] sm:$0xff] %v278
                %v280 = vld [vmem:[%s148 + $0x408] sm:$0xff]
                %281 = vst [vmem:[%s149 + $0x208] sm:$0xff] %v280
                %v282 = vld [vmem:[%s148 + $0x410] sm:$0xff]
                %283 = vst [vmem:[%s149 + $0x210] sm:$0xff] %v282
                %v284 = vld [vmem:[%s148 + $0x418] sm:$0xff]
                %285 = vst [vmem:[%s149 + $0x218] sm:$0xff] %v284
                %v286 = vld [vmem:[%s148 + $0x440] sm:$0xff]
                %287 = vst [vmem:[%s149 + $0x220] sm:$0xff] %v286
                %v288 = vld [vmem:[%s148 + $0x448] sm:$0xff]
                %289 = vst [vmem:[%s149 + $0x228] sm:$0xff] %v288
                %v290 = vld [vmem:[%s148 + $0x450] sm:$0xff]
                %291 = vst [vmem:[%s149 + $0x230] sm:$0xff] %v290
                %v292 = vld [vmem:[%s148 + $0x458] sm:$0xff]
                %293 = vst [vmem:[%s149 + $0x238] sm:$0xff] %v292
                %v294 = vld [vmem:[%s148 + $0x480] sm:$0xff]
                %295 = vst [vmem:[%s149 + $0x240] sm:$0xff] %v294
                %v296 = vld [vmem:[%s148 + $0x488] sm:$0xff]
                %297 = vst [vmem:[%s149 + $0x248] sm:$0xff] %v296
                %v298 = vld [vmem:[%s148 + $0x490] sm:$0xff]
                %299 = vst [vmem:[%s149 + $0x250] sm:$0xff] %v298
                %v300 = vld [vmem:[%s148 + $0x498] sm:$0xff]
                %301 = vst [vmem:[%s149 + $0x258] sm:$0xff] %v300
                %v302 = vld [vmem:[%s148 + $0x4c0] sm:$0xff]
                %303 = vst [vmem:[%s149 + $0x260] sm:$0xff] %v302
                %v304 = vld [vmem:[%s148 + $0x4c8] sm:$0xff]
                %305 = vst [vmem:[%s149 + $0x268] sm:$0xff] %v304
                %v306 = vld [vmem:[%s148 + $0x4d0] sm:$0xff]
                %307 = vst [vmem:[%s149 + $0x270] sm:$0xff] %v306
                %v308 = vld [vmem:[%s148 + $0x4d8] sm:$0xff]
                %309 = vst [vmem:[%s149 + $0x278] sm:$0xff] %v308
                %v310 = vld [vmem:[%s148 + $0x500] sm:$0xff]
                %311 = vst [vmem:[%s149 + $0x280] sm:$0xff] %v310
                %v312 = vld [vmem:[%s148 + $0x508] sm:$0xff]
                %313 = vst [vmem:[%s149 + $0x288] sm:$0xff] %v312
                %v314 = vld [vmem:[%s148 + $0x510] sm:$0xff]
                %315 = vst [vmem:[%s149 + $0x290] sm:$0xff] %v314
                %v316 = vld [vmem:[%s148 + $0x518] sm:$0xff]
                %317 = vst [vmem:[%s149 + $0x298] sm:$0xff] %v316
                %v318 = vld [vmem:[%s148 + $0x540] sm:$0xff]
                %319 = vst [vmem:[%s149 + $0x2a0] sm:$0xff] %v318
                %v320 = vld [vmem:[%s148 + $0x548] sm:$0xff]
                %321 = vst [vmem:[%s149 + $0x2a8] sm:$0xff] %v320
                %v322 = vld [vmem:[%s148 + $0x550] sm:$0xff]
                %323 = vst [vmem:[%s149 + $0x2b0] sm:$0xff] %v322
                %v324 = vld [vmem:[%s148 + $0x558] sm:$0xff]
                %325 = vst [vmem:[%s149 + $0x2b8] sm:$0xff] %v324
                %v326 = vld [vmem:[%s148 + $0x580] sm:$0xff]
                %327 = vst [vmem:[%s149 + $0x2c0] sm:$0xff] %v326
                %v328 = vld [vmem:[%s148 + $0x588] sm:$0xff]
                %329 = vst [vmem:[%s149 + $0x2c8] sm:$0xff] %v328
                %v330 = vld [vmem:[%s148 + $0x590] sm:$0xff]
                %331 = vst [vmem:[%s149 + $0x2d0] sm:$0xff] %v330
                %v332 = vld [vmem:[%s148 + $0x598] sm:$0xff]
                %333 = vst [vmem:[%s149 + $0x2d8] sm:$0xff] %v332
                %v334 = vld [vmem:[%s148 + $0x5c0] sm:$0xff]
                %335 = vst [vmem:[%s149 + $0x2e0] sm:$0xff] %v334
                %v336 = vld [vmem:[%s148 + $0x5c8] sm:$0xff]
                %337 = vst [vmem:[%s149 + $0x2e8] sm:$0xff] %v336
                %v338 = vld [vmem:[%s148 + $0x5d0] sm:$0xff]
                %339 = vst [vmem:[%s149 + $0x2f0] sm:$0xff] %v338
                %v340 = vld [vmem:[%s148 + $0x5d8] sm:$0xff]
                %341 = vst [vmem:[%s149 + $0x2f8] sm:$0xff] %v340
                %v342 = vld [vmem:[%s148 + $0x600] sm:$0xff]
                %343 = vst [vmem:[%s149 + $0x300] sm:$0xff] %v342
                %v344 = vld [vmem:[%s148 + $0x608] sm:$0xff]
                %345 = vst [vmem:[%s149 + $0x308] sm:$0xff] %v344
                %v346 = vld [vmem:[%s148 + $0x610] sm:$0xff]
                %347 = vst [vmem:[%s149 + $0x310] sm:$0xff] %v346
                %v348 = vld [vmem:[%s148 + $0x618] sm:$0xff]
                %349 = vst [vmem:[%s149 + $0x318] sm:$0xff] %v348
                %v350 = vld [vmem:[%s148 + $0x640] sm:$0xff]
                %351 = vst [vmem:[%s149 + $0x320] sm:$0xff] %v350
                %v352 = vld [vmem:[%s148 + $0x648] sm:$0xff]
                %353 = vst [vmem:[%s149 + $0x328] sm:$0xff] %v352
                %v354 = vld [vmem:[%s148 + $0x650] sm:$0xff]
                %355 = vst [vmem:[%s149 + $0x330] sm:$0xff] %v354
                %v356 = vld [vmem:[%s148 + $0x658] sm:$0xff]
                %357 = vst [vmem:[%s149 + $0x338] sm:$0xff] %v356
                %v358 = vld [vmem:[%s148 + $0x680] sm:$0xff]
                %359 = vst [vmem:[%s149 + $0x340] sm:$0xff] %v358
                %v360 = vld [vmem:[%s148 + $0x688] sm:$0xff]
                %361 = vst [vmem:[%s149 + $0x348] sm:$0xff] %v360
                %v362 = vld [vmem:[%s148 + $0x690] sm:$0xff]
                %363 = vst [vmem:[%s149 + $0x350] sm:$0xff] %v362
                %v364 = vld [vmem:[%s148 + $0x698] sm:$0xff]
                %365 = vst [vmem:[%s149 + $0x358] sm:$0xff] %v364
                %v366 = vld [vmem:[%s148 + $0x6c0] sm:$0xff]
                %367 = vst [vmem:[%s149 + $0x360] sm:$0xff] %v366
                %v368 = vld [vmem:[%s148 + $0x6c8] sm:$0xff]
                %369 = vst [vmem:[%s149 + $0x368] sm:$0xff] %v368
                %v370 = vld [vmem:[%s148 + $0x6d0] sm:$0xff]
                %371 = vst [vmem:[%s149 + $0x370] sm:$0xff] %v370
                %v372 = vld [vmem:[%s148 + $0x6d8] sm:$0xff]
                %373 = vst [vmem:[%s149 + $0x378] sm:$0xff] %v372
                %v374 = vld [vmem:[%s148 + $0x700] sm:$0xff]
                %375 = vst [vmem:[%s149 + $0x380] sm:$0xff] %v374
                %v376 = vld [vmem:[%s148 + $0x708] sm:$0xff]
                %377 = vst [vmem:[%s149 + $0x388] sm:$0xff] %v376
                %v378 = vld [vmem:[%s148 + $0x710] sm:$0xff]
                %379 = vst [vmem:[%s149 + $0x390] sm:$0xff] %v378
                %v380 = vld [vmem:[%s148 + $0x718] sm:$0xff]
                %381 = vst [vmem:[%s149 + $0x398] sm:$0xff] %v380
                %v382 = vld [vmem:[%s148 + $0x740] sm:$0xff]
                %383 = vst [vmem:[%s149 + $0x3a0] sm:$0xff] %v382
                %v384 = vld [vmem:[%s148 + $0x748] sm:$0xff]
                %385 = vst [vmem:[%s149 + $0x3a8] sm:$0xff] %v384
                %v386 = vld [vmem:[%s148 + $0x750] sm:$0xff]
                %387 = vst [vmem:[%s149 + $0x3b0] sm:$0xff] %v386
                %v388 = vld [vmem:[%s148 + $0x758] sm:$0xff]
                %389 = vst [vmem:[%s149 + $0x3b8] sm:$0xff] %v388
                %v390 = vld [vmem:[%s148 + $0x780] sm:$0xff]
                %391 = vst [vmem:[%s149 + $0x3c0] sm:$0xff] %v390
                %v392 = vld [vmem:[%s148 + $0x788] sm:$0xff]
                %393 = vst [vmem:[%s149 + $0x3c8] sm:$0xff] %v392
                %v394 = vld [vmem:[%s148 + $0x790] sm:$0xff]
                %395 = vst [vmem:[%s149 + $0x3d0] sm:$0xff] %v394
                %v396 = vld [vmem:[%s148 + $0x798] sm:$0xff]
                %397 = vst [vmem:[%s149 + $0x3d8] sm:$0xff] %v396
                %v398 = vld [vmem:[%s148 + $0x7c0] sm:$0xff]
                %399 = vst [vmem:[%s149 + $0x3e0] sm:$0xff] %v398
                %v400 = vld [vmem:[%s148 + $0x7c8] sm:$0xff]
                %401 = vst [vmem:[%s149 + $0x3e8] sm:$0xff] %v400
                %v402 = vld [vmem:[%s148 + $0x7d0] sm:$0xff]
                %403 = vst [vmem:[%s149 + $0x3f0] sm:$0xff] %v402
                %v404 = vld [vmem:[%s148 + $0x7d8] sm:$0xff]
                %405 = vst [vmem:[%s149 + $0x3f8] sm:$0xff] %v404
                %v406 = vld [vmem:[%s148 + $0x800] sm:$0xff]
                %407 = vst [vmem:[%s149 + $0x400] sm:$0xff] %v406
                %v408 = vld [vmem:[%s148 + $0x808] sm:$0xff]
                %409 = vst [vmem:[%s149 + $0x408] sm:$0xff] %v408
                %v410 = vld [vmem:[%s148 + $0x810] sm:$0xff]
                %411 = vst [vmem:[%s149 + $0x410] sm:$0xff] %v410
                %v412 = vld [vmem:[%s148 + $0x818] sm:$0xff]
                %413 = vst [vmem:[%s149 + $0x418] sm:$0xff] %v412
                %v414 = vld [vmem:[%s148 + $0x840] sm:$0xff]
                %415 = vst [vmem:[%s149 + $0x420] sm:$0xff] %v414
                %v416 = vld [vmem:[%s148 + $0x848] sm:$0xff]
                %417 = vst [vmem:[%s149 + $0x428] sm:$0xff] %v416
                %v418 = vld [vmem:[%s148 + $0x850] sm:$0xff]
                %419 = vst [vmem:[%s149 + $0x430] sm:$0xff] %v418
                %v420 = vld [vmem:[%s148 + $0x858] sm:$0xff]
                %421 = vst [vmem:[%s149 + $0x438] sm:$0xff] %v420
                %v422 = vld [vmem:[%s148 + $0x880] sm:$0xff]
                %423 = vst [vmem:[%s149 + $0x440] sm:$0xff] %v422
                %v424 = vld [vmem:[%s148 + $0x888] sm:$0xff]
                %425 = vst [vmem:[%s149 + $0x448] sm:$0xff] %v424
                %v426 = vld [vmem:[%s148 + $0x890] sm:$0xff]
                %427 = vst [vmem:[%s149 + $0x450] sm:$0xff] %v426
                %v428 = vld [vmem:[%s148 + $0x898] sm:$0xff]
                %429 = vst [vmem:[%s149 + $0x458] sm:$0xff] %v428
                %v430 = vld [vmem:[%s148 + $0x8c0] sm:$0xff]
                %431 = vst [vmem:[%s149 + $0x460] sm:$0xff] %v430
                %v432 = vld [vmem:[%s148 + $0x8c8] sm:$0xff]
                %433 = vst [vmem:[%s149 + $0x468] sm:$0xff] %v432
                %v434 = vld [vmem:[%s148 + $0x8d0] sm:$0xff]
                %435 = vst [vmem:[%s149 + $0x470] sm:$0xff] %v434
                %v436 = vld [vmem:[%s148 + $0x8d8] sm:$0xff]
                %437 = vst [vmem:[%s149 + $0x478] sm:$0xff] %v436
              $region41: #{_lambda_.7} parent=35 // loop_footer
                %s147 = sadd.s32 1, %s143
              $region42: #{_lambda_.7} parent=35 // loop_footer_branch
                %142 = sbr.rel target = $region38
              $region43: #{_lambda_.7} parent=35 // loop_exit
                _
            $region36: #{_lambda_.7} parent=31 // pred_fallthru
              _
            // Predicated region
            $region44: #{_lambda_.7} parent=31 // pred_check
              _
            $region45: #{_lambda_.7} parent=31 // pred_check_branch
              %439 = sbr.rel target = $region47
            $region46: #{_lambda_.7} parent=31 // pred_region
              _
            $region47: #{_lambda_.7} parent=31 // pred_fallthru
              _
          $region32: #{_lambda_.7} parent=27 // pred_fallthru
            _
          %440 = vnop
        $region28: #{_lambda_.7} parent=23 // pred_fallthru
          _
      $region24: #{_lambda_.7} parent=5 // pred_fallthru
        _
      %p441 = scmp.le.s32.totalorder 1, %s9
      %p442 = scmp.lt.s32.totalorder %s9, 3
      %p443 = pnand %p441, %p442
      %p444 = pneg %p443
      // Predicated region
      $region48: #{_lambda_.7} parent=5 // pred_check
        _
      $region49: #{_lambda_.7} parent=5 // pred_check_branch
        %446 = sbr.rel (%p443) target = $region51
      $region50: #{_lambda_.7} parent=5 // pred_region
        %s447 = ssub.s32 %s9, 1
        %s448 = sand.u32 %s43, 1
        %s449 = sand.u32 %s43, 1
        %s450 = smul.addr %s449, 1152
        %s451 = scalar_lea.vmem [#allocation2], %s450
        // Predicated region
        $region52: #{_lambda_.7} parent=50 // pred_check
          %p452 = pneg %p56
        $region53: #{_lambda_.7} parent=50 // pred_check_branch
          %454 = sbr.rel (%p452) target = $region55
        $region54: #{_lambda_.7} parent=50 // pred_region
          _
        $region55: #{_lambda_.7} parent=50 // pred_fallthru
          _
        %p455 = pneg %p30
        %p456 = pneg %p27
        %s457 = sand.u32 %s43, 1
        %s458 = sand.u32 %s43, 1
        %s459 = smul.addr %s458, 1152
        %s460 = scalar_lea.vmem [#allocation2], %s459
        %p461 = pneg %p56
        %p462 = pneg %p53
        %p463 = pneg %p77
        %p464 = pneg %p74
        %p465 = pneg %p103
        %p466 = pneg %p100
        %s467 = sand.u32 %s90, 1
        %s468 = sand.u32 %s90, 1
        %s469 = smul.addr %s468, 64
        %s470 = scalar_lea.vmem [#allocation3], %s469
        %s471 = smul.u32 8, %s14
        %s472 = smul.u32 8, %s14
        %v474 = vld [vmem:[%s0] sm:$0xff]
        %v475 = vld [vmem:[%s0 + $0x8] sm:$0xf]
        %v476 = vld [vmem:[%s0 + $0xc] sm:$0xff]
        %v477 = vld [vmem:[%s0 + $0x14] sm:$0xf]
        %v478 = vld [vmem:[%s451] sm:$0xff]
        %v479 = vld [vmem:[%s451 + $0x8] sm:$0xff]
        %v480 = vld [vmem:[%s451 + $0x10] sm:$0xff]
        %v481 = vld [vmem:[%s451 + $0x18] sm:$0xff]
        %v482 = vld [vmem:[%s451 + $0x20] sm:$0xff]
        %v483 = vld [vmem:[%s451 + $0x28] sm:$0xff]
        %v484 = vld [vmem:[%s451 + $0x30] sm:$0xff]
        %v485 = vld [vmem:[%s451 + $0x38] sm:$0xff]
        %v486 = vld [vmem:[%s451 + $0x40] sm:$0xff]
        %v487 = vld [vmem:[%s451 + $0x48] sm:$0xff]
        %v488 = vld [vmem:[%s451 + $0x50] sm:$0xff]
        %v489 = vld [vmem:[%s451 + $0x58] sm:$0xff]
        %v490 = vld [vmem:[%s451 + $0x60] sm:$0xff]
        %v491 = vld [vmem:[%s451 + $0x68] sm:$0xff]
        %v492 = vld [vmem:[%s451 + $0x70] sm:$0xff]
        %v493 = vld [vmem:[%s451 + $0x78] sm:$0xff]
        %v494 = vld [vmem:[%s451 + $0x80] sm:$0xff]
        %v495 = vld [vmem:[%s451 + $0x88] sm:$0xff]
        %v496 = vld [vmem:[%s451 + $0x90] sm:$0xff]
        %v497 = vld [vmem:[%s451 + $0x98] sm:$0xff]
        %v498 = vld [vmem:[%s451 + $0xa0] sm:$0xff]
        %v499 = vld [vmem:[%s451 + $0xa8] sm:$0xff]
        %v500 = vld [vmem:[%s451 + $0xb0] sm:$0xff]
        %v501 = vld [vmem:[%s451 + $0xb8] sm:$0xff]
        %v502 = vld [vmem:[%s451 + $0xc0] sm:$0xff]
        %v503 = vld [vmem:[%s451 + $0xc8] sm:$0xff]
        %v504 = vld [vmem:[%s451 + $0xd0] sm:$0xff]
        %v505 = vld [vmem:[%s451 + $0xd8] sm:$0xff]
        %v506 = vld [vmem:[%s451 + $0xe0] sm:$0xff]
        %v507 = vld [vmem:[%s451 + $0xe8] sm:$0xff]
        %v508 = vld [vmem:[%s451 + $0xf0] sm:$0xff]
        %v509 = vld [vmem:[%s451 + $0xf8] sm:$0xff]
        %v510 = vld [vmem:[%s451 + $0x100] sm:$0xff]
        %v511 = vld [vmem:[%s451 + $0x108] sm:$0xff]
        %v512 = vld [vmem:[%s451 + $0x110] sm:$0xff]
        %v513 = vld [vmem:[%s451 + $0x118] sm:$0xff]
        %v514 = vld [vmem:[%s451 + $0x120] sm:$0xff]
        %v515 = vld [vmem:[%s451 + $0x128] sm:$0xff]
        %v516 = vld [vmem:[%s451 + $0x130] sm:$0xff]
        %v517 = vld [vmem:[%s451 + $0x138] sm:$0xff]
        %v518 = vld [vmem:[%s451 + $0x140] sm:$0xff]
        %v519 = vld [vmem:[%s451 + $0x148] sm:$0xff]
        %v520 = vld [vmem:[%s451 + $0x150] sm:$0xff]
        %v521 = vld [vmem:[%s451 + $0x158] sm:$0xff]
        %v522 = vld [vmem:[%s451 + $0x160] sm:$0xff]
        %v523 = vld [vmem:[%s451 + $0x168] sm:$0xff]
        %v524 = vld [vmem:[%s451 + $0x170] sm:$0xff]
        %v525 = vld [vmem:[%s451 + $0x178] sm:$0xff]
        %v526 = vld [vmem:[%s451 + $0x180] sm:$0xff]
        %v527 = vld [vmem:[%s451 + $0x188] sm:$0xff]
        %v528 = vld [vmem:[%s451 + $0x190] sm:$0xff]
        %v529 = vld [vmem:[%s451 + $0x198] sm:$0xff]
        %v530 = vld [vmem:[%s451 + $0x1a0] sm:$0xff]
        %v531 = vld [vmem:[%s451 + $0x1a8] sm:$0xff]
        %v532 = vld [vmem:[%s451 + $0x1b0] sm:$0xff]
        %v533 = vld [vmem:[%s451 + $0x1b8] sm:$0xff]
        %v534 = vld [vmem:[%s451 + $0x1c0] sm:$0xff]
        %v535 = vld [vmem:[%s451 + $0x1c8] sm:$0xff]
        %v536 = vld [vmem:[%s451 + $0x1d0] sm:$0xff]
        %v537 = vld [vmem:[%s451 + $0x1d8] sm:$0xff]
        %v538 = vld [vmem:[%s451 + $0x1e0] sm:$0xff]
        %v539 = vld [vmem:[%s451 + $0x1e8] sm:$0xff]
        %v540 = vld [vmem:[%s451 + $0x1f0] sm:$0xff]
        %v541 = vld [vmem:[%s451 + $0x1f8] sm:$0xff]
        %v542 = vld [vmem:[%s451 + $0x200] sm:$0xff]
        %v543 = vld [vmem:[%s451 + $0x208] sm:$0xff]
        %v544 = vld [vmem:[%s451 + $0x210] sm:$0xff]
        %v545 = vld [vmem:[%s451 + $0x218] sm:$0xff]
        %v546 = vld [vmem:[%s451 + $0x220] sm:$0xff]
        %v547 = vld [vmem:[%s451 + $0x228] sm:$0xff]
        %v548 = vld [vmem:[%s451 + $0x230] sm:$0xff]
        %v549 = vld [vmem:[%s451 + $0x238] sm:$0xff]
        %v550 = vld [vmem:[%s451 + $0x240] sm:$0xff]
        %v551 = vld [vmem:[%s451 + $0x248] sm:$0xff]
        %v552 = vld [vmem:[%s451 + $0x250] sm:$0xff]
        %v553 = vld [vmem:[%s451 + $0x258] sm:$0xff]
        %v554 = vld [vmem:[%s451 + $0x260] sm:$0xff]
        %v555 = vld [vmem:[%s451 + $0x268] sm:$0xff]
        %v556 = vld [vmem:[%s451 + $0x270] sm:$0xff]
        %v557 = vld [vmem:[%s451 + $0x278] sm:$0xff]
        %v558 = vld [vmem:[%s451 + $0x280] sm:$0xff]
        %v559 = vld [vmem:[%s451 + $0x288] sm:$0xff]
        %v560 = vld [vmem:[%s451 + $0x290] sm:$0xff]
        %v561 = vld [vmem:[%s451 + $0x298] sm:$0xff]
        %v562 = vld [vmem:[%s451 + $0x2a0] sm:$0xff]
        %v563 = vld [vmem:[%s451 + $0x2a8] sm:$0xff]
        %v564 = vld [vmem:[%s451 + $0x2b0] sm:$0xff]
        %v565 = vld [vmem:[%s451 + $0x2b8] sm:$0xff]
        %v566 = vld [vmem:[%s451 + $0x2c0] sm:$0xff]
        %v567 = vld [vmem:[%s451 + $0x2c8] sm:$0xff]
        %v568 = vld [vmem:[%s451 + $0x2d0] sm:$0xff]
        %v569 = vld [vmem:[%s451 + $0x2d8] sm:$0xff]
        %v570 = vld [vmem:[%s451 + $0x2e0] sm:$0xff]
        %v571 = vld [vmem:[%s451 + $0x2e8] sm:$0xff]
        %v572 = vld [vmem:[%s451 + $0x2f0] sm:$0xff]
        %v573 = vld [vmem:[%s451 + $0x2f8] sm:$0xff]
        %v574 = vld [vmem:[%s451 + $0x300] sm:$0xff]
        %v575 = vld [vmem:[%s451 + $0x308] sm:$0xff]
        %v576 = vld [vmem:[%s451 + $0x310] sm:$0xff]
        %v577 = vld [vmem:[%s451 + $0x318] sm:$0xff]
        %v578 = vld [vmem:[%s451 + $0x320] sm:$0xff]
        %v579 = vld [vmem:[%s451 + $0x328] sm:$0xff]
        %v580 = vld [vmem:[%s451 + $0x330] sm:$0xff]
        %v581 = vld [vmem:[%s451 + $0x338] sm:$0xff]
        %v582 = vld [vmem:[%s451 + $0x340] sm:$0xff]
        %v583 = vld [vmem:[%s451 + $0x348] sm:$0xff]
        %v584 = vld [vmem:[%s451 + $0x350] sm:$0xff]
        %v585 = vld [vmem:[%s451 + $0x358] sm:$0xff]
        %v586 = vld [vmem:[%s451 + $0x360] sm:$0xff]
        %v587 = vld [vmem:[%s451 + $0x368] sm:$0xff]
        %v588 = vld [vmem:[%s451 + $0x370] sm:$0xff]
        %v589 = vld [vmem:[%s451 + $0x378] sm:$0xff]
        %v590 = vld [vmem:[%s451 + $0x380] sm:$0xff]
        %v591 = vld [vmem:[%s451 + $0x388] sm:$0xff]
        %v592 = vld [vmem:[%s451 + $0x390] sm:$0xff]
        %v593 = vld [vmem:[%s451 + $0x398] sm:$0xff]
        %v594 = vld [vmem:[%s451 + $0x3a0] sm:$0xff]
        %v595 = vld [vmem:[%s451 + $0x3a8] sm:$0xff]
        %v596 = vld [vmem:[%s451 + $0x3b0] sm:$0xff]
        %v597 = vld [vmem:[%s451 + $0x3b8] sm:$0xff]
        %v598 = vld [vmem:[%s451 + $0x3c0] sm:$0xff]
        %v599 = vld [vmem:[%s451 + $0x3c8] sm:$0xff]
        %v600 = vld [vmem:[%s451 + $0x3d0] sm:$0xff]
        %v601 = vld [vmem:[%s451 + $0x3d8] sm:$0xff]
        %v602 = vld [vmem:[%s451 + $0x3e0] sm:$0xff]
        %v603 = vld [vmem:[%s451 + $0x3e8] sm:$0xff]
        %v604 = vld [vmem:[%s451 + $0x3f0] sm:$0xff]
        %v605 = vld [vmem:[%s451 + $0x3f8] sm:$0xff]
        %v606 = vld [vmem:[%s451 + $0x400] sm:$0xff]
        %v607 = vld [vmem:[%s451 + $0x408] sm:$0xff]
        %v608 = vld [vmem:[%s451 + $0x410] sm:$0xff]
        %v609 = vld [vmem:[%s451 + $0x418] sm:$0xff]
        %v610 = vld [vmem:[%s451 + $0x420] sm:$0xff]
        %v611 = vld [vmem:[%s451 + $0x428] sm:$0xff]
        %v612 = vld [vmem:[%s451 + $0x430] sm:$0xff]
        %v613 = vld [vmem:[%s451 + $0x438] sm:$0xff]
        %v614 = vld [vmem:[%s451 + $0x440] sm:$0xff]
        %v615 = vld [vmem:[%s451 + $0x448] sm:$0xff]
        %v616 = vld [vmem:[%s451 + $0x450] sm:$0xff]
        %v617 = vld [vmem:[%s451 + $0x458] sm:$0xff]
        %v618 = vld [vmem:[%s451 + $0x460] sm:$0xff]
        %v619 = vld [vmem:[%s451 + $0x468] sm:$0xff]
        %v620 = vld [vmem:[%s451 + $0x470] sm:$0xff]
        %v621 = vld [vmem:[%s451 + $0x478] sm:$0xff]
        %v626 = vunpack.c.l.b16 %v474
        %v627 = vunpack.c.h.b16 %v474
        %v628 = vunpack.c.l.b16 %v475
        %v629 = vunpack.c.l.b16 %v476
        %v630 = vunpack.c.h.b16 %v476
        %v631 = vunpack.c.l.b16 %v477
        %v632 = vpack.c.b16 %v629, %v626
        %v633 = vpack.c.b16 %v630, %v627
        %v634 = vpack.c.b16 %v631, %v628
        %v781 = vunpack.c.l.b16 %v478
        %v782 = vunpack.c.h.b16 %v478
        %v783 = vunpack.c.l.b16 %v479
        %v784 = vunpack.c.h.b16 %v479
        %v785 = vunpack.c.l.b16 %v480
        %v786 = vunpack.c.h.b16 %v480
        %v787 = vunpack.c.l.b16 %v481
        %v788 = vunpack.c.h.b16 %v481
        %v789 = vunpack.c.l.b16 %v482
        %v790 = vunpack.c.h.b16 %v482
        %v791 = vunpack.c.l.b16 %v483
        %v792 = vunpack.c.h.b16 %v483
        %v793 = vunpack.c.l.b16 %v484
        %v794 = vunpack.c.h.b16 %v484
        %v795 = vunpack.c.l.b16 %v485
        %v796 = vunpack.c.h.b16 %v485
        %v797 = vunpack.c.l.b16 %v486
        %v798 = vunpack.c.h.b16 %v486
        %v799 = vunpack.c.l.b16 %v487
        %v800 = vunpack.c.h.b16 %v487
        %v801 = vunpack.c.l.b16 %v488
        %v802 = vunpack.c.h.b16 %v488
        %v803 = vunpack.c.l.b16 %v489
        %v804 = vunpack.c.h.b16 %v489
        %v805 = vunpack.c.l.b16 %v490
        %v806 = vunpack.c.h.b16 %v490
        %v807 = vunpack.c.l.b16 %v491
        %v808 = vunpack.c.h.b16 %v491
        %v809 = vunpack.c.l.b16 %v492
        %v810 = vunpack.c.h.b16 %v492
        %v811 = vunpack.c.l.b16 %v493
        %v812 = vunpack.c.h.b16 %v493
        %v813 = vunpack.c.l.b16 %v494
        %v814 = vunpack.c.h.b16 %v494
        %v815 = vunpack.c.l.b16 %v495
        %v816 = vunpack.c.h.b16 %v495
        %v817 = vunpack.c.l.b16 %v496
        %v818 = vunpack.c.h.b16 %v496
        %v819 = vunpack.c.l.b16 %v497
        %v820 = vunpack.c.h.b16 %v497
        %v821 = vunpack.c.l.b16 %v498
        %v822 = vunpack.c.h.b16 %v498
        %v823 = vunpack.c.l.b16 %v499
        %v824 = vunpack.c.h.b16 %v499
        %v825 = vunpack.c.l.b16 %v500
        %v826 = vunpack.c.h.b16 %v500
        %v827 = vunpack.c.l.b16 %v501
        %v828 = vunpack.c.h.b16 %v501
        %v829 = vunpack.c.l.b16 %v502
        %v830 = vunpack.c.h.b16 %v502
        %v831 = vunpack.c.l.b16 %v503
        %v832 = vunpack.c.h.b16 %v503
        %v833 = vunpack.c.l.b16 %v504
        %v834 = vunpack.c.h.b16 %v504
        %v835 = vunpack.c.l.b16 %v505
        %v836 = vunpack.c.h.b16 %v505
        %v837 = vunpack.c.l.b16 %v506
        %v838 = vunpack.c.h.b16 %v506
        %v839 = vunpack.c.l.b16 %v507
        %v840 = vunpack.c.h.b16 %v507
        %v841 = vunpack.c.l.b16 %v508
        %v842 = vunpack.c.h.b16 %v508
        %v843 = vunpack.c.l.b16 %v509
        %v844 = vunpack.c.h.b16 %v509
        %v845 = vunpack.c.l.b16 %v510
        %v846 = vunpack.c.h.b16 %v510
        %v847 = vunpack.c.l.b16 %v511
        %v848 = vunpack.c.h.b16 %v511
        %v849 = vunpack.c.l.b16 %v512
        %v850 = vunpack.c.h.b16 %v512
        %v851 = vunpack.c.l.b16 %v513
        %v852 = vunpack.c.h.b16 %v513
        %v853 = vunpack.c.l.b16 %v514
        %v854 = vunpack.c.h.b16 %v514
        %v855 = vunpack.c.l.b16 %v515
        %v856 = vunpack.c.h.b16 %v515
        %v857 = vunpack.c.l.b16 %v516
        %v858 = vunpack.c.h.b16 %v516
        %v859 = vunpack.c.l.b16 %v517
        %v860 = vunpack.c.h.b16 %v517
        %v861 = vunpack.c.l.b16 %v518
        %v862 = vunpack.c.h.b16 %v518
        %v863 = vunpack.c.l.b16 %v519
        %v864 = vunpack.c.h.b16 %v519
        %v865 = vunpack.c.l.b16 %v520
        %v866 = vunpack.c.h.b16 %v520
        %v867 = vunpack.c.l.b16 %v521
        %v868 = vunpack.c.h.b16 %v521
        %v869 = vunpack.c.l.b16 %v522
        %v870 = vunpack.c.h.b16 %v522
        %v871 = vunpack.c.l.b16 %v523
        %v872 = vunpack.c.h.b16 %v523
        %v873 = vunpack.c.l.b16 %v524
        %v874 = vunpack.c.h.b16 %v524
        %v875 = vunpack.c.l.b16 %v525
        %v876 = vunpack.c.h.b16 %v525
        %v877 = vunpack.c.l.b16 %v526
        %v878 = vunpack.c.h.b16 %v526
        %v879 = vunpack.c.l.b16 %v527
        %v880 = vunpack.c.h.b16 %v527
        %v881 = vunpack.c.l.b16 %v528
        %v882 = vunpack.c.h.b16 %v528
        %v883 = vunpack.c.l.b16 %v529
        %v884 = vunpack.c.h.b16 %v529
        %v885 = vunpack.c.l.b16 %v530
        %v886 = vunpack.c.h.b16 %v530
        %v887 = vunpack.c.l.b16 %v531
        %v888 = vunpack.c.h.b16 %v531
        %v889 = vunpack.c.l.b16 %v532
        %v890 = vunpack.c.h.b16 %v532
        %v891 = vunpack.c.l.b16 %v533
        %v892 = vunpack.c.h.b16 %v533
        %v893 = vunpack.c.l.b16 %v534
        %v894 = vunpack.c.h.b16 %v534
        %v895 = vunpack.c.l.b16 %v535
        %v896 = vunpack.c.h.b16 %v535
        %v897 = vunpack.c.l.b16 %v536
        %v898 = vunpack.c.h.b16 %v536
        %v899 = vunpack.c.l.b16 %v537
        %v900 = vunpack.c.h.b16 %v537
        %v901 = vunpack.c.l.b16 %v538
        %v902 = vunpack.c.h.b16 %v538
        %v903 = vunpack.c.l.b16 %v539
        %v904 = vunpack.c.h.b16 %v539
        %v905 = vunpack.c.l.b16 %v540
        %v906 = vunpack.c.h.b16 %v540
        %v907 = vunpack.c.l.b16 %v541
        %v908 = vunpack.c.h.b16 %v541
        %v909 = vunpack.c.l.b16 %v542
        %v910 = vunpack.c.h.b16 %v542
        %v911 = vunpack.c.l.b16 %v543
        %v912 = vunpack.c.h.b16 %v543
        %v913 = vunpack.c.l.b16 %v544
        %v914 = vunpack.c.h.b16 %v544
        %v915 = vunpack.c.l.b16 %v545
        %v916 = vunpack.c.h.b16 %v545
        %v917 = vunpack.c.l.b16 %v546
        %v918 = vunpack.c.h.b16 %v546
        %v919 = vunpack.c.l.b16 %v547
        %v920 = vunpack.c.h.b16 %v547
        %v921 = vunpack.c.l.b16 %v548
        %v922 = vunpack.c.h.b16 %v548
        %v923 = vunpack.c.l.b16 %v549
        %v924 = vunpack.c.h.b16 %v549
        %v925 = vunpack.c.l.b16 %v550
        %v926 = vunpack.c.h.b16 %v550
        %v927 = vunpack.c.l.b16 %v551
        %v928 = vunpack.c.h.b16 %v551
        %v929 = vunpack.c.l.b16 %v552
        %v930 = vunpack.c.h.b16 %v552
        %v931 = vunpack.c.l.b16 %v553
        %v932 = vunpack.c.h.b16 %v553
        %v933 = vunpack.c.l.b16 %v554
        %v934 = vunpack.c.h.b16 %v554
        %v935 = vunpack.c.l.b16 %v555
        %v936 = vunpack.c.h.b16 %v555
        %v937 = vunpack.c.l.b16 %v556
        %v938 = vunpack.c.h.b16 %v556
        %v939 = vunpack.c.l.b16 %v557
        %v940 = vunpack.c.h.b16 %v557
        %v941 = vunpack.c.l.b16 %v558
        %v942 = vunpack.c.h.b16 %v558
        %v943 = vunpack.c.l.b16 %v559
        %v944 = vunpack.c.h.b16 %v559
        %v945 = vunpack.c.l.b16 %v560
        %v946 = vunpack.c.h.b16 %v560
        %v947 = vunpack.c.l.b16 %v561
        %v948 = vunpack.c.h.b16 %v561
        %v949 = vunpack.c.l.b16 %v562
        %v950 = vunpack.c.h.b16 %v562
        %v951 = vunpack.c.l.b16 %v563
        %v952 = vunpack.c.h.b16 %v563
        %v953 = vunpack.c.l.b16 %v564
        %v954 = vunpack.c.h.b16 %v564
        %v955 = vunpack.c.l.b16 %v565
        %v956 = vunpack.c.h.b16 %v565
        %v957 = vunpack.c.l.b16 %v566
        %v958 = vunpack.c.h.b16 %v566
        %v959 = vunpack.c.l.b16 %v567
        %v960 = vunpack.c.h.b16 %v567
        %v961 = vunpack.c.l.b16 %v568
        %v962 = vunpack.c.h.b16 %v568
        %v963 = vunpack.c.l.b16 %v569
        %v964 = vunpack.c.h.b16 %v569
        %v965 = vunpack.c.l.b16 %v570
        %v966 = vunpack.c.h.b16 %v570
        %v967 = vunpack.c.l.b16 %v571
        %v968 = vunpack.c.h.b16 %v571
        %v969 = vunpack.c.l.b16 %v572
        %v970 = vunpack.c.h.b16 %v572
        %v971 = vunpack.c.l.b16 %v573
        %v972 = vunpack.c.h.b16 %v573
        %v973 = vunpack.c.l.b16 %v574
        %v974 = vunpack.c.h.b16 %v574
        %v975 = vunpack.c.l.b16 %v575
        %v976 = vunpack.c.h.b16 %v575
        %v977 = vunpack.c.l.b16 %v576
        %v978 = vunpack.c.h.b16 %v576
        %v979 = vunpack.c.l.b16 %v577
        %v980 = vunpack.c.h.b16 %v577
        %v981 = vunpack.c.l.b16 %v578
        %v982 = vunpack.c.h.b16 %v578
        %v983 = vunpack.c.l.b16 %v579
        %v984 = vunpack.c.h.b16 %v579
        %v985 = vunpack.c.l.b16 %v580
        %v986 = vunpack.c.h.b16 %v580
        %v987 = vunpack.c.l.b16 %v581
        %v988 = vunpack.c.h.b16 %v581
        %v989 = vunpack.c.l.b16 %v582
        %v990 = vunpack.c.h.b16 %v582
        %v991 = vunpack.c.l.b16 %v583
        %v992 = vunpack.c.h.b16 %v583
        %v993 = vunpack.c.l.b16 %v584
        %v994 = vunpack.c.h.b16 %v584
        %v995 = vunpack.c.l.b16 %v585
        %v996 = vunpack.c.h.b16 %v585
        %v997 = vunpack.c.l.b16 %v586
        %v998 = vunpack.c.h.b16 %v586
        %v999 = vunpack.c.l.b16 %v587
        %v1000 = vunpack.c.h.b16 %v587
        %v1001 = vunpack.c.l.b16 %v588
        %v1002 = vunpack.c.h.b16 %v588
        %v1003 = vunpack.c.l.b16 %v589
        %v1004 = vunpack.c.h.b16 %v589
        %v1005 = vunpack.c.l.b16 %v590
        %v1006 = vunpack.c.h.b16 %v590
        %v1007 = vunpack.c.l.b16 %v591
        %v1008 = vunpack.c.h.b16 %v591
        %v1009 = vunpack.c.l.b16 %v592
        %v1010 = vunpack.c.h.b16 %v592
        %v1011 = vunpack.c.l.b16 %v593
        %v1012 = vunpack.c.h.b16 %v593
        %v1013 = vunpack.c.l.b16 %v594
        %v1014 = vunpack.c.h.b16 %v594
        %v1015 = vunpack.c.l.b16 %v595
        %v1016 = vunpack.c.h.b16 %v595
        %v1017 = vunpack.c.l.b16 %v596
        %v1018 = vunpack.c.h.b16 %v596
        %v1019 = vunpack.c.l.b16 %v597
        %v1020 = vunpack.c.h.b16 %v597
        %v1021 = vunpack.c.l.b16 %v598
        %v1022 = vunpack.c.h.b16 %v598
        %v1023 = vunpack.c.l.b16 %v599
        %v1024 = vunpack.c.h.b16 %v599
        %v1025 = vunpack.c.l.b16 %v600
        %v1026 = vunpack.c.h.b16 %v600
        %v1027 = vunpack.c.l.b16 %v601
        %v1028 = vunpack.c.h.b16 %v601
        %v1029 = vunpack.c.l.b16 %v602
        %v1030 = vunpack.c.h.b16 %v602
        %v1031 = vunpack.c.l.b16 %v603
        %v1032 = vunpack.c.h.b16 %v603
        %v1033 = vunpack.c.l.b16 %v604
        %v1034 = vunpack.c.h.b16 %v604
        %v1035 = vunpack.c.l.b16 %v605
        %v1036 = vunpack.c.h.b16 %v605
        %v1037 = vunpack.c.l.b16 %v606
        %v1038 = vunpack.c.h.b16 %v606
        %v1039 = vunpack.c.l.b16 %v607
        %v1040 = vunpack.c.h.b16 %v607
        %v1041 = vunpack.c.l.b16 %v608
        %v1042 = vunpack.c.h.b16 %v608
        %v1043 = vunpack.c.l.b16 %v609
        %v1044 = vunpack.c.h.b16 %v609
        %v1045 = vunpack.c.l.b16 %v610
        %v1046 = vunpack.c.h.b16 %v610
        %v1047 = vunpack.c.l.b16 %v611
        %v1048 = vunpack.c.h.b16 %v611
        %v1049 = vunpack.c.l.b16 %v612
        %v1050 = vunpack.c.h.b16 %v612
        %v1051 = vunpack.c.l.b16 %v613
        %v1052 = vunpack.c.h.b16 %v613
        %v1053 = vunpack.c.l.b16 %v614
        %v1054 = vunpack.c.h.b16 %v614
        %v1055 = vunpack.c.l.b16 %v615
        %v1056 = vunpack.c.h.b16 %v615
        %v1057 = vunpack.c.l.b16 %v616
        %v1058 = vunpack.c.h.b16 %v616
        %v1059 = vunpack.c.l.b16 %v617
        %v1060 = vunpack.c.h.b16 %v617
        %v1061 = vunpack.c.l.b16 %v618
        %v1062 = vunpack.c.h.b16 %v618
        %v1063 = vunpack.c.l.b16 %v619
        %v1064 = vunpack.c.h.b16 %v619
        %v1065 = vunpack.c.l.b16 %v620
        %v1066 = vunpack.c.h.b16 %v620
        %v1067 = vunpack.c.l.b16 %v621
        %v1068 = vunpack.c.h.b16 %v621
        %v1069 = vpack.c.b16 %v789, %v781
        %v1070 = vpack.c.b16 %v790, %v782
        %v1071 = vpack.c.b16 %v791, %v783
        %v1072 = vpack.c.b16 %v792, %v784
        %v1073 = vpack.c.b16 %v793, %v785
        %v1074 = vpack.c.b16 %v794, %v786
        %v1075 = vpack.c.b16 %v795, %v787
        %v1076 = vpack.c.b16 %v796, %v788
        %v1077 = vpack.c.b16 %v805, %v797
        %v1078 = vpack.c.b16 %v806, %v798
        %v1079 = vpack.c.b16 %v807, %v799
        %v1080 = vpack.c.b16 %v808, %v800
        %v1081 = vpack.c.b16 %v809, %v801
        %v1082 = vpack.c.b16 %v810, %v802
        %v1083 = vpack.c.b16 %v811, %v803
        %v1084 = vpack.c.b16 %v812, %v804
        %v1085 = vpack.c.b16 %v821, %v813
        %v1086 = vpack.c.b16 %v822, %v814
        %v1087 = vpack.c.b16 %v823, %v815
        %v1088 = vpack.c.b16 %v824, %v816
        %v1089 = vpack.c.b16 %v825, %v817
        %v1090 = vpack.c.b16 %v826, %v818
        %v1091 = vpack.c.b16 %v827, %v819
        %v1092 = vpack.c.b16 %v828, %v820
        %v1093 = vpack.c.b16 %v837, %v829
        %v1094 = vpack.c.b16 %v838, %v830
        %v1095 = vpack.c.b16 %v839, %v831
        %v1096 = vpack.c.b16 %v840, %v832
        %v1097 = vpack.c.b16 %v841, %v833
        %v1098 = vpack.c.b16 %v842, %v834
        %v1099 = vpack.c.b16 %v843, %v835
        %v1100 = vpack.c.b16 %v844, %v836
        %v1101 = vpack.c.b16 %v853, %v845
        %v1102 = vpack.c.b16 %v854, %v846
        %v1103 = vpack.c.b16 %v855, %v847
        %v1104 = vpack.c.b16 %v856, %v848
        %v1105 = vpack.c.b16 %v857, %v849
        %v1106 = vpack.c.b16 %v858, %v850
        %v1107 = vpack.c.b16 %v859, %v851
        %v1108 = vpack.c.b16 %v860, %v852
        %v1109 = vpack.c.b16 %v869, %v861
        %v1110 = vpack.c.b16 %v870, %v862
        %v1111 = vpack.c.b16 %v871, %v863
        %v1112 = vpack.c.b16 %v872, %v864
        %v1113 = vpack.c.b16 %v873, %v865
        %v1114 = vpack.c.b16 %v874, %v866
        %v1115 = vpack.c.b16 %v875, %v867
        %v1116 = vpack.c.b16 %v876, %v868
        %v1117 = vpack.c.b16 %v885, %v877
        %v1118 = vpack.c.b16 %v886, %v878
        %v1119 = vpack.c.b16 %v887, %v879
        %v1120 = vpack.c.b16 %v888, %v880
        %v1121 = vpack.c.b16 %v889, %v881
        %v1122 = vpack.c.b16 %v890, %v882
        %v1123 = vpack.c.b16 %v891, %v883
        %v1124 = vpack.c.b16 %v892, %v884
        %v1125 = vpack.c.b16 %v901, %v893
        %v1126 = vpack.c.b16 %v902, %v894
        %v1127 = vpack.c.b16 %v903, %v895
        %v1128 = vpack.c.b16 %v904, %v896
        %v1129 = vpack.c.b16 %v905, %v897
        %v1130 = vpack.c.b16 %v906, %v898
        %v1131 = vpack.c.b16 %v907, %v899
        %v1132 = vpack.c.b16 %v908, %v900
        %v1133 = vpack.c.b16 %v917, %v909
        %v1134 = vpack.c.b16 %v918, %v910
        %v1135 = vpack.c.b16 %v919, %v911
        %v1136 = vpack.c.b16 %v920, %v912
        %v1137 = vpack.c.b16 %v921, %v913
        %v1138 = vpack.c.b16 %v922, %v914
        %v1139 = vpack.c.b16 %v923, %v915
        %v1140 = vpack.c.b16 %v924, %v916
        %v1141 = vpack.c.b16 %v933, %v925
        %v1142 = vpack.c.b16 %v934, %v926
        %v1143 = vpack.c.b16 %v935, %v927
        %v1144 = vpack.c.b16 %v936, %v928
        %v1145 = vpack.c.b16 %v937, %v929
        %v1146 = vpack.c.b16 %v938, %v930
        %v1147 = vpack.c.b16 %v939, %v931
        %v1148 = vpack.c.b16 %v940, %v932
        %v1149 = vpack.c.b16 %v949, %v941
        %v1150 = vpack.c.b16 %v950, %v942
        %v1151 = vpack.c.b16 %v951, %v943
        %v1152 = vpack.c.b16 %v952, %v944
        %v1153 = vpack.c.b16 %v953, %v945
        %v1154 = vpack.c.b16 %v954, %v946
        %v1155 = vpack.c.b16 %v955, %v947
        %v1156 = vpack.c.b16 %v956, %v948
        %v1157 = vpack.c.b16 %v965, %v957
        %v1158 = vpack.c.b16 %v966, %v958
        %v1159 = vpack.c.b16 %v967, %v959
        %v1160 = vpack.c.b16 %v968, %v960
        %v1161 = vpack.c.b16 %v969, %v961
        %v1162 = vpack.c.b16 %v970, %v962
        %v1163 = vpack.c.b16 %v971, %v963
        %v1164 = vpack.c.b16 %v972, %v964
        %v1165 = vpack.c.b16 %v981, %v973
        %v1166 = vpack.c.b16 %v982, %v974
        %v1167 = vpack.c.b16 %v983, %v975
        %v1168 = vpack.c.b16 %v984, %v976
        %v1169 = vpack.c.b16 %v985, %v977
        %v1170 = vpack.c.b16 %v986, %v978
        %v1171 = vpack.c.b16 %v987, %v979
        %v1172 = vpack.c.b16 %v988, %v980
        %v1173 = vpack.c.b16 %v997, %v989
        %v1174 = vpack.c.b16 %v998, %v990
        %v1175 = vpack.c.b16 %v999, %v991
        %v1176 = vpack.c.b16 %v1000, %v992
        %v1177 = vpack.c.b16 %v1001, %v993
        %v1178 = vpack.c.b16 %v1002, %v994
        %v1179 = vpack.c.b16 %v1003, %v995
        %v1180 = vpack.c.b16 %v1004, %v996
        %v1181 = vpack.c.b16 %v1013, %v1005
        %v1182 = vpack.c.b16 %v1014, %v1006
        %v1183 = vpack.c.b16 %v1015, %v1007
        %v1184 = vpack.c.b16 %v1016, %v1008
        %v1185 = vpack.c.b16 %v1017, %v1009
        %v1186 = vpack.c.b16 %v1018, %v1010
        %v1187 = vpack.c.b16 %v1019, %v1011
        %v1188 = vpack.c.b16 %v1020, %v1012
        %v1189 = vpack.c.b16 %v1029, %v1021
        %v1190 = vpack.c.b16 %v1030, %v1022
        %v1191 = vpack.c.b16 %v1031, %v1023
        %v1192 = vpack.c.b16 %v1032, %v1024
        %v1193 = vpack.c.b16 %v1033, %v1025
        %v1194 = vpack.c.b16 %v1034, %v1026
        %v1195 = vpack.c.b16 %v1035, %v1027
        %v1196 = vpack.c.b16 %v1036, %v1028
        %v1197 = vpack.c.b16 %v1045, %v1037
        %v1198 = vpack.c.b16 %v1046, %v1038
        %v1199 = vpack.c.b16 %v1047, %v1039
        %v1200 = vpack.c.b16 %v1048, %v1040
        %v1201 = vpack.c.b16 %v1049, %v1041
        %v1202 = vpack.c.b16 %v1050, %v1042
        %v1203 = vpack.c.b16 %v1051, %v1043
        %v1204 = vpack.c.b16 %v1052, %v1044
        %v1205 = vpack.c.b16 %v1061, %v1053
        %v1206 = vpack.c.b16 %v1062, %v1054
        %v1207 = vpack.c.b16 %v1063, %v1055
        %v1208 = vpack.c.b16 %v1064, %v1056
        %v1209 = vpack.c.b16 %v1065, %v1057
        %v1210 = vpack.c.b16 %v1066, %v1058
        %v1211 = vpack.c.b16 %v1067, %v1059
        %v1212 = vpack.c.b16 %v1068, %v1060
        %vm1357 = vcmask 261120
        %v1359 = vsel %vm1357, %v634, 0
        %1361 = vmatprep.subr.bf16.mxu0 %v1070
        %1362 = vmatpush1.bf16.msra.mxu0 %v1069
        %1363 = vmatprep.subr.bf16.mxu0 %v1078
        %1364 = vmatpush1.bf16.msra.mxu0 %v1077
        %1365 = vmatprep.subr.bf16.mxu0 %v1086
        %1366 = vmatpush1.bf16.msra.mxu0 %v1085
        %1367 = vmatprep.subr.bf16.mxu0 %v1094
        %1368 = vmatpush1.bf16.msra.mxu0 %v1093
        %1369 = vmatprep.subr.bf16.mxu0 %v1102
        %1370 = vmatpush1.bf16.msra.mxu0 %v1101
        %1371 = vmatprep.subr.bf16.mxu0 %v1110
        %1372 = vmatpush1.bf16.msra.mxu0 %v1109
        %1373 = vmatprep.subr.bf16.mxu0 %v1118
        %1374 = vmatpush1.bf16.msra.mxu0 %v1117
        %1375 = vmatprep.subr.bf16.mxu0 %v1126
        %1376 = vmatpush1.bf16.msra.mxu0 %v1125
        %1377 = vmatprep.subr.bf16.mxu0 %v1134
        %1378 = vmatpush1.bf16.msra.mxu0 %v1133
        %1379 = vmatprep.subr.bf16.mxu0 %v1142
        %1380 = vmatpush1.bf16.msra.mxu0 %v1141
        %1381 = vmatprep.subr.bf16.mxu0 %v1150
        %1382 = vmatpush1.bf16.msra.mxu0 %v1149
        %1383 = vmatprep.subr.bf16.mxu0 %v1158
        %1384 = vmatpush1.bf16.msra.mxu0 %v1157
        %1385 = vmatprep.subr.bf16.mxu0 %v1166
        %1386 = vmatpush1.bf16.msra.mxu0 %v1165
        %1387 = vmatprep.subr.bf16.mxu0 %v1174
        %1388 = vmatpush1.bf16.msra.mxu0 %v1173
        %1389 = vmatprep.subr.bf16.mxu0 %v1182
        %1390 = vmatpush1.bf16.msra.mxu0 %v1181
        %1391 = vmatprep.subr.bf16.mxu0 %v1190
        %1392 = vmatpush1.bf16.msra.mxu0 %v1189
        %1393 = vmatprep.mubr.bf16.mxu0 %v633
        %1394 = vmatmul.mubr.bf16.gmra.mrb[0].mxu0 %v632
        %v1395 = vpop.f32.mrb[0].mxu0
        %v1396 = vadd.f32 0.0, %v1395
        %v1397 = vpop.f32.mrb[0].mxu0
        %v1398 = vadd.f32 0.0, %v1397
        %v1399 = vpop.f32.mrb[0].mxu0
        %v1400 = vadd.f32 0.0, %v1399
        %v1401 = vpop.f32.mrb[0].mxu0
        %v1402 = vadd.f32 0.0, %v1401
        %1403 = vdwg.mxu0
        %1404 = vmatprep.subr.bf16.mxu0 %v1198
        %1405 = vmatpush1.bf16.msra.mxu0 %v1197
        %1406 = vmatprep.subr.bf16.mxu0 %v1206
        %1407 = vmatpush1.bf16.msra.mxu0 %v1205
        %1408 = vmatprep.subr.bf16.mxu0 0
        %1409 = vmatpush1.bf16.msra.mxu0 0
        %1410 = vmatprep.subr.bf16.mxu0 0
        %1411 = vmatpush1.bf16.msra.mxu0 0
        %1412 = vmatprep.subr.bf16.mxu0 0
        %1413 = vmatpush1.bf16.msra.mxu0 0
        %1414 = vmatprep.subr.bf16.mxu0 0
        %1415 = vmatpush1.bf16.msra.mxu0 0
        %1416 = vmatprep.subr.bf16.mxu0 0
        %1417 = vmatpush1.bf16.msra.mxu0 0
        %1418 = vmatprep.subr.bf16.mxu0 0
        %1419 = vmatpush1.bf16.msra.mxu0 0
        %1420 = vmatprep.subr.bf16.mxu0 0
        %1421 = vmatpush1.bf16.msra.mxu0 0
        %1422 = vmatprep.subr.bf16.mxu0 0
        %1423 = vmatpush1.bf16.msra.mxu0 0
        %1424 = vmatprep.subr.bf16.mxu0 0
        %1425 = vmatpush1.bf16.msra.mxu0 0
        %1426 = vmatprep.subr.bf16.mxu0 0
        %1427 = vmatpush1.bf16.msra.mxu0 0
        %1428 = vmatprep.subr.bf16.mxu0 0
        %1429 = vmatpush1.bf16.msra.mxu0 0
        %1430 = vmatprep.subr.bf16.mxu0 0
        %1431 = vmatpush1.bf16.msra.mxu0 0
        %1432 = vmatprep.subr.bf16.mxu0 0
        %1433 = vmatpush1.bf16.msra.mxu0 0
        %1434 = vmatprep.subr.bf16.mxu0 0
        %1435 = vmatpush1.bf16.msra.mxu0 0
        %1436 = vmatprep.mubr.bf16.mxu0 0
        %1437 = vmatmul.mubr.bf16.gmra.mrb[0].mxu0 %v1359
        %v1438 = vpop.f32.mrb[0].mxu0
        %v1439 = vadd.f32 %v1396, %v1438
        %v1440 = vpop.f32.mrb[0].mxu0
        %v1441 = vadd.f32 %v1398, %v1440
        %v1442 = vpop.f32.mrb[0].mxu0
        %v1443 = vadd.f32 %v1400, %v1442
        %v1444 = vpop.f32.mrb[0].mxu0
        %v1445 = vadd.f32 %v1402, %v1444
        %1446 = vdwg.mxu0
        %1447 = vmatprep.subr.bf16.mxu0 %v1072
        %1448 = vmatpush1.bf16.msra.mxu0 %v1071
        %1449 = vmatprep.subr.bf16.mxu0 %v1080
        %1450 = vmatpush1.bf16.msra.mxu0 %v1079
        %1451 = vmatprep.subr.bf16.mxu0 %v1088
        %1452 = vmatpush1.bf16.msra.mxu0 %v1087
        %1453 = vmatprep.subr.bf16.mxu0 %v1096
        %1454 = vmatpush1.bf16.msra.mxu0 %v1095
        %1455 = vmatprep.subr.bf16.mxu0 %v1104
        %1456 = vmatpush1.bf16.msra.mxu0 %v1103
        %1457 = vmatprep.subr.bf16.mxu0 %v1112
        %1458 = vmatpush1.bf16.msra.mxu0 %v1111
        %1459 = vmatprep.subr.bf16.mxu0 %v1120
        %1460 = vmatpush1.bf16.msra.mxu0 %v1119
        %1461 = vmatprep.subr.bf16.mxu0 %v1128
        %1462 = vmatpush1.bf16.msra.mxu0 %v1127
        %1463 = vmatprep.subr.bf16.mxu0 %v1136
        %1464 = vmatpush1.bf16.msra.mxu0 %v1135
        %1465 = vmatprep.subr.bf16.mxu0 %v1144
        %1466 = vmatpush1.bf16.msra.mxu0 %v1143
        %1467 = vmatprep.subr.bf16.mxu0 %v1152
        %1468 = vmatpush1.bf16.msra.mxu0 %v1151
        %1469 = vmatprep.subr.bf16.mxu0 %v1160
        %1470 = vmatpush1.bf16.msra.mxu0 %v1159
        %1471 = vmatprep.subr.bf16.mxu0 %v1168
        %1472 = vmatpush1.bf16.msra.mxu0 %v1167
        %1473 = vmatprep.subr.bf16.mxu0 %v1176
        %1474 = vmatpush1.bf16.msra.mxu0 %v1175
        %1475 = vmatprep.subr.bf16.mxu0 %v1184
        %1476 = vmatpush1.bf16.msra.mxu0 %v1183
        %1477 = vmatprep.subr.bf16.mxu0 %v1192
        %1478 = vmatpush1.bf16.msra.mxu0 %v1191
        %1479 = vmatprep.mubr.bf16.mxu0 %v633
        %1480 = vmatmul.mubr.bf16.gmra.mrb[0].mxu0 %v632
        %v1481 = vpop.f32.mrb[0].mxu0
        %v1482 = vadd.f32 0.0, %v1481
        %v1483 = vpop.f32.mrb[0].mxu0
        %v1484 = vadd.f32 0.0, %v1483
        %v1485 = vpop.f32.mrb[0].mxu0
        %v1486 = vadd.f32 0.0, %v1485
        %v1487 = vpop.f32.mrb[0].mxu0
        %v1488 = vadd.f32 0.0, %v1487
        %1489 = vdwg.mxu0
        %1490 = vmatprep.subr.bf16.mxu0 %v1200
        %1491 = vmatpush1.bf16.msra.mxu0 %v1199
        %1492 = vmatprep.subr.bf16.mxu0 %v1208
        %1493 = vmatpush1.bf16.msra.mxu0 %v1207
        %1494 = vmatprep.subr.bf16.mxu0 0
        %1495 = vmatpush1.bf16.msra.mxu0 0
        %1496 = vmatprep.subr.bf16.mxu0 0
        %1497 = vmatpush1.bf16.msra.mxu0 0
        %1498 = vmatprep.subr.bf16.mxu0 0
        %1499 = vmatpush1.bf16.msra.mxu0 0
        %1500 = vmatprep.subr.bf16.mxu0 0
        %1501 = vmatpush1.bf16.msra.mxu0 0
        %1502 = vmatprep.subr.bf16.mxu0 0
        %1503 = vmatpush1.bf16.msra.mxu0 0
        %1504 = vmatprep.subr.bf16.mxu0 0
        %1505 = vmatpush1.bf16.msra.mxu0 0
        %1506 = vmatprep.subr.bf16.mxu0 0
        %1507 = vmatpush1.bf16.msra.mxu0 0
        %1508 = vmatprep.subr.bf16.mxu0 0
        %1509 = vmatpush1.bf16.msra.mxu0 0
        %1510 = vmatprep.subr.bf16.mxu0 0
        %1511 = vmatpush1.bf16.msra.mxu0 0
        %1512 = vmatprep.subr.bf16.mxu0 0
        %1513 = vmatpush1.bf16.msra.mxu0 0
        %1514 = vmatprep.subr.bf16.mxu0 0
        %1515 = vmatpush1.bf16.msra.mxu0 0
        %1516 = vmatprep.subr.bf16.mxu0 0
        %1517 = vmatpush1.bf16.msra.mxu0 0
        %1518 = vmatprep.subr.bf16.mxu0 0
        %1519 = vmatpush1.bf16.msra.mxu0 0
        %1520 = vmatprep.subr.bf16.mxu0 0
        %1521 = vmatpush1.bf16.msra.mxu0 0
        %1522 = vmatprep.mubr.bf16.mxu0 0
        %1523 = vmatmul.mubr.bf16.gmra.mrb[0].mxu0 %v1359
        %v1524 = vpop.f32.mrb[0].mxu0
        %v1525 = vadd.f32 %v1482, %v1524
        %v1526 = vpop.f32.mrb[0].mxu0
        %v1527 = vadd.f32 %v1484, %v1526
        %v1528 = vpop.f32.mrb[0].mxu0
        %v1529 = vadd.f32 %v1486, %v1528
        %v1530 = vpop.f32.mrb[0].mxu0
        %v1531 = vadd.f32 %v1488, %v1530
        %1532 = vdwg.mxu0
        %1533 = vmatprep.subr.bf16.mxu0 %v1074
        %1534 = vmatpush1.bf16.msra.mxu0 %v1073
        %1535 = vmatprep.subr.bf16.mxu0 %v1082
        %1536 = vmatpush1.bf16.msra.mxu0 %v1081
        %1537 = vmatprep.subr.bf16.mxu0 %v1090
        %1538 = vmatpush1.bf16.msra.mxu0 %v1089
        %1539 = vmatprep.subr.bf16.mxu0 %v1098
        %1540 = vmatpush1.bf16.msra.mxu0 %v1097
        %1541 = vmatprep.subr.bf16.mxu0 %v1106
        %1542 = vmatpush1.bf16.msra.mxu0 %v1105
        %1543 = vmatprep.subr.bf16.mxu0 %v1114
        %1544 = vmatpush1.bf16.msra.mxu0 %v1113
        %1545 = vmatprep.subr.bf16.mxu0 %v1122
        %1546 = vmatpush1.bf16.msra.mxu0 %v1121
        %1547 = vmatprep.subr.bf16.mxu0 %v1130
        %1548 = vmatpush1.bf16.msra.mxu0 %v1129
        %1549 = vmatprep.subr.bf16.mxu0 %v1138
        %1550 = vmatpush1.bf16.msra.mxu0 %v1137
        %1551 = vmatprep.subr.bf16.mxu0 %v1146
        %1552 = vmatpush1.bf16.msra.mxu0 %v1145
        %1553 = vmatprep.subr.bf16.mxu0 %v1154
        %1554 = vmatpush1.bf16.msra.mxu0 %v1153
        %1555 = vmatprep.subr.bf16.mxu0 %v1162
        %1556 = vmatpush1.bf16.msra.mxu0 %v1161
        %1557 = vmatprep.subr.bf16.mxu0 %v1170
        %1558 = vmatpush1.bf16.msra.mxu0 %v1169
        %1559 = vmatprep.subr.bf16.mxu0 %v1178
        %1560 = vmatpush1.bf16.msra.mxu0 %v1177
        %1561 = vmatprep.subr.bf16.mxu0 %v1186
        %1562 = vmatpush1.bf16.msra.mxu0 %v1185
        %1563 = vmatprep.subr.bf16.mxu0 %v1194
        %1564 = vmatpush1.bf16.msra.mxu0 %v1193
        %1565 = vmatprep.mubr.bf16.mxu0 %v633
        %1566 = vmatmul.mubr.bf16.gmra.mrb[0].mxu0 %v632
        %v1567 = vpop.f32.mrb[0].mxu0
        %v1568 = vadd.f32 0.0, %v1567
        %v1569 = vpop.f32.mrb[0].mxu0
        %v1570 = vadd.f32 0.0, %v1569
        %v1571 = vpop.f32.mrb[0].mxu0
        %v1572 = vadd.f32 0.0, %v1571
        %v1573 = vpop.f32.mrb[0].mxu0
        %v1574 = vadd.f32 0.0, %v1573
        %1575 = vdwg.mxu0
        %1576 = vmatprep.subr.bf16.mxu0 %v1202
        %1577 = vmatpush1.bf16.msra.mxu0 %v1201
        %1578 = vmatprep.subr.bf16.mxu0 %v1210
        %1579 = vmatpush1.bf16.msra.mxu0 %v1209
        %1580 = vmatprep.subr.bf16.mxu0 0
        %1581 = vmatpush1.bf16.msra.mxu0 0
        %1582 = vmatprep.subr.bf16.mxu0 0
        %1583 = vmatpush1.bf16.msra.mxu0 0
        %1584 = vmatprep.subr.bf16.mxu0 0
        %1585 = vmatpush1.bf16.msra.mxu0 0
        %1586 = vmatprep.subr.bf16.mxu0 0
        %1587 = vmatpush1.bf16.msra.mxu0 0
        %1588 = vmatprep.subr.bf16.mxu0 0
        %1589 = vmatpush1.bf16.msra.mxu0 0
        %1590 = vmatprep.subr.bf16.mxu0 0
        %1591 = vmatpush1.bf16.msra.mxu0 0
        %1592 = vmatprep.subr.bf16.mxu0 0
        %1593 = vmatpush1.bf16.msra.mxu0 0
        %1594 = vmatprep.subr.bf16.mxu0 0
        %1595 = vmatpush1.bf16.msra.mxu0 0
        %1596 = vmatprep.subr.bf16.mxu0 0
        %1597 = vmatpush1.bf16.msra.mxu0 0
        %1598 = vmatprep.subr.bf16.mxu0 0
        %1599 = vmatpush1.bf16.msra.mxu0 0
        %1600 = vmatprep.subr.bf16.mxu0 0
        %1601 = vmatpush1.bf16.msra.mxu0 0
        %1602 = vmatprep.subr.bf16.mxu0 0
        %1603 = vmatpush1.bf16.msra.mxu0 0
        %1604 = vmatprep.subr.bf16.mxu0 0
        %1605 = vmatpush1.bf16.msra.mxu0 0
        %1606 = vmatprep.subr.bf16.mxu0 0
        %1607 = vmatpush1.bf16.msra.mxu0 0
        %1608 = vmatprep.mubr.bf16.mxu0 0
        %1609 = vmatmul.mubr.bf16.gmra.mrb[0].mxu0 %v1359
        %v1610 = vpop.f32.mrb[0].mxu0
        %v1611 = vadd.f32 %v1568, %v1610
        %v1612 = vpop.f32.mrb[0].mxu0
        %v1613 = vadd.f32 %v1570, %v1612
        %v1614 = vpop.f32.mrb[0].mxu0
        %v1615 = vadd.f32 %v1572, %v1614
        %v1616 = vpop.f32.mrb[0].mxu0
        %v1617 = vadd.f32 %v1574, %v1616
        %1618 = vdwg.mxu0
        %1619 = vmatprep.subr.bf16.mxu0 %v1076
        %1620 = vmatpush1.bf16.msra.mxu0 %v1075
        %1621 = vmatprep.subr.bf16.mxu0 %v1084
        %1622 = vmatpush1.bf16.msra.mxu0 %v1083
        %1623 = vmatprep.subr.bf16.mxu0 %v1092
        %1624 = vmatpush1.bf16.msra.mxu0 %v1091
        %1625 = vmatprep.subr.bf16.mxu0 %v1100
        %1626 = vmatpush1.bf16.msra.mxu0 %v1099
        %1627 = vmatprep.subr.bf16.mxu0 %v1108
        %1628 = vmatpush1.bf16.msra.mxu0 %v1107
        %1629 = vmatprep.subr.bf16.mxu0 %v1116
        %1630 = vmatpush1.bf16.msra.mxu0 %v1115
        %1631 = vmatprep.subr.bf16.mxu0 %v1124
        %1632 = vmatpush1.bf16.msra.mxu0 %v1123
        %1633 = vmatprep.subr.bf16.mxu0 %v1132
        %1634 = vmatpush1.bf16.msra.mxu0 %v1131
        %1635 = vmatprep.subr.bf16.mxu0 %v1140
        %1636 = vmatpush1.bf16.msra.mxu0 %v1139
        %1637 = vmatprep.subr.bf16.mxu0 %v1148
        %1638 = vmatpush1.bf16.msra.mxu0 %v1147
        %1639 = vmatprep.subr.bf16.mxu0 %v1156
        %1640 = vmatpush1.bf16.msra.mxu0 %v1155
        %1641 = vmatprep.subr.bf16.mxu0 %v1164
        %1642 = vmatpush1.bf16.msra.mxu0 %v1163
        %1643 = vmatprep.subr.bf16.mxu0 %v1172
        %1644 = vmatpush1.bf16.msra.mxu0 %v1171
        %1645 = vmatprep.subr.bf16.mxu0 %v1180
        %1646 = vmatpush1.bf16.msra.mxu0 %v1179
        %1647 = vmatprep.subr.bf16.mxu0 %v1188
        %1648 = vmatpush1.bf16.msra.mxu0 %v1187
        %1649 = vmatprep.subr.bf16.mxu0 %v1196
        %1650 = vmatpush1.bf16.msra.mxu0 %v1195
        %1651 = vmatprep.mubr.bf16.mxu0 %v633
        %1652 = vmatmul.mubr.bf16.gmra.mrb[0].mxu0 %v632
        %v1653 = vpop.f32.mrb[0].mxu0
        %v1654 = vadd.f32 0.0, %v1653
        %v1655 = vpop.f32.mrb[0].mxu0
        %v1656 = vadd.f32 0.0, %v1655
        %v1657 = vpop.f32.mrb[0].mxu0
        %v1658 = vadd.f32 0.0, %v1657
        %v1659 = vpop.f32.mrb[0].mxu0
        %v1660 = vadd.f32 0.0, %v1659
        %1661 = vdwg.mxu0
        %1662 = vmatprep.subr.bf16.mxu0 %v1204
        %1663 = vmatpush1.bf16.msra.mxu0 %v1203
        %1664 = vmatprep.subr.bf16.mxu0 %v1212
        %1665 = vmatpush1.bf16.msra.mxu0 %v1211
        %1666 = vmatprep.subr.bf16.mxu0 0
        %1667 = vmatpush1.bf16.msra.mxu0 0
        %1668 = vmatprep.subr.bf16.mxu0 0
        %1669 = vmatpush1.bf16.msra.mxu0 0
        %1670 = vmatprep.subr.bf16.mxu0 0
        %1671 = vmatpush1.bf16.msra.mxu0 0
        %1672 = vmatprep.subr.bf16.mxu0 0
        %1673 = vmatpush1.bf16.msra.mxu0 0
        %1674 = vmatprep.subr.bf16.mxu0 0
        %1675 = vmatpush1.bf16.msra.mxu0 0
        %1676 = vmatprep.subr.bf16.mxu0 0
        %1677 = vmatpush1.bf16.msra.mxu0 0
        %1678 = vmatprep.subr.bf16.mxu0 0
        %1679 = vmatpush1.bf16.msra.mxu0 0
        %1680 = vmatprep.subr.bf16.mxu0 0
        %1681 = vmatpush1.bf16.msra.mxu0 0
        %1682 = vmatprep.subr.bf16.mxu0 0
        %1683 = vmatpush1.bf16.msra.mxu0 0
        %1684 = vmatprep.subr.bf16.mxu0 0
        %1685 = vmatpush1.bf16.msra.mxu0 0
        %1686 = vmatprep.subr.bf16.mxu0 0
        %1687 = vmatpush1.bf16.msra.mxu0 0
        %1688 = vmatprep.subr.bf16.mxu0 0
        %1689 = vmatpush1.bf16.msra.mxu0 0
        %1690 = vmatprep.subr.bf16.mxu0 0
        %1691 = vmatpush1.bf16.msra.mxu0 0
        %1692 = vmatprep.subr.bf16.mxu0 0
        %1693 = vmatpush1.bf16.msra.mxu0 0
        %1694 = vmatprep.mubr.bf16.mxu0 0
        %1695 = vmatmul.mubr.bf16.gmra.mrb[0].mxu0 %v1359
        %v1696 = vpop.f32.mrb[0].mxu0
        %v1697 = vadd.f32 %v1654, %v1696
        %v1698 = vpop.f32.mrb[0].mxu0
        %v1699 = vadd.f32 %v1656, %v1698
        %v1700 = vpop.f32.mrb[0].mxu0
        %v1701 = vadd.f32 %v1658, %v1700
        %v1702 = vpop.f32.mrb[0].mxu0
        %v1703 = vadd.f32 %v1660, %v1702
        %1704 = vdwg.mxu0
        %v1705 = vld [vmem:[%s2] sm:$0xff]
        %v1706 = vld [vmem:[%s2 + $0x8] sm:$0xff]
        %1708 = vset.pattern.permute.xlu0 0
        %1709 = vperm.xlu0 %1708, %v1705
        %v1710 = vpop.permute.xlu0 %1709
        %1713 = vset.pattern.permute.xlu0 0
        %1714 = vperm.xlu0 %1713, %v1706
        %v1715 = vpop.permute.xlu0 %1714
        %v1717 = vmul.f32 %v1439, %v1710
        %v1718 = vmul.f32 %v1441, %v1710
        %v1719 = vmul.f32 %v1525, %v1710
        %v1720 = vmul.f32 %v1527, %v1710
        %v1721 = vmul.f32 %v1611, %v1710
        %v1722 = vmul.f32 %v1613, %v1710
        %v1723 = vmul.f32 %v1697, %v1710
        %v1724 = vmul.f32 %v1699, %v1710
        %v1725 = vmul.f32 %v1443, %v1715
        %v1726 = vmul.f32 %v1445, %v1715
        %v1727 = vmul.f32 %v1529, %v1715
        %v1728 = vmul.f32 %v1531, %v1715
        %v1729 = vmul.f32 %v1615, %v1715
        %v1730 = vmul.f32 %v1617, %v1715
        %v1731 = vmul.f32 %v1701, %v1715
        %v1732 = vmul.f32 %v1703, %v1715
        %1733 = vset.pattern.permute.xlu0 1
        %1734 = vperm.xlu0 %1733, %v1705
        %v1735 = vpop.permute.xlu0 %1734
        %1737 = vset.pattern.permute.xlu0 1
        %1738 = vperm.xlu0 %1737, %v1706
        %v1739 = vpop.permute.xlu0 %1738
        %v1741 = vadd.f32 %v1717, %v1735
        %v1742 = vadd.f32 %v1718, %v1735
        %v1743 = vadd.f32 %v1719, %v1735
        %v1744 = vadd.f32 %v1720, %v1735
        %v1745 = vadd.f32 %v1721, %v1735
        %v1746 = vadd.f32 %v1722, %v1735
        %v1747 = vadd.f32 %v1723, %v1735
        %v1748 = vadd.f32 %v1724, %v1735
        %v1749 = vadd.f32 %v1725, %v1739
        %v1750 = vadd.f32 %v1726, %v1739
        %v1751 = vadd.f32 %v1727, %v1739
        %v1752 = vadd.f32 %v1728, %v1739
        %v1753 = vadd.f32 %v1729, %v1739
        %v1754 = vadd.f32 %v1730, %v1739
        %v1755 = vadd.f32 %v1731, %v1739
        %v1756 = vadd.f32 %v1732, %v1739
        %vm1757 = vcmp.ge.f32.partialorder %v1741, 0.0
        %vm1758 = vcmp.ge.f32.partialorder %v1742, 0.0
        %vm1759 = vcmp.ge.f32.partialorder %v1743, 0.0
        %vm1760 = vcmp.ge.f32.partialorder %v1744, 0.0
        %vm1761 = vcmp.ge.f32.partialorder %v1745, 0.0
        %vm1762 = vcmp.ge.f32.partialorder %v1746, 0.0
        %vm1763 = vcmp.ge.f32.partialorder %v1747, 0.0
        %vm1764 = vcmp.ge.f32.partialorder %v1748, 0.0
        %vm1765 = vcmp.ge.f32.partialorder %v1749, 0.0
        %vm1766 = vcmp.ge.f32.partialorder %v1750, 0.0
        %vm1767 = vcmp.ge.f32.partialorder %v1751, 0.0
        %vm1768 = vcmp.ge.f32.partialorder %v1752, 0.0
        %vm1769 = vcmp.ge.f32.partialorder %v1753, 0.0
        %vm1770 = vcmp.ge.f32.partialorder %v1754, 0.0
        %vm1771 = vcmp.ge.f32.partialorder %v1755, 0.0
        %vm1772 = vcmp.ge.f32.partialorder %v1756, 0.0
        %v1773 = vmul.f32 %v1741, 0.2
        %v1774 = vmul.f32 %v1742, 0.2
        %v1775 = vmul.f32 %v1743, 0.2
        %v1776 = vmul.f32 %v1744, 0.2
        %v1777 = vmul.f32 %v1745, 0.2
        %v1778 = vmul.f32 %v1746, 0.2
        %v1779 = vmul.f32 %v1747, 0.2
        %v1780 = vmul.f32 %v1748, 0.2
        %v1781 = vmul.f32 %v1749, 0.2
        %v1782 = vmul.f32 %v1750, 0.2
        %v1783 = vmul.f32 %v1751, 0.2
        %v1784 = vmul.f32 %v1752, 0.2
        %v1785 = vmul.f32 %v1753, 0.2
        %v1786 = vmul.f32 %v1754, 0.2
        %v1787 = vmul.f32 %v1755, 0.2
        %v1788 = vmul.f32 %v1756, 0.2
        %v1789 = vsel %vm1757, %v1741, %v1773
        %v1790 = vsel %vm1758, %v1742, %v1774
        %v1791 = vsel %vm1759, %v1743, %v1775
        %v1792 = vsel %vm1760, %v1744, %v1776
        %v1793 = vsel %vm1761, %v1745, %v1777
        %v1794 = vsel %vm1762, %v1746, %v1778
        %v1795 = vsel %vm1763, %v1747, %v1779
        %v1796 = vsel %vm1764, %v1748, %v1780
        %v1797 = vsel %vm1765, %v1749, %v1781
        %v1798 = vsel %vm1766, %v1750, %v1782
        %v1799 = vsel %vm1767, %v1751, %v1783
        %v1800 = vsel %vm1768, %v1752, %v1784
        %v1801 = vsel %vm1769, %v1753, %v1785
        %v1802 = vsel %vm1770, %v1754, %v1786
        %v1803 = vsel %vm1771, %v1755, %v1787
        %v1804 = vsel %vm1772, %v1756, %v1788
        %v1805 = vpack.c.bf16 %v1797, %v1789
        %v1806 = vpack.c.bf16 %v1798, %v1790
        %v1807 = vpack.c.bf16 %v1799, %v1791
        %v1808 = vpack.c.bf16 %v1800, %v1792
        %v1809 = vpack.c.bf16 %v1801, %v1793
        %v1810 = vpack.c.bf16 %v1802, %v1794
        %v1811 = vpack.c.bf16 %v1803, %v1795
        %v1812 = vpack.c.bf16 %v1804, %v1796
        %v1821 = vunpack.c.l.b16 %v1805
        %v1822 = vunpack.c.l.b16 %v1806
        %v1823 = vunpack.c.l.b16 %v1807
        %v1824 = vunpack.c.l.b16 %v1808
        %v1825 = vunpack.c.l.b16 %v1809
        %v1826 = vunpack.c.l.b16 %v1810
        %v1827 = vunpack.c.l.b16 %v1811
        %v1828 = vunpack.c.l.b16 %v1812
        %v1829 = vunpack.c.h.b16 %v1805
        %v1830 = vunpack.c.h.b16 %v1806
        %v1831 = vunpack.c.h.b16 %v1807
        %v1832 = vunpack.c.h.b16 %v1808
        %v1833 = vunpack.c.h.b16 %v1809
        %v1834 = vunpack.c.h.b16 %v1810
        %v1835 = vunpack.c.h.b16 %v1811
        %v1836 = vunpack.c.h.b16 %v1812
        %v1837 = vpack.c.b16 %v1822, %v1821
        %v1838 = vpack.c.b16 %v1824, %v1823
        %v1839 = vpack.c.b16 %v1826, %v1825
        %v1840 = vpack.c.b16 %v1828, %v1827
        %v1841 = vpack.c.b16 %v1830, %v1829
        %v1842 = vpack.c.b16 %v1832, %v1831
        %v1843 = vpack.c.b16 %v1834, %v1833
        %v1844 = vpack.c.b16 %v1836, %v1835
        %1853 = vst [vmem:[%s470] sm:$0xff] %v1837
        %1854 = vst [vmem:[%s470 + $0x8] sm:$0xff] %v1838
        %1855 = vst [vmem:[%s470 + $0x10] sm:$0xff] %v1839
        %1856 = vst [vmem:[%s470 + $0x18] sm:$0xff] %v1840
        %1857 = vst [vmem:[%s470 + $0x20] sm:$0xff] %v1841
        %1858 = vst [vmem:[%s470 + $0x28] sm:$0xff] %v1842
        %1859 = vst [vmem:[%s470 + $0x30] sm:$0xff] %v1843
        %1860 = vst [vmem:[%s470 + $0x38] sm:$0xff] %v1844
        %s1861 = sand.u32 %s90, 1
        %s1862 = sand.u32 %s90, 1
        %s1863 = smul.addr %s1862, 64
        %s1864 = scalar_lea.vmem [#allocation3], %s1863
        // Predicated region
        $region56: #{_lambda_.7} parent=50 // pred_check
          %p1865 = pneg %p100
        $region57: #{_lambda_.7} parent=50 // pred_check_branch
          %1867 = sbr.rel (%p1865) target = $region59
        $region58: #{_lambda_.7} parent=50 // pred_region
          %s1868 = smul.u32 8, %s14
          %s1869 = smul.addr %s1868, 4
          %s1870 = scalar_lea.vmem %s3, %s1869
          // Predicated region
          $region60: #{_lambda_.7} parent=58 // pred_check
            _
          $region61: #{_lambda_.7} parent=58 // pred_check_branch
            %1872 = sbr.rel (0) target = $region63
          $region62: #{_lambda_.7} parent=58 // pred_region
            // Predicated region
            $region64: #{_lambda_.7} parent=62 // pred_check
              _
            $region65: #{_lambda_.7} parent=62 // pred_check_branch
              %1874 = sbr.rel (0) target = $region67
            $region66: #{_lambda_.7} parent=62 // pred_region
              loop: start=0, step=1, limit=1
              $region68: #{_lambda_.7} parent=66 // loop_pre_header
                _
              $region69: #{_lambda_.7} parent=66 // loop_header
                %s1876 = sphi 0, %s1880
                %p1877 = scmp.ge.s32.totalorder %s1876, 1
                %s1881 = sphi %s1864, %s1864
                %s1882 = sphi %s1870, %s1870
              $region70: #{_lambda_.7} parent=66 // loop_header_branch
                %1879 = sbr.rel (%p1877) target = $region74
              $region71: #{_lambda_.7} parent=66 // loop_body
                %v1883 = vld [vmem:[%s1881] sm:$0xff]
                %1884 = vst [vmem:[%s1882] sm:$0xff] %v1883
                %v1885 = vld [vmem:[%s1881 + $0x8] sm:$0xff]
                %1886 = vst [vmem:[%s1882 + $0x8] sm:$0xff] %v1885
                %v1887 = vld [vmem:[%s1881 + $0x10] sm:$0xff]
                %1888 = vst [vmem:[%s1882 + $0x10] sm:$0xff] %v1887
                %v1889 = vld [vmem:[%s1881 + $0x18] sm:$0xff]
                %1890 = vst [vmem:[%s1882 + $0x18] sm:$0xff] %v1889
                %v1891 = vld [vmem:[%s1881 + $0x20] sm:$0xff]
                %1892 = vst [vmem:[%s1882 + $0x40] sm:$0xff] %v1891
                %v1893 = vld [vmem:[%s1881 + $0x28] sm:$0xff]
                %1894 = vst [vmem:[%s1882 + $0x48] sm:$0xff] %v1893
                %v1895 = vld [vmem:[%s1881 + $0x30] sm:$0xff]
                %1896 = vst [vmem:[%s1882 + $0x50] sm:$0xff] %v1895
                %v1897 = vld [vmem:[%s1881 + $0x38] sm:$0xff]
                %1898 = vst [vmem:[%s1882 + $0x58] sm:$0xff] %v1897
              $region72: #{_lambda_.7} parent=66 // loop_footer
                %s1880 = sadd.s32 1, %s1876
              $region73: #{_lambda_.7} parent=66 // loop_footer_branch
                %1875 = sbr.rel target = $region69
              $region74: #{_lambda_.7} parent=66 // loop_exit
                _
            $region67: #{_lambda_.7} parent=62 // pred_fallthru
              _
            // Predicated region
            $region75: #{_lambda_.7} parent=62 // pred_check
              _
            $region76: #{_lambda_.7} parent=62 // pred_check_branch
              %1900 = sbr.rel target = $region78
            $region77: #{_lambda_.7} parent=62 // pred_region
              _
            $region78: #{_lambda_.7} parent=62 // pred_fallthru
              _
          $region63: #{_lambda_.7} parent=58 // pred_fallthru
            _
          %1901 = vnop
        $region59: #{_lambda_.7} parent=50 // pred_fallthru
          _
      $region51: #{_lambda_.7} parent=5 // pred_fallthru
        _
      %p1902 = scmp.le.s32.totalorder 2, %s9
      // Predicated region
      $region79: #{_lambda_.7} parent=5 // pred_check
        %p1903 = pneg %p1902
      $region80: #{_lambda_.7} parent=5 // pred_check_branch
        %1905 = sbr.rel (%p1903) target = $region82
      $region81: #{_lambda_.7} parent=5 // pred_region
        %s1906 = ssub.s32 %s9, 2
        // Predicated region
        $region83: #{_lambda_.7} parent=81 // pred_check
          %p1907 = pneg %p106
        $region84: #{_lambda_.7} parent=81 // pred_check_branch
          %1909 = sbr.rel (%p1907) target = $region86
        $region85: #{_lambda_.7} parent=81 // pred_region
          %s1910 = sand.u32 %s91, 1
          %s1911 = sand.u32 %s91, 1
          %s1912 = smul.addr %s1911, 64
          %s1913 = scalar_lea.vmem [#allocation3], %s1912
        $region86: #{_lambda_.7} parent=81 // pred_fallthru
          _
      $region82: #{_lambda_.7} parent=5 // pred_fallthru
        _
    $region6: #{_lambda_.7} parent=1 // loop_footer
      %s13 = sadd.s32 1, %s9
    $region7: #{_lambda_.7} parent=1 // loop_footer_branch
      %8 = sbr.rel target = $region3
    $region8: #{_lambda_.7} parent=1 // loop_exit
      _

// kernel: _lambda_.8
$region0: #{_lambda_.8}
  #allocation0 [shape = 'u32[]', space=smem, size = 0x4, offset = 0x4, fixed_abs, tag = 'smem constant byte address 0x4 - core index']
  #allocation1 [shape = 'u32[144,128]{1,0:T(1,128)}', space=vmem, size = 0x12000, scoped, tag = 'internal scratch']
  %s0 = inlined_call_operand.vmem [shape: bf16[32,576], index: 0, kind: input, shape index: {}]
  %s1 = inlined_call_operand.vmem [shape: bf16[576,512], index: 1, kind: input, shape index: {}]
  %s2 = inlined_call_operand.vmem [shape: f32[32,2], index: 2, kind: input, shape index: {}]
  %s3 = inlined_call_operand.vmem [shape: bf16[32,512], index: 3, kind: output, shape index: {}]
  %s4 = sld [smem:[#allocation0]]
  $region22: #{_lambda_.8} parent=0
    _
  %s6 = ssub.s32 1, %s4
  %s7 = scalar_select 0, %s6, %s4
  // Predicated region
  $region2: #{_lambda_.8} parent=0 // pred_check
    _
  $region3: #{_lambda_.8} parent=0 // pred_check_branch
    %9 = sbr.rel (0) target = $region5
  $region4: #{_lambda_.8} parent=0 // pred_region
    _
  $region5: #{_lambda_.8} parent=0 // pred_fallthru
    _
  // Predicated region
  $region6: #{_lambda_.8} parent=0 // pred_check
    _
  $region7: #{_lambda_.8} parent=0 // pred_check_branch
    %11 = sbr.rel (0) target = $region9
  $region8: #{_lambda_.8} parent=0 // pred_region
    _
  $region9: #{_lambda_.8} parent=0 // pred_fallthru
    _
  // Predicated region
  $region10: #{_lambda_.8} parent=0 // pred_check
    _
  $region11: #{_lambda_.8} parent=0 // pred_check_branch
    %13 = sbr.rel (0) target = $region13
  $region12: #{_lambda_.8} parent=0 // pred_region
    _
  $region13: #{_lambda_.8} parent=0 // pred_fallthru
    _
  %v15 = vld [vmem:[%s0] sm:$0xff]
  %v16 = vld [vmem:[%s0 + $0x8] sm:$0xff]
  %v17 = vld [vmem:[%s0 + $0x10] sm:$0xf]
  %v18 = vld [vmem:[%s0 + $0x14] sm:$0xff]
  %v19 = vld [vmem:[%s0 + $0x1c] sm:$0xff]
  %v20 = vld [vmem:[%s0 + $0x24] sm:$0xf]
  %v21 = vld [vmem:[%s0 + $0x28] sm:$0xff]
  %v22 = vld [vmem:[%s0 + $0x30] sm:$0xff]
  %v23 = vld [vmem:[%s0 + $0x38] sm:$0xf]
  %v24 = vld [vmem:[%s0 + $0x3c] sm:$0xff]
  %v25 = vld [vmem:[%s0 + $0x44] sm:$0xff]
  %v26 = vld [vmem:[%s0 + $0x4c] sm:$0xf]
  %v27 = vld [vmem:[%s1] sm:$0xff]
  %v28 = vld [vmem:[%s1 + $0x8] sm:$0xff]
  %v29 = vld [vmem:[%s1 + $0x10] sm:$0xff]
  %v30 = vld [vmem:[%s1 + $0x18] sm:$0xff]
  %v31 = vld [vmem:[%s1 + $0x20] sm:$0xff]
  %v32 = vld [vmem:[%s1 + $0x28] sm:$0xff]
  %v33 = vld [vmem:[%s1 + $0x30] sm:$0xff]
  %v34 = vld [vmem:[%s1 + $0x38] sm:$0xff]
  %v35 = vld [vmem:[%s1 + $0x40] sm:$0xff]
  %v36 = vld [vmem:[%s1 + $0x48] sm:$0xff]
  %v37 = vld [vmem:[%s1 + $0x50] sm:$0xff]
  %v38 = vld [vmem:[%s1 + $0x58] sm:$0xff]
  %v39 = vld [vmem:[%s1 + $0x60] sm:$0xff]
  %v40 = vld [vmem:[%s1 + $0x68] sm:$0xff]
  %v41 = vld [vmem:[%s1 + $0x70] sm:$0xff]
  %v42 = vld [vmem:[%s1 + $0x78] sm:$0xff]
  %v43 = vld [vmem:[%s1 + $0x80] sm:$0xff]
  %v44 = vld [vmem:[%s1 + $0x88] sm:$0xff]
  %v45 = vld [vmem:[%s1 + $0x90] sm:$0xff]
  %v46 = vld [vmem:[%s1 + $0x98] sm:$0xff]
  %v47 = vld [vmem:[%s1 + $0xa0] sm:$0xff]
  %v48 = vld [vmem:[%s1 + $0xa8] sm:$0xff]
  %v49 = vld [vmem:[%s1 + $0xb0] sm:$0xff]
  %v50 = vld [vmem:[%s1 + $0xb8] sm:$0xff]
  %v51 = vld [vmem:[%s1 + $0xc0] sm:$0xff]
  %v52 = vld [vmem:[%s1 + $0xc8] sm:$0xff]
  %v53 = vld [vmem:[%s1 + $0xd0] sm:$0xff]
  %v54 = vld [vmem:[%s1 + $0xd8] sm:$0xff]
  %v55 = vld [vmem:[%s1 + $0xe0] sm:$0xff]
  %v56 = vld [vmem:[%s1 + $0xe8] sm:$0xff]
  %v57 = vld [vmem:[%s1 + $0xf0] sm:$0xff]
  %v58 = vld [vmem:[%s1 + $0xf8] sm:$0xff]
  %v59 = vld [vmem:[%s1 + $0x100] sm:$0xff]
  %v60 = vld [vmem:[%s1 + $0x108] sm:$0xff]
  %v61 = vld [vmem:[%s1 + $0x110] sm:$0xff]
  %v62 = vld [vmem:[%s1 + $0x118] sm:$0xff]
  %v63 = vld [vmem:[%s1 + $0x120] sm:$0xff]
  %v64 = vld [vmem:[%s1 + $0x128] sm:$0xff]
  %v65 = vld [vmem:[%s1 + $0x130] sm:$0xff]
  %v66 = vld [vmem:[%s1 + $0x138] sm:$0xff]
  %v67 = vld [vmem:[%s1 + $0x140] sm:$0xff]
  %v68 = vld [vmem:[%s1 + $0x148] sm:$0xff]
  %v69 = vld [vmem:[%s1 + $0x150] sm:$0xff]
  %v70 = vld [vmem:[%s1 + $0x158] sm:$0xff]
  %v71 = vld [vmem:[%s1 + $0x160] sm:$0xff]
  %v72 = vld [vmem:[%s1 + $0x168] sm:$0xff]
  %v73 = vld [vmem:[%s1 + $0x170] sm:$0xff]
  %v74 = vld [vmem:[%s1 + $0x178] sm:$0xff]
  %v75 = vld [vmem:[%s1 + $0x180] sm:$0xff]
  %v76 = vld [vmem:[%s1 + $0x188] sm:$0xff]
  %v77 = vld [vmem:[%s1 + $0x190] sm:$0xff]
  %v78 = vld [vmem:[%s1 + $0x198] sm:$0xff]
  %v79 = vld [vmem:[%s1 + $0x1a0] sm:$0xff]
  %v80 = vld [vmem:[%s1 + $0x1a8] sm:$0xff]
  %v81 = vld [vmem:[%s1 + $0x1b0] sm:$0xff]
  %v82 = vld [vmem:[%s1 + $0x1b8] sm:$0xff]
  %v83 = vld [vmem:[%s1 + $0x1c0] sm:$0xff]
  %v84 = vld [vmem:[%s1 + $0x1c8] sm:$0xff]
  %v85 = vld [vmem:[%s1 + $0x1d0] sm:$0xff]
  %v86 = vld [vmem:[%s1 + $0x1d8] sm:$0xff]
  %v87 = vld [vmem:[%s1 + $0x1e0] sm:$0xff]
  %v88 = vld [vmem:[%s1 + $0x1e8] sm:$0xff]
  %v89 = vld [vmem:[%s1 + $0x1f0] sm:$0xff]
  %v90 = vld [vmem:[%s1 + $0x1f8] sm:$0xff]
  %v91 = vld [vmem:[%s1 + $0x200] sm:$0xff]
  %v92 = vld [vmem:[%s1 + $0x208] sm:$0xff]
  %v93 = vld [vmem:[%s1 + $0x210] sm:$0xff]
  %v94 = vld [vmem:[%s1 + $0x218] sm:$0xff]
  %v95 = vld [vmem:[%s1 + $0x220] sm:$0xff]
  %v96 = vld [vmem:[%s1 + $0x228] sm:$0xff]
  %v97 = vld [vmem:[%s1 + $0x230] sm:$0xff]
  %v98 = vld [vmem:[%s1 + $0x238] sm:$0xff]
  %v99 = vld [vmem:[%s1 + $0x240] sm:$0xff]
  %v100 = vld [vmem:[%s1 + $0x248] sm:$0xff]
  %v101 = vld [vmem:[%s1 + $0x250] sm:$0xff]
  %v102 = vld [vmem:[%s1 + $0x258] sm:$0xff]
  %v103 = vld [vmem:[%s1 + $0x260] sm:$0xff]
  %v104 = vld [vmem:[%s1 + $0x268] sm:$0xff]
  %v105 = vld [vmem:[%s1 + $0x270] sm:$0xff]
  %v106 = vld [vmem:[%s1 + $0x278] sm:$0xff]
  %v107 = vld [vmem:[%s1 + $0x280] sm:$0xff]
  %v108 = vld [vmem:[%s1 + $0x288] sm:$0xff]
  %v109 = vld [vmem:[%s1 + $0x290] sm:$0xff]
  %v110 = vld [vmem:[%s1 + $0x298] sm:$0xff]
  %v111 = vld [vmem:[%s1 + $0x2a0] sm:$0xff]
  %v112 = vld [vmem:[%s1 + $0x2a8] sm:$0xff]
  %v113 = vld [vmem:[%s1 + $0x2b0] sm:$0xff]
  %v114 = vld [vmem:[%s1 + $0x2b8] sm:$0xff]
  %v115 = vld [vmem:[%s1 + $0x2c0] sm:$0xff]
  %v116 = vld [vmem:[%s1 + $0x2c8] sm:$0xff]
  %v117 = vld [vmem:[%s1 + $0x2d0] sm:$0xff]
  %v118 = vld [vmem:[%s1 + $0x2d8] sm:$0xff]
  %v119 = vld [vmem:[%s1 + $0x2e0] sm:$0xff]
  %v120 = vld [vmem:[%s1 + $0x2e8] sm:$0xff]
  %v121 = vld [vmem:[%s1 + $0x2f0] sm:$0xff]
  %v122 = vld [vmem:[%s1 + $0x2f8] sm:$0xff]
  %v123 = vld [vmem:[%s1 + $0x300] sm:$0xff]
  %v124 = vld [vmem:[%s1 + $0x308] sm:$0xff]
  %v125 = vld [vmem:[%s1 + $0x310] sm:$0xff]
  %v126 = vld [vmem:[%s1 + $0x318] sm:$0xff]
  %v127 = vld [vmem:[%s1 + $0x320] sm:$0xff]
  %v128 = vld [vmem:[%s1 + $0x328] sm:$0xff]
  %v129 = vld [vmem:[%s1 + $0x330] sm:$0xff]
  %v130 = vld [vmem:[%s1 + $0x338] sm:$0xff]
  %v131 = vld [vmem:[%s1 + $0x340] sm:$0xff]
  %v132 = vld [vmem:[%s1 + $0x348] sm:$0xff]
  %v133 = vld [vmem:[%s1 + $0x350] sm:$0xff]
  %v134 = vld [vmem:[%s1 + $0x358] sm:$0xff]
  %v135 = vld [vmem:[%s1 + $0x360] sm:$0xff]
  %v136 = vld [vmem:[%s1 + $0x368] sm:$0xff]
  %v137 = vld [vmem:[%s1 + $0x370] sm:$0xff]
  %v138 = vld [vmem:[%s1 + $0x378] sm:$0xff]
  %v139 = vld [vmem:[%s1 + $0x380] sm:$0xff]
  %v140 = vld [vmem:[%s1 + $0x388] sm:$0xff]
  %v141 = vld [vmem:[%s1 + $0x390] sm:$0xff]
  %v142 = vld [vmem:[%s1 + $0x398] sm:$0xff]
  %v143 = vld [vmem:[%s1 + $0x3a0] sm:$0xff]
  %v144 = vld [vmem:[%s1 + $0x3a8] sm:$0xff]
  %v145 = vld [vmem:[%s1 + $0x3b0] sm:$0xff]
  %v146 = vld [vmem:[%s1 + $0x3b8] sm:$0xff]
  %v147 = vld [vmem:[%s1 + $0x3c0] sm:$0xff]
  %v148 = vld [vmem:[%s1 + $0x3c8] sm:$0xff]
  %v149 = vld [vmem:[%s1 + $0x3d0] sm:$0xff]
  %v150 = vld [vmem:[%s1 + $0x3d8] sm:$0xff]
  %v151 = vld [vmem:[%s1 + $0x3e0] sm:$0xff]
  %v152 = vld [vmem:[%s1 + $0x3e8] sm:$0xff]
  %v153 = vld [vmem:[%s1 + $0x3f0] sm:$0xff]
  %v154 = vld [vmem:[%s1 + $0x3f8] sm:$0xff]
  %v155 = vld [vmem:[%s1 + $0x400] sm:$0xff]
  %v156 = vld [vmem:[%s1 + $0x408] sm:$0xff]
  %v157 = vld [vmem:[%s1 + $0x410] sm:$0xff]
  %v158 = vld [vmem:[%s1 + $0x418] sm:$0xff]
  %v159 = vld [vmem:[%s1 + $0x420] sm:$0xff]
  %v160 = vld [vmem:[%s1 + $0x428] sm:$0xff]
  %v161 = vld [vmem:[%s1 + $0x430] sm:$0xff]
  %v162 = vld [vmem:[%s1 + $0x438] sm:$0xff]
  %v163 = vld [vmem:[%s1 + $0x440] sm:$0xff]
  %v164 = vld [vmem:[%s1 + $0x448] sm:$0xff]
  %v165 = vld [vmem:[%s1 + $0x450] sm:$0xff]
  %v166 = vld [vmem:[%s1 + $0x458] sm:$0xff]
  %v167 = vld [vmem:[%s1 + $0x460] sm:$0xff]
  %v168 = vld [vmem:[%s1 + $0x468] sm:$0xff]
  %v169 = vld [vmem:[%s1 + $0x470] sm:$0xff]
  %v170 = vld [vmem:[%s1 + $0x478] sm:$0xff]
  %v183 = vunpack.c.l.b16 %v15
  %v184 = vunpack.c.h.b16 %v15
  %v185 = vunpack.c.l.b16 %v16
  %v186 = vunpack.c.h.b16 %v16
  %v187 = vunpack.c.l.b16 %v17
  %v188 = vunpack.c.l.b16 %v18
  %v189 = vunpack.c.h.b16 %v18
  %v190 = vunpack.c.l.b16 %v19
  %v191 = vunpack.c.h.b16 %v19
  %v192 = vunpack.c.l.b16 %v20
  %v193 = vunpack.c.l.b16 %v21
  %v194 = vunpack.c.h.b16 %v21
  %v195 = vunpack.c.l.b16 %v22
  %v196 = vunpack.c.h.b16 %v22
  %v197 = vunpack.c.l.b16 %v23
  %v198 = vunpack.c.l.b16 %v24
  %v199 = vunpack.c.h.b16 %v24
  %v200 = vunpack.c.l.b16 %v25
  %v201 = vunpack.c.h.b16 %v25
  %v202 = vunpack.c.l.b16 %v26
  %v203 = vpack.c.b16 %v188, %v183
  %v204 = vpack.c.b16 %v189, %v184
  %v205 = vpack.c.b16 %v190, %v185
  %v206 = vpack.c.b16 %v191, %v186
  %v207 = vpack.c.b16 %v192, %v187
  %v208 = vpack.c.b16 %v198, %v193
  %v209 = vpack.c.b16 %v199, %v194
  %v210 = vpack.c.b16 %v200, %v195
  %v211 = vpack.c.b16 %v201, %v196
  %v212 = vpack.c.b16 %v202, %v197
  %v365 = vunpack.c.l.b16 %v27
  %v366 = vunpack.c.h.b16 %v27
  %v367 = vunpack.c.l.b16 %v28
  %v368 = vunpack.c.h.b16 %v28
  %v369 = vunpack.c.l.b16 %v29
  %v370 = vunpack.c.h.b16 %v29
  %v371 = vunpack.c.l.b16 %v30
  %v372 = vunpack.c.h.b16 %v30
  %v373 = vunpack.c.l.b16 %v31
  %v374 = vunpack.c.h.b16 %v31
  %v375 = vunpack.c.l.b16 %v32
  %v376 = vunpack.c.h.b16 %v32
  %v377 = vunpack.c.l.b16 %v33
  %v378 = vunpack.c.h.b16 %v33
  %v379 = vunpack.c.l.b16 %v34
  %v380 = vunpack.c.h.b16 %v34
  %v381 = vunpack.c.l.b16 %v35
  %v382 = vunpack.c.h.b16 %v35
  %v383 = vunpack.c.l.b16 %v36
  %v384 = vunpack.c.h.b16 %v36
  %v385 = vunpack.c.l.b16 %v37
  %v386 = vunpack.c.h.b16 %v37
  %v387 = vunpack.c.l.b16 %v38
  %v388 = vunpack.c.h.b16 %v38
  %v389 = vunpack.c.l.b16 %v39
  %v390 = vunpack.c.h.b16 %v39
  %v391 = vunpack.c.l.b16 %v40
  %v392 = vunpack.c.h.b16 %v40
  %v393 = vunpack.c.l.b16 %v41
  %v394 = vunpack.c.h.b16 %v41
  %v395 = vunpack.c.l.b16 %v42
  %v396 = vunpack.c.h.b16 %v42
  %v397 = vunpack.c.l.b16 %v43
  %v398 = vunpack.c.h.b16 %v43
  %v399 = vunpack.c.l.b16 %v44
  %v400 = vunpack.c.h.b16 %v44
  %v401 = vunpack.c.l.b16 %v45
  %v402 = vunpack.c.h.b16 %v45
  %v403 = vunpack.c.l.b16 %v46
  %v404 = vunpack.c.h.b16 %v46
  %v405 = vunpack.c.l.b16 %v47
  %v406 = vunpack.c.h.b16 %v47
  %v407 = vunpack.c.l.b16 %v48
  %v408 = vunpack.c.h.b16 %v48
  %v409 = vunpack.c.l.b16 %v49
  %v410 = vunpack.c.h.b16 %v49
  %v411 = vunpack.c.l.b16 %v50
  %v412 = vunpack.c.h.b16 %v50
  %v413 = vunpack.c.l.b16 %v51
  %v414 = vunpack.c.h.b16 %v51
  %v415 = vunpack.c.l.b16 %v52
  %v416 = vunpack.c.h.b16 %v52
  %v417 = vunpack.c.l.b16 %v53
  %v418 = vunpack.c.h.b16 %v53
  %v419 = vunpack.c.l.b16 %v54
  %v420 = vunpack.c.h.b16 %v54
  %v421 = vunpack.c.l.b16 %v55
  %v422 = vunpack.c.h.b16 %v55
  %v423 = vunpack.c.l.b16 %v56
  %v424 = vunpack.c.h.b16 %v56
  %v425 = vunpack.c.l.b16 %v57
  %v426 = vunpack.c.h.b16 %v57
  %v427 = vunpack.c.l.b16 %v58
  %v428 = vunpack.c.h.b16 %v58
  %v429 = vunpack.c.l.b16 %v59
  %v430 = vunpack.c.h.b16 %v59
  %v431 = vunpack.c.l.b16 %v60
  %v432 = vunpack.c.h.b16 %v60
  %v433 = vunpack.c.l.b16 %v61
  %v434 = vunpack.c.h.b16 %v61
  %v435 = vunpack.c.l.b16 %v62
  %v436 = vunpack.c.h.b16 %v62
  %v437 = vunpack.c.l.b16 %v63
  %v438 = vunpack.c.h.b16 %v63
  %v439 = vunpack.c.l.b16 %v64
  %v440 = vunpack.c.h.b16 %v64
  %v441 = vunpack.c.l.b16 %v65
  %v442 = vunpack.c.h.b16 %v65
  %v443 = vunpack.c.l.b16 %v66
  %v444 = vunpack.c.h.b16 %v66
  %v445 = vunpack.c.l.b16 %v67
  %v446 = vunpack.c.h.b16 %v67
  %v447 = vunpack.c.l.b16 %v68
  %v448 = vunpack.c.h.b16 %v68
  %v449 = vunpack.c.l.b16 %v69
  %v450 = vunpack.c.h.b16 %v69
  %v451 = vunpack.c.l.b16 %v70
  %v452 = vunpack.c.h.b16 %v70
  %v453 = vunpack.c.l.b16 %v71
  %v454 = vunpack.c.h.b16 %v71
  %v455 = vunpack.c.l.b16 %v72
  %v456 = vunpack.c.h.b16 %v72
  %v457 = vunpack.c.l.b16 %v73
  %v458 = vunpack.c.h.b16 %v73
  %v459 = vunpack.c.l.b16 %v74
  %v460 = vunpack.c.h.b16 %v74
  %v461 = vunpack.c.l.b16 %v75
  %v462 = vunpack.c.h.b16 %v75
  %v463 = vunpack.c.l.b16 %v76
  %v464 = vunpack.c.h.b16 %v76
  %v465 = vunpack.c.l.b16 %v77
  %v466 = vunpack.c.h.b16 %v77
  %v467 = vunpack.c.l.b16 %v78
  %v468 = vunpack.c.h.b16 %v78
  %v469 = vunpack.c.l.b16 %v79
  %v470 = vunpack.c.h.b16 %v79
  %v471 = vunpack.c.l.b16 %v80
  %v472 = vunpack.c.h.b16 %v80
  %v473 = vunpack.c.l.b16 %v81
  %v474 = vunpack.c.h.b16 %v81
  %v475 = vunpack.c.l.b16 %v82
  %v476 = vunpack.c.h.b16 %v82
  %v477 = vunpack.c.l.b16 %v83
  %v478 = vunpack.c.h.b16 %v83
  %v479 = vunpack.c.l.b16 %v84
  %v480 = vunpack.c.h.b16 %v84
  %v481 = vunpack.c.l.b16 %v85
  %v482 = vunpack.c.h.b16 %v85
  %v483 = vunpack.c.l.b16 %v86
  %v484 = vunpack.c.h.b16 %v86
  %v485 = vunpack.c.l.b16 %v87
  %v486 = vunpack.c.h.b16 %v87
  %v487 = vunpack.c.l.b16 %v88
  %v488 = vunpack.c.h.b16 %v88
  %v489 = vunpack.c.l.b16 %v89
  %v490 = vunpack.c.h.b16 %v89
  %v491 = vunpack.c.l.b16 %v90
  %v492 = vunpack.c.h.b16 %v90
  %v493 = vunpack.c.l.b16 %v91
  %v494 = vunpack.c.h.b16 %v91
  %v495 = vunpack.c.l.b16 %v92
  %v496 = vunpack.c.h.b16 %v92
  %v497 = vunpack.c.l.b16 %v93
  %v498 = vunpack.c.h.b16 %v93
  %v499 = vunpack.c.l.b16 %v94
  %v500 = vunpack.c.h.b16 %v94
  %v501 = vunpack.c.l.b16 %v95
  %v502 = vunpack.c.h.b16 %v95
  %v503 = vunpack.c.l.b16 %v96
  %v504 = vunpack.c.h.b16 %v96
  %v505 = vunpack.c.l.b16 %v97
  %v506 = vunpack.c.h.b16 %v97
  %v507 = vunpack.c.l.b16 %v98
  %v508 = vunpack.c.h.b16 %v98
  %v509 = vunpack.c.l.b16 %v99
  %v510 = vunpack.c.h.b16 %v99
  %v511 = vunpack.c.l.b16 %v100
  %v512 = vunpack.c.h.b16 %v100
  %v513 = vunpack.c.l.b16 %v101
  %v514 = vunpack.c.h.b16 %v101
  %v515 = vunpack.c.l.b16 %v102
  %v516 = vunpack.c.h.b16 %v102
  %v517 = vunpack.c.l.b16 %v103
  %v518 = vunpack.c.h.b16 %v103
  %v519 = vunpack.c.l.b16 %v104
  %v520 = vunpack.c.h.b16 %v104
  %v521 = vunpack.c.l.b16 %v105
  %v522 = vunpack.c.h.b16 %v105
  %v523 = vunpack.c.l.b16 %v106
  %v524 = vunpack.c.h.b16 %v106
  %v525 = vunpack.c.l.b16 %v107
  %v526 = vunpack.c.h.b16 %v107
  %v527 = vunpack.c.l.b16 %v108
  %v528 = vunpack.c.h.b16 %v108
  %v529 = vunpack.c.l.b16 %v109
  %v530 = vunpack.c.h.b16 %v109
  %v531 = vunpack.c.l.b16 %v110
  %v532 = vunpack.c.h.b16 %v110
  %v533 = vunpack.c.l.b16 %v111
  %v534 = vunpack.c.h.b16 %v111
  %v535 = vunpack.c.l.b16 %v112
  %v536 = vunpack.c.h.b16 %v112
  %v537 = vunpack.c.l.b16 %v113
  %v538 = vunpack.c.h.b16 %v113
  %v539 = vunpack.c.l.b16 %v114
  %v540 = vunpack.c.h.b16 %v114
  %v541 = vunpack.c.l.b16 %v115
  %v542 = vunpack.c.h.b16 %v115
  %v543 = vunpack.c.l.b16 %v116
  %v544 = vunpack.c.h.b16 %v116
  %v545 = vunpack.c.l.b16 %v117
  %v546 = vunpack.c.h.b16 %v117
  %v547 = vunpack.c.l.b16 %v118
  %v548 = vunpack.c.h.b16 %v118
  %v549 = vunpack.c.l.b16 %v119
  %v550 = vunpack.c.h.b16 %v119
  %v551 = vunpack.c.l.b16 %v120
  %v552 = vunpack.c.h.b16 %v120
  %v553 = vunpack.c.l.b16 %v121
  %v554 = vunpack.c.h.b16 %v121
  %v555 = vunpack.c.l.b16 %v122
  %v556 = vunpack.c.h.b16 %v122
  %v557 = vunpack.c.l.b16 %v123
  %v558 = vunpack.c.h.b16 %v123
  %v559 = vunpack.c.l.b16 %v124
  %v560 = vunpack.c.h.b16 %v124
  %v561 = vunpack.c.l.b16 %v125
  %v562 = vunpack.c.h.b16 %v125
  %v563 = vunpack.c.l.b16 %v126
  %v564 = vunpack.c.h.b16 %v126
  %v565 = vunpack.c.l.b16 %v127
  %v566 = vunpack.c.h.b16 %v127
  %v567 = vunpack.c.l.b16 %v128
  %v568 = vunpack.c.h.b16 %v128
  %v569 = vunpack.c.l.b16 %v129
  %v570 = vunpack.c.h.b16 %v129
  %v571 = vunpack.c.l.b16 %v130
  %v572 = vunpack.c.h.b16 %v130
  %v573 = vunpack.c.l.b16 %v131
  %v574 = vunpack.c.h.b16 %v131
  %v575 = vunpack.c.l.b16 %v132
  %v576 = vunpack.c.h.b16 %v132
  %v577 = vunpack.c.l.b16 %v133
  %v578 = vunpack.c.h.b16 %v133
  %v579 = vunpack.c.l.b16 %v134
  %v580 = vunpack.c.h.b16 %v134
  %v581 = vunpack.c.l.b16 %v135
  %v582 = vunpack.c.h.b16 %v135
  %v583 = vunpack.c.l.b16 %v136
  %v584 = vunpack.c.h.b16 %v136
  %v585 = vunpack.c.l.b16 %v137
  %v586 = vunpack.c.h.b16 %v137
  %v587 = vunpack.c.l.b16 %v138
  %v588 = vunpack.c.h.b16 %v138
  %v589 = vunpack.c.l.b16 %v139
  %v590 = vunpack.c.h.b16 %v139
  %v591 = vunpack.c.l.b16 %v140
  %v592 = vunpack.c.h.b16 %v140
  %v593 = vunpack.c.l.b16 %v141
  %v594 = vunpack.c.h.b16 %v141
  %v595 = vunpack.c.l.b16 %v142
  %v596 = vunpack.c.h.b16 %v142
  %v597 = vunpack.c.l.b16 %v143
  %v598 = vunpack.c.h.b16 %v143
  %v599 = vunpack.c.l.b16 %v144
  %v600 = vunpack.c.h.b16 %v144
  %v601 = vunpack.c.l.b16 %v145
  %v602 = vunpack.c.h.b16 %v145
  %v603 = vunpack.c.l.b16 %v146
  %v604 = vunpack.c.h.b16 %v146
  %v605 = vunpack.c.l.b16 %v147
  %v606 = vunpack.c.h.b16 %v147
  %v607 = vunpack.c.l.b16 %v148
  %v608 = vunpack.c.h.b16 %v148
  %v609 = vunpack.c.l.b16 %v149
  %v610 = vunpack.c.h.b16 %v149
  %v611 = vunpack.c.l.b16 %v150
  %v612 = vunpack.c.h.b16 %v150
  %v613 = vunpack.c.l.b16 %v151
  %v614 = vunpack.c.h.b16 %v151
  %v615 = vunpack.c.l.b16 %v152
  %v616 = vunpack.c.h.b16 %v152
  %v617 = vunpack.c.l.b16 %v153
  %v618 = vunpack.c.h.b16 %v153
  %v619 = vunpack.c.l.b16 %v154
  %v620 = vunpack.c.h.b16 %v154
  %v621 = vunpack.c.l.b16 %v155
  %v622 = vunpack.c.h.b16 %v155
  %v623 = vunpack.c.l.b16 %v156
  %v624 = vunpack.c.h.b16 %v156
  %v625 = vunpack.c.l.b16 %v157
  %v626 = vunpack.c.h.b16 %v157
  %v627 = vunpack.c.l.b16 %v158
  %v628 = vunpack.c.h.b16 %v158
  %v629 = vunpack.c.l.b16 %v159
  %v630 = vunpack.c.h.b16 %v159
  %v631 = vunpack.c.l.b16 %v160
  %v632 = vunpack.c.h.b16 %v160
  %v633 = vunpack.c.l.b16 %v161
  %v634 = vunpack.c.h.b16 %v161
  %v635 = vunpack.c.l.b16 %v162
  %v636 = vunpack.c.h.b16 %v162
  %v637 = vunpack.c.l.b16 %v163
  %v638 = vunpack.c.h.b16 %v163
  %v639 = vunpack.c.l.b16 %v164
  %v640 = vunpack.c.h.b16 %v164
  %v641 = vunpack.c.l.b16 %v165
  %v642 = vunpack.c.h.b16 %v165
  %v643 = vunpack.c.l.b16 %v166
  %v644 = vunpack.c.h.b16 %v166
  %v645 = vunpack.c.l.b16 %v167
  %v646 = vunpack.c.h.b16 %v167
  %v647 = vunpack.c.l.b16 %v168
  %v648 = vunpack.c.h.b16 %v168
  %v649 = vunpack.c.l.b16 %v169
  %v650 = vunpack.c.h.b16 %v169
  %v651 = vunpack.c.l.b16 %v170
  %v652 = vunpack.c.h.b16 %v170
  %v653 = vpack.c.b16 %v369, %v365
  %v654 = vpack.c.b16 %v370, %v366
  %v655 = vpack.c.b16 %v371, %v367
  %v656 = vpack.c.b16 %v372, %v368
  %v657 = vpack.c.b16 %v377, %v373
  %v658 = vpack.c.b16 %v378, %v374
  %v659 = vpack.c.b16 %v379, %v375
  %v660 = vpack.c.b16 %v380, %v376
  %v661 = vpack.c.b16 %v385, %v381
  %v662 = vpack.c.b16 %v386, %v382
  %v663 = vpack.c.b16 %v387, %v383
  %v664 = vpack.c.b16 %v388, %v384
  %v665 = vpack.c.b16 %v393, %v389
  %v666 = vpack.c.b16 %v394, %v390
  %v667 = vpack.c.b16 %v395, %v391
  %v668 = vpack.c.b16 %v396, %v392
  %v669 = vpack.c.b16 %v401, %v397
  %v670 = vpack.c.b16 %v402, %v398
  %v671 = vpack.c.b16 %v403, %v399
  %v672 = vpack.c.b16 %v404, %v400
  %v673 = vpack.c.b16 %v409, %v405
  %v674 = vpack.c.b16 %v410, %v406
  %v675 = vpack.c.b16 %v411, %v407
  %v676 = vpack.c.b16 %v412, %v408
  %v677 = vpack.c.b16 %v417, %v413
  %v678 = vpack.c.b16 %v418, %v414
  %v679 = vpack.c.b16 %v419, %v415
  %v680 = vpack.c.b16 %v420, %v416
  %v681 = vpack.c.b16 %v425, %v421
  %v682 = vpack.c.b16 %v426, %v422
  %v683 = vpack.c.b16 %v427, %v423
  %v684 = vpack.c.b16 %v428, %v424
  %v685 = vpack.c.b16 %v433, %v429
  %v686 = vpack.c.b16 %v434, %v430
  %v687 = vpack.c.b16 %v435, %v431
  %v688 = vpack.c.b16 %v436, %v432
  %v689 = vpack.c.b16 %v441, %v437
  %v690 = vpack.c.b16 %v442, %v438
  %v691 = vpack.c.b16 %v443, %v439
  %v692 = vpack.c.b16 %v444, %v440
  %v693 = vpack.c.b16 %v449, %v445
  %v694 = vpack.c.b16 %v450, %v446
  %v695 = vpack.c.b16 %v451, %v447
  %v696 = vpack.c.b16 %v452, %v448
  %v697 = vpack.c.b16 %v457, %v453
  %v698 = vpack.c.b16 %v458, %v454
  %v699 = vpack.c.b16 %v459, %v455
  %v700 = vpack.c.b16 %v460, %v456
  %v701 = vpack.c.b16 %v465, %v461
  %v702 = vpack.c.b16 %v466, %v462
  %v703 = vpack.c.b16 %v467, %v463
  %v704 = vpack.c.b16 %v468, %v464
  %v705 = vpack.c.b16 %v473, %v469
  %v706 = vpack.c.b16 %v474, %v470
  %v707 = vpack.c.b16 %v475, %v471
  %v708 = vpack.c.b16 %v476, %v472
  %v709 = vpack.c.b16 %v481, %v477
  %v710 = vpack.c.b16 %v482, %v478
  %v711 = vpack.c.b16 %v483, %v479
  %v712 = vpack.c.b16 %v484, %v480
  %v713 = vpack.c.b16 %v489, %v485
  %v714 = vpack.c.b16 %v490, %v486
  %v715 = vpack.c.b16 %v491, %v487
  %v716 = vpack.c.b16 %v492, %v488
  %v717 = vpack.c.b16 %v497, %v493
  %v718 = vpack.c.b16 %v498, %v494
  %v719 = vpack.c.b16 %v499, %v495
  %v720 = vpack.c.b16 %v500, %v496
  %v721 = vpack.c.b16 %v505, %v501
  %v722 = vpack.c.b16 %v506, %v502
  %v723 = vpack.c.b16 %v507, %v503
  %v724 = vpack.c.b16 %v508, %v504
  %v725 = vpack.c.b16 %v513, %v509
  %v726 = vpack.c.b16 %v514, %v510
  %v727 = vpack.c.b16 %v515, %v511
  %v728 = vpack.c.b16 %v516, %v512
  %v729 = vpack.c.b16 %v521, %v517
  %v730 = vpack.c.b16 %v522, %v518
  %v731 = vpack.c.b16 %v523, %v519
  %v732 = vpack.c.b16 %v524, %v520
  %v733 = vpack.c.b16 %v529, %v525
  %v734 = vpack.c.b16 %v530, %v526
  %v735 = vpack.c.b16 %v531, %v527
  %v736 = vpack.c.b16 %v532, %v528
  %v737 = vpack.c.b16 %v537, %v533
  %v738 = vpack.c.b16 %v538, %v534
  %v739 = vpack.c.b16 %v539, %v535
  %v740 = vpack.c.b16 %v540, %v536
  %v741 = vpack.c.b16 %v545, %v541
  %v742 = vpack.c.b16 %v546, %v542
  %v743 = vpack.c.b16 %v547, %v543
  %v744 = vpack.c.b16 %v548, %v544
  %v745 = vpack.c.b16 %v553, %v549
  %v746 = vpack.c.b16 %v554, %v550
  %v747 = vpack.c.b16 %v555, %v551
  %v748 = vpack.c.b16 %v556, %v552
  %v749 = vpack.c.b16 %v561, %v557
  %v750 = vpack.c.b16 %v562, %v558
  %v751 = vpack.c.b16 %v563, %v559
  %v752 = vpack.c.b16 %v564, %v560
  %v753 = vpack.c.b16 %v569, %v565
  %v754 = vpack.c.b16 %v570, %v566
  %v755 = vpack.c.b16 %v571, %v567
  %v756 = vpack.c.b16 %v572, %v568
  %v757 = vpack.c.b16 %v577, %v573
  %v758 = vpack.c.b16 %v578, %v574
  %v759 = vpack.c.b16 %v579, %v575
  %v760 = vpack.c.b16 %v580, %v576
  %v761 = vpack.c.b16 %v585, %v581
  %v762 = vpack.c.b16 %v586, %v582
  %v763 = vpack.c.b16 %v587, %v583
  %v764 = vpack.c.b16 %v588, %v584
  %v765 = vpack.c.b16 %v593, %v589
  %v766 = vpack.c.b16 %v594, %v590
  %v767 = vpack.c.b16 %v595, %v591
  %v768 = vpack.c.b16 %v596, %v592
  %v769 = vpack.c.b16 %v601, %v597
  %v770 = vpack.c.b16 %v602, %v598
  %v771 = vpack.c.b16 %v603, %v599
  %v772 = vpack.c.b16 %v604, %v600
  %v773 = vpack.c.b16 %v609, %v605
  %v774 = vpack.c.b16 %v610, %v606
  %v775 = vpack.c.b16 %v611, %v607
  %v776 = vpack.c.b16 %v612, %v608
  %v777 = vpack.c.b16 %v617, %v613
  %v778 = vpack.c.b16 %v618, %v614
  %v779 = vpack.c.b16 %v619, %v615
  %v780 = vpack.c.b16 %v620, %v616
  %v781 = vpack.c.b16 %v625, %v621
  %v782 = vpack.c.b16 %v626, %v622
  %v783 = vpack.c.b16 %v627, %v623
  %v784 = vpack.c.b16 %v628, %v624
  %v785 = vpack.c.b16 %v633, %v629
  %v786 = vpack.c.b16 %v634, %v630
  %v787 = vpack.c.b16 %v635, %v631
  %v788 = vpack.c.b16 %v636, %v632
  %v789 = vpack.c.b16 %v641, %v637
  %v790 = vpack.c.b16 %v642, %v638
  %v791 = vpack.c.b16 %v643, %v639
  %v792 = vpack.c.b16 %v644, %v640
  %v793 = vpack.c.b16 %v649, %v645
  %v794 = vpack.c.b16 %v650, %v646
  %v795 = vpack.c.b16 %v651, %v647
  %v796 = vpack.c.b16 %v652, %v648
  %vm941 = vcmask 523264
  %v943 = vsel %vm941, %v207, 0
  %v946 = vsel %vm941, %v212, 0
  %948 = vmatprep.subr.bf16.mxu0 %v654
  %949 = vmatpush1.bf16.msra.mxu0 %v653
  %950 = vmatprep.subr.bf16.mxu0 %v658
  %951 = vmatpush1.bf16.msra.mxu0 %v657
  %952 = vmatprep.subr.bf16.mxu0 %v662
  %953 = vmatpush1.bf16.msra.mxu0 %v661
  %954 = vmatprep.subr.bf16.mxu0 %v666
  %955 = vmatpush1.bf16.msra.mxu0 %v665
  %956 = vmatprep.subr.bf16.mxu0 %v670
  %957 = vmatpush1.bf16.msra.mxu0 %v669
  %958 = vmatprep.subr.bf16.mxu0 %v674
  %959 = vmatpush1.bf16.msra.mxu0 %v673
  %960 = vmatprep.subr.bf16.mxu0 %v678
  %961 = vmatpush1.bf16.msra.mxu0 %v677
  %962 = vmatprep.subr.bf16.mxu0 %v682
  %963 = vmatpush1.bf16.msra.mxu0 %v681
  %964 = vmatprep.subr.bf16.mxu0 %v686
  %965 = vmatpush1.bf16.msra.mxu0 %v685
  %966 = vmatprep.subr.bf16.mxu0 %v690
  %967 = vmatpush1.bf16.msra.mxu0 %v689
  %968 = vmatprep.subr.bf16.mxu0 %v694
  %969 = vmatpush1.bf16.msra.mxu0 %v693
  %970 = vmatprep.subr.bf16.mxu0 %v698
  %971 = vmatpush1.bf16.msra.mxu0 %v697
  %972 = vmatprep.subr.bf16.mxu0 %v702
  %973 = vmatpush1.bf16.msra.mxu0 %v701
  %974 = vmatprep.subr.bf16.mxu0 %v706
  %975 = vmatpush1.bf16.msra.mxu0 %v705
  %976 = vmatprep.subr.bf16.mxu0 %v710
  %977 = vmatpush1.bf16.msra.mxu0 %v709
  %978 = vmatprep.subr.bf16.mxu0 %v714
  %979 = vmatpush1.bf16.msra.mxu0 %v713
  %980 = vmatprep.mubr.bf16.mxu0 %v204
  %981 = vmatmul.mubr.bf16.gmra.mrb[0].mxu0 %v203
  %v982 = vpop.f32.mrb[0].mxu0
  %v983 = vadd.f32 0.0, %v982
  %v984 = vpop.f32.mrb[0].mxu0
  %v985 = vadd.f32 0.0, %v984
  %v986 = vpop.f32.mrb[0].mxu0
  %v987 = vadd.f32 0.0, %v986
  %v988 = vpop.f32.mrb[0].mxu0
  %v989 = vadd.f32 0.0, %v988
  %990 = vmatprep.mubr.bf16.mxu0 %v209
  %991 = vmatmul.mubr.bf16.gmra.mrb[0].mxu0 %v208
  %v992 = vpop.f32.mrb[0].mxu0
  %v993 = vadd.f32 0.0, %v992
  %v994 = vpop.f32.mrb[0].mxu0
  %v995 = vadd.f32 0.0, %v994
  %v996 = vpop.f32.mrb[0].mxu0
  %v997 = vadd.f32 0.0, %v996
  %v998 = vpop.f32.mrb[0].mxu0
  %v999 = vadd.f32 0.0, %v998
  %1000 = vdwg.mxu0
  %1001 = vmatprep.subr.bf16.mxu0 %v718
  %1002 = vmatpush1.bf16.msra.mxu0 %v717
  %1003 = vmatprep.subr.bf16.mxu0 %v722
  %1004 = vmatpush1.bf16.msra.mxu0 %v721
  %1005 = vmatprep.subr.bf16.mxu0 %v726
  %1006 = vmatpush1.bf16.msra.mxu0 %v725
  %1007 = vmatprep.subr.bf16.mxu0 %v730
  %1008 = vmatpush1.bf16.msra.mxu0 %v729
  %1009 = vmatprep.subr.bf16.mxu0 %v734
  %1010 = vmatpush1.bf16.msra.mxu0 %v733
  %1011 = vmatprep.subr.bf16.mxu0 %v738
  %1012 = vmatpush1.bf16.msra.mxu0 %v737
  %1013 = vmatprep.subr.bf16.mxu0 %v742
  %1014 = vmatpush1.bf16.msra.mxu0 %v741
  %1015 = vmatprep.subr.bf16.mxu0 %v746
  %1016 = vmatpush1.bf16.msra.mxu0 %v745
  %1017 = vmatprep.subr.bf16.mxu0 %v750
  %1018 = vmatpush1.bf16.msra.mxu0 %v749
  %1019 = vmatprep.subr.bf16.mxu0 %v754
  %1020 = vmatpush1.bf16.msra.mxu0 %v753
  %1021 = vmatprep.subr.bf16.mxu0 %v758
  %1022 = vmatpush1.bf16.msra.mxu0 %v757
  %1023 = vmatprep.subr.bf16.mxu0 %v762
  %1024 = vmatpush1.bf16.msra.mxu0 %v761
  %1025 = vmatprep.subr.bf16.mxu0 %v766
  %1026 = vmatpush1.bf16.msra.mxu0 %v765
  %1027 = vmatprep.subr.bf16.mxu0 %v770
  %1028 = vmatpush1.bf16.msra.mxu0 %v769
  %1029 = vmatprep.subr.bf16.mxu0 %v774
  %1030 = vmatpush1.bf16.msra.mxu0 %v773
  %1031 = vmatprep.subr.bf16.mxu0 %v778
  %1032 = vmatpush1.bf16.msra.mxu0 %v777
  %1033 = vmatprep.mubr.bf16.mxu0 %v206
  %1034 = vmatmul.mubr.bf16.gmra.mrb[0].mxu0 %v205
  %v1035 = vpop.f32.mrb[0].mxu0
  %v1036 = vadd.f32 %v983, %v1035
  %v1037 = vpop.f32.mrb[0].mxu0
  %v1038 = vadd.f32 %v985, %v1037
  %v1039 = vpop.f32.mrb[0].mxu0
  %v1040 = vadd.f32 %v987, %v1039
  %v1041 = vpop.f32.mrb[0].mxu0
  %v1042 = vadd.f32 %v989, %v1041
  %1043 = vmatprep.mubr.bf16.mxu0 %v211
  %1044 = vmatmul.mubr.bf16.gmra.mrb[0].mxu0 %v210
  %v1045 = vpop.f32.mrb[0].mxu0
  %v1046 = vadd.f32 %v993, %v1045
  %v1047 = vpop.f32.mrb[0].mxu0
  %v1048 = vadd.f32 %v995, %v1047
  %v1049 = vpop.f32.mrb[0].mxu0
  %v1050 = vadd.f32 %v997, %v1049
  %v1051 = vpop.f32.mrb[0].mxu0
  %v1052 = vadd.f32 %v999, %v1051
  %1053 = vdwg.mxu0
  %1054 = vmatprep.subr.bf16.mxu0 %v782
  %1055 = vmatpush1.bf16.msra.mxu0 %v781
  %1056 = vmatprep.subr.bf16.mxu0 %v786
  %1057 = vmatpush1.bf16.msra.mxu0 %v785
  %1058 = vmatprep.subr.bf16.mxu0 %v790
  %1059 = vmatpush1.bf16.msra.mxu0 %v789
  %1060 = vmatprep.subr.bf16.mxu0 %v794
  %1061 = vmatpush1.bf16.msra.mxu0 %v793
  %1062 = vmatprep.subr.bf16.mxu0 0
  %1063 = vmatpush1.bf16.msra.mxu0 0
  %1064 = vmatprep.subr.bf16.mxu0 0
  %1065 = vmatpush1.bf16.msra.mxu0 0
  %1066 = vmatprep.subr.bf16.mxu0 0
  %1067 = vmatpush1.bf16.msra.mxu0 0
  %1068 = vmatprep.subr.bf16.mxu0 0
  %1069 = vmatpush1.bf16.msra.mxu0 0
  %1070 = vmatprep.subr.bf16.mxu0 0
  %1071 = vmatpush1.bf16.msra.mxu0 0
  %1072 = vmatprep.subr.bf16.mxu0 0
  %1073 = vmatpush1.bf16.msra.mxu0 0
  %1074 = vmatprep.subr.bf16.mxu0 0
  %1075 = vmatpush1.bf16.msra.mxu0 0
  %1076 = vmatprep.subr.bf16.mxu0 0
  %1077 = vmatpush1.bf16.msra.mxu0 0
  %1078 = vmatprep.subr.bf16.mxu0 0
  %1079 = vmatpush1.bf16.msra.mxu0 0
  %1080 = vmatprep.subr.bf16.mxu0 0
  %1081 = vmatpush1.bf16.msra.mxu0 0
  %1082 = vmatprep.subr.bf16.mxu0 0
  %1083 = vmatpush1.bf16.msra.mxu0 0
  %1084 = vmatprep.subr.bf16.mxu0 0
  %1085 = vmatpush1.bf16.msra.mxu0 0
  %1086 = vmatprep.mubr.bf16.mxu0 0
  %1087 = vmatmul.mubr.bf16.gmra.mrb[0].mxu0 %v943
  %v1088 = vpop.f32.mrb[0].mxu0
  %v1089 = vadd.f32 %v1036, %v1088
  %v1090 = vpop.f32.mrb[0].mxu0
  %v1091 = vadd.f32 %v1038, %v1090
  %v1092 = vpop.f32.mrb[0].mxu0
  %v1093 = vadd.f32 %v1040, %v1092
  %v1094 = vpop.f32.mrb[0].mxu0
  %v1095 = vadd.f32 %v1042, %v1094
  %1096 = vmatprep.mubr.bf16.mxu0 0
  %1097 = vmatmul.mubr.bf16.gmra.mrb[0].mxu0 %v946
  %v1098 = vpop.f32.mrb[0].mxu0
  %v1099 = vadd.f32 %v1046, %v1098
  %v1100 = vpop.f32.mrb[0].mxu0
  %v1101 = vadd.f32 %v1048, %v1100
  %v1102 = vpop.f32.mrb[0].mxu0
  %v1103 = vadd.f32 %v1050, %v1102
  %v1104 = vpop.f32.mrb[0].mxu0
  %v1105 = vadd.f32 %v1052, %v1104
  %1106 = vdwg.mxu0
  %1107 = vmatprep.subr.bf16.mxu0 %v656
  %1108 = vmatpush1.bf16.msra.mxu0 %v655
  %1109 = vmatprep.subr.bf16.mxu0 %v660
  %1110 = vmatpush1.bf16.msra.mxu0 %v659
  %1111 = vmatprep.subr.bf16.mxu0 %v664
  %1112 = vmatpush1.bf16.msra.mxu0 %v663
  %1113 = vmatprep.subr.bf16.mxu0 %v668
  %1114 = vmatpush1.bf16.msra.mxu0 %v667
  %1115 = vmatprep.subr.bf16.mxu0 %v672
  %1116 = vmatpush1.bf16.msra.mxu0 %v671
  %1117 = vmatprep.subr.bf16.mxu0 %v676
  %1118 = vmatpush1.bf16.msra.mxu0 %v675
  %1119 = vmatprep.subr.bf16.mxu0 %v680
  %1120 = vmatpush1.bf16.msra.mxu0 %v679
  %1121 = vmatprep.subr.bf16.mxu0 %v684
  %1122 = vmatpush1.bf16.msra.mxu0 %v683
  %1123 = vmatprep.subr.bf16.mxu0 %v688
  %1124 = vmatpush1.bf16.msra.mxu0 %v687
  %1125 = vmatprep.subr.bf16.mxu0 %v692
  %1126 = vmatpush1.bf16.msra.mxu0 %v691
  %1127 = vmatprep.subr.bf16.mxu0 %v696
  %1128 = vmatpush1.bf16.msra.mxu0 %v695
  %1129 = vmatprep.subr.bf16.mxu0 %v700
  %1130 = vmatpush1.bf16.msra.mxu0 %v699
  %1131 = vmatprep.subr.bf16.mxu0 %v704
  %1132 = vmatpush1.bf16.msra.mxu0 %v703
  %1133 = vmatprep.subr.bf16.mxu0 %v708
  %1134 = vmatpush1.bf16.msra.mxu0 %v707
  %1135 = vmatprep.subr.bf16.mxu0 %v712
  %1136 = vmatpush1.bf16.msra.mxu0 %v711
  %1137 = vmatprep.subr.bf16.mxu0 %v716
  %1138 = vmatpush1.bf16.msra.mxu0 %v715
  %1139 = vmatprep.mubr.bf16.mxu0 %v204
  %1140 = vmatmul.mubr.bf16.gmra.mrb[0].mxu0 %v203
  %v1141 = vpop.f32.mrb[0].mxu0
  %v1142 = vadd.f32 0.0, %v1141
  %v1143 = vpop.f32.mrb[0].mxu0
  %v1144 = vadd.f32 0.0, %v1143
  %v1145 = vpop.f32.mrb[0].mxu0
  %v1146 = vadd.f32 0.0, %v1145
  %v1147 = vpop.f32.mrb[0].mxu0
  %v1148 = vadd.f32 0.0, %v1147
  %1149 = vmatprep.mubr.bf16.mxu0 %v209
  %1150 = vmatmul.mubr.bf16.gmra.mrb[0].mxu0 %v208
  %v1151 = vpop.f32.mrb[0].mxu0
  %v1152 = vadd.f32 0.0, %v1151
  %v1153 = vpop.f32.mrb[0].mxu0
  %v1154 = vadd.f32 0.0, %v1153
  %v1155 = vpop.f32.mrb[0].mxu0
  %v1156 = vadd.f32 0.0, %v1155
  %v1157 = vpop.f32.mrb[0].mxu0
  %v1158 = vadd.f32 0.0, %v1157
  %1159 = vdwg.mxu0
  %1160 = vmatprep.subr.bf16.mxu0 %v720
  %1161 = vmatpush1.bf16.msra.mxu0 %v719
  %1162 = vmatprep.subr.bf16.mxu0 %v724
  %1163 = vmatpush1.bf16.msra.mxu0 %v723
  %1164 = vmatprep.subr.bf16.mxu0 %v728
  %1165 = vmatpush1.bf16.msra.mxu0 %v727
  %1166 = vmatprep.subr.bf16.mxu0 %v732
  %1167 = vmatpush1.bf16.msra.mxu0 %v731
  %1168 = vmatprep.subr.bf16.mxu0 %v736
  %1169 = vmatpush1.bf16.msra.mxu0 %v735
  %1170 = vmatprep.subr.bf16.mxu0 %v740
  %1171 = vmatpush1.bf16.msra.mxu0 %v739
  %1172 = vmatprep.subr.bf16.mxu0 %v744
  %1173 = vmatpush1.bf16.msra.mxu0 %v743
  %1174 = vmatprep.subr.bf16.mxu0 %v748
  %1175 = vmatpush1.bf16.msra.mxu0 %v747
  %1176 = vmatprep.subr.bf16.mxu0 %v752
  %1177 = vmatpush1.bf16.msra.mxu0 %v751
  %1178 = vmatprep.subr.bf16.mxu0 %v756
  %1179 = vmatpush1.bf16.msra.mxu0 %v755
  %1180 = vmatprep.subr.bf16.mxu0 %v760
  %1181 = vmatpush1.bf16.msra.mxu0 %v759
  %1182 = vmatprep.subr.bf16.mxu0 %v764
  %1183 = vmatpush1.bf16.msra.mxu0 %v763
  %1184 = vmatprep.subr.bf16.mxu0 %v768
  %1185 = vmatpush1.bf16.msra.mxu0 %v767
  %1186 = vmatprep.subr.bf16.mxu0 %v772
  %1187 = vmatpush1.bf16.msra.mxu0 %v771
  %1188 = vmatprep.subr.bf16.mxu0 %v776
  %1189 = vmatpush1.bf16.msra.mxu0 %v775
  %1190 = vmatprep.subr.bf16.mxu0 %v780
  %1191 = vmatpush1.bf16.msra.mxu0 %v779
  %1192 = vmatprep.mubr.bf16.mxu0 %v206
  %1193 = vmatmul.mubr.bf16.gmra.mrb[0].mxu0 %v205
  %v1194 = vpop.f32.mrb[0].mxu0
  %v1195 = vadd.f32 %v1142, %v1194
  %v1196 = vpop.f32.mrb[0].mxu0
  %v1197 = vadd.f32 %v1144, %v1196
  %v1198 = vpop.f32.mrb[0].mxu0
  %v1199 = vadd.f32 %v1146, %v1198
  %v1200 = vpop.f32.mrb[0].mxu0
  %v1201 = vadd.f32 %v1148, %v1200
  %1202 = vmatprep.mubr.bf16.mxu0 %v211
  %1203 = vmatmul.mubr.bf16.gmra.mrb[0].mxu0 %v210
  %v1204 = vpop.f32.mrb[0].mxu0
  %v1205 = vadd.f32 %v1152, %v1204
  %v1206 = vpop.f32.mrb[0].mxu0
  %v1207 = vadd.f32 %v1154, %v1206
  %v1208 = vpop.f32.mrb[0].mxu0
  %v1209 = vadd.f32 %v1156, %v1208
  %v1210 = vpop.f32.mrb[0].mxu0
  %v1211 = vadd.f32 %v1158, %v1210
  %1212 = vdwg.mxu0
  %1213 = vmatprep.subr.bf16.mxu0 %v784
  %1214 = vmatpush1.bf16.msra.mxu0 %v783
  %1215 = vmatprep.subr.bf16.mxu0 %v788
  %1216 = vmatpush1.bf16.msra.mxu0 %v787
  %1217 = vmatprep.subr.bf16.mxu0 %v792
  %1218 = vmatpush1.bf16.msra.mxu0 %v791
  %1219 = vmatprep.subr.bf16.mxu0 %v796
  %1220 = vmatpush1.bf16.msra.mxu0 %v795
  %1221 = vmatprep.subr.bf16.mxu0 0
  %1222 = vmatpush1.bf16.msra.mxu0 0
  %1223 = vmatprep.subr.bf16.mxu0 0
  %1224 = vmatpush1.bf16.msra.mxu0 0
  %1225 = vmatprep.subr.bf16.mxu0 0
  %1226 = vmatpush1.bf16.msra.mxu0 0
  %1227 = vmatprep.subr.bf16.mxu0 0
  %1228 = vmatpush1.bf16.msra.mxu0 0
  %1229 = vmatprep.subr.bf16.mxu0 0
  %1230 = vmatpush1.bf16.msra.mxu0 0
  %1231 = vmatprep.subr.bf16.mxu0 0
  %1232 = vmatpush1.bf16.msra.mxu0 0
  %1233 = vmatprep.subr.bf16.mxu0 0
  %1234 = vmatpush1.bf16.msra.mxu0 0
  %1235 = vmatprep.subr.bf16.mxu0 0
  %1236 = vmatpush1.bf16.msra.mxu0 0
  %1237 = vmatprep.subr.bf16.mxu0 0
  %1238 = vmatpush1.bf16.msra.mxu0 0
  %1239 = vmatprep.subr.bf16.mxu0 0
  %1240 = vmatpush1.bf16.msra.mxu0 0
  %1241 = vmatprep.subr.bf16.mxu0 0
  %1242 = vmatpush1.bf16.msra.mxu0 0
  %1243 = vmatprep.subr.bf16.mxu0 0
  %1244 = vmatpush1.bf16.msra.mxu0 0
  %1245 = vmatprep.mubr.bf16.mxu0 0
  %1246 = vmatmul.mubr.bf16.gmra.mrb[0].mxu0 %v943
  %v1247 = vpop.f32.mrb[0].mxu0
  %v1248 = vadd.f32 %v1195, %v1247
  %v1249 = vpop.f32.mrb[0].mxu0
  %v1250 = vadd.f32 %v1197, %v1249
  %v1251 = vpop.f32.mrb[0].mxu0
  %v1252 = vadd.f32 %v1199, %v1251
  %v1253 = vpop.f32.mrb[0].mxu0
  %v1254 = vadd.f32 %v1201, %v1253
  %1255 = vmatprep.mubr.bf16.mxu0 0
  %1256 = vmatmul.mubr.bf16.gmra.mrb[0].mxu0 %v946
  %v1257 = vpop.f32.mrb[0].mxu0
  %v1258 = vadd.f32 %v1205, %v1257
  %v1259 = vpop.f32.mrb[0].mxu0
  %v1260 = vadd.f32 %v1207, %v1259
  %v1261 = vpop.f32.mrb[0].mxu0
  %v1262 = vadd.f32 %v1209, %v1261
  %v1263 = vpop.f32.mrb[0].mxu0
  %v1264 = vadd.f32 %v1211, %v1263
  %1265 = vdwg.mxu0
  %v1266 = vld [vmem:[%s2] sm:$0xff]
  %v1267 = vld [vmem:[%s2 + $0x8] sm:$0xff]
  %v1268 = vld [vmem:[%s2 + $0x10] sm:$0xff]
  %v1269 = vld [vmem:[%s2 + $0x18] sm:$0xff]
  %1271 = vset.pattern.permute.xlu0 0
  %1272 = vperm.xlu0 %1271, %v1266
  %v1273 = vpop.permute.xlu0 %1272
  %1276 = vset.pattern.permute.xlu0 0
  %1277 = vperm.xlu0 %1276, %v1267
  %v1278 = vpop.permute.xlu0 %1277
  %1281 = vset.pattern.permute.xlu0 0
  %1282 = vperm.xlu0 %1281, %v1268
  %v1283 = vpop.permute.xlu0 %1282
  %1286 = vset.pattern.permute.xlu0 0
  %1287 = vperm.xlu0 %1286, %v1269
  %v1288 = vpop.permute.xlu0 %1287
  %v1290 = vmul.f32 %v1089, %v1273
  %v1291 = vmul.f32 %v1091, %v1273
  %v1292 = vmul.f32 %v1248, %v1273
  %v1293 = vmul.f32 %v1250, %v1273
  %v1294 = vmul.f32 %v1093, %v1278
  %v1295 = vmul.f32 %v1095, %v1278
  %v1296 = vmul.f32 %v1252, %v1278
  %v1297 = vmul.f32 %v1254, %v1278
  %v1298 = vmul.f32 %v1099, %v1283
  %v1299 = vmul.f32 %v1101, %v1283
  %v1300 = vmul.f32 %v1258, %v1283
  %v1301 = vmul.f32 %v1260, %v1283
  %v1302 = vmul.f32 %v1103, %v1288
  %v1303 = vmul.f32 %v1105, %v1288
  %v1304 = vmul.f32 %v1262, %v1288
  %v1305 = vmul.f32 %v1264, %v1288
  %1306 = vset.pattern.permute.xlu0 1
  %1307 = vperm.xlu0 %1306, %v1266
  %v1308 = vpop.permute.xlu0 %1307
  %1310 = vset.pattern.permute.xlu0 1
  %1311 = vperm.xlu0 %1310, %v1267
  %v1312 = vpop.permute.xlu0 %1311
  %1314 = vset.pattern.permute.xlu0 1
  %1315 = vperm.xlu0 %1314, %v1268
  %v1316 = vpop.permute.xlu0 %1315
  %1318 = vset.pattern.permute.xlu0 1
  %1319 = vperm.xlu0 %1318, %v1269
  %v1320 = vpop.permute.xlu0 %1319
  %v1322 = vadd.f32 %v1290, %v1308
  %v1323 = vadd.f32 %v1291, %v1308
  %v1324 = vadd.f32 %v1292, %v1308
  %v1325 = vadd.f32 %v1293, %v1308
  %v1326 = vadd.f32 %v1294, %v1312
  %v1327 = vadd.f32 %v1295, %v1312
  %v1328 = vadd.f32 %v1296, %v1312
  %v1329 = vadd.f32 %v1297, %v1312
  %v1330 = vadd.f32 %v1298, %v1316
  %v1331 = vadd.f32 %v1299, %v1316
  %v1332 = vadd.f32 %v1300, %v1316
  %v1333 = vadd.f32 %v1301, %v1316
  %v1334 = vadd.f32 %v1302, %v1320
  %v1335 = vadd.f32 %v1303, %v1320
  %v1336 = vadd.f32 %v1304, %v1320
  %v1337 = vadd.f32 %v1305, %v1320
  %vm1338 = vcmp.ge.f32.partialorder %v1322, 0.0
  %vm1339 = vcmp.ge.f32.partialorder %v1323, 0.0
  %vm1340 = vcmp.ge.f32.partialorder %v1324, 0.0
  %vm1341 = vcmp.ge.f32.partialorder %v1325, 0.0
  %vm1342 = vcmp.ge.f32.partialorder %v1326, 0.0
  %vm1343 = vcmp.ge.f32.partialorder %v1327, 0.0
  %vm1344 = vcmp.ge.f32.partialorder %v1328, 0.0
  %vm1345 = vcmp.ge.f32.partialorder %v1329, 0.0
  %vm1346 = vcmp.ge.f32.partialorder %v1330, 0.0
  %vm1347 = vcmp.ge.f32.partialorder %v1331, 0.0
  %vm1348 = vcmp.ge.f32.partialorder %v1332, 0.0
  %vm1349 = vcmp.ge.f32.partialorder %v1333, 0.0
  %vm1350 = vcmp.ge.f32.partialorder %v1334, 0.0
  %vm1351 = vcmp.ge.f32.partialorder %v1335, 0.0
  %vm1352 = vcmp.ge.f32.partialorder %v1336, 0.0
  %vm1353 = vcmp.ge.f32.partialorder %v1337, 0.0
  %v1354 = vmul.f32 %v1322, 0.2
  %v1355 = vmul.f32 %v1323, 0.2
  %v1356 = vmul.f32 %v1324, 0.2
  %v1357 = vmul.f32 %v1325, 0.2
  %v1358 = vmul.f32 %v1326, 0.2
  %v1359 = vmul.f32 %v1327, 0.2
  %v1360 = vmul.f32 %v1328, 0.2
  %v1361 = vmul.f32 %v1329, 0.2
  %v1362 = vmul.f32 %v1330, 0.2
  %v1363 = vmul.f32 %v1331, 0.2
  %v1364 = vmul.f32 %v1332, 0.2
  %v1365 = vmul.f32 %v1333, 0.2
  %v1366 = vmul.f32 %v1334, 0.2
  %v1367 = vmul.f32 %v1335, 0.2
  %v1368 = vmul.f32 %v1336, 0.2
  %v1369 = vmul.f32 %v1337, 0.2
  %v1370 = vsel %vm1338, %v1322, %v1354
  %v1371 = vsel %vm1339, %v1323, %v1355
  %v1372 = vsel %vm1340, %v1324, %v1356
  %v1373 = vsel %vm1341, %v1325, %v1357
  %v1374 = vsel %vm1342, %v1326, %v1358
  %v1375 = vsel %vm1343, %v1327, %v1359
  %v1376 = vsel %vm1344, %v1328, %v1360
  %v1377 = vsel %vm1345, %v1329, %v1361
  %v1378 = vsel %vm1346, %v1330, %v1362
  %v1379 = vsel %vm1347, %v1331, %v1363
  %v1380 = vsel %vm1348, %v1332, %v1364
  %v1381 = vsel %vm1349, %v1333, %v1365
  %v1382 = vsel %vm1350, %v1334, %v1366
  %v1383 = vsel %vm1351, %v1335, %v1367
  %v1384 = vsel %vm1352, %v1336, %v1368
  %v1385 = vsel %vm1353, %v1337, %v1369
  %v1386 = vpack.c.bf16 %v1374, %v1370
  %v1387 = vpack.c.bf16 %v1375, %v1371
  %v1388 = vpack.c.bf16 %v1376, %v1372
  %v1389 = vpack.c.bf16 %v1377, %v1373
  %v1390 = vpack.c.bf16 %v1382, %v1378
  %v1391 = vpack.c.bf16 %v1383, %v1379
  %v1392 = vpack.c.bf16 %v1384, %v1380
  %v1393 = vpack.c.bf16 %v1385, %v1381
  %v1402 = vunpack.c.l.b16 %v1386
  %v1403 = vunpack.c.l.b16 %v1387
  %v1404 = vunpack.c.l.b16 %v1388
  %v1405 = vunpack.c.l.b16 %v1389
  %v1406 = vunpack.c.h.b16 %v1386
  %v1407 = vunpack.c.h.b16 %v1387
  %v1408 = vunpack.c.h.b16 %v1388
  %v1409 = vunpack.c.h.b16 %v1389
  %v1410 = vunpack.c.l.b16 %v1390
  %v1411 = vunpack.c.l.b16 %v1391
  %v1412 = vunpack.c.l.b16 %v1392
  %v1413 = vunpack.c.l.b16 %v1393
  %v1414 = vunpack.c.h.b16 %v1390
  %v1415 = vunpack.c.h.b16 %v1391
  %v1416 = vunpack.c.h.b16 %v1392
  %v1417 = vunpack.c.h.b16 %v1393
  %v1418 = vpack.c.b16 %v1403, %v1402
  %v1419 = vpack.c.b16 %v1405, %v1404
  %v1420 = vpack.c.b16 %v1407, %v1406
  %v1421 = vpack.c.b16 %v1409, %v1408
  %v1422 = vpack.c.b16 %v1411, %v1410
  %v1423 = vpack.c.b16 %v1413, %v1412
  %v1424 = vpack.c.b16 %v1415, %v1414
  %v1425 = vpack.c.b16 %v1417, %v1416
  %1434 = vst [vmem:[%s3] sm:$0xff] %v1418
  %1435 = vst [vmem:[%s3 + $0x8] sm:$0xff] %v1419
  %1436 = vst [vmem:[%s3 + $0x10] sm:$0xff] %v1420
  %1437 = vst [vmem:[%s3 + $0x18] sm:$0xff] %v1421
  %1438 = vst [vmem:[%s3 + $0x20] sm:$0xff] %v1422
  %1439 = vst [vmem:[%s3 + $0x28] sm:$0xff] %v1423
  %1440 = vst [vmem:[%s3 + $0x30] sm:$0xff] %v1424
  %1441 = vst [vmem:[%s3 + $0x38] sm:$0xff] %v1425
  // Predicated region
  $region14: #{_lambda_.8} parent=0 // pred_check
    _
  $region15: #{_lambda_.8} parent=0 // pred_check_branch
    %1443 = sbr.rel (0) target = $region17
  $region16: #{_lambda_.8} parent=0 // pred_region
    _
  $region17: #{_lambda_.8} parent=0 // pred_fallthru
    _
  // Predicated region
  $region18: #{_lambda_.8} parent=0 // pred_check
    _
  $region19: #{_lambda_.8} parent=0 // pred_check_branch
    %1445 = sbr.rel (0) target = $region21
  $region20: #{_lambda_.8} parent=0 // pred_region
    _
  $region21: #{_lambda_.8} parent=0 // pred_fallthru
    _

// kernel: _lambda_.9
$region0: #{_lambda_.9}
  #allocation0 [shape = 'u32[]', space=smem, size = 0x4, offset = 0x4, fixed_abs, tag = 'smem constant byte address 0x4 - core index']
  #allocation1 [shape = 'u32[144,128]{1,0:T(1,128)}', space=vmem, size = 0x12000, scoped, tag = 'internal scratch']
  %s0 = inlined_call_operand.vmem [shape: bf16[64,1152], index: 0, kind: input, shape index: {}]
  %s1 = inlined_call_operand.vmem [shape: bf16[1152,128], index: 1, kind: input, shape index: {}]
  %s2 = inlined_call_operand.vmem [shape: f32[64,2], index: 2, kind: input, shape index: {}]
  %s3 = inlined_call_operand.vmem [shape: bf16[64,128], index: 3, kind: output, shape index: {}]
  %s4 = sld [smem:[#allocation0]]
  $region22: #{_lambda_.9} parent=0
    _
  %s6 = ssub.s32 1, %s4
  %s7 = scalar_select 0, %s6, %s4
  // Predicated region
  $region2: #{_lambda_.9} parent=0 // pred_check
    _
  $region3: #{_lambda_.9} parent=0 // pred_check_branch
    %9 = sbr.rel (0) target = $region5
  $region4: #{_lambda_.9} parent=0 // pred_region
    _
  $region5: #{_lambda_.9} parent=0 // pred_fallthru
    _
  // Predicated region
  $region6: #{_lambda_.9} parent=0 // pred_check
    _
  $region7: #{_lambda_.9} parent=0 // pred_check_branch
    %11 = sbr.rel (0) target = $region9
  $region8: #{_lambda_.9} parent=0 // pred_region
    _
  $region9: #{_lambda_.9} parent=0 // pred_fallthru
    _
  // Predicated region
  $region10: #{_lambda_.9} parent=0 // pred_check
    _
  $region11: #{_lambda_.9} parent=0 // pred_check_branch
    %13 = sbr.rel (0) target = $region13
  $region12: #{_lambda_.9} parent=0 // pred_region
    _
  $region13: #{_lambda_.9} parent=0 // pred_fallthru
    _
  %v15 = vld [vmem:[%s0] sm:$0xff]
  %v16 = vld [vmem:[%s0 + $0x8] sm:$0xff]
  %v17 = vld [vmem:[%s0 + $0x10] sm:$0xff]
  %v18 = vld [vmem:[%s0 + $0x18] sm:$0xff]
  %v19 = vld [vmem:[%s0 + $0x20] sm:$0xf]
  %v20 = vld [vmem:[%s0 + $0x24] sm:$0xff]
  %v21 = vld [vmem:[%s0 + $0x2c] sm:$0xff]
  %v22 = vld [vmem:[%s0 + $0x34] sm:$0xff]
  %v23 = vld [vmem:[%s0 + $0x3c] sm:$0xff]
  %v24 = vld [vmem:[%s0 + $0x44] sm:$0xf]
  %v25 = vld [vmem:[%s0 + $0x48] sm:$0xff]
  %v26 = vld [vmem:[%s0 + $0x50] sm:$0xff]
  %v27 = vld [vmem:[%s0 + $0x58] sm:$0xff]
  %v28 = vld [vmem:[%s0 + $0x60] sm:$0xff]
  %v29 = vld [vmem:[%s0 + $0x68] sm:$0xf]
  %v30 = vld [vmem:[%s0 + $0x6c] sm:$0xff]
  %v31 = vld [vmem:[%s0 + $0x74] sm:$0xff]
  %v32 = vld [vmem:[%s0 + $0x7c] sm:$0xff]
  %v33 = vld [vmem:[%s0 + $0x84] sm:$0xff]
  %v34 = vld [vmem:[%s0 + $0x8c] sm:$0xf]
  %v35 = vld [vmem:[%s0 + $0x90] sm:$0xff]
  %v36 = vld [vmem:[%s0 + $0x98] sm:$0xff]
  %v37 = vld [vmem:[%s0 + $0xa0] sm:$0xff]
  %v38 = vld [vmem:[%s0 + $0xa8] sm:$0xff]
  %v39 = vld [vmem:[%s0 + $0xb0] sm:$0xf]
  %v40 = vld [vmem:[%s0 + $0xb4] sm:$0xff]
  %v41 = vld [vmem:[%s0 + $0xbc] sm:$0xff]
  %v42 = vld [vmem:[%s0 + $0xc4] sm:$0xff]
  %v43 = vld [vmem:[%s0 + $0xcc] sm:$0xff]
  %v44 = vld [vmem:[%s0 + $0xd4] sm:$0xf]
  %v45 = vld [vmem:[%s0 + $0xd8] sm:$0xff]
  %v46 = vld [vmem:[%s0 + $0xe0] sm:$0xff]
  %v47 = vld [vmem:[%s0 + $0xe8] sm:$0xff]
  %v48 = vld [vmem:[%s0 + $0xf0] sm:$0xff]
  %v49 = vld [vmem:[%s0 + $0xf8] sm:$0xf]
  %v50 = vld [vmem:[%s0 + $0xfc] sm:$0xff]
  %v51 = vld [vmem:[%s0 + $0x104] sm:$0xff]
  %v52 = vld [vmem:[%s0 + $0x10c] sm:$0xff]
  %v53 = vld [vmem:[%s0 + $0x114] sm:$0xff]
  %v54 = vld [vmem:[%s0 + $0x11c] sm:$0xf]
  %v55 = vld [vmem:[%s1] sm:$0xf]
  %v56 = vld [vmem:[%s1 + $0x4] sm:$0xf]
  %v57 = vld [vmem:[%s1 + $0x8] sm:$0xf]
  %v58 = vld [vmem:[%s1 + $0xc] sm:$0xf]
  %v59 = vld [vmem:[%s1 + $0x10] sm:$0xf]
  %v60 = vld [vmem:[%s1 + $0x14] sm:$0xf]
  %v61 = vld [vmem:[%s1 + $0x18] sm:$0xf]
  %v62 = vld [vmem:[%s1 + $0x1c] sm:$0xf]
  %v63 = vld [vmem:[%s1 + $0x20] sm:$0xf]
  %v64 = vld [vmem:[%s1 + $0x24] sm:$0xf]
  %v65 = vld [vmem:[%s1 + $0x28] sm:$0xf]
  %v66 = vld [vmem:[%s1 + $0x2c] sm:$0xf]
  %v67 = vld [vmem:[%s1 + $0x30] sm:$0xf]
  %v68 = vld [vmem:[%s1 + $0x34] sm:$0xf]
  %v69 = vld [vmem:[%s1 + $0x38] sm:$0xf]
  %v70 = vld [vmem:[%s1 + $0x3c] sm:$0xf]
  %v71 = vld [vmem:[%s1 + $0x40] sm:$0xf]
  %v72 = vld [vmem:[%s1 + $0x44] sm:$0xf]
  %v73 = vld [vmem:[%s1 + $0x48] sm:$0xf]
  %v74 = vld [vmem:[%s1 + $0x4c] sm:$0xf]
  %v75 = vld [vmem:[%s1 + $0x50] sm:$0xf]
  %v76 = vld [vmem:[%s1 + $0x54] sm:$0xf]
  %v77 = vld [vmem:[%s1 + $0x58] sm:$0xf]
  %v78 = vld [vmem:[%s1 + $0x5c] sm:$0xf]
  %v79 = vld [vmem:[%s1 + $0x60] sm:$0xf]
  %v80 = vld [vmem:[%s1 + $0x64] sm:$0xf]
  %v81 = vld [vmem:[%s1 + $0x68] sm:$0xf]
  %v82 = vld [vmem:[%s1 + $0x6c] sm:$0xf]
  %v83 = vld [vmem:[%s1 + $0x70] sm:$0xf]
  %v84 = vld [vmem:[%s1 + $0x74] sm:$0xf]
  %v85 = vld [vmem:[%s1 + $0x78] sm:$0xf]
  %v86 = vld [vmem:[%s1 + $0x7c] sm:$0xf]
  %v87 = vld [vmem:[%s1 + $0x80] sm:$0xf]
  %v88 = vld [vmem:[%s1 + $0x84] sm:$0xf]
  %v89 = vld [vmem:[%s1 + $0x88] sm:$0xf]
  %v90 = vld [vmem:[%s1 + $0x8c] sm:$0xf]
  %v91 = vld [vmem:[%s1 + $0x90] sm:$0xf]
  %v92 = vld [vmem:[%s1 + $0x94] sm:$0xf]
  %v93 = vld [vmem:[%s1 + $0x98] sm:$0xf]
  %v94 = vld [vmem:[%s1 + $0x9c] sm:$0xf]
  %v95 = vld [vmem:[%s1 + $0xa0] sm:$0xf]
  %v96 = vld [vmem:[%s1 + $0xa4] sm:$0xf]
  %v97 = vld [vmem:[%s1 + $0xa8] sm:$0xf]
  %v98 = vld [vmem:[%s1 + $0xac] sm:$0xf]
  %v99 = vld [vmem:[%s1 + $0xb0] sm:$0xf]
  %v100 = vld [vmem:[%s1 + $0xb4] sm:$0xf]
  %v101 = vld [vmem:[%s1 + $0xb8] sm:$0xf]
  %v102 = vld [vmem:[%s1 + $0xbc] sm:$0xf]
  %v103 = vld [vmem:[%s1 + $0xc0] sm:$0xf]
  %v104 = vld [vmem:[%s1 + $0xc4] sm:$0xf]
  %v105 = vld [vmem:[%s1 + $0xc8] sm:$0xf]
  %v106 = vld [vmem:[%s1 + $0xcc] sm:$0xf]
  %v107 = vld [vmem:[%s1 + $0xd0] sm:$0xf]
  %v108 = vld [vmem:[%s1 + $0xd4] sm:$0xf]
  %v109 = vld [vmem:[%s1 + $0xd8] sm:$0xf]
  %v110 = vld [vmem:[%s1 + $0xdc] sm:$0xf]
  %v111 = vld [vmem:[%s1 + $0xe0] sm:$0xf]
  %v112 = vld [vmem:[%s1 + $0xe4] sm:$0xf]
  %v113 = vld [vmem:[%s1 + $0xe8] sm:$0xf]
  %v114 = vld [vmem:[%s1 + $0xec] sm:$0xf]
  %v115 = vld [vmem:[%s1 + $0xf0] sm:$0xf]
  %v116 = vld [vmem:[%s1 + $0xf4] sm:$0xf]
  %v117 = vld [vmem:[%s1 + $0xf8] sm:$0xf]
  %v118 = vld [vmem:[%s1 + $0xfc] sm:$0xf]
  %v119 = vld [vmem:[%s1 + $0x100] sm:$0xf]
  %v120 = vld [vmem:[%s1 + $0x104] sm:$0xf]
  %v121 = vld [vmem:[%s1 + $0x108] sm:$0xf]
  %v122 = vld [vmem:[%s1 + $0x10c] sm:$0xf]
  %v123 = vld [vmem:[%s1 + $0x110] sm:$0xf]
  %v124 = vld [vmem:[%s1 + $0x114] sm:$0xf]
  %v125 = vld [vmem:[%s1 + $0x118] sm:$0xf]
  %v126 = vld [vmem:[%s1 + $0x11c] sm:$0xf]
  %v127 = vld [vmem:[%s1 + $0x120] sm:$0xf]
  %v128 = vld [vmem:[%s1 + $0x124] sm:$0xf]
  %v129 = vld [vmem:[%s1 + $0x128] sm:$0xf]
  %v130 = vld [vmem:[%s1 + $0x12c] sm:$0xf]
  %v131 = vld [vmem:[%s1 + $0x130] sm:$0xf]
  %v132 = vld [vmem:[%s1 + $0x134] sm:$0xf]
  %v133 = vld [vmem:[%s1 + $0x138] sm:$0xf]
  %v134 = vld [vmem:[%s1 + $0x13c] sm:$0xf]
  %v135 = vld [vmem:[%s1 + $0x140] sm:$0xf]
  %v136 = vld [vmem:[%s1 + $0x144] sm:$0xf]
  %v137 = vld [vmem:[%s1 + $0x148] sm:$0xf]
  %v138 = vld [vmem:[%s1 + $0x14c] sm:$0xf]
  %v139 = vld [vmem:[%s1 + $0x150] sm:$0xf]
  %v140 = vld [vmem:[%s1 + $0x154] sm:$0xf]
  %v141 = vld [vmem:[%s1 + $0x158] sm:$0xf]
  %v142 = vld [vmem:[%s1 + $0x15c] sm:$0xf]
  %v143 = vld [vmem:[%s1 + $0x160] sm:$0xf]
  %v144 = vld [vmem:[%s1 + $0x164] sm:$0xf]
  %v145 = vld [vmem:[%s1 + $0x168] sm:$0xf]
  %v146 = vld [vmem:[%s1 + $0x16c] sm:$0xf]
  %v147 = vld [vmem:[%s1 + $0x170] sm:$0xf]
  %v148 = vld [vmem:[%s1 + $0x174] sm:$0xf]
  %v149 = vld [vmem:[%s1 + $0x178] sm:$0xf]
  %v150 = vld [vmem:[%s1 + $0x17c] sm:$0xf]
  %v151 = vld [vmem:[%s1 + $0x180] sm:$0xf]
  %v152 = vld [vmem:[%s1 + $0x184] sm:$0xf]
  %v153 = vld [vmem:[%s1 + $0x188] sm:$0xf]
  %v154 = vld [vmem:[%s1 + $0x18c] sm:$0xf]
  %v155 = vld [vmem:[%s1 + $0x190] sm:$0xf]
  %v156 = vld [vmem:[%s1 + $0x194] sm:$0xf]
  %v157 = vld [vmem:[%s1 + $0x198] sm:$0xf]
  %v158 = vld [vmem:[%s1 + $0x19c] sm:$0xf]
  %v159 = vld [vmem:[%s1 + $0x1a0] sm:$0xf]
  %v160 = vld [vmem:[%s1 + $0x1a4] sm:$0xf]
  %v161 = vld [vmem:[%s1 + $0x1a8] sm:$0xf]
  %v162 = vld [vmem:[%s1 + $0x1ac] sm:$0xf]
  %v163 = vld [vmem:[%s1 + $0x1b0] sm:$0xf]
  %v164 = vld [vmem:[%s1 + $0x1b4] sm:$0xf]
  %v165 = vld [vmem:[%s1 + $0x1b8] sm:$0xf]
  %v166 = vld [vmem:[%s1 + $0x1bc] sm:$0xf]
  %v167 = vld [vmem:[%s1 + $0x1c0] sm:$0xf]
  %v168 = vld [vmem:[%s1 + $0x1c4] sm:$0xf]
  %v169 = vld [vmem:[%s1 + $0x1c8] sm:$0xf]
  %v170 = vld [vmem:[%s1 + $0x1cc] sm:$0xf]
  %v171 = vld [vmem:[%s1 + $0x1d0] sm:$0xf]
  %v172 = vld [vmem:[%s1 + $0x1d4] sm:$0xf]
  %v173 = vld [vmem:[%s1 + $0x1d8] sm:$0xf]
  %v174 = vld [vmem:[%s1 + $0x1dc] sm:$0xf]
  %v175 = vld [vmem:[%s1 + $0x1e0] sm:$0xf]
  %v176 = vld [vmem:[%s1 + $0x1e4] sm:$0xf]
  %v177 = vld [vmem:[%s1 + $0x1e8] sm:$0xf]
  %v178 = vld [vmem:[%s1 + $0x1ec] sm:$0xf]
  %v179 = vld [vmem:[%s1 + $0x1f0] sm:$0xf]
  %v180 = vld [vmem:[%s1 + $0x1f4] sm:$0xf]
  %v181 = vld [vmem:[%s1 + $0x1f8] sm:$0xf]
  %v182 = vld [vmem:[%s1 + $0x1fc] sm:$0xf]
  %v183 = vld [vmem:[%s1 + $0x200] sm:$0xf]
  %v184 = vld [vmem:[%s1 + $0x204] sm:$0xf]
  %v185 = vld [vmem:[%s1 + $0x208] sm:$0xf]
  %v186 = vld [vmem:[%s1 + $0x20c] sm:$0xf]
  %v187 = vld [vmem:[%s1 + $0x210] sm:$0xf]
  %v188 = vld [vmem:[%s1 + $0x214] sm:$0xf]
  %v189 = vld [vmem:[%s1 + $0x218] sm:$0xf]
  %v190 = vld [vmem:[%s1 + $0x21c] sm:$0xf]
  %v191 = vld [vmem:[%s1 + $0x220] sm:$0xf]
  %v192 = vld [vmem:[%s1 + $0x224] sm:$0xf]
  %v193 = vld [vmem:[%s1 + $0x228] sm:$0xf]
  %v194 = vld [vmem:[%s1 + $0x22c] sm:$0xf]
  %v195 = vld [vmem:[%s1 + $0x230] sm:$0xf]
  %v196 = vld [vmem:[%s1 + $0x234] sm:$0xf]
  %v197 = vld [vmem:[%s1 + $0x238] sm:$0xf]
  %v198 = vld [vmem:[%s1 + $0x23c] sm:$0xf]
  %v239 = vunpack.c.l.b16 %v15
  %v240 = vunpack.c.h.b16 %v15
  %v241 = vunpack.c.l.b16 %v16
  %v242 = vunpack.c.h.b16 %v16
  %v243 = vunpack.c.l.b16 %v17
  %v244 = vunpack.c.h.b16 %v17
  %v245 = vunpack.c.l.b16 %v18
  %v246 = vunpack.c.h.b16 %v18
  %v247 = vunpack.c.l.b16 %v19
  %v248 = vunpack.c.l.b16 %v20
  %v249 = vunpack.c.h.b16 %v20
  %v250 = vunpack.c.l.b16 %v21
  %v251 = vunpack.c.h.b16 %v21
  %v252 = vunpack.c.l.b16 %v22
  %v253 = vunpack.c.h.b16 %v22
  %v254 = vunpack.c.l.b16 %v23
  %v255 = vunpack.c.h.b16 %v23
  %v256 = vunpack.c.l.b16 %v24
  %v257 = vunpack.c.l.b16 %v25
  %v258 = vunpack.c.h.b16 %v25
  %v259 = vunpack.c.l.b16 %v26
  %v260 = vunpack.c.h.b16 %v26
  %v261 = vunpack.c.l.b16 %v27
  %v262 = vunpack.c.h.b16 %v27
  %v263 = vunpack.c.l.b16 %v28
  %v264 = vunpack.c.h.b16 %v28
  %v265 = vunpack.c.l.b16 %v29
  %v266 = vunpack.c.l.b16 %v30
  %v267 = vunpack.c.h.b16 %v30
  %v268 = vunpack.c.l.b16 %v31
  %v269 = vunpack.c.h.b16 %v31
  %v270 = vunpack.c.l.b16 %v32
  %v271 = vunpack.c.h.b16 %v32
  %v272 = vunpack.c.l.b16 %v33
  %v273 = vunpack.c.h.b16 %v33
  %v274 = vunpack.c.l.b16 %v34
  %v275 = vunpack.c.l.b16 %v35
  %v276 = vunpack.c.h.b16 %v35
  %v277 = vunpack.c.l.b16 %v36
  %v278 = vunpack.c.h.b16 %v36
  %v279 = vunpack.c.l.b16 %v37
  %v280 = vunpack.c.h.b16 %v37
  %v281 = vunpack.c.l.b16 %v38
  %v282 = vunpack.c.h.b16 %v38
  %v283 = vunpack.c.l.b16 %v39
  %v284 = vunpack.c.l.b16 %v40
  %v285 = vunpack.c.h.b16 %v40
  %v286 = vunpack.c.l.b16 %v41
  %v287 = vunpack.c.h.b16 %v41
  %v288 = vunpack.c.l.b16 %v42
  %v289 = vunpack.c.h.b16 %v42
  %v290 = vunpack.c.l.b16 %v43
  %v291 = vunpack.c.h.b16 %v43
  %v292 = vunpack.c.l.b16 %v44
  %v293 = vunpack.c.l.b16 %v45
  %v294 = vunpack.c.h.b16 %v45
  %v295 = vunpack.c.l.b16 %v46
  %v296 = vunpack.c.h.b16 %v46
  %v297 = vunpack.c.l.b16 %v47
  %v298 = vunpack.c.h.b16 %v47
  %v299 = vunpack.c.l.b16 %v48
  %v300 = vunpack.c.h.b16 %v48
  %v301 = vunpack.c.l.b16 %v49
  %v302 = vunpack.c.l.b16 %v50
  %v303 = vunpack.c.h.b16 %v50
  %v304 = vunpack.c.l.b16 %v51
  %v305 = vunpack.c.h.b16 %v51
  %v306 = vunpack.c.l.b16 %v52
  %v307 = vunpack.c.h.b16 %v52
  %v308 = vunpack.c.l.b16 %v53
  %v309 = vunpack.c.h.b16 %v53
  %v310 = vunpack.c.l.b16 %v54
  %v311 = vpack.c.b16 %v248, %v239
  %v312 = vpack.c.b16 %v249, %v240
  %v313 = vpack.c.b16 %v250, %v241
  %v314 = vpack.c.b16 %v251, %v242
  %v315 = vpack.c.b16 %v252, %v243
  %v316 = vpack.c.b16 %v253, %v244
  %v317 = vpack.c.b16 %v254, %v245
  %v318 = vpack.c.b16 %v255, %v246
  %v319 = vpack.c.b16 %v256, %v247
  %v320 = vpack.c.b16 %v266, %v257
  %v321 = vpack.c.b16 %v267, %v258
  %v322 = vpack.c.b16 %v268, %v259
  %v323 = vpack.c.b16 %v269, %v260
  %v324 = vpack.c.b16 %v270, %v261
  %v325 = vpack.c.b16 %v271, %v262
  %v326 = vpack.c.b16 %v272, %v263
  %v327 = vpack.c.b16 %v273, %v264
  %v328 = vpack.c.b16 %v274, %v265
  %v329 = vpack.c.b16 %v284, %v275
  %v330 = vpack.c.b16 %v285, %v276
  %v331 = vpack.c.b16 %v286, %v277
  %v332 = vpack.c.b16 %v287, %v278
  %v333 = vpack.c.b16 %v288, %v279
  %v334 = vpack.c.b16 %v289, %v280
  %v335 = vpack.c.b16 %v290, %v281
  %v336 = vpack.c.b16 %v291, %v282
  %v337 = vpack.c.b16 %v292, %v283
  %v338 = vpack.c.b16 %v302, %v293
  %v339 = vpack.c.b16 %v303, %v294
  %v340 = vpack.c.b16 %v304, %v295
  %v341 = vpack.c.b16 %v305, %v296
  %v342 = vpack.c.b16 %v306, %v297
  %v343 = vpack.c.b16 %v307, %v298
  %v344 = vpack.c.b16 %v308, %v299
  %v345 = vpack.c.b16 %v309, %v300
  %v346 = vpack.c.b16 %v310, %v301
  %v527 = vunpack.c.l.b16 %v55
  %v528 = vunpack.c.l.b16 %v56
  %v529 = vunpack.c.l.b16 %v57
  %v530 = vunpack.c.l.b16 %v58
  %v531 = vunpack.c.l.b16 %v59
  %v532 = vunpack.c.l.b16 %v60
  %v533 = vunpack.c.l.b16 %v61
  %v534 = vunpack.c.l.b16 %v62
  %v535 = vunpack.c.l.b16 %v63
  %v536 = vunpack.c.l.b16 %v64
  %v537 = vunpack.c.l.b16 %v65
  %v538 = vunpack.c.l.b16 %v66
  %v539 = vunpack.c.l.b16 %v67
  %v540 = vunpack.c.l.b16 %v68
  %v541 = vunpack.c.l.b16 %v69
  %v542 = vunpack.c.l.b16 %v70
  %v543 = vunpack.c.l.b16 %v71
  %v544 = vunpack.c.l.b16 %v72
  %v545 = vunpack.c.l.b16 %v73
  %v546 = vunpack.c.l.b16 %v74
  %v547 = vunpack.c.l.b16 %v75
  %v548 = vunpack.c.l.b16 %v76
  %v549 = vunpack.c.l.b16 %v77
  %v550 = vunpack.c.l.b16 %v78
  %v551 = vunpack.c.l.b16 %v79
  %v552 = vunpack.c.l.b16 %v80
  %v553 = vunpack.c.l.b16 %v81
  %v554 = vunpack.c.l.b16 %v82
  %v555 = vunpack.c.l.b16 %v83
  %v556 = vunpack.c.l.b16 %v84
  %v557 = vunpack.c.l.b16 %v85
  %v558 = vunpack.c.l.b16 %v86
  %v559 = vunpack.c.l.b16 %v87
  %v560 = vunpack.c.l.b16 %v88
  %v561 = vunpack.c.l.b16 %v89
  %v562 = vunpack.c.l.b16 %v90
  %v563 = vunpack.c.l.b16 %v91
  %v564 = vunpack.c.l.b16 %v92
  %v565 = vunpack.c.l.b16 %v93
  %v566 = vunpack.c.l.b16 %v94
  %v567 = vunpack.c.l.b16 %v95
  %v568 = vunpack.c.l.b16 %v96
  %v569 = vunpack.c.l.b16 %v97
  %v570 = vunpack.c.l.b16 %v98
  %v571 = vunpack.c.l.b16 %v99
  %v572 = vunpack.c.l.b16 %v100
  %v573 = vunpack.c.l.b16 %v101
  %v574 = vunpack.c.l.b16 %v102
  %v575 = vunpack.c.l.b16 %v103
  %v576 = vunpack.c.l.b16 %v104
  %v577 = vunpack.c.l.b16 %v105
  %v578 = vunpack.c.l.b16 %v106
  %v579 = vunpack.c.l.b16 %v107
  %v580 = vunpack.c.l.b16 %v108
  %v581 = vunpack.c.l.b16 %v109
  %v582 = vunpack.c.l.b16 %v110
  %v583 = vunpack.c.l.b16 %v111
  %v584 = vunpack.c.l.b16 %v112
  %v585 = vunpack.c.l.b16 %v113
  %v586 = vunpack.c.l.b16 %v114
  %v587 = vunpack.c.l.b16 %v115
  %v588 = vunpack.c.l.b16 %v116
  %v589 = vunpack.c.l.b16 %v117
  %v590 = vunpack.c.l.b16 %v118
  %v591 = vunpack.c.l.b16 %v119
  %v592 = vunpack.c.l.b16 %v120
  %v593 = vunpack.c.l.b16 %v121
  %v594 = vunpack.c.l.b16 %v122
  %v595 = vunpack.c.l.b16 %v123
  %v596 = vunpack.c.l.b16 %v124
  %v597 = vunpack.c.l.b16 %v125
  %v598 = vunpack.c.l.b16 %v126
  %v599 = vunpack.c.l.b16 %v127
  %v600 = vunpack.c.l.b16 %v128
  %v601 = vunpack.c.l.b16 %v129
  %v602 = vunpack.c.l.b16 %v130
  %v603 = vunpack.c.l.b16 %v131
  %v604 = vunpack.c.l.b16 %v132
  %v605 = vunpack.c.l.b16 %v133
  %v606 = vunpack.c.l.b16 %v134
  %v607 = vunpack.c.l.b16 %v135
  %v608 = vunpack.c.l.b16 %v136
  %v609 = vunpack.c.l.b16 %v137
  %v610 = vunpack.c.l.b16 %v138
  %v611 = vunpack.c.l.b16 %v139
  %v612 = vunpack.c.l.b16 %v140
  %v613 = vunpack.c.l.b16 %v141
  %v614 = vunpack.c.l.b16 %v142
  %v615 = vunpack.c.l.b16 %v143
  %v616 = vunpack.c.l.b16 %v144
  %v617 = vunpack.c.l.b16 %v145
  %v618 = vunpack.c.l.b16 %v146
  %v619 = vunpack.c.l.b16 %v147
  %v620 = vunpack.c.l.b16 %v148
  %v621 = vunpack.c.l.b16 %v149
  %v622 = vunpack.c.l.b16 %v150
  %v623 = vunpack.c.l.b16 %v151
  %v624 = vunpack.c.l.b16 %v152
  %v625 = vunpack.c.l.b16 %v153
  %v626 = vunpack.c.l.b16 %v154
  %v627 = vunpack.c.l.b16 %v155
  %v628 = vunpack.c.l.b16 %v156
  %v629 = vunpack.c.l.b16 %v157
  %v630 = vunpack.c.l.b16 %v158
  %v631 = vunpack.c.l.b16 %v159
  %v632 = vunpack.c.l.b16 %v160
  %v633 = vunpack.c.l.b16 %v161
  %v634 = vunpack.c.l.b16 %v162
  %v635 = vunpack.c.l.b16 %v163
  %v636 = vunpack.c.l.b16 %v164
  %v637 = vunpack.c.l.b16 %v165
  %v638 = vunpack.c.l.b16 %v166
  %v639 = vunpack.c.l.b16 %v167
  %v640 = vunpack.c.l.b16 %v168
  %v641 = vunpack.c.l.b16 %v169
  %v642 = vunpack.c.l.b16 %v170
  %v643 = vunpack.c.l.b16 %v171
  %v644 = vunpack.c.l.b16 %v172
  %v645 = vunpack.c.l.b16 %v173
  %v646 = vunpack.c.l.b16 %v174
  %v647 = vunpack.c.l.b16 %v175
  %v648 = vunpack.c.l.b16 %v176
  %v649 = vunpack.c.l.b16 %v177
  %v650 = vunpack.c.l.b16 %v178
  %v651 = vunpack.c.l.b16 %v179
  %v652 = vunpack.c.l.b16 %v180
  %v653 = vunpack.c.l.b16 %v181
  %v654 = vunpack.c.l.b16 %v182
  %v655 = vunpack.c.l.b16 %v183
  %v656 = vunpack.c.l.b16 %v184
  %v657 = vunpack.c.l.b16 %v185
  %v658 = vunpack.c.l.b16 %v186
  %v659 = vunpack.c.l.b16 %v187
  %v660 = vunpack.c.l.b16 %v188
  %v661 = vunpack.c.l.b16 %v189
  %v662 = vunpack.c.l.b16 %v190
  %v663 = vunpack.c.l.b16 %v191
  %v664 = vunpack.c.l.b16 %v192
  %v665 = vunpack.c.l.b16 %v193
  %v666 = vunpack.c.l.b16 %v194
  %v667 = vunpack.c.l.b16 %v195
  %v668 = vunpack.c.l.b16 %v196
  %v669 = vunpack.c.l.b16 %v197
  %v670 = vunpack.c.l.b16 %v198
  %v671 = vpack.c.b16 %v528, %v527
  %v672 = vpack.c.b16 %v530, %v529
  %v673 = vpack.c.b16 %v532, %v531
  %v674 = vpack.c.b16 %v534, %v533
  %v675 = vpack.c.b16 %v536, %v535
  %v676 = vpack.c.b16 %v538, %v537
  %v677 = vpack.c.b16 %v540, %v539
  %v678 = vpack.c.b16 %v542, %v541
  %v679 = vpack.c.b16 %v544, %v543
  %v680 = vpack.c.b16 %v546, %v545
  %v681 = vpack.c.b16 %v548, %v547
  %v682 = vpack.c.b16 %v550, %v549
  %v683 = vpack.c.b16 %v552, %v551
  %v684 = vpack.c.b16 %v554, %v553
  %v685 = vpack.c.b16 %v556, %v555
  %v686 = vpack.c.b16 %v558, %v557
  %v687 = vpack.c.b16 %v560, %v559
  %v688 = vpack.c.b16 %v562, %v561
  %v689 = vpack.c.b16 %v564, %v563
  %v690 = vpack.c.b16 %v566, %v565
  %v691 = vpack.c.b16 %v568, %v567
  %v692 = vpack.c.b16 %v570, %v569
  %v693 = vpack.c.b16 %v572, %v571
  %v694 = vpack.c.b16 %v574, %v573
  %v695 = vpack.c.b16 %v576, %v575
  %v696 = vpack.c.b16 %v578, %v577
  %v697 = vpack.c.b16 %v580, %v579
  %v698 = vpack.c.b16 %v582, %v581
  %v699 = vpack.c.b16 %v584, %v583
  %v700 = vpack.c.b16 %v586, %v585
  %v701 = vpack.c.b16 %v588, %v587
  %v702 = vpack.c.b16 %v590, %v589
  %v703 = vpack.c.b16 %v592, %v591
  %v704 = vpack.c.b16 %v594, %v593
  %v705 = vpack.c.b16 %v596, %v595
  %v706 = vpack.c.b16 %v598, %v597
  %v707 = vpack.c.b16 %v600, %v599
  %v708 = vpack.c.b16 %v602, %v601
  %v709 = vpack.c.b16 %v604, %v603
  %v710 = vpack.c.b16 %v606, %v605
  %v711 = vpack.c.b16 %v608, %v607
  %v712 = vpack.c.b16 %v610, %v609
  %v713 = vpack.c.b16 %v612, %v611
  %v714 = vpack.c.b16 %v614, %v613
  %v715 = vpack.c.b16 %v616, %v615
  %v716 = vpack.c.b16 %v618, %v617
  %v717 = vpack.c.b16 %v620, %v619
  %v718 = vpack.c.b16 %v622, %v621
  %v719 = vpack.c.b16 %v624, %v623
  %v720 = vpack.c.b16 %v626, %v625
  %v721 = vpack.c.b16 %v628, %v627
  %v722 = vpack.c.b16 %v630, %v629
  %v723 = vpack.c.b16 %v632, %v631
  %v724 = vpack.c.b16 %v634, %v633
  %v725 = vpack.c.b16 %v636, %v635
  %v726 = vpack.c.b16 %v638, %v637
  %v727 = vpack.c.b16 %v640, %v639
  %v728 = vpack.c.b16 %v642, %v641
  %v729 = vpack.c.b16 %v644, %v643
  %v730 = vpack.c.b16 %v646, %v645
  %v731 = vpack.c.b16 %v648, %v647
  %v732 = vpack.c.b16 %v650, %v649
  %v733 = vpack.c.b16 %v652, %v651
  %v734 = vpack.c.b16 %v654, %v653
  %v735 = vpack.c.b16 %v656, %v655
  %v736 = vpack.c.b16 %v658, %v657
  %v737 = vpack.c.b16 %v660, %v659
  %v738 = vpack.c.b16 %v662, %v661
  %v739 = vpack.c.b16 %v664, %v663
  %v740 = vpack.c.b16 %v666, %v665
  %v741 = vpack.c.b16 %v668, %v667
  %v742 = vpack.c.b16 %v670, %v669
  %815 = vmatprep.subr.bf16.mxu0 0
  %816 = vmatpush1.bf16.msra.mxu0 %v671
  %817 = vmatprep.subr.bf16.mxu0 0
  %818 = vmatpush1.bf16.msra.mxu0 %v672
  %819 = vmatprep.subr.bf16.mxu0 0
  %820 = vmatpush1.bf16.msra.mxu0 %v673
  %821 = vmatprep.subr.bf16.mxu0 0
  %822 = vmatpush1.bf16.msra.mxu0 %v674
  %823 = vmatprep.subr.bf16.mxu0 0
  %824 = vmatpush1.bf16.msra.mxu0 %v675
  %825 = vmatprep.subr.bf16.mxu0 0
  %826 = vmatpush1.bf16.msra.mxu0 %v676
  %827 = vmatprep.subr.bf16.mxu0 0
  %828 = vmatpush1.bf16.msra.mxu0 %v677
  %829 = vmatprep.subr.bf16.mxu0 0
  %830 = vmatpush1.bf16.msra.mxu0 %v678
  %831 = vmatprep.subr.bf16.mxu0 0
  %832 = vmatpush1.bf16.msra.mxu0 %v679
  %833 = vmatprep.subr.bf16.mxu0 0
  %834 = vmatpush1.bf16.msra.mxu0 %v680
  %835 = vmatprep.subr.bf16.mxu0 0
  %836 = vmatpush1.bf16.msra.mxu0 %v681
  %837 = vmatprep.subr.bf16.mxu0 0
  %838 = vmatpush1.bf16.msra.mxu0 %v682
  %839 = vmatprep.subr.bf16.mxu0 0
  %840 = vmatpush1.bf16.msra.mxu0 %v683
  %841 = vmatprep.subr.bf16.mxu0 0
  %842 = vmatpush1.bf16.msra.mxu0 %v684
  %843 = vmatprep.subr.bf16.mxu0 0
  %844 = vmatpush1.bf16.msra.mxu0 %v685
  %845 = vmatprep.subr.bf16.mxu0 0
  %846 = vmatpush1.bf16.msra.mxu0 %v686
  %847 = vmatprep.mubr.bf16.mxu0 %v312
  %848 = vmatmul.mubr.bf16.gmra.mrb[0].mxu0 %v311
  %v849 = vpop.f32.mrb[0].mxu0
  %v850 = vadd.f32 0.0, %v849
  %v851 = vpop.f32.mrb[0].mxu0
  %v852 = vpop.f32.mrb[0].mxu0
  %v853 = vadd.f32 0.0, %v852
  %v854 = vpop.f32.mrb[0].mxu0
  %855 = vmatprep.mubr.bf16.mxu0 %v321
  %856 = vmatmul.mubr.bf16.gmra.mrb[0].mxu0 %v320
  %v857 = vpop.f32.mrb[0].mxu0
  %v858 = vadd.f32 0.0, %v857
  %v859 = vpop.f32.mrb[0].mxu0
  %v860 = vpop.f32.mrb[0].mxu0
  %v861 = vadd.f32 0.0, %v860
  %v862 = vpop.f32.mrb[0].mxu0
  %863 = vmatprep.mubr.bf16.mxu0 %v330
  %864 = vmatmul.mubr.bf16.gmra.mrb[0].mxu0 %v329
  %v865 = vpop.f32.mrb[0].mxu0
  %v866 = vadd.f32 0.0, %v865
  %v867 = vpop.f32.mrb[0].mxu0
  %v868 = vpop.f32.mrb[0].mxu0
  %v869 = vadd.f32 0.0, %v868
  %v870 = vpop.f32.mrb[0].mxu0
  %871 = vmatprep.mubr.bf16.mxu0 %v339
  %872 = vmatmul.mubr.bf16.gmra.mrb[0].mxu0 %v338
  %v873 = vpop.f32.mrb[0].mxu0
  %v874 = vadd.f32 0.0, %v873
  %v875 = vpop.f32.mrb[0].mxu0
  %v876 = vpop.f32.mrb[0].mxu0
  %v877 = vadd.f32 0.0, %v876
  %v878 = vpop.f32.mrb[0].mxu0
  %879 = vdwg.mxu0
  %880 = vmatprep.subr.bf16.mxu0 0
  %881 = vmatpush1.bf16.msra.mxu0 %v687
  %882 = vmatprep.subr.bf16.mxu0 0
  %883 = vmatpush1.bf16.msra.mxu0 %v688
  %884 = vmatprep.subr.bf16.mxu0 0
  %885 = vmatpush1.bf16.msra.mxu0 %v689
  %886 = vmatprep.subr.bf16.mxu0 0
  %887 = vmatpush1.bf16.msra.mxu0 %v690
  %888 = vmatprep.subr.bf16.mxu0 0
  %889 = vmatpush1.bf16.msra.mxu0 %v691
  %890 = vmatprep.subr.bf16.mxu0 0
  %891 = vmatpush1.bf16.msra.mxu0 %v692
  %892 = vmatprep.subr.bf16.mxu0 0
  %893 = vmatpush1.bf16.msra.mxu0 %v693
  %894 = vmatprep.subr.bf16.mxu0 0
  %895 = vmatpush1.bf16.msra.mxu0 %v694
  %896 = vmatprep.subr.bf16.mxu0 0
  %897 = vmatpush1.bf16.msra.mxu0 %v695
  %898 = vmatprep.subr.bf16.mxu0 0
  %899 = vmatpush1.bf16.msra.mxu0 %v696
  %900 = vmatprep.subr.bf16.mxu0 0
  %901 = vmatpush1.bf16.msra.mxu0 %v697
  %902 = vmatprep.subr.bf16.mxu0 0
  %903 = vmatpush1.bf16.msra.mxu0 %v698
  %904 = vmatprep.subr.bf16.mxu0 0
  %905 = vmatpush1.bf16.msra.mxu0 %v699
  %906 = vmatprep.subr.bf16.mxu0 0
  %907 = vmatpush1.bf16.msra.mxu0 %v700
  %908 = vmatprep.subr.bf16.mxu0 0
  %909 = vmatpush1.bf16.msra.mxu0 %v701
  %910 = vmatprep.subr.bf16.mxu0 0
  %911 = vmatpush1.bf16.msra.mxu0 %v702
  %912 = vmatprep.mubr.bf16.mxu0 %v314
  %913 = vmatmul.mubr.bf16.gmra.mrb[0].mxu0 %v313
  %v914 = vpop.f32.mrb[0].mxu0
  %v915 = vadd.f32 %v850, %v914
  %v916 = vpop.f32.mrb[0].mxu0
  %v917 = vpop.f32.mrb[0].mxu0
  %v918 = vadd.f32 %v853, %v917
  %v919 = vpop.f32.mrb[0].mxu0
  %920 = vmatprep.mubr.bf16.mxu0 %v323
  %921 = vmatmul.mubr.bf16.gmra.mrb[0].mxu0 %v322
  %v922 = vpop.f32.mrb[0].mxu0
  %v923 = vadd.f32 %v858, %v922
  %v924 = vpop.f32.mrb[0].mxu0
  %v925 = vpop.f32.mrb[0].mxu0
  %v926 = vadd.f32 %v861, %v925
  %v927 = vpop.f32.mrb[0].mxu0
  %928 = vmatprep.mubr.bf16.mxu0 %v332
  %929 = vmatmul.mubr.bf16.gmra.mrb[0].mxu0 %v331
  %v930 = vpop.f32.mrb[0].mxu0
  %v931 = vadd.f32 %v866, %v930
  %v932 = vpop.f32.mrb[0].mxu0
  %v933 = vpop.f32.mrb[0].mxu0
  %v934 = vadd.f32 %v869, %v933
  %v935 = vpop.f32.mrb[0].mxu0
  %936 = vmatprep.mubr.bf16.mxu0 %v341
  %937 = vmatmul.mubr.bf16.gmra.mrb[0].mxu0 %v340
  %v938 = vpop.f32.mrb[0].mxu0
  %v939 = vadd.f32 %v874, %v938
  %v940 = vpop.f32.mrb[0].mxu0
  %v941 = vpop.f32.mrb[0].mxu0
  %v942 = vadd.f32 %v877, %v941
  %v943 = vpop.f32.mrb[0].mxu0
  %944 = vdwg.mxu0
  %945 = vmatprep.subr.bf16.mxu0 0
  %946 = vmatpush1.bf16.msra.mxu0 %v703
  %947 = vmatprep.subr.bf16.mxu0 0
  %948 = vmatpush1.bf16.msra.mxu0 %v704
  %949 = vmatprep.subr.bf16.mxu0 0
  %950 = vmatpush1.bf16.msra.mxu0 %v705
  %951 = vmatprep.subr.bf16.mxu0 0
  %952 = vmatpush1.bf16.msra.mxu0 %v706
  %953 = vmatprep.subr.bf16.mxu0 0
  %954 = vmatpush1.bf16.msra.mxu0 %v707
  %955 = vmatprep.subr.bf16.mxu0 0
  %956 = vmatpush1.bf16.msra.mxu0 %v708
  %957 = vmatprep.subr.bf16.mxu0 0
  %958 = vmatpush1.bf16.msra.mxu0 %v709
  %959 = vmatprep.subr.bf16.mxu0 0
  %960 = vmatpush1.bf16.msra.mxu0 %v710
  %961 = vmatprep.subr.bf16.mxu0 0
  %962 = vmatpush1.bf16.msra.mxu0 %v711
  %963 = vmatprep.subr.bf16.mxu0 0
  %964 = vmatpush1.bf16.msra.mxu0 %v712
  %965 = vmatprep.subr.bf16.mxu0 0
  %966 = vmatpush1.bf16.msra.mxu0 %v713
  %967 = vmatprep.subr.bf16.mxu0 0
  %968 = vmatpush1.bf16.msra.mxu0 %v714
  %969 = vmatprep.subr.bf16.mxu0 0
  %970 = vmatpush1.bf16.msra.mxu0 %v715
  %971 = vmatprep.subr.bf16.mxu0 0
  %972 = vmatpush1.bf16.msra.mxu0 %v716
  %973 = vmatprep.subr.bf16.mxu0 0
  %974 = vmatpush1.bf16.msra.mxu0 %v717
  %975 = vmatprep.subr.bf16.mxu0 0
  %976 = vmatpush1.bf16.msra.mxu0 %v718
  %977 = vmatprep.mubr.bf16.mxu0 %v316
  %978 = vmatmul.mubr.bf16.gmra.mrb[0].mxu0 %v315
  %v979 = vpop.f32.mrb[0].mxu0
  %v980 = vadd.f32 %v915, %v979
  %v981 = vpop.f32.mrb[0].mxu0
  %v982 = vpop.f32.mrb[0].mxu0
  %v983 = vadd.f32 %v918, %v982
  %v984 = vpop.f32.mrb[0].mxu0
  %985 = vmatprep.mubr.bf16.mxu0 %v325
  %986 = vmatmul.mubr.bf16.gmra.mrb[0].mxu0 %v324
  %v987 = vpop.f32.mrb[0].mxu0
  %v988 = vadd.f32 %v923, %v987
  %v989 = vpop.f32.mrb[0].mxu0
  %v990 = vpop.f32.mrb[0].mxu0
  %v991 = vadd.f32 %v926, %v990
  %v992 = vpop.f32.mrb[0].mxu0
  %993 = vmatprep.mubr.bf16.mxu0 %v334
  %994 = vmatmul.mubr.bf16.gmra.mrb[0].mxu0 %v333
  %v995 = vpop.f32.mrb[0].mxu0
  %v996 = vadd.f32 %v931, %v995
  %v997 = vpop.f32.mrb[0].mxu0
  %v998 = vpop.f32.mrb[0].mxu0
  %v999 = vadd.f32 %v934, %v998
  %v1000 = vpop.f32.mrb[0].mxu0
  %1001 = vmatprep.mubr.bf16.mxu0 %v343
  %1002 = vmatmul.mubr.bf16.gmra.mrb[0].mxu0 %v342
  %v1003 = vpop.f32.mrb[0].mxu0
  %v1004 = vadd.f32 %v939, %v1003
  %v1005 = vpop.f32.mrb[0].mxu0
  %v1006 = vpop.f32.mrb[0].mxu0
  %v1007 = vadd.f32 %v942, %v1006
  %v1008 = vpop.f32.mrb[0].mxu0
  %1009 = vdwg.mxu0
  %1010 = vmatprep.subr.bf16.mxu0 0
  %1011 = vmatpush1.bf16.msra.mxu0 %v719
  %1012 = vmatprep.subr.bf16.mxu0 0
  %1013 = vmatpush1.bf16.msra.mxu0 %v720
  %1014 = vmatprep.subr.bf16.mxu0 0
  %1015 = vmatpush1.bf16.msra.mxu0 %v721
  %1016 = vmatprep.subr.bf16.mxu0 0
  %1017 = vmatpush1.bf16.msra.mxu0 %v722
  %1018 = vmatprep.subr.bf16.mxu0 0
  %1019 = vmatpush1.bf16.msra.mxu0 %v723
  %1020 = vmatprep.subr.bf16.mxu0 0
  %1021 = vmatpush1.bf16.msra.mxu0 %v724
  %1022 = vmatprep.subr.bf16.mxu0 0
  %1023 = vmatpush1.bf16.msra.mxu0 %v725
  %1024 = vmatprep.subr.bf16.mxu0 0
  %1025 = vmatpush1.bf16.msra.mxu0 %v726
  %1026 = vmatprep.subr.bf16.mxu0 0
  %1027 = vmatpush1.bf16.msra.mxu0 %v727
  %1028 = vmatprep.subr.bf16.mxu0 0
  %1029 = vmatpush1.bf16.msra.mxu0 %v728
  %1030 = vmatprep.subr.bf16.mxu0 0
  %1031 = vmatpush1.bf16.msra.mxu0 %v729
  %1032 = vmatprep.subr.bf16.mxu0 0
  %1033 = vmatpush1.bf16.msra.mxu0 %v730
  %1034 = vmatprep.subr.bf16.mxu0 0
  %1035 = vmatpush1.bf16.msra.mxu0 %v731
  %1036 = vmatprep.subr.bf16.mxu0 0
  %1037 = vmatpush1.bf16.msra.mxu0 %v732
  %1038 = vmatprep.subr.bf16.mxu0 0
  %1039 = vmatpush1.bf16.msra.mxu0 %v733
  %1040 = vmatprep.subr.bf16.mxu0 0
  %1041 = vmatpush1.bf16.msra.mxu0 %v734
  %1042 = vmatprep.mubr.bf16.mxu0 %v318
  %1043 = vmatmul.mubr.bf16.gmra.mrb[0].mxu0 %v317
  %v1044 = vpop.f32.mrb[0].mxu0
  %v1045 = vadd.f32 %v980, %v1044
  %v1046 = vpop.f32.mrb[0].mxu0
  %v1047 = vpop.f32.mrb[0].mxu0
  %v1048 = vadd.f32 %v983, %v1047
  %v1049 = vpop.f32.mrb[0].mxu0
  %1050 = vmatprep.mubr.bf16.mxu0 %v327
  %1051 = vmatmul.mubr.bf16.gmra.mrb[0].mxu0 %v326
  %v1052 = vpop.f32.mrb[0].mxu0
  %v1053 = vadd.f32 %v988, %v1052
  %v1054 = vpop.f32.mrb[0].mxu0
  %v1055 = vpop.f32.mrb[0].mxu0
  %v1056 = vadd.f32 %v991, %v1055
  %v1057 = vpop.f32.mrb[0].mxu0
  %1058 = vmatprep.mubr.bf16.mxu0 %v336
  %1059 = vmatmul.mubr.bf16.gmra.mrb[0].mxu0 %v335
  %v1060 = vpop.f32.mrb[0].mxu0
  %v1061 = vadd.f32 %v996, %v1060
  %v1062 = vpop.f32.mrb[0].mxu0
  %v1063 = vpop.f32.mrb[0].mxu0
  %v1064 = vadd.f32 %v999, %v1063
  %v1065 = vpop.f32.mrb[0].mxu0
  %1066 = vmatprep.mubr.bf16.mxu0 %v345
  %1067 = vmatmul.mubr.bf16.gmra.mrb[0].mxu0 %v344
  %v1068 = vpop.f32.mrb[0].mxu0
  %v1069 = vadd.f32 %v1004, %v1068
  %v1070 = vpop.f32.mrb[0].mxu0
  %v1071 = vpop.f32.mrb[0].mxu0
  %v1072 = vadd.f32 %v1007, %v1071
  %v1073 = vpop.f32.mrb[0].mxu0
  %1074 = vdwg.mxu0
  %1075 = vmatprep.subr.bf16.mxu0 0
  %1076 = vmatpush1.bf16.msra.mxu0 %v735
  %1077 = vmatprep.subr.bf16.mxu0 0
  %1078 = vmatpush1.bf16.msra.mxu0 %v736
  %1079 = vmatprep.subr.bf16.mxu0 0
  %1080 = vmatpush1.bf16.msra.mxu0 %v737
  %1081 = vmatprep.subr.bf16.mxu0 0
  %1082 = vmatpush1.bf16.msra.mxu0 %v738
  %1083 = vmatprep.subr.bf16.mxu0 0
  %1084 = vmatpush1.bf16.msra.mxu0 %v739
  %1085 = vmatprep.subr.bf16.mxu0 0
  %1086 = vmatpush1.bf16.msra.mxu0 %v740
  %1087 = vmatprep.subr.bf16.mxu0 0
  %1088 = vmatpush1.bf16.msra.mxu0 %v741
  %1089 = vmatprep.subr.bf16.mxu0 0
  %1090 = vmatpush1.bf16.msra.mxu0 %v742
  %1091 = vmatprep.subr.bf16.mxu0 0
  %1092 = vmatpush1.bf16.msra.mxu0 0
  %1093 = vmatprep.subr.bf16.mxu0 0
  %1094 = vmatpush1.bf16.msra.mxu0 0
  %1095 = vmatprep.subr.bf16.mxu0 0
  %1096 = vmatpush1.bf16.msra.mxu0 0
  %1097 = vmatprep.subr.bf16.mxu0 0
  %1098 = vmatpush1.bf16.msra.mxu0 0
  %1099 = vmatprep.subr.bf16.mxu0 0
  %1100 = vmatpush1.bf16.msra.mxu0 0
  %1101 = vmatprep.subr.bf16.mxu0 0
  %1102 = vmatpush1.bf16.msra.mxu0 0
  %1103 = vmatprep.subr.bf16.mxu0 0
  %1104 = vmatpush1.bf16.msra.mxu0 0
  %1105 = vmatprep.subr.bf16.mxu0 0
  %1106 = vmatpush1.bf16.msra.mxu0 0
  %1107 = vmatprep.mubr.bf16.mxu0 0
  %1108 = vmatmul.mubr.bf16.gmra.mrb[0].mxu0 %v319
  %v1109 = vpop.f32.mrb[0].mxu0
  %v1110 = vadd.f32 %v1045, %v1109
  %v1111 = vpop.f32.mrb[0].mxu0
  %v1112 = vpop.f32.mrb[0].mxu0
  %v1113 = vadd.f32 %v1048, %v1112
  %v1114 = vpop.f32.mrb[0].mxu0
  %1115 = vmatprep.mubr.bf16.mxu0 0
  %1116 = vmatmul.mubr.bf16.gmra.mrb[0].mxu0 %v328
  %v1117 = vpop.f32.mrb[0].mxu0
  %v1118 = vadd.f32 %v1053, %v1117
  %v1119 = vpop.f32.mrb[0].mxu0
  %v1120 = vpop.f32.mrb[0].mxu0
  %v1121 = vadd.f32 %v1056, %v1120
  %v1122 = vpop.f32.mrb[0].mxu0
  %1123 = vmatprep.mubr.bf16.mxu0 0
  %1124 = vmatmul.mubr.bf16.gmra.mrb[0].mxu0 %v337
  %v1125 = vpop.f32.mrb[0].mxu0
  %v1126 = vadd.f32 %v1061, %v1125
  %v1127 = vpop.f32.mrb[0].mxu0
  %v1128 = vpop.f32.mrb[0].mxu0
  %v1129 = vadd.f32 %v1064, %v1128
  %v1130 = vpop.f32.mrb[0].mxu0
  %1131 = vmatprep.mubr.bf16.mxu0 0
  %1132 = vmatmul.mubr.bf16.gmra.mrb[0].mxu0 %v346
  %v1133 = vpop.f32.mrb[0].mxu0
  %v1134 = vadd.f32 %v1069, %v1133
  %v1135 = vpop.f32.mrb[0].mxu0
  %v1136 = vpop.f32.mrb[0].mxu0
  %v1137 = vadd.f32 %v1072, %v1136
  %v1138 = vpop.f32.mrb[0].mxu0
  %1139 = vdwg.mxu0
  %v1140 = vld [vmem:[%s2] sm:$0xff]
  %v1141 = vld [vmem:[%s2 + $0x8] sm:$0xff]
  %v1142 = vld [vmem:[%s2 + $0x10] sm:$0xff]
  %v1143 = vld [vmem:[%s2 + $0x18] sm:$0xff]
  %v1144 = vld [vmem:[%s2 + $0x20] sm:$0xff]
  %v1145 = vld [vmem:[%s2 + $0x28] sm:$0xff]
  %v1146 = vld [vmem:[%s2 + $0x30] sm:$0xff]
  %v1147 = vld [vmem:[%s2 + $0x38] sm:$0xff]
  %1149 = vset.pattern.permute.xlu0 0
  %1150 = vperm.xlu0 %1149, %v1140
  %v1151 = vpop.permute.xlu0 %1150
  %1154 = vset.pattern.permute.xlu0 0
  %1155 = vperm.xlu0 %1154, %v1141
  %v1156 = vpop.permute.xlu0 %1155
  %1159 = vset.pattern.permute.xlu0 0
  %1160 = vperm.xlu0 %1159, %v1142
  %v1161 = vpop.permute.xlu0 %1160
  %1164 = vset.pattern.permute.xlu0 0
  %1165 = vperm.xlu0 %1164, %v1143
  %v1166 = vpop.permute.xlu0 %1165
  %1169 = vset.pattern.permute.xlu0 0
  %1170 = vperm.xlu0 %1169, %v1144
  %v1171 = vpop.permute.xlu0 %1170
  %1174 = vset.pattern.permute.xlu0 0
  %1175 = vperm.xlu0 %1174, %v1145
  %v1176 = vpop.permute.xlu0 %1175
  %1179 = vset.pattern.permute.xlu0 0
  %1180 = vperm.xlu0 %1179, %v1146
  %v1181 = vpop.permute.xlu0 %1180
  %1184 = vset.pattern.permute.xlu0 0
  %1185 = vperm.xlu0 %1184, %v1147
  %v1186 = vpop.permute.xlu0 %1185
  %v1188 = vmul.f32 %v1110, %v1151
  %v1189 = vmul.f32 %v1113, %v1156
  %v1190 = vmul.f32 %v1118, %v1161
  %v1191 = vmul.f32 %v1121, %v1166
  %v1192 = vmul.f32 %v1126, %v1171
  %v1193 = vmul.f32 %v1129, %v1176
  %v1194 = vmul.f32 %v1134, %v1181
  %v1195 = vmul.f32 %v1137, %v1186
  %1196 = vset.pattern.permute.xlu0 1
  %1197 = vperm.xlu0 %1196, %v1140
  %v1198 = vpop.permute.xlu0 %1197
  %1200 = vset.pattern.permute.xlu0 1
  %1201 = vperm.xlu0 %1200, %v1141
  %v1202 = vpop.permute.xlu0 %1201
  %1204 = vset.pattern.permute.xlu0 1
  %1205 = vperm.xlu0 %1204, %v1142
  %v1206 = vpop.permute.xlu0 %1205
  %1208 = vset.pattern.permute.xlu0 1
  %1209 = vperm.xlu0 %1208, %v1143
  %v1210 = vpop.permute.xlu0 %1209
  %1212 = vset.pattern.permute.xlu0 1
  %1213 = vperm.xlu0 %1212, %v1144
  %v1214 = vpop.permute.xlu0 %1213
  %1216 = vset.pattern.permute.xlu0 1
  %1217 = vperm.xlu0 %1216, %v1145
  %v1218 = vpop.permute.xlu0 %1217
  %1220 = vset.pattern.permute.xlu0 1
  %1221 = vperm.xlu0 %1220, %v1146
  %v1222 = vpop.permute.xlu0 %1221
  %1224 = vset.pattern.permute.xlu0 1
  %1225 = vperm.xlu0 %1224, %v1147
  %v1226 = vpop.permute.xlu0 %1225
  %v1228 = vadd.f32 %v1188, %v1198
  %v1229 = vadd.f32 %v1189, %v1202
  %v1230 = vadd.f32 %v1190, %v1206
  %v1231 = vadd.f32 %v1191, %v1210
  %v1232 = vadd.f32 %v1192, %v1214
  %v1233 = vadd.f32 %v1193, %v1218
  %v1234 = vadd.f32 %v1194, %v1222
  %v1235 = vadd.f32 %v1195, %v1226
  %vm1236 = vcmp.ge.f32.partialorder %v1228, 0.0
  %vm1237 = vcmp.ge.f32.partialorder %v1229, 0.0
  %vm1238 = vcmp.ge.f32.partialorder %v1230, 0.0
  %vm1239 = vcmp.ge.f32.partialorder %v1231, 0.0
  %vm1240 = vcmp.ge.f32.partialorder %v1232, 0.0
  %vm1241 = vcmp.ge.f32.partialorder %v1233, 0.0
  %vm1242 = vcmp.ge.f32.partialorder %v1234, 0.0
  %vm1243 = vcmp.ge.f32.partialorder %v1235, 0.0
  %v1244 = vmul.f32 %v1228, 0.2
  %v1245 = vmul.f32 %v1229, 0.2
  %v1246 = vmul.f32 %v1230, 0.2
  %v1247 = vmul.f32 %v1231, 0.2
  %v1248 = vmul.f32 %v1232, 0.2
  %v1249 = vmul.f32 %v1233, 0.2
  %v1250 = vmul.f32 %v1234, 0.2
  %v1251 = vmul.f32 %v1235, 0.2
  %v1252 = vsel %vm1236, %v1228, %v1244
  %v1253 = vsel %vm1237, %v1229, %v1245
  %v1254 = vsel %vm1238, %v1230, %v1246
  %v1255 = vsel %vm1239, %v1231, %v1247
  %v1256 = vsel %vm1240, %v1232, %v1248
  %v1257 = vsel %vm1241, %v1233, %v1249
  %v1258 = vsel %vm1242, %v1234, %v1250
  %v1259 = vsel %vm1243, %v1235, %v1251
  %v1260 = vpack.c.bf16 %v1253, %v1252
  %v1261 = vpack.c.bf16 %v1255, %v1254
  %v1262 = vpack.c.bf16 %v1257, %v1256
  %v1263 = vpack.c.bf16 %v1259, %v1258
  %v1268 = vunpack.c.l.b16 %v1260
  %v1269 = vunpack.c.h.b16 %v1260
  %v1270 = vunpack.c.l.b16 %v1261
  %v1271 = vunpack.c.h.b16 %v1261
  %v1272 = vunpack.c.l.b16 %v1262
  %v1273 = vunpack.c.h.b16 %v1262
  %v1274 = vunpack.c.l.b16 %v1263
  %v1275 = vunpack.c.h.b16 %v1263
  %v1276 = vpack.c.b16 %v1268, %v1268
  %v1277 = vpack.c.b16 %v1269, %v1269
  %v1278 = vpack.c.b16 %v1270, %v1270
  %v1279 = vpack.c.b16 %v1271, %v1271
  %v1280 = vpack.c.b16 %v1272, %v1272
  %v1281 = vpack.c.b16 %v1273, %v1273
  %v1282 = vpack.c.b16 %v1274, %v1274
  %v1283 = vpack.c.b16 %v1275, %v1275
  %1292 = vst [vmem:[%s3] sm:$0xf] %v1276
  %1293 = vst [vmem:[%s3 + $0x4] sm:$0xf] %v1277
  %1294 = vst [vmem:[%s3 + $0x8] sm:$0xf] %v1278
  %1295 = vst [vmem:[%s3 + $0xc] sm:$0xf] %v1279
  %1296 = vst [vmem:[%s3 + $0x10] sm:$0xf] %v1280
  %1297 = vst [vmem:[%s3 + $0x14] sm:$0xf] %v1281
  %1298 = vst [vmem:[%s3 + $0x18] sm:$0xf] %v1282
  %1299 = vst [vmem:[%s3 + $0x1c] sm:$0xf] %v1283
  // Predicated region
  $region14: #{_lambda_.9} parent=0 // pred_check
    _
  $region15: #{_lambda_.9} parent=0 // pred_check_branch
    %1301 = sbr.rel (0) target = $region17
  $region16: #{_lambda_.9} parent=0 // pred_region
    _
  $region17: #{_lambda_.9} parent=0 // pred_fallthru
    _
  // Predicated region
  $region18: #{_lambda_.9} parent=0 // pred_check
    _
  $region19: #{_lambda_.9} parent=0 // pred_check_branch
    %1303 = sbr.rel (0) target = $region21
  $region20: #{_lambda_.9} parent=0 // pred_region
    _
  $region21: #{_lambda_.9} parent=0 // pred_fallthru
    _

// kernel: _lambda_.11
$region0: #{_lambda_.11}
  #allocation0 [shape = 'u32[]', space=smem, size = 0x4, offset = 0x4, fixed_abs, tag = 'smem constant byte address 0x4 - core index']
  #allocation1 [shape = 'u32[144,128]{1,0:T(1,128)}', space=vmem, size = 0x12000, scoped, tag = 'internal scratch']
  %s0 = inlined_call_operand.vmem [shape: bf16[1,1280], index: 0, kind: input, shape index: {}]
  %s1 = inlined_call_operand.vmem [shape: bf16[1280,2], index: 1, kind: input, shape index: {}]
  %s2 = inlined_call_operand.vmem [shape: f32[1,2], index: 2, kind: input, shape index: {}]
  %s3 = inlined_call_operand.hbm [shape: f32[1,2], index: 3, kind: output, shape index: {}]
  %s4 = sld [smem:[#allocation0]]
  $region22: #{_lambda_.11} parent=0
    _
  %s6 = ssub.s32 1, %s4
  %s7 = scalar_select 0, %s6, %s4
  $region1: #{_lambda_.11} parent=0
    #allocation2 [shape = 'u8[512]{0}', space=vmem, size = 0x400, scoped, tag = 'output window, operand 0, single buffered']
    #allocation3 [shape = 's32[1]{0}', space=sflag, size = 0x4, scoped, tag = 'scoped memory for _lambda_.11']
    %8 = vsyncpa [#allocation3], 0
    // Predicated region
    $region2: #{_lambda_.11} parent=1 // pred_check
      _
    $region3: #{_lambda_.11} parent=1 // pred_check_branch
      %10 = sbr.rel (0) target = $region5
    $region4: #{_lambda_.11} parent=1 // pred_region
      _
    $region5: #{_lambda_.11} parent=1 // pred_fallthru
      _
    // Predicated region
    $region6: #{_lambda_.11} parent=1 // pred_check
      _
    $region7: #{_lambda_.11} parent=1 // pred_check_branch
      %12 = sbr.rel (0) target = $region9
    $region8: #{_lambda_.11} parent=1 // pred_region
      _
    $region9: #{_lambda_.11} parent=1 // pred_fallthru
      _
    // Predicated region
    $region10: #{_lambda_.11} parent=1 // pred_check
      _
    $region11: #{_lambda_.11} parent=1 // pred_check_branch
      %14 = sbr.rel (0) target = $region13
    $region12: #{_lambda_.11} parent=1 // pred_region
      _
    $region13: #{_lambda_.11} parent=1 // pred_fallthru
      _
    %v16 = vld [vmem:[%s0] sm:$0xff]
    %v17 = vld [vmem:[%s0 + $0x8] sm:$0x3]
    %v18 = vld [vmem:[%s1] sm:$0xf]
    %v19 = vld [vmem:[%s1 + $0x4] sm:$0xf]
    %v20 = vld [vmem:[%s1 + $0x8] sm:$0xf]
    %v21 = vld [vmem:[%s1 + $0xc] sm:$0xf]
    %v22 = vld [vmem:[%s1 + $0x10] sm:$0xf]
    %v23 = vld [vmem:[%s1 + $0x14] sm:$0xf]
    %v24 = vld [vmem:[%s1 + $0x18] sm:$0xf]
    %v25 = vld [vmem:[%s1 + $0x1c] sm:$0xf]
    %v26 = vld [vmem:[%s1 + $0x20] sm:$0xf]
    %v27 = vld [vmem:[%s1 + $0x24] sm:$0xf]
    %v28 = vld [vmem:[%s1 + $0x28] sm:$0xf]
    %v29 = vld [vmem:[%s1 + $0x2c] sm:$0xf]
    %v30 = vld [vmem:[%s1 + $0x30] sm:$0xf]
    %v31 = vld [vmem:[%s1 + $0x34] sm:$0xf]
    %v32 = vld [vmem:[%s1 + $0x38] sm:$0xf]
    %v33 = vld [vmem:[%s1 + $0x3c] sm:$0xf]
    %v34 = vld [vmem:[%s1 + $0x40] sm:$0xf]
    %v35 = vld [vmem:[%s1 + $0x44] sm:$0xf]
    %v36 = vld [vmem:[%s1 + $0x48] sm:$0xf]
    %v37 = vld [vmem:[%s1 + $0x4c] sm:$0xf]
    %v38 = vld [vmem:[%s1 + $0x50] sm:$0xf]
    %v39 = vld [vmem:[%s1 + $0x54] sm:$0xf]
    %v40 = vld [vmem:[%s1 + $0x58] sm:$0xf]
    %v41 = vld [vmem:[%s1 + $0x5c] sm:$0xf]
    %v42 = vld [vmem:[%s1 + $0x60] sm:$0xf]
    %v43 = vld [vmem:[%s1 + $0x64] sm:$0xf]
    %v44 = vld [vmem:[%s1 + $0x68] sm:$0xf]
    %v45 = vld [vmem:[%s1 + $0x6c] sm:$0xf]
    %v46 = vld [vmem:[%s1 + $0x70] sm:$0xf]
    %v47 = vld [vmem:[%s1 + $0x74] sm:$0xf]
    %v48 = vld [vmem:[%s1 + $0x78] sm:$0xf]
    %v49 = vld [vmem:[%s1 + $0x7c] sm:$0xf]
    %v50 = vld [vmem:[%s1 + $0x80] sm:$0xf]
    %v51 = vld [vmem:[%s1 + $0x84] sm:$0xf]
    %v52 = vld [vmem:[%s1 + $0x88] sm:$0xf]
    %v53 = vld [vmem:[%s1 + $0x8c] sm:$0xf]
    %v54 = vld [vmem:[%s1 + $0x90] sm:$0xf]
    %v55 = vld [vmem:[%s1 + $0x94] sm:$0xf]
    %v56 = vld [vmem:[%s1 + $0x98] sm:$0xf]
    %v57 = vld [vmem:[%s1 + $0x9c] sm:$0xf]
    %v58 = vld [vmem:[%s1 + $0xa0] sm:$0xf]
    %v59 = vld [vmem:[%s1 + $0xa4] sm:$0xf]
    %v60 = vld [vmem:[%s1 + $0xa8] sm:$0xf]
    %v61 = vld [vmem:[%s1 + $0xac] sm:$0xf]
    %v62 = vld [vmem:[%s1 + $0xb0] sm:$0xf]
    %v63 = vld [vmem:[%s1 + $0xb4] sm:$0xf]
    %v64 = vld [vmem:[%s1 + $0xb8] sm:$0xf]
    %v65 = vld [vmem:[%s1 + $0xbc] sm:$0xf]
    %v66 = vld [vmem:[%s1 + $0xc0] sm:$0xf]
    %v67 = vld [vmem:[%s1 + $0xc4] sm:$0xf]
    %v68 = vld [vmem:[%s1 + $0xc8] sm:$0xf]
    %v69 = vld [vmem:[%s1 + $0xcc] sm:$0xf]
    %v70 = vld [vmem:[%s1 + $0xd0] sm:$0xf]
    %v71 = vld [vmem:[%s1 + $0xd4] sm:$0xf]
    %v72 = vld [vmem:[%s1 + $0xd8] sm:$0xf]
    %v73 = vld [vmem:[%s1 + $0xdc] sm:$0xf]
    %v74 = vld [vmem:[%s1 + $0xe0] sm:$0xf]
    %v75 = vld [vmem:[%s1 + $0xe4] sm:$0xf]
    %v76 = vld [vmem:[%s1 + $0xe8] sm:$0xf]
    %v77 = vld [vmem:[%s1 + $0xec] sm:$0xf]
    %v78 = vld [vmem:[%s1 + $0xf0] sm:$0xf]
    %v79 = vld [vmem:[%s1 + $0xf4] sm:$0xf]
    %v80 = vld [vmem:[%s1 + $0xf8] sm:$0xf]
    %v81 = vld [vmem:[%s1 + $0xfc] sm:$0xf]
    %v82 = vld [vmem:[%s1 + $0x100] sm:$0xf]
    %v83 = vld [vmem:[%s1 + $0x104] sm:$0xf]
    %v84 = vld [vmem:[%s1 + $0x108] sm:$0xf]
    %v85 = vld [vmem:[%s1 + $0x10c] sm:$0xf]
    %v86 = vld [vmem:[%s1 + $0x110] sm:$0xf]
    %v87 = vld [vmem:[%s1 + $0x114] sm:$0xf]
    %v88 = vld [vmem:[%s1 + $0x118] sm:$0xf]
    %v89 = vld [vmem:[%s1 + $0x11c] sm:$0xf]
    %v90 = vld [vmem:[%s1 + $0x120] sm:$0xf]
    %v91 = vld [vmem:[%s1 + $0x124] sm:$0xf]
    %v92 = vld [vmem:[%s1 + $0x128] sm:$0xf]
    %v93 = vld [vmem:[%s1 + $0x12c] sm:$0xf]
    %v94 = vld [vmem:[%s1 + $0x130] sm:$0xf]
    %v95 = vld [vmem:[%s1 + $0x134] sm:$0xf]
    %v96 = vld [vmem:[%s1 + $0x138] sm:$0xf]
    %v97 = vld [vmem:[%s1 + $0x13c] sm:$0xf]
    %v98 = vld [vmem:[%s1 + $0x140] sm:$0xf]
    %v99 = vld [vmem:[%s1 + $0x144] sm:$0xf]
    %v100 = vld [vmem:[%s1 + $0x148] sm:$0xf]
    %v101 = vld [vmem:[%s1 + $0x14c] sm:$0xf]
    %v102 = vld [vmem:[%s1 + $0x150] sm:$0xf]
    %v103 = vld [vmem:[%s1 + $0x154] sm:$0xf]
    %v104 = vld [vmem:[%s1 + $0x158] sm:$0xf]
    %v105 = vld [vmem:[%s1 + $0x15c] sm:$0xf]
    %v106 = vld [vmem:[%s1 + $0x160] sm:$0xf]
    %v107 = vld [vmem:[%s1 + $0x164] sm:$0xf]
    %v108 = vld [vmem:[%s1 + $0x168] sm:$0xf]
    %v109 = vld [vmem:[%s1 + $0x16c] sm:$0xf]
    %v110 = vld [vmem:[%s1 + $0x170] sm:$0xf]
    %v111 = vld [vmem:[%s1 + $0x174] sm:$0xf]
    %v112 = vld [vmem:[%s1 + $0x178] sm:$0xf]
    %v113 = vld [vmem:[%s1 + $0x17c] sm:$0xf]
    %v114 = vld [vmem:[%s1 + $0x180] sm:$0xf]
    %v115 = vld [vmem:[%s1 + $0x184] sm:$0xf]
    %v116 = vld [vmem:[%s1 + $0x188] sm:$0xf]
    %v117 = vld [vmem:[%s1 + $0x18c] sm:$0xf]
    %v118 = vld [vmem:[%s1 + $0x190] sm:$0xf]
    %v119 = vld [vmem:[%s1 + $0x194] sm:$0xf]
    %v120 = vld [vmem:[%s1 + $0x198] sm:$0xf]
    %v121 = vld [vmem:[%s1 + $0x19c] sm:$0xf]
    %v122 = vld [vmem:[%s1 + $0x1a0] sm:$0xf]
    %v123 = vld [vmem:[%s1 + $0x1a4] sm:$0xf]
    %v124 = vld [vmem:[%s1 + $0x1a8] sm:$0xf]
    %v125 = vld [vmem:[%s1 + $0x1ac] sm:$0xf]
    %v126 = vld [vmem:[%s1 + $0x1b0] sm:$0xf]
    %v127 = vld [vmem:[%s1 + $0x1b4] sm:$0xf]
    %v128 = vld [vmem:[%s1 + $0x1b8] sm:$0xf]
    %v129 = vld [vmem:[%s1 + $0x1bc] sm:$0xf]
    %v130 = vld [vmem:[%s1 + $0x1c0] sm:$0xf]
    %v131 = vld [vmem:[%s1 + $0x1c4] sm:$0xf]
    %v132 = vld [vmem:[%s1 + $0x1c8] sm:$0xf]
    %v133 = vld [vmem:[%s1 + $0x1cc] sm:$0xf]
    %v134 = vld [vmem:[%s1 + $0x1d0] sm:$0xf]
    %v135 = vld [vmem:[%s1 + $0x1d4] sm:$0xf]
    %v136 = vld [vmem:[%s1 + $0x1d8] sm:$0xf]
    %v137 = vld [vmem:[%s1 + $0x1dc] sm:$0xf]
    %v138 = vld [vmem:[%s1 + $0x1e0] sm:$0xf]
    %v139 = vld [vmem:[%s1 + $0x1e4] sm:$0xf]
    %v140 = vld [vmem:[%s1 + $0x1e8] sm:$0xf]
    %v141 = vld [vmem:[%s1 + $0x1ec] sm:$0xf]
    %v142 = vld [vmem:[%s1 + $0x1f0] sm:$0xf]
    %v143 = vld [vmem:[%s1 + $0x1f4] sm:$0xf]
    %v144 = vld [vmem:[%s1 + $0x1f8] sm:$0xf]
    %v145 = vld [vmem:[%s1 + $0x1fc] sm:$0xf]
    %v146 = vld [vmem:[%s1 + $0x200] sm:$0xf]
    %v147 = vld [vmem:[%s1 + $0x204] sm:$0xf]
    %v148 = vld [vmem:[%s1 + $0x208] sm:$0xf]
    %v149 = vld [vmem:[%s1 + $0x20c] sm:$0xf]
    %v150 = vld [vmem:[%s1 + $0x210] sm:$0xf]
    %v151 = vld [vmem:[%s1 + $0x214] sm:$0xf]
    %v152 = vld [vmem:[%s1 + $0x218] sm:$0xf]
    %v153 = vld [vmem:[%s1 + $0x21c] sm:$0xf]
    %v154 = vld [vmem:[%s1 + $0x220] sm:$0xf]
    %v155 = vld [vmem:[%s1 + $0x224] sm:$0xf]
    %v156 = vld [vmem:[%s1 + $0x228] sm:$0xf]
    %v157 = vld [vmem:[%s1 + $0x22c] sm:$0xf]
    %v158 = vld [vmem:[%s1 + $0x230] sm:$0xf]
    %v159 = vld [vmem:[%s1 + $0x234] sm:$0xf]
    %v160 = vld [vmem:[%s1 + $0x238] sm:$0xf]
    %v161 = vld [vmem:[%s1 + $0x23c] sm:$0xf]
    %v162 = vld [vmem:[%s1 + $0x240] sm:$0xf]
    %v163 = vld [vmem:[%s1 + $0x244] sm:$0xf]
    %v164 = vld [vmem:[%s1 + $0x248] sm:$0xf]
    %v165 = vld [vmem:[%s1 + $0x24c] sm:$0xf]
    %v166 = vld [vmem:[%s1 + $0x250] sm:$0xf]
    %v167 = vld [vmem:[%s1 + $0x254] sm:$0xf]
    %v168 = vld [vmem:[%s1 + $0x258] sm:$0xf]
    %v169 = vld [vmem:[%s1 + $0x25c] sm:$0xf]
    %v170 = vld [vmem:[%s1 + $0x260] sm:$0xf]
    %v171 = vld [vmem:[%s1 + $0x264] sm:$0xf]
    %v172 = vld [vmem:[%s1 + $0x268] sm:$0xf]
    %v173 = vld [vmem:[%s1 + $0x26c] sm:$0xf]
    %v174 = vld [vmem:[%s1 + $0x270] sm:$0xf]
    %v175 = vld [vmem:[%s1 + $0x274] sm:$0xf]
    %v176 = vld [vmem:[%s1 + $0x278] sm:$0xf]
    %v177 = vld [vmem:[%s1 + $0x27c] sm:$0xf]
    %v180 = vcombine.high %v16, %v16
    %v182 = vunpack.c.l.s4 1966171168
    %v183 = vunpack.c.0.s8 %v182
    %v184 = vlaneseq
    %v185 = vshrl.u32 %v184, 7
    %v186 = vsub.s32 %v183, %v185
    %v187 = vrot.slane %v16, %v186
    %v189 = vunpack.c.l.s4 1966171168
    %v190 = vunpack.c.0.s8 %v189
    %v191 = vlaneseq
    %v192 = vshrl.u32 %v191, 7
    %v193 = vsub.s32 %v190, %v192
    %v194 = vrot.slane %v180, %v193
    %v195 = vcombine.high %v187, %v187
    %v196 = vcombine.high %v194, %v194
    %v198 = vunpack.c.l.s4 1966171168
    %v199 = vunpack.c.0.s8 %v198
    %v200 = vlaneseq
    %v201 = vshrl.u32 %v200, 7
    %v202 = vsub.s32 %v199, %v201
    %v203 = vrot.slane %v187, %v202
    %v205 = vunpack.c.l.s4 1966171168
    %v206 = vunpack.c.0.s8 %v205
    %v207 = vlaneseq
    %v208 = vshrl.u32 %v207, 7
    %v209 = vsub.s32 %v206, %v208
    %v210 = vrot.slane %v194, %v209
    %v212 = vunpack.c.l.s4 1966171168
    %v213 = vunpack.c.0.s8 %v212
    %v214 = vlaneseq
    %v215 = vshrl.u32 %v214, 7
    %v216 = vsub.s32 %v213, %v215
    %v217 = vrot.slane %v195, %v216
    %v219 = vunpack.c.l.s4 1966171168
    %v220 = vunpack.c.0.s8 %v219
    %v221 = vlaneseq
    %v222 = vshrl.u32 %v221, 7
    %v223 = vsub.s32 %v220, %v222
    %v224 = vrot.slane %v196, %v223
    %v225 = vcombine.high %v203, %v203
    %v226 = vcombine.high %v210, %v210
    %v227 = vcombine.high %v217, %v217
    %v228 = vcombine.high %v224, %v224
    %v230 = vunpack.c.l.s4 1966171168
    %v231 = vunpack.c.0.s8 %v230
    %v232 = vlaneseq
    %v233 = vshrl.u32 %v232, 7
    %v234 = vsub.s32 %v231, %v233
    %v235 = vrot.slane %v17, %v234
    %v236 = vcombine.high %v235, %v235
    %v238 = vunpack.c.l.s4 1966171168
    %v239 = vunpack.c.0.s8 %v238
    %v240 = vlaneseq
    %v241 = vshrl.u32 %v240, 7
    %v242 = vsub.s32 %v239, %v241
    %v243 = vrot.slane %v235, %v242
    %v245 = vunpack.c.l.s4 1966171168
    %v246 = vunpack.c.0.s8 %v245
    %v247 = vlaneseq
    %v248 = vshrl.u32 %v247, 7
    %v249 = vsub.s32 %v246, %v248
    %v250 = vrot.slane %v236, %v249
    %v421 = vunpack.c.l.b16 %v18
    %v422 = vunpack.c.l.b16 %v19
    %v423 = vunpack.c.l.b16 %v20
    %v424 = vunpack.c.l.b16 %v21
    %v425 = vunpack.c.l.b16 %v22
    %v426 = vunpack.c.l.b16 %v23
    %v427 = vunpack.c.l.b16 %v24
    %v428 = vunpack.c.l.b16 %v25
    %v429 = vunpack.c.l.b16 %v26
    %v430 = vunpack.c.l.b16 %v27
    %v431 = vunpack.c.l.b16 %v28
    %v432 = vunpack.c.l.b16 %v29
    %v433 = vunpack.c.l.b16 %v30
    %v434 = vunpack.c.l.b16 %v31
    %v435 = vunpack.c.l.b16 %v32
    %v436 = vunpack.c.l.b16 %v33
    %v437 = vunpack.c.l.b16 %v34
    %v438 = vunpack.c.l.b16 %v35
    %v439 = vunpack.c.l.b16 %v36
    %v440 = vunpack.c.l.b16 %v37
    %v441 = vunpack.c.l.b16 %v38
    %v442 = vunpack.c.l.b16 %v39
    %v443 = vunpack.c.l.b16 %v40
    %v444 = vunpack.c.l.b16 %v41
    %v445 = vunpack.c.l.b16 %v42
    %v446 = vunpack.c.l.b16 %v43
    %v447 = vunpack.c.l.b16 %v44
    %v448 = vunpack.c.l.b16 %v45
    %v449 = vunpack.c.l.b16 %v46
    %v450 = vunpack.c.l.b16 %v47
    %v451 = vunpack.c.l.b16 %v48
    %v452 = vunpack.c.l.b16 %v49
    %v453 = vunpack.c.l.b16 %v50
    %v454 = vunpack.c.l.b16 %v51
    %v455 = vunpack.c.l.b16 %v52
    %v456 = vunpack.c.l.b16 %v53
    %v457 = vunpack.c.l.b16 %v54
    %v458 = vunpack.c.l.b16 %v55
    %v459 = vunpack.c.l.b16 %v56
    %v460 = vunpack.c.l.b16 %v57
    %v461 = vunpack.c.l.b16 %v58
    %v462 = vunpack.c.l.b16 %v59
    %v463 = vunpack.c.l.b16 %v60
    %v464 = vunpack.c.l.b16 %v61
    %v465 = vunpack.c.l.b16 %v62
    %v466 = vunpack.c.l.b16 %v63
    %v467 = vunpack.c.l.b16 %v64
    %v468 = vunpack.c.l.b16 %v65
    %v469 = vunpack.c.l.b16 %v66
    %v470 = vunpack.c.l.b16 %v67
    %v471 = vunpack.c.l.b16 %v68
    %v472 = vunpack.c.l.b16 %v69
    %v473 = vunpack.c.l.b16 %v70
    %v474 = vunpack.c.l.b16 %v71
    %v475 = vunpack.c.l.b16 %v72
    %v476 = vunpack.c.l.b16 %v73
    %v477 = vunpack.c.l.b16 %v74
    %v478 = vunpack.c.l.b16 %v75
    %v479 = vunpack.c.l.b16 %v76
    %v480 = vunpack.c.l.b16 %v77
    %v481 = vunpack.c.l.b16 %v78
    %v482 = vunpack.c.l.b16 %v79
    %v483 = vunpack.c.l.b16 %v80
    %v484 = vunpack.c.l.b16 %v81
    %v485 = vunpack.c.l.b16 %v82
    %v486 = vunpack.c.l.b16 %v83
    %v487 = vunpack.c.l.b16 %v84
    %v488 = vunpack.c.l.b16 %v85
    %v489 = vunpack.c.l.b16 %v86
    %v490 = vunpack.c.l.b16 %v87
    %v491 = vunpack.c.l.b16 %v88
    %v492 = vunpack.c.l.b16 %v89
    %v493 = vunpack.c.l.b16 %v90
    %v494 = vunpack.c.l.b16 %v91
    %v495 = vunpack.c.l.b16 %v92
    %v496 = vunpack.c.l.b16 %v93
    %v497 = vunpack.c.l.b16 %v94
    %v498 = vunpack.c.l.b16 %v95
    %v499 = vunpack.c.l.b16 %v96
    %v500 = vunpack.c.l.b16 %v97
    %v501 = vunpack.c.l.b16 %v98
    %v502 = vunpack.c.l.b16 %v99
    %v503 = vunpack.c.l.b16 %v100
    %v504 = vunpack.c.l.b16 %v101
    %v505 = vunpack.c.l.b16 %v102
    %v506 = vunpack.c.l.b16 %v103
    %v507 = vunpack.c.l.b16 %v104
    %v508 = vunpack.c.l.b16 %v105
    %v509 = vunpack.c.l.b16 %v106
    %v510 = vunpack.c.l.b16 %v107
    %v511 = vunpack.c.l.b16 %v108
    %v512 = vunpack.c.l.b16 %v109
    %v513 = vunpack.c.l.b16 %v110
    %v514 = vunpack.c.l.b16 %v111
    %v515 = vunpack.c.l.b16 %v112
    %v516 = vunpack.c.l.b16 %v113
    %v517 = vunpack.c.l.b16 %v114
    %v518 = vunpack.c.l.b16 %v115
    %v519 = vunpack.c.l.b16 %v116
    %v520 = vunpack.c.l.b16 %v117
    %v521 = vunpack.c.l.b16 %v118
    %v522 = vunpack.c.l.b16 %v119
    %v523 = vunpack.c.l.b16 %v120
    %v524 = vunpack.c.l.b16 %v121
    %v525 = vunpack.c.l.b16 %v122
    %v526 = vunpack.c.l.b16 %v123
    %v527 = vunpack.c.l.b16 %v124
    %v528 = vunpack.c.l.b16 %v125
    %v529 = vunpack.c.l.b16 %v126
    %v530 = vunpack.c.l.b16 %v127
    %v531 = vunpack.c.l.b16 %v128
    %v532 = vunpack.c.l.b16 %v129
    %v533 = vunpack.c.l.b16 %v130
    %v534 = vunpack.c.l.b16 %v131
    %v535 = vunpack.c.l.b16 %v132
    %v536 = vunpack.c.l.b16 %v133
    %v537 = vunpack.c.l.b16 %v134
    %v538 = vunpack.c.l.b16 %v135
    %v539 = vunpack.c.l.b16 %v136
    %v540 = vunpack.c.l.b16 %v137
    %v541 = vunpack.c.l.b16 %v138
    %v542 = vunpack.c.l.b16 %v139
    %v543 = vunpack.c.l.b16 %v140
    %v544 = vunpack.c.l.b16 %v141
    %v545 = vunpack.c.l.b16 %v142
    %v546 = vunpack.c.l.b16 %v143
    %v547 = vunpack.c.l.b16 %v144
    %v548 = vunpack.c.l.b16 %v145
    %v549 = vunpack.c.l.b16 %v146
    %v550 = vunpack.c.l.b16 %v147
    %v551 = vunpack.c.l.b16 %v148
    %v552 = vunpack.c.l.b16 %v149
    %v553 = vunpack.c.l.b16 %v150
    %v554 = vunpack.c.l.b16 %v151
    %v555 = vunpack.c.l.b16 %v152
    %v556 = vunpack.c.l.b16 %v153
    %v557 = vunpack.c.l.b16 %v154
    %v558 = vunpack.c.l.b16 %v155
    %v559 = vunpack.c.l.b16 %v156
    %v560 = vunpack.c.l.b16 %v157
    %v561 = vunpack.c.l.b16 %v158
    %v562 = vunpack.c.l.b16 %v159
    %v563 = vunpack.c.l.b16 %v160
    %v564 = vunpack.c.l.b16 %v161
    %v565 = vunpack.c.l.b16 %v162
    %v566 = vunpack.c.l.b16 %v163
    %v567 = vunpack.c.l.b16 %v164
    %v568 = vunpack.c.l.b16 %v165
    %v569 = vunpack.c.l.b16 %v166
    %v570 = vunpack.c.l.b16 %v167
    %v571 = vunpack.c.l.b16 %v168
    %v572 = vunpack.c.l.b16 %v169
    %v573 = vunpack.c.l.b16 %v170
    %v574 = vunpack.c.l.b16 %v171
    %v575 = vunpack.c.l.b16 %v172
    %v576 = vunpack.c.l.b16 %v173
    %v577 = vunpack.c.l.b16 %v174
    %v578 = vunpack.c.l.b16 %v175
    %v579 = vunpack.c.l.b16 %v176
    %v580 = vunpack.c.l.b16 %v177
    %v581 = vpack.c.b16 %v422, %v421
    %v582 = vpack.c.b16 %v424, %v423
    %v583 = vpack.c.b16 %v426, %v425
    %v584 = vpack.c.b16 %v428, %v427
    %v585 = vpack.c.b16 %v430, %v429
    %v586 = vpack.c.b16 %v432, %v431
    %v587 = vpack.c.b16 %v434, %v433
    %v588 = vpack.c.b16 %v436, %v435
    %v589 = vpack.c.b16 %v438, %v437
    %v590 = vpack.c.b16 %v440, %v439
    %v591 = vpack.c.b16 %v442, %v441
    %v592 = vpack.c.b16 %v444, %v443
    %v593 = vpack.c.b16 %v446, %v445
    %v594 = vpack.c.b16 %v448, %v447
    %v595 = vpack.c.b16 %v450, %v449
    %v596 = vpack.c.b16 %v452, %v451
    %v597 = vpack.c.b16 %v454, %v453
    %v598 = vpack.c.b16 %v456, %v455
    %v599 = vpack.c.b16 %v458, %v457
    %v600 = vpack.c.b16 %v460, %v459
    %v601 = vpack.c.b16 %v462, %v461
    %v602 = vpack.c.b16 %v464, %v463
    %v603 = vpack.c.b16 %v466, %v465
    %v604 = vpack.c.b16 %v468, %v467
    %v605 = vpack.c.b16 %v470, %v469
    %v606 = vpack.c.b16 %v472, %v471
    %v607 = vpack.c.b16 %v474, %v473
    %v608 = vpack.c.b16 %v476, %v475
    %v609 = vpack.c.b16 %v478, %v477
    %v610 = vpack.c.b16 %v480, %v479
    %v611 = vpack.c.b16 %v482, %v481
    %v612 = vpack.c.b16 %v484, %v483
    %v613 = vpack.c.b16 %v486, %v485
    %v614 = vpack.c.b16 %v488, %v487
    %v615 = vpack.c.b16 %v490, %v489
    %v616 = vpack.c.b16 %v492, %v491
    %v617 = vpack.c.b16 %v494, %v493
    %v618 = vpack.c.b16 %v496, %v495
    %v619 = vpack.c.b16 %v498, %v497
    %v620 = vpack.c.b16 %v500, %v499
    %v621 = vpack.c.b16 %v502, %v501
    %v622 = vpack.c.b16 %v504, %v503
    %v623 = vpack.c.b16 %v506, %v505
    %v624 = vpack.c.b16 %v508, %v507
    %v625 = vpack.c.b16 %v510, %v509
    %v626 = vpack.c.b16 %v512, %v511
    %v627 = vpack.c.b16 %v514, %v513
    %v628 = vpack.c.b16 %v516, %v515
    %v629 = vpack.c.b16 %v518, %v517
    %v630 = vpack.c.b16 %v520, %v519
    %v631 = vpack.c.b16 %v522, %v521
    %v632 = vpack.c.b16 %v524, %v523
    %v633 = vpack.c.b16 %v526, %v525
    %v634 = vpack.c.b16 %v528, %v527
    %v635 = vpack.c.b16 %v530, %v529
    %v636 = vpack.c.b16 %v532, %v531
    %v637 = vpack.c.b16 %v534, %v533
    %v638 = vpack.c.b16 %v536, %v535
    %v639 = vpack.c.b16 %v538, %v537
    %v640 = vpack.c.b16 %v540, %v539
    %v641 = vpack.c.b16 %v542, %v541
    %v642 = vpack.c.b16 %v544, %v543
    %v643 = vpack.c.b16 %v546, %v545
    %v644 = vpack.c.b16 %v548, %v547
    %v645 = vpack.c.b16 %v550, %v549
    %v646 = vpack.c.b16 %v552, %v551
    %v647 = vpack.c.b16 %v554, %v553
    %v648 = vpack.c.b16 %v556, %v555
    %v649 = vpack.c.b16 %v558, %v557
    %v650 = vpack.c.b16 %v560, %v559
    %v651 = vpack.c.b16 %v562, %v561
    %v652 = vpack.c.b16 %v564, %v563
    %v653 = vpack.c.b16 %v566, %v565
    %v654 = vpack.c.b16 %v568, %v567
    %v655 = vpack.c.b16 %v570, %v569
    %v656 = vpack.c.b16 %v572, %v571
    %v657 = vpack.c.b16 %v574, %v573
    %v658 = vpack.c.b16 %v576, %v575
    %v659 = vpack.c.b16 %v578, %v577
    %v660 = vpack.c.b16 %v580, %v579
    %741 = vmatprep.subr.bf16.mxu0 0
    %742 = vmatpush1.bf16.msra.mxu0 %v581
    %743 = vmatprep.subr.bf16.mxu0 0
    %744 = vmatpush1.bf16.msra.mxu0 %v582
    %745 = vmatprep.subr.bf16.mxu0 0
    %746 = vmatpush1.bf16.msra.mxu0 %v583
    %747 = vmatprep.subr.bf16.mxu0 0
    %748 = vmatpush1.bf16.msra.mxu0 %v584
    %749 = vmatprep.subr.bf16.mxu0 0
    %750 = vmatpush1.bf16.msra.mxu0 %v585
    %751 = vmatprep.subr.bf16.mxu0 0
    %752 = vmatpush1.bf16.msra.mxu0 %v586
    %753 = vmatprep.subr.bf16.mxu0 0
    %754 = vmatpush1.bf16.msra.mxu0 %v587
    %755 = vmatprep.subr.bf16.mxu0 0
    %756 = vmatpush1.bf16.msra.mxu0 %v588
    %757 = vmatprep.subr.bf16.mxu0 0
    %758 = vmatpush1.bf16.msra.mxu0 %v589
    %759 = vmatprep.subr.bf16.mxu0 0
    %760 = vmatpush1.bf16.msra.mxu0 %v590
    %761 = vmatprep.subr.bf16.mxu0 0
    %762 = vmatpush1.bf16.msra.mxu0 %v591
    %763 = vmatprep.subr.bf16.mxu0 0
    %764 = vmatpush1.bf16.msra.mxu0 %v592
    %765 = vmatprep.subr.bf16.mxu0 0
    %766 = vmatpush1.bf16.msra.mxu0 %v593
    %767 = vmatprep.subr.bf16.mxu0 0
    %768 = vmatpush1.bf16.msra.mxu0 %v594
    %769 = vmatprep.subr.bf16.mxu0 0
    %770 = vmatpush1.bf16.msra.mxu0 %v595
    %771 = vmatprep.subr.bf16.mxu0 0
    %772 = vmatpush1.bf16.msra.mxu0 %v596
    %773 = vmatprep.mubr.bf16.mxu0 %v217
    %774 = vmatmul.mubr.bf16.gmra.mrb[0].mxu0 %v203
    %v775 = vpop.f32.mrb[0].mxu0
    %v776 = vadd.f32 0.0, %v775
    %v777 = vpop.f32.mrb[0].mxu0
    %v778 = vpop.f32.mrb[0].mxu0
    %v779 = vpop.f32.mrb[0].mxu0
    %780 = vdwg.mxu0
    %781 = vmatprep.subr.bf16.mxu0 0
    %782 = vmatpush1.bf16.msra.mxu0 %v597
    %783 = vmatprep.subr.bf16.mxu0 0
    %784 = vmatpush1.bf16.msra.mxu0 %v598
    %785 = vmatprep.subr.bf16.mxu0 0
    %786 = vmatpush1.bf16.msra.mxu0 %v599
    %787 = vmatprep.subr.bf16.mxu0 0
    %788 = vmatpush1.bf16.msra.mxu0 %v600
    %789 = vmatprep.subr.bf16.mxu0 0
    %790 = vmatpush1.bf16.msra.mxu0 %v601
    %791 = vmatprep.subr.bf16.mxu0 0
    %792 = vmatpush1.bf16.msra.mxu0 %v602
    %793 = vmatprep.subr.bf16.mxu0 0
    %794 = vmatpush1.bf16.msra.mxu0 %v603
    %795 = vmatprep.subr.bf16.mxu0 0
    %796 = vmatpush1.bf16.msra.mxu0 %v604
    %797 = vmatprep.subr.bf16.mxu0 0
    %798 = vmatpush1.bf16.msra.mxu0 %v605
    %799 = vmatprep.subr.bf16.mxu0 0
    %800 = vmatpush1.bf16.msra.mxu0 %v606
    %801 = vmatprep.subr.bf16.mxu0 0
    %802 = vmatpush1.bf16.msra.mxu0 %v607
    %803 = vmatprep.subr.bf16.mxu0 0
    %804 = vmatpush1.bf16.msra.mxu0 %v608
    %805 = vmatprep.subr.bf16.mxu0 0
    %806 = vmatpush1.bf16.msra.mxu0 %v609
    %807 = vmatprep.subr.bf16.mxu0 0
    %808 = vmatpush1.bf16.msra.mxu0 %v610
    %809 = vmatprep.subr.bf16.mxu0 0
    %810 = vmatpush1.bf16.msra.mxu0 %v611
    %811 = vmatprep.subr.bf16.mxu0 0
    %812 = vmatpush1.bf16.msra.mxu0 %v612
    %813 = vmatprep.mubr.bf16.mxu0 %v227
    %814 = vmatmul.mubr.bf16.gmra.mrb[0].mxu0 %v225
    %v815 = vpop.f32.mrb[0].mxu0
    %v816 = vadd.f32 %v776, %v815
    %v817 = vpop.f32.mrb[0].mxu0
    %v818 = vpop.f32.mrb[0].mxu0
    %v819 = vpop.f32.mrb[0].mxu0
    %820 = vdwg.mxu0
    %821 = vmatprep.subr.bf16.mxu0 0
    %822 = vmatpush1.bf16.msra.mxu0 %v613
    %823 = vmatprep.subr.bf16.mxu0 0
    %824 = vmatpush1.bf16.msra.mxu0 %v614
    %825 = vmatprep.subr.bf16.mxu0 0
    %826 = vmatpush1.bf16.msra.mxu0 %v615
    %827 = vmatprep.subr.bf16.mxu0 0
    %828 = vmatpush1.bf16.msra.mxu0 %v616
    %829 = vmatprep.subr.bf16.mxu0 0
    %830 = vmatpush1.bf16.msra.mxu0 %v617
    %831 = vmatprep.subr.bf16.mxu0 0
    %832 = vmatpush1.bf16.msra.mxu0 %v618
    %833 = vmatprep.subr.bf16.mxu0 0
    %834 = vmatpush1.bf16.msra.mxu0 %v619
    %835 = vmatprep.subr.bf16.mxu0 0
    %836 = vmatpush1.bf16.msra.mxu0 %v620
    %837 = vmatprep.subr.bf16.mxu0 0
    %838 = vmatpush1.bf16.msra.mxu0 %v621
    %839 = vmatprep.subr.bf16.mxu0 0
    %840 = vmatpush1.bf16.msra.mxu0 %v622
    %841 = vmatprep.subr.bf16.mxu0 0
    %842 = vmatpush1.bf16.msra.mxu0 %v623
    %843 = vmatprep.subr.bf16.mxu0 0
    %844 = vmatpush1.bf16.msra.mxu0 %v624
    %845 = vmatprep.subr.bf16.mxu0 0
    %846 = vmatpush1.bf16.msra.mxu0 %v625
    %847 = vmatprep.subr.bf16.mxu0 0
    %848 = vmatpush1.bf16.msra.mxu0 %v626
    %849 = vmatprep.subr.bf16.mxu0 0
    %850 = vmatpush1.bf16.msra.mxu0 %v627
    %851 = vmatprep.subr.bf16.mxu0 0
    %852 = vmatpush1.bf16.msra.mxu0 %v628
    %853 = vmatprep.mubr.bf16.mxu0 %v224
    %854 = vmatmul.mubr.bf16.gmra.mrb[0].mxu0 %v210
    %v855 = vpop.f32.mrb[0].mxu0
    %v856 = vadd.f32 %v816, %v855
    %v857 = vpop.f32.mrb[0].mxu0
    %v858 = vpop.f32.mrb[0].mxu0
    %v859 = vpop.f32.mrb[0].mxu0
    %860 = vdwg.mxu0
    %861 = vmatprep.subr.bf16.mxu0 0
    %862 = vmatpush1.bf16.msra.mxu0 %v629
    %863 = vmatprep.subr.bf16.mxu0 0
    %864 = vmatpush1.bf16.msra.mxu0 %v630
    %865 = vmatprep.subr.bf16.mxu0 0
    %866 = vmatpush1.bf16.msra.mxu0 %v631
    %867 = vmatprep.subr.bf16.mxu0 0
    %868 = vmatpush1.bf16.msra.mxu0 %v632
    %869 = vmatprep.subr.bf16.mxu0 0
    %870 = vmatpush1.bf16.msra.mxu0 %v633
    %871 = vmatprep.subr.bf16.mxu0 0
    %872 = vmatpush1.bf16.msra.mxu0 %v634
    %873 = vmatprep.subr.bf16.mxu0 0
    %874 = vmatpush1.bf16.msra.mxu0 %v635
    %875 = vmatprep.subr.bf16.mxu0 0
    %876 = vmatpush1.bf16.msra.mxu0 %v636
    %877 = vmatprep.subr.bf16.mxu0 0
    %878 = vmatpush1.bf16.msra.mxu0 %v637
    %879 = vmatprep.subr.bf16.mxu0 0
    %880 = vmatpush1.bf16.msra.mxu0 %v638
    %881 = vmatprep.subr.bf16.mxu0 0
    %882 = vmatpush1.bf16.msra.mxu0 %v639
    %883 = vmatprep.subr.bf16.mxu0 0
    %884 = vmatpush1.bf16.msra.mxu0 %v640
    %885 = vmatprep.subr.bf16.mxu0 0
    %886 = vmatpush1.bf16.msra.mxu0 %v641
    %887 = vmatprep.subr.bf16.mxu0 0
    %888 = vmatpush1.bf16.msra.mxu0 %v642
    %889 = vmatprep.subr.bf16.mxu0 0
    %890 = vmatpush1.bf16.msra.mxu0 %v643
    %891 = vmatprep.subr.bf16.mxu0 0
    %892 = vmatpush1.bf16.msra.mxu0 %v644
    %893 = vmatprep.mubr.bf16.mxu0 %v228
    %894 = vmatmul.mubr.bf16.gmra.mrb[0].mxu0 %v226
    %v895 = vpop.f32.mrb[0].mxu0
    %v896 = vadd.f32 %v856, %v895
    %v897 = vpop.f32.mrb[0].mxu0
    %v898 = vpop.f32.mrb[0].mxu0
    %v899 = vpop.f32.mrb[0].mxu0
    %900 = vdwg.mxu0
    %901 = vmatprep.subr.bf16.mxu0 0
    %902 = vmatpush1.bf16.msra.mxu0 %v645
    %903 = vmatprep.subr.bf16.mxu0 0
    %904 = vmatpush1.bf16.msra.mxu0 %v646
    %905 = vmatprep.subr.bf16.mxu0 0
    %906 = vmatpush1.bf16.msra.mxu0 %v647
    %907 = vmatprep.subr.bf16.mxu0 0
    %908 = vmatpush1.bf16.msra.mxu0 %v648
    %909 = vmatprep.subr.bf16.mxu0 0
    %910 = vmatpush1.bf16.msra.mxu0 %v649
    %911 = vmatprep.subr.bf16.mxu0 0
    %912 = vmatpush1.bf16.msra.mxu0 %v650
    %913 = vmatprep.subr.bf16.mxu0 0
    %914 = vmatpush1.bf16.msra.mxu0 %v651
    %915 = vmatprep.subr.bf16.mxu0 0
    %916 = vmatpush1.bf16.msra.mxu0 %v652
    %917 = vmatprep.subr.bf16.mxu0 0
    %918 = vmatpush1.bf16.msra.mxu0 %v653
    %919 = vmatprep.subr.bf16.mxu0 0
    %920 = vmatpush1.bf16.msra.mxu0 %v654
    %921 = vmatprep.subr.bf16.mxu0 0
    %922 = vmatpush1.bf16.msra.mxu0 %v655
    %923 = vmatprep.subr.bf16.mxu0 0
    %924 = vmatpush1.bf16.msra.mxu0 %v656
    %925 = vmatprep.subr.bf16.mxu0 0
    %926 = vmatpush1.bf16.msra.mxu0 %v657
    %927 = vmatprep.subr.bf16.mxu0 0
    %928 = vmatpush1.bf16.msra.mxu0 %v658
    %929 = vmatprep.subr.bf16.mxu0 0
    %930 = vmatpush1.bf16.msra.mxu0 %v659
    %931 = vmatprep.subr.bf16.mxu0 0
    %932 = vmatpush1.bf16.msra.mxu0 %v660
    %933 = vmatprep.mubr.bf16.mxu0 %v250
    %934 = vmatmul.mubr.bf16.gmra.mrb[0].mxu0 %v243
    %v935 = vpop.f32.mrb[0].mxu0
    %v936 = vadd.f32 %v896, %v935
    %v937 = vpop.f32.mrb[0].mxu0
    %v938 = vpop.f32.mrb[0].mxu0
    %v939 = vpop.f32.mrb[0].mxu0
    %940 = vdwg.mxu0
    %v941 = vld [vmem:[%s2] sm:$0x1]
    %943 = vset.pattern.permute.xlu0 0
    %944 = vperm.xlu0 %943, %v941
    %v945 = vpop.permute.xlu0 %944
    %v947 = vlaneseq
    %v948 = vshrl.u32 %v947, 7
    %v949 = vsub.s32 0, %v948
    %v950 = vrot.slane %v945, %v949
    %v951 = vmul.f32 %v936, %v950
    %952 = vset.pattern.permute.xlu0 1
    %953 = vperm.xlu0 %952, %v941
    %v954 = vpop.permute.xlu0 %953
    %v956 = vlaneseq
    %v957 = vshrl.u32 %v956, 7
    %v958 = vsub.s32 0, %v957
    %v959 = vrot.slane %v954, %v958
    %v960 = vadd.f32 %v951, %v959
    %v961 = vsub.f32 0.0, %v960
    %v962 = vmul.f32 %v961, 1.442695
    %v963 = vpow.pop %v962
    %v964 = vadd.f32 %v963, 1.0
    %v965 = vrcp.pop %v964
    %v966 = vmul.f32 1.0, %v965
    %vm967 = vcmask 8192
    %968 = vst.msk [vmem:[#allocation2] sm:$0x1] %vm967, %v966
    // Predicated region
    $region14: #{_lambda_.11} parent=1 // pred_check
      _
    $region15: #{_lambda_.11} parent=1 // pred_check_branch
      %970 = sbr.rel (0) target = $region17
    $region16: #{_lambda_.11} parent=1 // pred_region
      %s972 = ssub.s32 16, 16
      %973 = vsyncadd [#allocation3], %s972
      %s975 = sshll.u32 [#allocation2], 4
      %s976 = int_to_ptr.vmem [resolvable:$true] %s975
      %978 = dma.vmem_to_hbm [thread:$0]  %s976, 16, %s3, [#allocation3]
    $region17: #{_lambda_.11} parent=1 // pred_fallthru
      _
    // Predicated region
    $region18: #{_lambda_.11} parent=1 // pred_check
      _
    $region19: #{_lambda_.11} parent=1 // pred_check_branch
      %980 = sbr.rel (0) target = $region21
    $region20: #{_lambda_.11} parent=1 // pred_region
      %981 = dma.done [#allocation3], 16
    $region21: #{_lambda_.11} parent=1 // pred_fallthru
      _
    %982 = vsyncpa [#allocation3], 1

// kernel: _lambda_.10
$region0: #{_lambda_.10}
  #allocation0 [shape = 'u32[]', space=smem, size = 0x4, offset = 0x4, fixed_abs, tag = 'smem constant byte address 0x4 - core index']
  #allocation1 [shape = 'u32[144,128]{1,0:T(1,128)}', space=vmem, size = 0x12000, scoped, tag = 'internal scratch']
  %s0 = inlined_call_operand.vmem [shape: bf16[80,2304], index: 0, kind: input, shape index: {}]
  %s1 = inlined_call_operand.vmem [shape: bf16[2304,32], index: 1, kind: input, shape index: {}]
  %s2 = inlined_call_operand.vmem [shape: f32[80,2], index: 2, kind: input, shape index: {}]
  %s3 = inlined_call_operand.vmem [shape: bf16[80,32], index: 3, kind: output, shape index: {}]
  %s4 = sld [smem:[#allocation0]]
  $region22: #{_lambda_.10} parent=0
    _
  %s6 = ssub.s32 1, %s4
  %s7 = scalar_select 0, %s6, %s4
  // Predicated region
  $region2: #{_lambda_.10} parent=0 // pred_check
    _
  $region3: #{_lambda_.10} parent=0 // pred_check_branch
    %9 = sbr.rel (0) target = $region5
  $region4: #{_lambda_.10} parent=0 // pred_region
    _
  $region5: #{_lambda_.10} parent=0 // pred_fallthru
    _
  // Predicated region
  $region6: #{_lambda_.10} parent=0 // pred_check
    _
  $region7: #{_lambda_.10} parent=0 // pred_check_branch
    %11 = sbr.rel (0) target = $region9
  $region8: #{_lambda_.10} parent=0 // pred_region
    _
  $region9: #{_lambda_.10} parent=0 // pred_fallthru
    _
  // Predicated region
  $region10: #{_lambda_.10} parent=0 // pred_check
    _
  $region11: #{_lambda_.10} parent=0 // pred_check_branch
    %13 = sbr.rel (0) target = $region13
  $region12: #{_lambda_.10} parent=0 // pred_region
    _
  $region13: #{_lambda_.10} parent=0 // pred_fallthru
    _
  %v15 = vld [vmem:[%s0] sm:$0xff]
  %v16 = vld [vmem:[%s0 + $0x8] sm:$0xff]
  %v17 = vld [vmem:[%s0 + $0x10] sm:$0xff]
  %v18 = vld [vmem:[%s0 + $0x18] sm:$0xff]
  %v19 = vld [vmem:[%s0 + $0x20] sm:$0xff]
  %v20 = vld [vmem:[%s0 + $0x28] sm:$0xff]
  %v21 = vld [vmem:[%s0 + $0x30] sm:$0xff]
  %v22 = vld [vmem:[%s0 + $0x38] sm:$0xff]
  %v23 = vld [vmem:[%s0 + $0x40] sm:$0xff]
  %v24 = vld [vmem:[%s0 + $0x48] sm:$0xff]
  %v25 = vld [vmem:[%s0 + $0x50] sm:$0xff]
  %v26 = vld [vmem:[%s0 + $0x58] sm:$0xff]
  %v27 = vld [vmem:[%s0 + $0x60] sm:$0xff]
  %v28 = vld [vmem:[%s0 + $0x68] sm:$0xff]
  %v29 = vld [vmem:[%s0 + $0x70] sm:$0xff]
  %v30 = vld [vmem:[%s0 + $0x78] sm:$0xff]
  %v31 = vld [vmem:[%s0 + $0x80] sm:$0xff]
  %v32 = vld [vmem:[%s0 + $0x88] sm:$0xff]
  %v33 = vld [vmem:[%s0 + $0x90] sm:$0xff]
  %v34 = vld [vmem:[%s0 + $0x98] sm:$0xff]
  %v35 = vld [vmem:[%s0 + $0xa0] sm:$0xff]
  %v36 = vld [vmem:[%s0 + $0xa8] sm:$0xff]
  %v37 = vld [vmem:[%s0 + $0xb0] sm:$0xff]
  %v38 = vld [vmem:[%s0 + $0xb8] sm:$0xff]
  %v39 = vld [vmem:[%s0 + $0xc0] sm:$0xff]
  %v40 = vld [vmem:[%s0 + $0xc8] sm:$0xff]
  %v41 = vld [vmem:[%s0 + $0xd0] sm:$0xff]
  %v42 = vld [vmem:[%s0 + $0xd8] sm:$0xff]
  %v43 = vld [vmem:[%s0 + $0xe0] sm:$0xff]
  %v44 = vld [vmem:[%s0 + $0xe8] sm:$0xff]
  %v45 = vld [vmem:[%s0 + $0xf0] sm:$0xff]
  %v46 = vld [vmem:[%s0 + $0xf8] sm:$0xff]
  %v47 = vld [vmem:[%s0 + $0x100] sm:$0xff]
  %v48 = vld [vmem:[%s0 + $0x108] sm:$0xff]
  %v49 = vld [vmem:[%s0 + $0x110] sm:$0xff]
  %v50 = vld [vmem:[%s0 + $0x118] sm:$0xff]
  %v51 = vld [vmem:[%s0 + $0x120] sm:$0xff]
  %v52 = vld [vmem:[%s0 + $0x128] sm:$0xff]
  %v53 = vld [vmem:[%s0 + $0x130] sm:$0xff]
  %v54 = vld [vmem:[%s0 + $0x138] sm:$0xff]
  %v55 = vld [vmem:[%s0 + $0x140] sm:$0xff]
  %v56 = vld [vmem:[%s0 + $0x148] sm:$0xff]
  %v57 = vld [vmem:[%s0 + $0x150] sm:$0xff]
  %v58 = vld [vmem:[%s0 + $0x158] sm:$0xff]
  %v59 = vld [vmem:[%s0 + $0x160] sm:$0xff]
  %v60 = vld [vmem:[%s0 + $0x168] sm:$0xff]
  %v61 = vld [vmem:[%s0 + $0x170] sm:$0xff]
  %v62 = vld [vmem:[%s0 + $0x178] sm:$0xff]
  %v63 = vld [vmem:[%s0 + $0x180] sm:$0xff]
  %v64 = vld [vmem:[%s0 + $0x188] sm:$0xff]
  %v65 = vld [vmem:[%s0 + $0x190] sm:$0xff]
  %v66 = vld [vmem:[%s0 + $0x198] sm:$0xff]
  %v67 = vld [vmem:[%s0 + $0x1a0] sm:$0xff]
  %v68 = vld [vmem:[%s0 + $0x1a8] sm:$0xff]
  %v69 = vld [vmem:[%s0 + $0x1b0] sm:$0xff]
  %v70 = vld [vmem:[%s0 + $0x1b8] sm:$0xff]
  %v71 = vld [vmem:[%s0 + $0x1c0] sm:$0xff]
  %v72 = vld [vmem:[%s0 + $0x1c8] sm:$0xff]
  %v73 = vld [vmem:[%s0 + $0x1d0] sm:$0xff]
  %v74 = vld [vmem:[%s0 + $0x1d8] sm:$0xff]
  %v75 = vld [vmem:[%s0 + $0x1e0] sm:$0xff]
  %v76 = vld [vmem:[%s0 + $0x1e8] sm:$0xff]
  %v77 = vld [vmem:[%s0 + $0x1f0] sm:$0xff]
  %v78 = vld [vmem:[%s0 + $0x1f8] sm:$0xff]
  %v79 = vld [vmem:[%s0 + $0x200] sm:$0xff]
  %v80 = vld [vmem:[%s0 + $0x208] sm:$0xff]
  %v81 = vld [vmem:[%s0 + $0x210] sm:$0xff]
  %v82 = vld [vmem:[%s0 + $0x218] sm:$0xff]
  %v83 = vld [vmem:[%s0 + $0x220] sm:$0xff]
  %v84 = vld [vmem:[%s0 + $0x228] sm:$0xff]
  %v85 = vld [vmem:[%s0 + $0x230] sm:$0xff]
  %v86 = vld [vmem:[%s0 + $0x238] sm:$0xff]
  %v87 = vld [vmem:[%s0 + $0x240] sm:$0xff]
  %v88 = vld [vmem:[%s0 + $0x248] sm:$0xff]
  %v89 = vld [vmem:[%s0 + $0x250] sm:$0xff]
  %v90 = vld [vmem:[%s0 + $0x258] sm:$0xff]
  %v91 = vld [vmem:[%s0 + $0x260] sm:$0xff]
  %v92 = vld [vmem:[%s0 + $0x268] sm:$0xff]
  %v93 = vld [vmem:[%s0 + $0x270] sm:$0xff]
  %v94 = vld [vmem:[%s0 + $0x278] sm:$0xff]
  %v95 = vld [vmem:[%s0 + $0x280] sm:$0xff]
  %v96 = vld [vmem:[%s0 + $0x288] sm:$0xff]
  %v97 = vld [vmem:[%s0 + $0x290] sm:$0xff]
  %v98 = vld [vmem:[%s0 + $0x298] sm:$0xff]
  %v99 = vld [vmem:[%s0 + $0x2a0] sm:$0xff]
  %v100 = vld [vmem:[%s0 + $0x2a8] sm:$0xff]
  %v101 = vld [vmem:[%s0 + $0x2b0] sm:$0xff]
  %v102 = vld [vmem:[%s0 + $0x2b8] sm:$0xff]
  %v103 = vld [vmem:[%s0 + $0x2c0] sm:$0xff]
  %v104 = vld [vmem:[%s0 + $0x2c8] sm:$0xff]
  %v105 = vld [vmem:[%s1] sm:$0xf]
  %v106 = vld [vmem:[%s1 + $0x4] sm:$0xf]
  %v107 = vld [vmem:[%s1 + $0x8] sm:$0xf]
  %v108 = vld [vmem:[%s1 + $0xc] sm:$0xf]
  %v109 = vld [vmem:[%s1 + $0x10] sm:$0xf]
  %v110 = vld [vmem:[%s1 + $0x14] sm:$0xf]
  %v111 = vld [vmem:[%s1 + $0x18] sm:$0xf]
  %v112 = vld [vmem:[%s1 + $0x1c] sm:$0xf]
  %v113 = vld [vmem:[%s1 + $0x20] sm:$0xf]
  %v114 = vld [vmem:[%s1 + $0x24] sm:$0xf]
  %v115 = vld [vmem:[%s1 + $0x28] sm:$0xf]
  %v116 = vld [vmem:[%s1 + $0x2c] sm:$0xf]
  %v117 = vld [vmem:[%s1 + $0x30] sm:$0xf]
  %v118 = vld [vmem:[%s1 + $0x34] sm:$0xf]
  %v119 = vld [vmem:[%s1 + $0x38] sm:$0xf]
  %v120 = vld [vmem:[%s1 + $0x3c] sm:$0xf]
  %v121 = vld [vmem:[%s1 + $0x40] sm:$0xf]
  %v122 = vld [vmem:[%s1 + $0x44] sm:$0xf]
  %v123 = vld [vmem:[%s1 + $0x48] sm:$0xf]
  %v124 = vld [vmem:[%s1 + $0x4c] sm:$0xf]
  %v125 = vld [vmem:[%s1 + $0x50] sm:$0xf]
  %v126 = vld [vmem:[%s1 + $0x54] sm:$0xf]
  %v127 = vld [vmem:[%s1 + $0x58] sm:$0xf]
  %v128 = vld [vmem:[%s1 + $0x5c] sm:$0xf]
  %v129 = vld [vmem:[%s1 + $0x60] sm:$0xf]
  %v130 = vld [vmem:[%s1 + $0x64] sm:$0xf]
  %v131 = vld [vmem:[%s1 + $0x68] sm:$0xf]
  %v132 = vld [vmem:[%s1 + $0x6c] sm:$0xf]
  %v133 = vld [vmem:[%s1 + $0x70] sm:$0xf]
  %v134 = vld [vmem:[%s1 + $0x74] sm:$0xf]
  %v135 = vld [vmem:[%s1 + $0x78] sm:$0xf]
  %v136 = vld [vmem:[%s1 + $0x7c] sm:$0xf]
  %v137 = vld [vmem:[%s1 + $0x80] sm:$0xf]
  %v138 = vld [vmem:[%s1 + $0x84] sm:$0xf]
  %v139 = vld [vmem:[%s1 + $0x88] sm:$0xf]
  %v140 = vld [vmem:[%s1 + $0x8c] sm:$0xf]
  %v141 = vld [vmem:[%s1 + $0x90] sm:$0xf]
  %v142 = vld [vmem:[%s1 + $0x94] sm:$0xf]
  %v143 = vld [vmem:[%s1 + $0x98] sm:$0xf]
  %v144 = vld [vmem:[%s1 + $0x9c] sm:$0xf]
  %v145 = vld [vmem:[%s1 + $0xa0] sm:$0xf]
  %v146 = vld [vmem:[%s1 + $0xa4] sm:$0xf]
  %v147 = vld [vmem:[%s1 + $0xa8] sm:$0xf]
  %v148 = vld [vmem:[%s1 + $0xac] sm:$0xf]
  %v149 = vld [vmem:[%s1 + $0xb0] sm:$0xf]
  %v150 = vld [vmem:[%s1 + $0xb4] sm:$0xf]
  %v151 = vld [vmem:[%s1 + $0xb8] sm:$0xf]
  %v152 = vld [vmem:[%s1 + $0xbc] sm:$0xf]
  %v153 = vld [vmem:[%s1 + $0xc0] sm:$0xf]
  %v154 = vld [vmem:[%s1 + $0xc4] sm:$0xf]
  %v155 = vld [vmem:[%s1 + $0xc8] sm:$0xf]
  %v156 = vld [vmem:[%s1 + $0xcc] sm:$0xf]
  %v157 = vld [vmem:[%s1 + $0xd0] sm:$0xf]
  %v158 = vld [vmem:[%s1 + $0xd4] sm:$0xf]
  %v159 = vld [vmem:[%s1 + $0xd8] sm:$0xf]
  %v160 = vld [vmem:[%s1 + $0xdc] sm:$0xf]
  %v161 = vld [vmem:[%s1 + $0xe0] sm:$0xf]
  %v162 = vld [vmem:[%s1 + $0xe4] sm:$0xf]
  %v163 = vld [vmem:[%s1 + $0xe8] sm:$0xf]
  %v164 = vld [vmem:[%s1 + $0xec] sm:$0xf]
  %v165 = vld [vmem:[%s1 + $0xf0] sm:$0xf]
  %v166 = vld [vmem:[%s1 + $0xf4] sm:$0xf]
  %v167 = vld [vmem:[%s1 + $0xf8] sm:$0xf]
  %v168 = vld [vmem:[%s1 + $0xfc] sm:$0xf]
  %v169 = vld [vmem:[%s1 + $0x100] sm:$0xf]
  %v170 = vld [vmem:[%s1 + $0x104] sm:$0xf]
  %v171 = vld [vmem:[%s1 + $0x108] sm:$0xf]
  %v172 = vld [vmem:[%s1 + $0x10c] sm:$0xf]
  %v173 = vld [vmem:[%s1 + $0x110] sm:$0xf]
  %v174 = vld [vmem:[%s1 + $0x114] sm:$0xf]
  %v175 = vld [vmem:[%s1 + $0x118] sm:$0xf]
  %v176 = vld [vmem:[%s1 + $0x11c] sm:$0xf]
  %v177 = vld [vmem:[%s1 + $0x120] sm:$0xf]
  %v178 = vld [vmem:[%s1 + $0x124] sm:$0xf]
  %v179 = vld [vmem:[%s1 + $0x128] sm:$0xf]
  %v180 = vld [vmem:[%s1 + $0x12c] sm:$0xf]
  %v181 = vld [vmem:[%s1 + $0x130] sm:$0xf]
  %v182 = vld [vmem:[%s1 + $0x134] sm:$0xf]
  %v183 = vld [vmem:[%s1 + $0x138] sm:$0xf]
  %v184 = vld [vmem:[%s1 + $0x13c] sm:$0xf]
  %v185 = vld [vmem:[%s1 + $0x140] sm:$0xf]
  %v186 = vld [vmem:[%s1 + $0x144] sm:$0xf]
  %v187 = vld [vmem:[%s1 + $0x148] sm:$0xf]
  %v188 = vld [vmem:[%s1 + $0x14c] sm:$0xf]
  %v189 = vld [vmem:[%s1 + $0x150] sm:$0xf]
  %v190 = vld [vmem:[%s1 + $0x154] sm:$0xf]
  %v191 = vld [vmem:[%s1 + $0x158] sm:$0xf]
  %v192 = vld [vmem:[%s1 + $0x15c] sm:$0xf]
  %v193 = vld [vmem:[%s1 + $0x160] sm:$0xf]
  %v194 = vld [vmem:[%s1 + $0x164] sm:$0xf]
  %v195 = vld [vmem:[%s1 + $0x168] sm:$0xf]
  %v196 = vld [vmem:[%s1 + $0x16c] sm:$0xf]
  %v197 = vld [vmem:[%s1 + $0x170] sm:$0xf]
  %v198 = vld [vmem:[%s1 + $0x174] sm:$0xf]
  %v199 = vld [vmem:[%s1 + $0x178] sm:$0xf]
  %v200 = vld [vmem:[%s1 + $0x17c] sm:$0xf]
  %v201 = vld [vmem:[%s1 + $0x180] sm:$0xf]
  %v202 = vld [vmem:[%s1 + $0x184] sm:$0xf]
  %v203 = vld [vmem:[%s1 + $0x188] sm:$0xf]
  %v204 = vld [vmem:[%s1 + $0x18c] sm:$0xf]
  %v205 = vld [vmem:[%s1 + $0x190] sm:$0xf]
  %v206 = vld [vmem:[%s1 + $0x194] sm:$0xf]
  %v207 = vld [vmem:[%s1 + $0x198] sm:$0xf]
  %v208 = vld [vmem:[%s1 + $0x19c] sm:$0xf]
  %v209 = vld [vmem:[%s1 + $0x1a0] sm:$0xf]
  %v210 = vld [vmem:[%s1 + $0x1a4] sm:$0xf]
  %v211 = vld [vmem:[%s1 + $0x1a8] sm:$0xf]
  %v212 = vld [vmem:[%s1 + $0x1ac] sm:$0xf]
  %v213 = vld [vmem:[%s1 + $0x1b0] sm:$0xf]
  %v214 = vld [vmem:[%s1 + $0x1b4] sm:$0xf]
  %v215 = vld [vmem:[%s1 + $0x1b8] sm:$0xf]
  %v216 = vld [vmem:[%s1 + $0x1bc] sm:$0xf]
  %v217 = vld [vmem:[%s1 + $0x1c0] sm:$0xf]
  %v218 = vld [vmem:[%s1 + $0x1c4] sm:$0xf]
  %v219 = vld [vmem:[%s1 + $0x1c8] sm:$0xf]
  %v220 = vld [vmem:[%s1 + $0x1cc] sm:$0xf]
  %v221 = vld [vmem:[%s1 + $0x1d0] sm:$0xf]
  %v222 = vld [vmem:[%s1 + $0x1d4] sm:$0xf]
  %v223 = vld [vmem:[%s1 + $0x1d8] sm:$0xf]
  %v224 = vld [vmem:[%s1 + $0x1dc] sm:$0xf]
  %v225 = vld [vmem:[%s1 + $0x1e0] sm:$0xf]
  %v226 = vld [vmem:[%s1 + $0x1e4] sm:$0xf]
  %v227 = vld [vmem:[%s1 + $0x1e8] sm:$0xf]
  %v228 = vld [vmem:[%s1 + $0x1ec] sm:$0xf]
  %v229 = vld [vmem:[%s1 + $0x1f0] sm:$0xf]
  %v230 = vld [vmem:[%s1 + $0x1f4] sm:$0xf]
  %v231 = vld [vmem:[%s1 + $0x1f8] sm:$0xf]
  %v232 = vld [vmem:[%s1 + $0x1fc] sm:$0xf]
  %v233 = vld [vmem:[%s1 + $0x200] sm:$0xf]
  %v234 = vld [vmem:[%s1 + $0x204] sm:$0xf]
  %v235 = vld [vmem:[%s1 + $0x208] sm:$0xf]
  %v236 = vld [vmem:[%s1 + $0x20c] sm:$0xf]
  %v237 = vld [vmem:[%s1 + $0x210] sm:$0xf]
  %v238 = vld [vmem:[%s1 + $0x214] sm:$0xf]
  %v239 = vld [vmem:[%s1 + $0x218] sm:$0xf]
  %v240 = vld [vmem:[%s1 + $0x21c] sm:$0xf]
  %v241 = vld [vmem:[%s1 + $0x220] sm:$0xf]
  %v242 = vld [vmem:[%s1 + $0x224] sm:$0xf]
  %v243 = vld [vmem:[%s1 + $0x228] sm:$0xf]
  %v244 = vld [vmem:[%s1 + $0x22c] sm:$0xf]
  %v245 = vld [vmem:[%s1 + $0x230] sm:$0xf]
  %v246 = vld [vmem:[%s1 + $0x234] sm:$0xf]
  %v247 = vld [vmem:[%s1 + $0x238] sm:$0xf]
  %v248 = vld [vmem:[%s1 + $0x23c] sm:$0xf]
  %v249 = vld [vmem:[%s1 + $0x240] sm:$0xf]
  %v250 = vld [vmem:[%s1 + $0x244] sm:$0xf]
  %v251 = vld [vmem:[%s1 + $0x248] sm:$0xf]
  %v252 = vld [vmem:[%s1 + $0x24c] sm:$0xf]
  %v253 = vld [vmem:[%s1 + $0x250] sm:$0xf]
  %v254 = vld [vmem:[%s1 + $0x254] sm:$0xf]
  %v255 = vld [vmem:[%s1 + $0x258] sm:$0xf]
  %v256 = vld [vmem:[%s1 + $0x25c] sm:$0xf]
  %v257 = vld [vmem:[%s1 + $0x260] sm:$0xf]
  %v258 = vld [vmem:[%s1 + $0x264] sm:$0xf]
  %v259 = vld [vmem:[%s1 + $0x268] sm:$0xf]
  %v260 = vld [vmem:[%s1 + $0x26c] sm:$0xf]
  %v261 = vld [vmem:[%s1 + $0x270] sm:$0xf]
  %v262 = vld [vmem:[%s1 + $0x274] sm:$0xf]
  %v263 = vld [vmem:[%s1 + $0x278] sm:$0xf]
  %v264 = vld [vmem:[%s1 + $0x27c] sm:$0xf]
  %v265 = vld [vmem:[%s1 + $0x280] sm:$0xf]
  %v266 = vld [vmem:[%s1 + $0x284] sm:$0xf]
  %v267 = vld [vmem:[%s1 + $0x288] sm:$0xf]
  %v268 = vld [vmem:[%s1 + $0x28c] sm:$0xf]
  %v269 = vld [vmem:[%s1 + $0x290] sm:$0xf]
  %v270 = vld [vmem:[%s1 + $0x294] sm:$0xf]
  %v271 = vld [vmem:[%s1 + $0x298] sm:$0xf]
  %v272 = vld [vmem:[%s1 + $0x29c] sm:$0xf]
  %v273 = vld [vmem:[%s1 + $0x2a0] sm:$0xf]
  %v274 = vld [vmem:[%s1 + $0x2a4] sm:$0xf]
  %v275 = vld [vmem:[%s1 + $0x2a8] sm:$0xf]
  %v276 = vld [vmem:[%s1 + $0x2ac] sm:$0xf]
  %v277 = vld [vmem:[%s1 + $0x2b0] sm:$0xf]
  %v278 = vld [vmem:[%s1 + $0x2b4] sm:$0xf]
  %v279 = vld [vmem:[%s1 + $0x2b8] sm:$0xf]
  %v280 = vld [vmem:[%s1 + $0x2bc] sm:$0xf]
  %v281 = vld [vmem:[%s1 + $0x2c0] sm:$0xf]
  %v282 = vld [vmem:[%s1 + $0x2c4] sm:$0xf]
  %v283 = vld [vmem:[%s1 + $0x2c8] sm:$0xf]
  %v284 = vld [vmem:[%s1 + $0x2cc] sm:$0xf]
  %v285 = vld [vmem:[%s1 + $0x2d0] sm:$0xf]
  %v286 = vld [vmem:[%s1 + $0x2d4] sm:$0xf]
  %v287 = vld [vmem:[%s1 + $0x2d8] sm:$0xf]
  %v288 = vld [vmem:[%s1 + $0x2dc] sm:$0xf]
  %v289 = vld [vmem:[%s1 + $0x2e0] sm:$0xf]
  %v290 = vld [vmem:[%s1 + $0x2e4] sm:$0xf]
  %v291 = vld [vmem:[%s1 + $0x2e8] sm:$0xf]
  %v292 = vld [vmem:[%s1 + $0x2ec] sm:$0xf]
  %v293 = vld [vmem:[%s1 + $0x2f0] sm:$0xf]
  %v294 = vld [vmem:[%s1 + $0x2f4] sm:$0xf]
  %v295 = vld [vmem:[%s1 + $0x2f8] sm:$0xf]
  %v296 = vld [vmem:[%s1 + $0x2fc] sm:$0xf]
  %v297 = vld [vmem:[%s1 + $0x300] sm:$0xf]
  %v298 = vld [vmem:[%s1 + $0x304] sm:$0xf]
  %v299 = vld [vmem:[%s1 + $0x308] sm:$0xf]
  %v300 = vld [vmem:[%s1 + $0x30c] sm:$0xf]
  %v301 = vld [vmem:[%s1 + $0x310] sm:$0xf]
  %v302 = vld [vmem:[%s1 + $0x314] sm:$0xf]
  %v303 = vld [vmem:[%s1 + $0x318] sm:$0xf]
  %v304 = vld [vmem:[%s1 + $0x31c] sm:$0xf]
  %v305 = vld [vmem:[%s1 + $0x320] sm:$0xf]
  %v306 = vld [vmem:[%s1 + $0x324] sm:$0xf]
  %v307 = vld [vmem:[%s1 + $0x328] sm:$0xf]
  %v308 = vld [vmem:[%s1 + $0x32c] sm:$0xf]
  %v309 = vld [vmem:[%s1 + $0x330] sm:$0xf]
  %v310 = vld [vmem:[%s1 + $0x334] sm:$0xf]
  %v311 = vld [vmem:[%s1 + $0x338] sm:$0xf]
  %v312 = vld [vmem:[%s1 + $0x33c] sm:$0xf]
  %v313 = vld [vmem:[%s1 + $0x340] sm:$0xf]
  %v314 = vld [vmem:[%s1 + $0x344] sm:$0xf]
  %v315 = vld [vmem:[%s1 + $0x348] sm:$0xf]
  %v316 = vld [vmem:[%s1 + $0x34c] sm:$0xf]
  %v317 = vld [vmem:[%s1 + $0x350] sm:$0xf]
  %v318 = vld [vmem:[%s1 + $0x354] sm:$0xf]
  %v319 = vld [vmem:[%s1 + $0x358] sm:$0xf]
  %v320 = vld [vmem:[%s1 + $0x35c] sm:$0xf]
  %v321 = vld [vmem:[%s1 + $0x360] sm:$0xf]
  %v322 = vld [vmem:[%s1 + $0x364] sm:$0xf]
  %v323 = vld [vmem:[%s1 + $0x368] sm:$0xf]
  %v324 = vld [vmem:[%s1 + $0x36c] sm:$0xf]
  %v325 = vld [vmem:[%s1 + $0x370] sm:$0xf]
  %v326 = vld [vmem:[%s1 + $0x374] sm:$0xf]
  %v327 = vld [vmem:[%s1 + $0x378] sm:$0xf]
  %v328 = vld [vmem:[%s1 + $0x37c] sm:$0xf]
  %v329 = vld [vmem:[%s1 + $0x380] sm:$0xf]
  %v330 = vld [vmem:[%s1 + $0x384] sm:$0xf]
  %v331 = vld [vmem:[%s1 + $0x388] sm:$0xf]
  %v332 = vld [vmem:[%s1 + $0x38c] sm:$0xf]
  %v333 = vld [vmem:[%s1 + $0x390] sm:$0xf]
  %v334 = vld [vmem:[%s1 + $0x394] sm:$0xf]
  %v335 = vld [vmem:[%s1 + $0x398] sm:$0xf]
  %v336 = vld [vmem:[%s1 + $0x39c] sm:$0xf]
  %v337 = vld [vmem:[%s1 + $0x3a0] sm:$0xf]
  %v338 = vld [vmem:[%s1 + $0x3a4] sm:$0xf]
  %v339 = vld [vmem:[%s1 + $0x3a8] sm:$0xf]
  %v340 = vld [vmem:[%s1 + $0x3ac] sm:$0xf]
  %v341 = vld [vmem:[%s1 + $0x3b0] sm:$0xf]
  %v342 = vld [vmem:[%s1 + $0x3b4] sm:$0xf]
  %v343 = vld [vmem:[%s1 + $0x3b8] sm:$0xf]
  %v344 = vld [vmem:[%s1 + $0x3bc] sm:$0xf]
  %v345 = vld [vmem:[%s1 + $0x3c0] sm:$0xf]
  %v346 = vld [vmem:[%s1 + $0x3c4] sm:$0xf]
  %v347 = vld [vmem:[%s1 + $0x3c8] sm:$0xf]
  %v348 = vld [vmem:[%s1 + $0x3cc] sm:$0xf]
  %v349 = vld [vmem:[%s1 + $0x3d0] sm:$0xf]
  %v350 = vld [vmem:[%s1 + $0x3d4] sm:$0xf]
  %v351 = vld [vmem:[%s1 + $0x3d8] sm:$0xf]
  %v352 = vld [vmem:[%s1 + $0x3dc] sm:$0xf]
  %v353 = vld [vmem:[%s1 + $0x3e0] sm:$0xf]
  %v354 = vld [vmem:[%s1 + $0x3e4] sm:$0xf]
  %v355 = vld [vmem:[%s1 + $0x3e8] sm:$0xf]
  %v356 = vld [vmem:[%s1 + $0x3ec] sm:$0xf]
  %v357 = vld [vmem:[%s1 + $0x3f0] sm:$0xf]
  %v358 = vld [vmem:[%s1 + $0x3f4] sm:$0xf]
  %v359 = vld [vmem:[%s1 + $0x3f8] sm:$0xf]
  %v360 = vld [vmem:[%s1 + $0x3fc] sm:$0xf]
  %v361 = vld [vmem:[%s1 + $0x400] sm:$0xf]
  %v362 = vld [vmem:[%s1 + $0x404] sm:$0xf]
  %v363 = vld [vmem:[%s1 + $0x408] sm:$0xf]
  %v364 = vld [vmem:[%s1 + $0x40c] sm:$0xf]
  %v365 = vld [vmem:[%s1 + $0x410] sm:$0xf]
  %v366 = vld [vmem:[%s1 + $0x414] sm:$0xf]
  %v367 = vld [vmem:[%s1 + $0x418] sm:$0xf]
  %v368 = vld [vmem:[%s1 + $0x41c] sm:$0xf]
  %v369 = vld [vmem:[%s1 + $0x420] sm:$0xf]
  %v370 = vld [vmem:[%s1 + $0x424] sm:$0xf]
  %v371 = vld [vmem:[%s1 + $0x428] sm:$0xf]
  %v372 = vld [vmem:[%s1 + $0x42c] sm:$0xf]
  %v373 = vld [vmem:[%s1 + $0x430] sm:$0xf]
  %v374 = vld [vmem:[%s1 + $0x434] sm:$0xf]
  %v375 = vld [vmem:[%s1 + $0x438] sm:$0xf]
  %v376 = vld [vmem:[%s1 + $0x43c] sm:$0xf]
  %v377 = vld [vmem:[%s1 + $0x440] sm:$0xf]
  %v378 = vld [vmem:[%s1 + $0x444] sm:$0xf]
  %v379 = vld [vmem:[%s1 + $0x448] sm:$0xf]
  %v380 = vld [vmem:[%s1 + $0x44c] sm:$0xf]
  %v381 = vld [vmem:[%s1 + $0x450] sm:$0xf]
  %v382 = vld [vmem:[%s1 + $0x454] sm:$0xf]
  %v383 = vld [vmem:[%s1 + $0x458] sm:$0xf]
  %v384 = vld [vmem:[%s1 + $0x45c] sm:$0xf]
  %v385 = vld [vmem:[%s1 + $0x460] sm:$0xf]
  %v386 = vld [vmem:[%s1 + $0x464] sm:$0xf]
  %v387 = vld [vmem:[%s1 + $0x468] sm:$0xf]
  %v388 = vld [vmem:[%s1 + $0x46c] sm:$0xf]
  %v389 = vld [vmem:[%s1 + $0x470] sm:$0xf]
  %v390 = vld [vmem:[%s1 + $0x474] sm:$0xf]
  %v391 = vld [vmem:[%s1 + $0x478] sm:$0xf]
  %v392 = vld [vmem:[%s1 + $0x47c] sm:$0xf]
  %v483 = vunpack.c.l.b16 %v15
  %v484 = vunpack.c.h.b16 %v15
  %v485 = vunpack.c.l.b16 %v16
  %v486 = vunpack.c.h.b16 %v16
  %v487 = vunpack.c.l.b16 %v17
  %v488 = vunpack.c.h.b16 %v17
  %v489 = vunpack.c.l.b16 %v18
  %v490 = vunpack.c.h.b16 %v18
  %v491 = vunpack.c.l.b16 %v19
  %v492 = vunpack.c.h.b16 %v19
  %v493 = vunpack.c.l.b16 %v20
  %v494 = vunpack.c.h.b16 %v20
  %v495 = vunpack.c.l.b16 %v21
  %v496 = vunpack.c.h.b16 %v21
  %v497 = vunpack.c.l.b16 %v22
  %v498 = vunpack.c.h.b16 %v22
  %v499 = vunpack.c.l.b16 %v23
  %v500 = vunpack.c.h.b16 %v23
  %v501 = vunpack.c.l.b16 %v24
  %v502 = vunpack.c.h.b16 %v24
  %v503 = vunpack.c.l.b16 %v25
  %v504 = vunpack.c.h.b16 %v25
  %v505 = vunpack.c.l.b16 %v26
  %v506 = vunpack.c.h.b16 %v26
  %v507 = vunpack.c.l.b16 %v27
  %v508 = vunpack.c.h.b16 %v27
  %v509 = vunpack.c.l.b16 %v28
  %v510 = vunpack.c.h.b16 %v28
  %v511 = vunpack.c.l.b16 %v29
  %v512 = vunpack.c.h.b16 %v29
  %v513 = vunpack.c.l.b16 %v30
  %v514 = vunpack.c.h.b16 %v30
  %v515 = vunpack.c.l.b16 %v31
  %v516 = vunpack.c.h.b16 %v31
  %v517 = vunpack.c.l.b16 %v32
  %v518 = vunpack.c.h.b16 %v32
  %v519 = vunpack.c.l.b16 %v33
  %v520 = vunpack.c.h.b16 %v33
  %v521 = vunpack.c.l.b16 %v34
  %v522 = vunpack.c.h.b16 %v34
  %v523 = vunpack.c.l.b16 %v35
  %v524 = vunpack.c.h.b16 %v35
  %v525 = vunpack.c.l.b16 %v36
  %v526 = vunpack.c.h.b16 %v36
  %v527 = vunpack.c.l.b16 %v37
  %v528 = vunpack.c.h.b16 %v37
  %v529 = vunpack.c.l.b16 %v38
  %v530 = vunpack.c.h.b16 %v38
  %v531 = vunpack.c.l.b16 %v39
  %v532 = vunpack.c.h.b16 %v39
  %v533 = vunpack.c.l.b16 %v40
  %v534 = vunpack.c.h.b16 %v40
  %v535 = vunpack.c.l.b16 %v41
  %v536 = vunpack.c.h.b16 %v41
  %v537 = vunpack.c.l.b16 %v42
  %v538 = vunpack.c.h.b16 %v42
  %v539 = vunpack.c.l.b16 %v43
  %v540 = vunpack.c.h.b16 %v43
  %v541 = vunpack.c.l.b16 %v44
  %v542 = vunpack.c.h.b16 %v44
  %v543 = vunpack.c.l.b16 %v45
  %v544 = vunpack.c.h.b16 %v45
  %v545 = vunpack.c.l.b16 %v46
  %v546 = vunpack.c.h.b16 %v46
  %v547 = vunpack.c.l.b16 %v47
  %v548 = vunpack.c.h.b16 %v47
  %v549 = vunpack.c.l.b16 %v48
  %v550 = vunpack.c.h.b16 %v48
  %v551 = vunpack.c.l.b16 %v49
  %v552 = vunpack.c.h.b16 %v49
  %v553 = vunpack.c.l.b16 %v50
  %v554 = vunpack.c.h.b16 %v50
  %v555 = vunpack.c.l.b16 %v51
  %v556 = vunpack.c.h.b16 %v51
  %v557 = vunpack.c.l.b16 %v52
  %v558 = vunpack.c.h.b16 %v52
  %v559 = vunpack.c.l.b16 %v53
  %v560 = vunpack.c.h.b16 %v53
  %v561 = vunpack.c.l.b16 %v54
  %v562 = vunpack.c.h.b16 %v54
  %v563 = vunpack.c.l.b16 %v55
  %v564 = vunpack.c.h.b16 %v55
  %v565 = vunpack.c.l.b16 %v56
  %v566 = vunpack.c.h.b16 %v56
  %v567 = vunpack.c.l.b16 %v57
  %v568 = vunpack.c.h.b16 %v57
  %v569 = vunpack.c.l.b16 %v58
  %v570 = vunpack.c.h.b16 %v58
  %v571 = vunpack.c.l.b16 %v59
  %v572 = vunpack.c.h.b16 %v59
  %v573 = vunpack.c.l.b16 %v60
  %v574 = vunpack.c.h.b16 %v60
  %v575 = vunpack.c.l.b16 %v61
  %v576 = vunpack.c.h.b16 %v61
  %v577 = vunpack.c.l.b16 %v62
  %v578 = vunpack.c.h.b16 %v62
  %v579 = vunpack.c.l.b16 %v63
  %v580 = vunpack.c.h.b16 %v63
  %v581 = vunpack.c.l.b16 %v64
  %v582 = vunpack.c.h.b16 %v64
  %v583 = vunpack.c.l.b16 %v65
  %v584 = vunpack.c.h.b16 %v65
  %v585 = vunpack.c.l.b16 %v66
  %v586 = vunpack.c.h.b16 %v66
  %v587 = vunpack.c.l.b16 %v67
  %v588 = vunpack.c.h.b16 %v67
  %v589 = vunpack.c.l.b16 %v68
  %v590 = vunpack.c.h.b16 %v68
  %v591 = vunpack.c.l.b16 %v69
  %v592 = vunpack.c.h.b16 %v69
  %v593 = vunpack.c.l.b16 %v70
  %v594 = vunpack.c.h.b16 %v70
  %v595 = vunpack.c.l.b16 %v71
  %v596 = vunpack.c.h.b16 %v71
  %v597 = vunpack.c.l.b16 %v72
  %v598 = vunpack.c.h.b16 %v72
  %v599 = vunpack.c.l.b16 %v73
  %v600 = vunpack.c.h.b16 %v73
  %v601 = vunpack.c.l.b16 %v74
  %v602 = vunpack.c.h.b16 %v74
  %v603 = vunpack.c.l.b16 %v75
  %v604 = vunpack.c.h.b16 %v75
  %v605 = vunpack.c.l.b16 %v76
  %v606 = vunpack.c.h.b16 %v76
  %v607 = vunpack.c.l.b16 %v77
  %v608 = vunpack.c.h.b16 %v77
  %v609 = vunpack.c.l.b16 %v78
  %v610 = vunpack.c.h.b16 %v78
  %v611 = vunpack.c.l.b16 %v79
  %v612 = vunpack.c.h.b16 %v79
  %v613 = vunpack.c.l.b16 %v80
  %v614 = vunpack.c.h.b16 %v80
  %v615 = vunpack.c.l.b16 %v81
  %v616 = vunpack.c.h.b16 %v81
  %v617 = vunpack.c.l.b16 %v82
  %v618 = vunpack.c.h.b16 %v82
  %v619 = vunpack.c.l.b16 %v83
  %v620 = vunpack.c.h.b16 %v83
  %v621 = vunpack.c.l.b16 %v84
  %v622 = vunpack.c.h.b16 %v84
  %v623 = vunpack.c.l.b16 %v85
  %v624 = vunpack.c.h.b16 %v85
  %v625 = vunpack.c.l.b16 %v86
  %v626 = vunpack.c.h.b16 %v86
  %v627 = vunpack.c.l.b16 %v87
  %v628 = vunpack.c.h.b16 %v87
  %v629 = vunpack.c.l.b16 %v88
  %v630 = vunpack.c.h.b16 %v88
  %v631 = vunpack.c.l.b16 %v89
  %v632 = vunpack.c.h.b16 %v89
  %v633 = vunpack.c.l.b16 %v90
  %v634 = vunpack.c.h.b16 %v90
  %v635 = vunpack.c.l.b16 %v91
  %v636 = vunpack.c.h.b16 %v91
  %v637 = vunpack.c.l.b16 %v92
  %v638 = vunpack.c.h.b16 %v92
  %v639 = vunpack.c.l.b16 %v93
  %v640 = vunpack.c.h.b16 %v93
  %v641 = vunpack.c.l.b16 %v94
  %v642 = vunpack.c.h.b16 %v94
  %v643 = vunpack.c.l.b16 %v95
  %v644 = vunpack.c.h.b16 %v95
  %v645 = vunpack.c.l.b16 %v96
  %v646 = vunpack.c.h.b16 %v96
  %v647 = vunpack.c.l.b16 %v97
  %v648 = vunpack.c.h.b16 %v97
  %v649 = vunpack.c.l.b16 %v98
  %v650 = vunpack.c.h.b16 %v98
  %v651 = vunpack.c.l.b16 %v99
  %v652 = vunpack.c.h.b16 %v99
  %v653 = vunpack.c.l.b16 %v100
  %v654 = vunpack.c.h.b16 %v100
  %v655 = vunpack.c.l.b16 %v101
  %v656 = vunpack.c.h.b16 %v101
  %v657 = vunpack.c.l.b16 %v102
  %v658 = vunpack.c.h.b16 %v102
  %v659 = vunpack.c.l.b16 %v103
  %v660 = vunpack.c.h.b16 %v103
  %v661 = vunpack.c.l.b16 %v104
  %v662 = vunpack.c.h.b16 %v104
  %v663 = vpack.c.b16 %v501, %v483
  %v664 = vpack.c.b16 %v502, %v484
  %v665 = vpack.c.b16 %v503, %v485
  %v666 = vpack.c.b16 %v504, %v486
  %v667 = vpack.c.b16 %v505, %v487
  %v668 = vpack.c.b16 %v506, %v488
  %v669 = vpack.c.b16 %v507, %v489
  %v670 = vpack.c.b16 %v508, %v490
  %v671 = vpack.c.b16 %v509, %v491
  %v672 = vpack.c.b16 %v510, %v492
  %v673 = vpack.c.b16 %v511, %v493
  %v674 = vpack.c.b16 %v512, %v494
  %v675 = vpack.c.b16 %v513, %v495
  %v676 = vpack.c.b16 %v514, %v496
  %v677 = vpack.c.b16 %v515, %v497
  %v678 = vpack.c.b16 %v516, %v498
  %v679 = vpack.c.b16 %v517, %v499
  %v680 = vpack.c.b16 %v518, %v500
  %v681 = vpack.c.b16 %v537, %v519
  %v682 = vpack.c.b16 %v538, %v520
  %v683 = vpack.c.b16 %v539, %v521
  %v684 = vpack.c.b16 %v540, %v522
  %v685 = vpack.c.b16 %v541, %v523
  %v686 = vpack.c.b16 %v542, %v524
  %v687 = vpack.c.b16 %v543, %v525
  %v688 = vpack.c.b16 %v544, %v526
  %v689 = vpack.c.b16 %v545, %v527
  %v690 = vpack.c.b16 %v546, %v528
  %v691 = vpack.c.b16 %v547, %v529
  %v692 = vpack.c.b16 %v548, %v530
  %v693 = vpack.c.b16 %v549, %v531
  %v694 = vpack.c.b16 %v550, %v532
  %v695 = vpack.c.b16 %v551, %v533
  %v696 = vpack.c.b16 %v552, %v534
  %v697 = vpack.c.b16 %v553, %v535
  %v698 = vpack.c.b16 %v554, %v536
  %v699 = vpack.c.b16 %v573, %v555
  %v700 = vpack.c.b16 %v574, %v556
  %v701 = vpack.c.b16 %v575, %v557
  %v702 = vpack.c.b16 %v576, %v558
  %v703 = vpack.c.b16 %v577, %v559
  %v704 = vpack.c.b16 %v578, %v560
  %v705 = vpack.c.b16 %v579, %v561
  %v706 = vpack.c.b16 %v580, %v562
  %v707 = vpack.c.b16 %v581, %v563
  %v708 = vpack.c.b16 %v582, %v564
  %v709 = vpack.c.b16 %v583, %v565
  %v710 = vpack.c.b16 %v584, %v566
  %v711 = vpack.c.b16 %v585, %v567
  %v712 = vpack.c.b16 %v586, %v568
  %v713 = vpack.c.b16 %v587, %v569
  %v714 = vpack.c.b16 %v588, %v570
  %v715 = vpack.c.b16 %v589, %v571
  %v716 = vpack.c.b16 %v590, %v572
  %v717 = vpack.c.b16 %v609, %v591
  %v718 = vpack.c.b16 %v610, %v592
  %v719 = vpack.c.b16 %v611, %v593
  %v720 = vpack.c.b16 %v612, %v594
  %v721 = vpack.c.b16 %v613, %v595
  %v722 = vpack.c.b16 %v614, %v596
  %v723 = vpack.c.b16 %v615, %v597
  %v724 = vpack.c.b16 %v616, %v598
  %v725 = vpack.c.b16 %v617, %v599
  %v726 = vpack.c.b16 %v618, %v600
  %v727 = vpack.c.b16 %v619, %v601
  %v728 = vpack.c.b16 %v620, %v602
  %v729 = vpack.c.b16 %v621, %v603
  %v730 = vpack.c.b16 %v622, %v604
  %v731 = vpack.c.b16 %v623, %v605
  %v732 = vpack.c.b16 %v624, %v606
  %v733 = vpack.c.b16 %v625, %v607
  %v734 = vpack.c.b16 %v626, %v608
  %v735 = vpack.c.b16 %v645, %v627
  %v736 = vpack.c.b16 %v646, %v628
  %v737 = vpack.c.b16 %v647, %v629
  %v738 = vpack.c.b16 %v648, %v630
  %v739 = vpack.c.b16 %v649, %v631
  %v740 = vpack.c.b16 %v650, %v632
  %v741 = vpack.c.b16 %v651, %v633
  %v742 = vpack.c.b16 %v652, %v634
  %v743 = vpack.c.b16 %v653, %v635
  %v744 = vpack.c.b16 %v654, %v636
  %v745 = vpack.c.b16 %v655, %v637
  %v746 = vpack.c.b16 %v656, %v638
  %v747 = vpack.c.b16 %v657, %v639
  %v748 = vpack.c.b16 %v658, %v640
  %v749 = vpack.c.b16 %v659, %v641
  %v750 = vpack.c.b16 %v660, %v642
  %v751 = vpack.c.b16 %v661, %v643
  %v752 = vpack.c.b16 %v662, %v644
  %v1131 = vunpack.c.l.b16 %v105
  %v1132 = vunpack.c.l.b16 %v106
  %v1133 = vunpack.c.l.b16 %v107
  %v1134 = vunpack.c.l.b16 %v108
  %v1135 = vunpack.c.l.b16 %v109
  %v1136 = vunpack.c.l.b16 %v110
  %v1137 = vunpack.c.l.b16 %v111
  %v1138 = vunpack.c.l.b16 %v112
  %v1139 = vunpack.c.l.b16 %v113
  %v1140 = vunpack.c.l.b16 %v114
  %v1141 = vunpack.c.l.b16 %v115
  %v1142 = vunpack.c.l.b16 %v116
  %v1143 = vunpack.c.l.b16 %v117
  %v1144 = vunpack.c.l.b16 %v118
  %v1145 = vunpack.c.l.b16 %v119
  %v1146 = vunpack.c.l.b16 %v120
  %v1147 = vunpack.c.l.b16 %v121
  %v1148 = vunpack.c.l.b16 %v122
  %v1149 = vunpack.c.l.b16 %v123
  %v1150 = vunpack.c.l.b16 %v124
  %v1151 = vunpack.c.l.b16 %v125
  %v1152 = vunpack.c.l.b16 %v126
  %v1153 = vunpack.c.l.b16 %v127
  %v1154 = vunpack.c.l.b16 %v128
  %v1155 = vunpack.c.l.b16 %v129
  %v1156 = vunpack.c.l.b16 %v130
  %v1157 = vunpack.c.l.b16 %v131
  %v1158 = vunpack.c.l.b16 %v132
  %v1159 = vunpack.c.l.b16 %v133
  %v1160 = vunpack.c.l.b16 %v134
  %v1161 = vunpack.c.l.b16 %v135
  %v1162 = vunpack.c.l.b16 %v136
  %v1163 = vunpack.c.l.b16 %v137
  %v1164 = vunpack.c.l.b16 %v138
  %v1165 = vunpack.c.l.b16 %v139
  %v1166 = vunpack.c.l.b16 %v140
  %v1167 = vunpack.c.l.b16 %v141
  %v1168 = vunpack.c.l.b16 %v142
  %v1169 = vunpack.c.l.b16 %v143
  %v1170 = vunpack.c.l.b16 %v144
  %v1171 = vunpack.c.l.b16 %v145
  %v1172 = vunpack.c.l.b16 %v146
  %v1173 = vunpack.c.l.b16 %v147
  %v1174 = vunpack.c.l.b16 %v148
  %v1175 = vunpack.c.l.b16 %v149
  %v1176 = vunpack.c.l.b16 %v150
  %v1177 = vunpack.c.l.b16 %v151
  %v1178 = vunpack.c.l.b16 %v152
  %v1179 = vunpack.c.l.b16 %v153
  %v1180 = vunpack.c.l.b16 %v154
  %v1181 = vunpack.c.l.b16 %v155
  %v1182 = vunpack.c.l.b16 %v156
  %v1183 = vunpack.c.l.b16 %v157
  %v1184 = vunpack.c.l.b16 %v158
  %v1185 = vunpack.c.l.b16 %v159
  %v1186 = vunpack.c.l.b16 %v160
  %v1187 = vunpack.c.l.b16 %v161
  %v1188 = vunpack.c.l.b16 %v162
  %v1189 = vunpack.c.l.b16 %v163
  %v1190 = vunpack.c.l.b16 %v164
  %v1191 = vunpack.c.l.b16 %v165
  %v1192 = vunpack.c.l.b16 %v166
  %v1193 = vunpack.c.l.b16 %v167
  %v1194 = vunpack.c.l.b16 %v168
  %v1195 = vunpack.c.l.b16 %v169
  %v1196 = vunpack.c.l.b16 %v170
  %v1197 = vunpack.c.l.b16 %v171
  %v1198 = vunpack.c.l.b16 %v172
  %v1199 = vunpack.c.l.b16 %v173
  %v1200 = vunpack.c.l.b16 %v174
  %v1201 = vunpack.c.l.b16 %v175
  %v1202 = vunpack.c.l.b16 %v176
  %v1203 = vunpack.c.l.b16 %v177
  %v1204 = vunpack.c.l.b16 %v178
  %v1205 = vunpack.c.l.b16 %v179
  %v1206 = vunpack.c.l.b16 %v180
  %v1207 = vunpack.c.l.b16 %v181
  %v1208 = vunpack.c.l.b16 %v182
  %v1209 = vunpack.c.l.b16 %v183
  %v1210 = vunpack.c.l.b16 %v184
  %v1211 = vunpack.c.l.b16 %v185
  %v1212 = vunpack.c.l.b16 %v186
  %v1213 = vunpack.c.l.b16 %v187
  %v1214 = vunpack.c.l.b16 %v188
  %v1215 = vunpack.c.l.b16 %v189
  %v1216 = vunpack.c.l.b16 %v190
  %v1217 = vunpack.c.l.b16 %v191
  %v1218 = vunpack.c.l.b16 %v192
  %v1219 = vunpack.c.l.b16 %v193
  %v1220 = vunpack.c.l.b16 %v194
  %v1221 = vunpack.c.l.b16 %v195
  %v1222 = vunpack.c.l.b16 %v196
  %v1223 = vunpack.c.l.b16 %v197
  %v1224 = vunpack.c.l.b16 %v198
  %v1225 = vunpack.c.l.b16 %v199
  %v1226 = vunpack.c.l.b16 %v200
  %v1227 = vunpack.c.l.b16 %v201
  %v1228 = vunpack.c.l.b16 %v202
  %v1229 = vunpack.c.l.b16 %v203
  %v1230 = vunpack.c.l.b16 %v204
  %v1231 = vunpack.c.l.b16 %v205
  %v1232 = vunpack.c.l.b16 %v206
  %v1233 = vunpack.c.l.b16 %v207
  %v1234 = vunpack.c.l.b16 %v208
  %v1235 = vunpack.c.l.b16 %v209
  %v1236 = vunpack.c.l.b16 %v210
  %v1237 = vunpack.c.l.b16 %v211
  %v1238 = vunpack.c.l.b16 %v212
  %v1239 = vunpack.c.l.b16 %v213
  %v1240 = vunpack.c.l.b16 %v214
  %v1241 = vunpack.c.l.b16 %v215
  %v1242 = vunpack.c.l.b16 %v216
  %v1243 = vunpack.c.l.b16 %v217
  %v1244 = vunpack.c.l.b16 %v218
  %v1245 = vunpack.c.l.b16 %v219
  %v1246 = vunpack.c.l.b16 %v220
  %v1247 = vunpack.c.l.b16 %v221
  %v1248 = vunpack.c.l.b16 %v222
  %v1249 = vunpack.c.l.b16 %v223
  %v1250 = vunpack.c.l.b16 %v224
  %v1251 = vunpack.c.l.b16 %v225
  %v1252 = vunpack.c.l.b16 %v226
  %v1253 = vunpack.c.l.b16 %v227
  %v1254 = vunpack.c.l.b16 %v228
  %v1255 = vunpack.c.l.b16 %v229
  %v1256 = vunpack.c.l.b16 %v230
  %v1257 = vunpack.c.l.b16 %v231
  %v1258 = vunpack.c.l.b16 %v232
  %v1259 = vunpack.c.l.b16 %v233
  %v1260 = vunpack.c.l.b16 %v234
  %v1261 = vunpack.c.l.b16 %v235
  %v1262 = vunpack.c.l.b16 %v236
  %v1263 = vunpack.c.l.b16 %v237
  %v1264 = vunpack.c.l.b16 %v238
  %v1265 = vunpack.c.l.b16 %v239
  %v1266 = vunpack.c.l.b16 %v240
  %v1267 = vunpack.c.l.b16 %v241
  %v1268 = vunpack.c.l.b16 %v242
  %v1269 = vunpack.c.l.b16 %v243
  %v1270 = vunpack.c.l.b16 %v244
  %v1271 = vunpack.c.l.b16 %v245
  %v1272 = vunpack.c.l.b16 %v246
  %v1273 = vunpack.c.l.b16 %v247
  %v1274 = vunpack.c.l.b16 %v248
  %v1275 = vunpack.c.l.b16 %v249
  %v1276 = vunpack.c.l.b16 %v250
  %v1277 = vunpack.c.l.b16 %v251
  %v1278 = vunpack.c.l.b16 %v252
  %v1279 = vunpack.c.l.b16 %v253
  %v1280 = vunpack.c.l.b16 %v254
  %v1281 = vunpack.c.l.b16 %v255
  %v1282 = vunpack.c.l.b16 %v256
  %v1283 = vunpack.c.l.b16 %v257
  %v1284 = vunpack.c.l.b16 %v258
  %v1285 = vunpack.c.l.b16 %v259
  %v1286 = vunpack.c.l.b16 %v260
  %v1287 = vunpack.c.l.b16 %v261
  %v1288 = vunpack.c.l.b16 %v262
  %v1289 = vunpack.c.l.b16 %v263
  %v1290 = vunpack.c.l.b16 %v264
  %v1291 = vunpack.c.l.b16 %v265
  %v1292 = vunpack.c.l.b16 %v266
  %v1293 = vunpack.c.l.b16 %v267
  %v1294 = vunpack.c.l.b16 %v268
  %v1295 = vunpack.c.l.b16 %v269
  %v1296 = vunpack.c.l.b16 %v270
  %v1297 = vunpack.c.l.b16 %v271
  %v1298 = vunpack.c.l.b16 %v272
  %v1299 = vunpack.c.l.b16 %v273
  %v1300 = vunpack.c.l.b16 %v274
  %v1301 = vunpack.c.l.b16 %v275
  %v1302 = vunpack.c.l.b16 %v276
  %v1303 = vunpack.c.l.b16 %v277
  %v1304 = vunpack.c.l.b16 %v278
  %v1305 = vunpack.c.l.b16 %v279
  %v1306 = vunpack.c.l.b16 %v280
  %v1307 = vunpack.c.l.b16 %v281
  %v1308 = vunpack.c.l.b16 %v282
  %v1309 = vunpack.c.l.b16 %v283
  %v1310 = vunpack.c.l.b16 %v284
  %v1311 = vunpack.c.l.b16 %v285
  %v1312 = vunpack.c.l.b16 %v286
  %v1313 = vunpack.c.l.b16 %v287
  %v1314 = vunpack.c.l.b16 %v288
  %v1315 = vunpack.c.l.b16 %v289
  %v1316 = vunpack.c.l.b16 %v290
  %v1317 = vunpack.c.l.b16 %v291
  %v1318 = vunpack.c.l.b16 %v292
  %v1319 = vunpack.c.l.b16 %v293
  %v1320 = vunpack.c.l.b16 %v294
  %v1321 = vunpack.c.l.b16 %v295
  %v1322 = vunpack.c.l.b16 %v296
  %v1323 = vunpack.c.l.b16 %v297
  %v1324 = vunpack.c.l.b16 %v298
  %v1325 = vunpack.c.l.b16 %v299
  %v1326 = vunpack.c.l.b16 %v300
  %v1327 = vunpack.c.l.b16 %v301
  %v1328 = vunpack.c.l.b16 %v302
  %v1329 = vunpack.c.l.b16 %v303
  %v1330 = vunpack.c.l.b16 %v304
  %v1331 = vunpack.c.l.b16 %v305
  %v1332 = vunpack.c.l.b16 %v306
  %v1333 = vunpack.c.l.b16 %v307
  %v1334 = vunpack.c.l.b16 %v308
  %v1335 = vunpack.c.l.b16 %v309
  %v1336 = vunpack.c.l.b16 %v310
  %v1337 = vunpack.c.l.b16 %v311
  %v1338 = vunpack.c.l.b16 %v312
  %v1339 = vunpack.c.l.b16 %v313
  %v1340 = vunpack.c.l.b16 %v314
  %v1341 = vunpack.c.l.b16 %v315
  %v1342 = vunpack.c.l.b16 %v316
  %v1343 = vunpack.c.l.b16 %v317
  %v1344 = vunpack.c.l.b16 %v318
  %v1345 = vunpack.c.l.b16 %v319
  %v1346 = vunpack.c.l.b16 %v320
  %v1347 = vunpack.c.l.b16 %v321
  %v1348 = vunpack.c.l.b16 %v322
  %v1349 = vunpack.c.l.b16 %v323
  %v1350 = vunpack.c.l.b16 %v324
  %v1351 = vunpack.c.l.b16 %v325
  %v1352 = vunpack.c.l.b16 %v326
  %v1353 = vunpack.c.l.b16 %v327
  %v1354 = vunpack.c.l.b16 %v328
  %v1355 = vunpack.c.l.b16 %v329
  %v1356 = vunpack.c.l.b16 %v330
  %v1357 = vunpack.c.l.b16 %v331
  %v1358 = vunpack.c.l.b16 %v332
  %v1359 = vunpack.c.l.b16 %v333
  %v1360 = vunpack.c.l.b16 %v334
  %v1361 = vunpack.c.l.b16 %v335
  %v1362 = vunpack.c.l.b16 %v336
  %v1363 = vunpack.c.l.b16 %v337
  %v1364 = vunpack.c.l.b16 %v338
  %v1365 = vunpack.c.l.b16 %v339
  %v1366 = vunpack.c.l.b16 %v340
  %v1367 = vunpack.c.l.b16 %v341
  %v1368 = vunpack.c.l.b16 %v342
  %v1369 = vunpack.c.l.b16 %v343
  %v1370 = vunpack.c.l.b16 %v344
  %v1371 = vunpack.c.l.b16 %v345
  %v1372 = vunpack.c.l.b16 %v346
  %v1373 = vunpack.c.l.b16 %v347
  %v1374 = vunpack.c.l.b16 %v348
  %v1375 = vunpack.c.l.b16 %v349
  %v1376 = vunpack.c.l.b16 %v350
  %v1377 = vunpack.c.l.b16 %v351
  %v1378 = vunpack.c.l.b16 %v352
  %v1379 = vunpack.c.l.b16 %v353
  %v1380 = vunpack.c.l.b16 %v354
  %v1381 = vunpack.c.l.b16 %v355
  %v1382 = vunpack.c.l.b16 %v356
  %v1383 = vunpack.c.l.b16 %v357
  %v1384 = vunpack.c.l.b16 %v358
  %v1385 = vunpack.c.l.b16 %v359
  %v1386 = vunpack.c.l.b16 %v360
  %v1387 = vunpack.c.l.b16 %v361
  %v1388 = vunpack.c.l.b16 %v362
  %v1389 = vunpack.c.l.b16 %v363
  %v1390 = vunpack.c.l.b16 %v364
  %v1391 = vunpack.c.l.b16 %v365
  %v1392 = vunpack.c.l.b16 %v366
  %v1393 = vunpack.c.l.b16 %v367
  %v1394 = vunpack.c.l.b16 %v368
  %v1395 = vunpack.c.l.b16 %v369
  %v1396 = vunpack.c.l.b16 %v370
  %v1397 = vunpack.c.l.b16 %v371
  %v1398 = vunpack.c.l.b16 %v372
  %v1399 = vunpack.c.l.b16 %v373
  %v1400 = vunpack.c.l.b16 %v374
  %v1401 = vunpack.c.l.b16 %v375
  %v1402 = vunpack.c.l.b16 %v376
  %v1403 = vunpack.c.l.b16 %v377
  %v1404 = vunpack.c.l.b16 %v378
  %v1405 = vunpack.c.l.b16 %v379
  %v1406 = vunpack.c.l.b16 %v380
  %v1407 = vunpack.c.l.b16 %v381
  %v1408 = vunpack.c.l.b16 %v382
  %v1409 = vunpack.c.l.b16 %v383
  %v1410 = vunpack.c.l.b16 %v384
  %v1411 = vunpack.c.l.b16 %v385
  %v1412 = vunpack.c.l.b16 %v386
  %v1413 = vunpack.c.l.b16 %v387
  %v1414 = vunpack.c.l.b16 %v388
  %v1415 = vunpack.c.l.b16 %v389
  %v1416 = vunpack.c.l.b16 %v390
  %v1417 = vunpack.c.l.b16 %v391
  %v1418 = vunpack.c.l.b16 %v392
  %v1419 = vpack.c.b16 %v1132, %v1131
  %v1420 = vpack.c.b16 %v1134, %v1133
  %v1421 = vpack.c.b16 %v1136, %v1135
  %v1422 = vpack.c.b16 %v1138, %v1137
  %v1423 = vpack.c.b16 %v1140, %v1139
  %v1424 = vpack.c.b16 %v1142, %v1141
  %v1425 = vpack.c.b16 %v1144, %v1143
  %v1426 = vpack.c.b16 %v1146, %v1145
  %v1427 = vpack.c.b16 %v1148, %v1147
  %v1428 = vpack.c.b16 %v1150, %v1149
  %v1429 = vpack.c.b16 %v1152, %v1151
  %v1430 = vpack.c.b16 %v1154, %v1153
  %v1431 = vpack.c.b16 %v1156, %v1155
  %v1432 = vpack.c.b16 %v1158, %v1157
  %v1433 = vpack.c.b16 %v1160, %v1159
  %v1434 = vpack.c.b16 %v1162, %v1161
  %v1435 = vpack.c.b16 %v1164, %v1163
  %v1436 = vpack.c.b16 %v1166, %v1165
  %v1437 = vpack.c.b16 %v1168, %v1167
  %v1438 = vpack.c.b16 %v1170, %v1169
  %v1439 = vpack.c.b16 %v1172, %v1171
  %v1440 = vpack.c.b16 %v1174, %v1173
  %v1441 = vpack.c.b16 %v1176, %v1175
  %v1442 = vpack.c.b16 %v1178, %v1177
  %v1443 = vpack.c.b16 %v1180, %v1179
  %v1444 = vpack.c.b16 %v1182, %v1181
  %v1445 = vpack.c.b16 %v1184, %v1183
  %v1446 = vpack.c.b16 %v1186, %v1185
  %v1447 = vpack.c.b16 %v1188, %v1187
  %v1448 = vpack.c.b16 %v1190, %v1189
  %v1449 = vpack.c.b16 %v1192, %v1191
  %v1450 = vpack.c.b16 %v1194, %v1193
  %v1451 = vpack.c.b16 %v1196, %v1195
  %v1452 = vpack.c.b16 %v1198, %v1197
  %v1453 = vpack.c.b16 %v1200, %v1199
  %v1454 = vpack.c.b16 %v1202, %v1201
  %v1455 = vpack.c.b16 %v1204, %v1203
  %v1456 = vpack.c.b16 %v1206, %v1205
  %v1457 = vpack.c.b16 %v1208, %v1207
  %v1458 = vpack.c.b16 %v1210, %v1209
  %v1459 = vpack.c.b16 %v1212, %v1211
  %v1460 = vpack.c.b16 %v1214, %v1213
  %v1461 = vpack.c.b16 %v1216, %v1215
  %v1462 = vpack.c.b16 %v1218, %v1217
  %v1463 = vpack.c.b16 %v1220, %v1219
  %v1464 = vpack.c.b16 %v1222, %v1221
  %v1465 = vpack.c.b16 %v1224, %v1223
  %v1466 = vpack.c.b16 %v1226, %v1225
  %v1467 = vpack.c.b16 %v1228, %v1227
  %v1468 = vpack.c.b16 %v1230, %v1229
  %v1469 = vpack.c.b16 %v1232, %v1231
  %v1470 = vpack.c.b16 %v1234, %v1233
  %v1471 = vpack.c.b16 %v1236, %v1235
  %v1472 = vpack.c.b16 %v1238, %v1237
  %v1473 = vpack.c.b16 %v1240, %v1239
  %v1474 = vpack.c.b16 %v1242, %v1241
  %v1475 = vpack.c.b16 %v1244, %v1243
  %v1476 = vpack.c.b16 %v1246, %v1245
  %v1477 = vpack.c.b16 %v1248, %v1247
  %v1478 = vpack.c.b16 %v1250, %v1249
  %v1479 = vpack.c.b16 %v1252, %v1251
  %v1480 = vpack.c.b16 %v1254, %v1253
  %v1481 = vpack.c.b16 %v1256, %v1255
  %v1482 = vpack.c.b16 %v1258, %v1257
  %v1483 = vpack.c.b16 %v1260, %v1259
  %v1484 = vpack.c.b16 %v1262, %v1261
  %v1485 = vpack.c.b16 %v1264, %v1263
  %v1486 = vpack.c.b16 %v1266, %v1265
  %v1487 = vpack.c.b16 %v1268, %v1267
  %v1488 = vpack.c.b16 %v1270, %v1269
  %v1489 = vpack.c.b16 %v1272, %v1271
  %v1490 = vpack.c.b16 %v1274, %v1273
  %v1491 = vpack.c.b16 %v1276, %v1275
  %v1492 = vpack.c.b16 %v1278, %v1277
  %v1493 = vpack.c.b16 %v1280, %v1279
  %v1494 = vpack.c.b16 %v1282, %v1281
  %v1495 = vpack.c.b16 %v1284, %v1283
  %v1496 = vpack.c.b16 %v1286, %v1285
  %v1497 = vpack.c.b16 %v1288, %v1287
  %v1498 = vpack.c.b16 %v1290, %v1289
  %v1499 = vpack.c.b16 %v1292, %v1291
  %v1500 = vpack.c.b16 %v1294, %v1293
  %v1501 = vpack.c.b16 %v1296, %v1295
  %v1502 = vpack.c.b16 %v1298, %v1297
  %v1503 = vpack.c.b16 %v1300, %v1299
  %v1504 = vpack.c.b16 %v1302, %v1301
  %v1505 = vpack.c.b16 %v1304, %v1303
  %v1506 = vpack.c.b16 %v1306, %v1305
  %v1507 = vpack.c.b16 %v1308, %v1307
  %v1508 = vpack.c.b16 %v1310, %v1309
  %v1509 = vpack.c.b16 %v1312, %v1311
  %v1510 = vpack.c.b16 %v1314, %v1313
  %v1511 = vpack.c.b16 %v1316, %v1315
  %v1512 = vpack.c.b16 %v1318, %v1317
  %v1513 = vpack.c.b16 %v1320, %v1319
  %v1514 = vpack.c.b16 %v1322, %v1321
  %v1515 = vpack.c.b16 %v1324, %v1323
  %v1516 = vpack.c.b16 %v1326, %v1325
  %v1517 = vpack.c.b16 %v1328, %v1327
  %v1518 = vpack.c.b16 %v1330, %v1329
  %v1519 = vpack.c.b16 %v1332, %v1331
  %v1520 = vpack.c.b16 %v1334, %v1333
  %v1521 = vpack.c.b16 %v1336, %v1335
  %v1522 = vpack.c.b16 %v1338, %v1337
  %v1523 = vpack.c.b16 %v1340, %v1339
  %v1524 = vpack.c.b16 %v1342, %v1341
  %v1525 = vpack.c.b16 %v1344, %v1343
  %v1526 = vpack.c.b16 %v1346, %v1345
  %v1527 = vpack.c.b16 %v1348, %v1347
  %v1528 = vpack.c.b16 %v1350, %v1349
  %v1529 = vpack.c.b16 %v1352, %v1351
  %v1530 = vpack.c.b16 %v1354, %v1353
  %v1531 = vpack.c.b16 %v1356, %v1355
  %v1532 = vpack.c.b16 %v1358, %v1357
  %v1533 = vpack.c.b16 %v1360, %v1359
  %v1534 = vpack.c.b16 %v1362, %v1361
  %v1535 = vpack.c.b16 %v1364, %v1363
  %v1536 = vpack.c.b16 %v1366, %v1365
  %v1537 = vpack.c.b16 %v1368, %v1367
  %v1538 = vpack.c.b16 %v1370, %v1369
  %v1539 = vpack.c.b16 %v1372, %v1371
  %v1540 = vpack.c.b16 %v1374, %v1373
  %v1541 = vpack.c.b16 %v1376, %v1375
  %v1542 = vpack.c.b16 %v1378, %v1377
  %v1543 = vpack.c.b16 %v1380, %v1379
  %v1544 = vpack.c.b16 %v1382, %v1381
  %v1545 = vpack.c.b16 %v1384, %v1383
  %v1546 = vpack.c.b16 %v1386, %v1385
  %v1547 = vpack.c.b16 %v1388, %v1387
  %v1548 = vpack.c.b16 %v1390, %v1389
  %v1549 = vpack.c.b16 %v1392, %v1391
  %v1550 = vpack.c.b16 %v1394, %v1393
  %v1551 = vpack.c.b16 %v1396, %v1395
  %v1552 = vpack.c.b16 %v1398, %v1397
  %v1553 = vpack.c.b16 %v1400, %v1399
  %v1554 = vpack.c.b16 %v1402, %v1401
  %v1555 = vpack.c.b16 %v1404, %v1403
  %v1556 = vpack.c.b16 %v1406, %v1405
  %v1557 = vpack.c.b16 %v1408, %v1407
  %v1558 = vpack.c.b16 %v1410, %v1409
  %v1559 = vpack.c.b16 %v1412, %v1411
  %v1560 = vpack.c.b16 %v1414, %v1413
  %v1561 = vpack.c.b16 %v1416, %v1415
  %v1562 = vpack.c.b16 %v1418, %v1417
  %1707 = vmatprep.subr.bf16.mxu0 0
  %1708 = vmatpush1.bf16.msra.mxu0 %v1419
  %1709 = vmatprep.subr.bf16.mxu0 0
  %1710 = vmatpush1.bf16.msra.mxu0 %v1420
  %1711 = vmatprep.subr.bf16.mxu0 0
  %1712 = vmatpush1.bf16.msra.mxu0 %v1421
  %1713 = vmatprep.subr.bf16.mxu0 0
  %1714 = vmatpush1.bf16.msra.mxu0 %v1422
  %1715 = vmatprep.subr.bf16.mxu0 0
  %1716 = vmatpush1.bf16.msra.mxu0 %v1423
  %1717 = vmatprep.subr.bf16.mxu0 0
  %1718 = vmatpush1.bf16.msra.mxu0 %v1424
  %1719 = vmatprep.subr.bf16.mxu0 0
  %1720 = vmatpush1.bf16.msra.mxu0 %v1425
  %1721 = vmatprep.subr.bf16.mxu0 0
  %1722 = vmatpush1.bf16.msra.mxu0 %v1426
  %1723 = vmatprep.subr.bf16.mxu0 0
  %1724 = vmatpush1.bf16.msra.mxu0 %v1427
  %1725 = vmatprep.subr.bf16.mxu0 0
  %1726 = vmatpush1.bf16.msra.mxu0 %v1428
  %1727 = vmatprep.subr.bf16.mxu0 0
  %1728 = vmatpush1.bf16.msra.mxu0 %v1429
  %1729 = vmatprep.subr.bf16.mxu0 0
  %1730 = vmatpush1.bf16.msra.mxu0 %v1430
  %1731 = vmatprep.subr.bf16.mxu0 0
  %1732 = vmatpush1.bf16.msra.mxu0 %v1431
  %1733 = vmatprep.subr.bf16.mxu0 0
  %1734 = vmatpush1.bf16.msra.mxu0 %v1432
  %1735 = vmatprep.subr.bf16.mxu0 0
  %1736 = vmatpush1.bf16.msra.mxu0 %v1433
  %1737 = vmatprep.subr.bf16.mxu0 0
  %1738 = vmatpush1.bf16.msra.mxu0 %v1434
  %1739 = vmatprep.mubr.bf16.mxu0 %v664
  %1740 = vmatmul.mubr.bf16.gmra.mrb[0].mxu0 %v663
  %v1741 = vpop.f32.mrb[0].mxu0
  %v1742 = vadd.f32 0.0, %v1741
  %v1743 = vpop.f32.mrb[0].mxu0
  %v1744 = vpop.f32.mrb[0].mxu0
  %v1745 = vadd.f32 0.0, %v1744
  %v1746 = vpop.f32.mrb[0].mxu0
  %1747 = vmatprep.mubr.bf16.mxu0 %v682
  %1748 = vmatmul.mubr.bf16.gmra.mrb[0].mxu0 %v681
  %v1749 = vpop.f32.mrb[0].mxu0
  %v1750 = vadd.f32 0.0, %v1749
  %v1751 = vpop.f32.mrb[0].mxu0
  %v1752 = vpop.f32.mrb[0].mxu0
  %v1753 = vadd.f32 0.0, %v1752
  %v1754 = vpop.f32.mrb[0].mxu0
  %1755 = vmatprep.mubr.bf16.mxu0 %v700
  %1756 = vmatmul.mubr.bf16.gmra.mrb[0].mxu0 %v699
  %v1757 = vpop.f32.mrb[0].mxu0
  %v1758 = vadd.f32 0.0, %v1757
  %v1759 = vpop.f32.mrb[0].mxu0
  %v1760 = vpop.f32.mrb[0].mxu0
  %v1761 = vadd.f32 0.0, %v1760
  %v1762 = vpop.f32.mrb[0].mxu0
  %1763 = vmatprep.mubr.bf16.mxu0 %v718
  %1764 = vmatmul.mubr.bf16.gmra.mrb[0].mxu0 %v717
  %v1765 = vpop.f32.mrb[0].mxu0
  %v1766 = vadd.f32 0.0, %v1765
  %v1767 = vpop.f32.mrb[0].mxu0
  %v1768 = vpop.f32.mrb[0].mxu0
  %v1769 = vadd.f32 0.0, %v1768
  %v1770 = vpop.f32.mrb[0].mxu0
  %1771 = vmatprep.mubr.bf16.mxu0 %v736
  %1772 = vmatmul.mubr.bf16.gmra.mrb[0].mxu0 %v735
  %v1773 = vpop.f32.mrb[0].mxu0
  %v1774 = vadd.f32 0.0, %v1773
  %v1775 = vpop.f32.mrb[0].mxu0
  %v1776 = vpop.f32.mrb[0].mxu0
  %v1777 = vadd.f32 0.0, %v1776
  %v1778 = vpop.f32.mrb[0].mxu0
  %1779 = vdwg.mxu0
  %1780 = vmatprep.subr.bf16.mxu0 0
  %1781 = vmatpush1.bf16.msra.mxu0 %v1435
  %1782 = vmatprep.subr.bf16.mxu0 0
  %1783 = vmatpush1.bf16.msra.mxu0 %v1436
  %1784 = vmatprep.subr.bf16.mxu0 0
  %1785 = vmatpush1.bf16.msra.mxu0 %v1437
  %1786 = vmatprep.subr.bf16.mxu0 0
  %1787 = vmatpush1.bf16.msra.mxu0 %v1438
  %1788 = vmatprep.subr.bf16.mxu0 0
  %1789 = vmatpush1.bf16.msra.mxu0 %v1439
  %1790 = vmatprep.subr.bf16.mxu0 0
  %1791 = vmatpush1.bf16.msra.mxu0 %v1440
  %1792 = vmatprep.subr.bf16.mxu0 0
  %1793 = vmatpush1.bf16.msra.mxu0 %v1441
  %1794 = vmatprep.subr.bf16.mxu0 0
  %1795 = vmatpush1.bf16.msra.mxu0 %v1442
  %1796 = vmatprep.subr.bf16.mxu0 0
  %1797 = vmatpush1.bf16.msra.mxu0 %v1443
  %1798 = vmatprep.subr.bf16.mxu0 0
  %1799 = vmatpush1.bf16.msra.mxu0 %v1444
  %1800 = vmatprep.subr.bf16.mxu0 0
  %1801 = vmatpush1.bf16.msra.mxu0 %v1445
  %1802 = vmatprep.subr.bf16.mxu0 0
  %1803 = vmatpush1.bf16.msra.mxu0 %v1446
  %1804 = vmatprep.subr.bf16.mxu0 0
  %1805 = vmatpush1.bf16.msra.mxu0 %v1447
  %1806 = vmatprep.subr.bf16.mxu0 0
  %1807 = vmatpush1.bf16.msra.mxu0 %v1448
  %1808 = vmatprep.subr.bf16.mxu0 0
  %1809 = vmatpush1.bf16.msra.mxu0 %v1449
  %1810 = vmatprep.subr.bf16.mxu0 0
  %1811 = vmatpush1.bf16.msra.mxu0 %v1450
  %1812 = vmatprep.mubr.bf16.mxu0 %v666
  %1813 = vmatmul.mubr.bf16.gmra.mrb[0].mxu0 %v665
  %v1814 = vpop.f32.mrb[0].mxu0
  %v1815 = vadd.f32 %v1742, %v1814
  %v1816 = vpop.f32.mrb[0].mxu0
  %v1817 = vpop.f32.mrb[0].mxu0
  %v1818 = vadd.f32 %v1745, %v1817
  %v1819 = vpop.f32.mrb[0].mxu0
  %1820 = vmatprep.mubr.bf16.mxu0 %v684
  %1821 = vmatmul.mubr.bf16.gmra.mrb[0].mxu0 %v683
  %v1822 = vpop.f32.mrb[0].mxu0
  %v1823 = vadd.f32 %v1750, %v1822
  %v1824 = vpop.f32.mrb[0].mxu0
  %v1825 = vpop.f32.mrb[0].mxu0
  %v1826 = vadd.f32 %v1753, %v1825
  %v1827 = vpop.f32.mrb[0].mxu0
  %1828 = vmatprep.mubr.bf16.mxu0 %v702
  %1829 = vmatmul.mubr.bf16.gmra.mrb[0].mxu0 %v701
  %v1830 = vpop.f32.mrb[0].mxu0
  %v1831 = vadd.f32 %v1758, %v1830
  %v1832 = vpop.f32.mrb[0].mxu0
  %v1833 = vpop.f32.mrb[0].mxu0
  %v1834 = vadd.f32 %v1761, %v1833
  %v1835 = vpop.f32.mrb[0].mxu0
  %1836 = vmatprep.mubr.bf16.mxu0 %v720
  %1837 = vmatmul.mubr.bf16.gmra.mrb[0].mxu0 %v719
  %v1838 = vpop.f32.mrb[0].mxu0
  %v1839 = vadd.f32 %v1766, %v1838
  %v1840 = vpop.f32.mrb[0].mxu0
  %v1841 = vpop.f32.mrb[0].mxu0
  %v1842 = vadd.f32 %v1769, %v1841
  %v1843 = vpop.f32.mrb[0].mxu0
  %1844 = vmatprep.mubr.bf16.mxu0 %v738
  %1845 = vmatmul.mubr.bf16.gmra.mrb[0].mxu0 %v737
  %v1846 = vpop.f32.mrb[0].mxu0
  %v1847 = vadd.f32 %v1774, %v1846
  %v1848 = vpop.f32.mrb[0].mxu0
  %v1849 = vpop.f32.mrb[0].mxu0
  %v1850 = vadd.f32 %v1777, %v1849
  %v1851 = vpop.f32.mrb[0].mxu0
  %1852 = vdwg.mxu0
  %1853 = vmatprep.subr.bf16.mxu0 0
  %1854 = vmatpush1.bf16.msra.mxu0 %v1451
  %1855 = vmatprep.subr.bf16.mxu0 0
  %1856 = vmatpush1.bf16.msra.mxu0 %v1452
  %1857 = vmatprep.subr.bf16.mxu0 0
  %1858 = vmatpush1.bf16.msra.mxu0 %v1453
  %1859 = vmatprep.subr.bf16.mxu0 0
  %1860 = vmatpush1.bf16.msra.mxu0 %v1454
  %1861 = vmatprep.subr.bf16.mxu0 0
  %1862 = vmatpush1.bf16.msra.mxu0 %v1455
  %1863 = vmatprep.subr.bf16.mxu0 0
  %1864 = vmatpush1.bf16.msra.mxu0 %v1456
  %1865 = vmatprep.subr.bf16.mxu0 0
  %1866 = vmatpush1.bf16.msra.mxu0 %v1457
  %1867 = vmatprep.subr.bf16.mxu0 0
  %1868 = vmatpush1.bf16.msra.mxu0 %v1458
  %1869 = vmatprep.subr.bf16.mxu0 0
  %1870 = vmatpush1.bf16.msra.mxu0 %v1459
  %1871 = vmatprep.subr.bf16.mxu0 0
  %1872 = vmatpush1.bf16.msra.mxu0 %v1460
  %1873 = vmatprep.subr.bf16.mxu0 0
  %1874 = vmatpush1.bf16.msra.mxu0 %v1461
  %1875 = vmatprep.subr.bf16.mxu0 0
  %1876 = vmatpush1.bf16.msra.mxu0 %v1462
  %1877 = vmatprep.subr.bf16.mxu0 0
  %1878 = vmatpush1.bf16.msra.mxu0 %v1463
  %1879 = vmatprep.subr.bf16.mxu0 0
  %1880 = vmatpush1.bf16.msra.mxu0 %v1464
  %1881 = vmatprep.subr.bf16.mxu0 0
  %1882 = vmatpush1.bf16.msra.mxu0 %v1465
  %1883 = vmatprep.subr.bf16.mxu0 0
  %1884 = vmatpush1.bf16.msra.mxu0 %v1466
  %1885 = vmatprep.mubr.bf16.mxu0 %v668
  %1886 = vmatmul.mubr.bf16.gmra.mrb[0].mxu0 %v667
  %v1887 = vpop.f32.mrb[0].mxu0
  %v1888 = vadd.f32 %v1815, %v1887
  %v1889 = vpop.f32.mrb[0].mxu0
  %v1890 = vpop.f32.mrb[0].mxu0
  %v1891 = vadd.f32 %v1818, %v1890
  %v1892 = vpop.f32.mrb[0].mxu0
  %1893 = vmatprep.mubr.bf16.mxu0 %v686
  %1894 = vmatmul.mubr.bf16.gmra.mrb[0].mxu0 %v685
  %v1895 = vpop.f32.mrb[0].mxu0
  %v1896 = vadd.f32 %v1823, %v1895
  %v1897 = vpop.f32.mrb[0].mxu0
  %v1898 = vpop.f32.mrb[0].mxu0
  %v1899 = vadd.f32 %v1826, %v1898
  %v1900 = vpop.f32.mrb[0].mxu0
  %1901 = vmatprep.mubr.bf16.mxu0 %v704
  %1902 = vmatmul.mubr.bf16.gmra.mrb[0].mxu0 %v703
  %v1903 = vpop.f32.mrb[0].mxu0
  %v1904 = vadd.f32 %v1831, %v1903
  %v1905 = vpop.f32.mrb[0].mxu0
  %v1906 = vpop.f32.mrb[0].mxu0
  %v1907 = vadd.f32 %v1834, %v1906
  %v1908 = vpop.f32.mrb[0].mxu0
  %1909 = vmatprep.mubr.bf16.mxu0 %v722
  %1910 = vmatmul.mubr.bf16.gmra.mrb[0].mxu0 %v721
  %v1911 = vpop.f32.mrb[0].mxu0
  %v1912 = vadd.f32 %v1839, %v1911
  %v1913 = vpop.f32.mrb[0].mxu0
  %v1914 = vpop.f32.mrb[0].mxu0
  %v1915 = vadd.f32 %v1842, %v1914
  %v1916 = vpop.f32.mrb[0].mxu0
  %1917 = vmatprep.mubr.bf16.mxu0 %v740
  %1918 = vmatmul.mubr.bf16.gmra.mrb[0].mxu0 %v739
  %v1919 = vpop.f32.mrb[0].mxu0
  %v1920 = vadd.f32 %v1847, %v1919
  %v1921 = vpop.f32.mrb[0].mxu0
  %v1922 = vpop.f32.mrb[0].mxu0
  %v1923 = vadd.f32 %v1850, %v1922
  %v1924 = vpop.f32.mrb[0].mxu0
  %1925 = vdwg.mxu0
  %1926 = vmatprep.subr.bf16.mxu0 0
  %1927 = vmatpush1.bf16.msra.mxu0 %v1467
  %1928 = vmatprep.subr.bf16.mxu0 0
  %1929 = vmatpush1.bf16.msra.mxu0 %v1468
  %1930 = vmatprep.subr.bf16.mxu0 0
  %1931 = vmatpush1.bf16.msra.mxu0 %v1469
  %1932 = vmatprep.subr.bf16.mxu0 0
  %1933 = vmatpush1.bf16.msra.mxu0 %v1470
  %1934 = vmatprep.subr.bf16.mxu0 0
  %1935 = vmatpush1.bf16.msra.mxu0 %v1471
  %1936 = vmatprep.subr.bf16.mxu0 0
  %1937 = vmatpush1.bf16.msra.mxu0 %v1472
  %1938 = vmatprep.subr.bf16.mxu0 0
  %1939 = vmatpush1.bf16.msra.mxu0 %v1473
  %1940 = vmatprep.subr.bf16.mxu0 0
  %1941 = vmatpush1.bf16.msra.mxu0 %v1474
  %1942 = vmatprep.subr.bf16.mxu0 0
  %1943 = vmatpush1.bf16.msra.mxu0 %v1475
  %1944 = vmatprep.subr.bf16.mxu0 0
  %1945 = vmatpush1.bf16.msra.mxu0 %v1476
  %1946 = vmatprep.subr.bf16.mxu0 0
  %1947 = vmatpush1.bf16.msra.mxu0 %v1477
  %1948 = vmatprep.subr.bf16.mxu0 0
  %1949 = vmatpush1.bf16.msra.mxu0 %v1478
  %1950 = vmatprep.subr.bf16.mxu0 0
  %1951 = vmatpush1.bf16.msra.mxu0 %v1479
  %1952 = vmatprep.subr.bf16.mxu0 0
  %1953 = vmatpush1.bf16.msra.mxu0 %v1480
  %1954 = vmatprep.subr.bf16.mxu0 0
  %1955 = vmatpush1.bf16.msra.mxu0 %v1481
  %1956 = vmatprep.subr.bf16.mxu0 0
  %1957 = vmatpush1.bf16.msra.mxu0 %v1482
  %1958 = vmatprep.mubr.bf16.mxu0 %v670
  %1959 = vmatmul.mubr.bf16.gmra.mrb[0].mxu0 %v669
  %v1960 = vpop.f32.mrb[0].mxu0
  %v1961 = vadd.f32 %v1888, %v1960
  %v1962 = vpop.f32.mrb[0].mxu0
  %v1963 = vpop.f32.mrb[0].mxu0
  %v1964 = vadd.f32 %v1891, %v1963
  %v1965 = vpop.f32.mrb[0].mxu0
  %1966 = vmatprep.mubr.bf16.mxu0 %v688
  %1967 = vmatmul.mubr.bf16.gmra.mrb[0].mxu0 %v687
  %v1968 = vpop.f32.mrb[0].mxu0
  %v1969 = vadd.f32 %v1896, %v1968
  %v1970 = vpop.f32.mrb[0].mxu0
  %v1971 = vpop.f32.mrb[0].mxu0
  %v1972 = vadd.f32 %v1899, %v1971
  %v1973 = vpop.f32.mrb[0].mxu0
  %1974 = vmatprep.mubr.bf16.mxu0 %v706
  %1975 = vmatmul.mubr.bf16.gmra.mrb[0].mxu0 %v705
  %v1976 = vpop.f32.mrb[0].mxu0
  %v1977 = vadd.f32 %v1904, %v1976
  %v1978 = vpop.f32.mrb[0].mxu0
  %v1979 = vpop.f32.mrb[0].mxu0
  %v1980 = vadd.f32 %v1907, %v1979
  %v1981 = vpop.f32.mrb[0].mxu0
  %1982 = vmatprep.mubr.bf16.mxu0 %v724
  %1983 = vmatmul.mubr.bf16.gmra.mrb[0].mxu0 %v723
  %v1984 = vpop.f32.mrb[0].mxu0
  %v1985 = vadd.f32 %v1912, %v1984
  %v1986 = vpop.f32.mrb[0].mxu0
  %v1987 = vpop.f32.mrb[0].mxu0
  %v1988 = vadd.f32 %v1915, %v1987
  %v1989 = vpop.f32.mrb[0].mxu0
  %1990 = vmatprep.mubr.bf16.mxu0 %v742
  %1991 = vmatmul.mubr.bf16.gmra.mrb[0].mxu0 %v741
  %v1992 = vpop.f32.mrb[0].mxu0
  %v1993 = vadd.f32 %v1920, %v1992
  %v1994 = vpop.f32.mrb[0].mxu0
  %v1995 = vpop.f32.mrb[0].mxu0
  %v1996 = vadd.f32 %v1923, %v1995
  %v1997 = vpop.f32.mrb[0].mxu0
  %1998 = vdwg.mxu0
  %1999 = vmatprep.subr.bf16.mxu0 0
  %2000 = vmatpush1.bf16.msra.mxu0 %v1483
  %2001 = vmatprep.subr.bf16.mxu0 0
  %2002 = vmatpush1.bf16.msra.mxu0 %v1484
  %2003 = vmatprep.subr.bf16.mxu0 0
  %2004 = vmatpush1.bf16.msra.mxu0 %v1485
  %2005 = vmatprep.subr.bf16.mxu0 0
  %2006 = vmatpush1.bf16.msra.mxu0 %v1486
  %2007 = vmatprep.subr.bf16.mxu0 0
  %2008 = vmatpush1.bf16.msra.mxu0 %v1487
  %2009 = vmatprep.subr.bf16.mxu0 0
  %2010 = vmatpush1.bf16.msra.mxu0 %v1488
  %2011 = vmatprep.subr.bf16.mxu0 0
  %2012 = vmatpush1.bf16.msra.mxu0 %v1489
  %2013 = vmatprep.subr.bf16.mxu0 0
  %2014 = vmatpush1.bf16.msra.mxu0 %v1490
  %2015 = vmatprep.subr.bf16.mxu0 0
  %2016 = vmatpush1.bf16.msra.mxu0 %v1491
  %2017 = vmatprep.subr.bf16.mxu0 0
  %2018 = vmatpush1.bf16.msra.mxu0 %v1492
  %2019 = vmatprep.subr.bf16.mxu0 0
  %2020 = vmatpush1.bf16.msra.mxu0 %v1493
  %2021 = vmatprep.subr.bf16.mxu0 0
  %2022 = vmatpush1.bf16.msra.mxu0 %v1494
  %2023 = vmatprep.subr.bf16.mxu0 0
  %2024 = vmatpush1.bf16.msra.mxu0 %v1495
  %2025 = vmatprep.subr.bf16.mxu0 0
  %2026 = vmatpush1.bf16.msra.mxu0 %v1496
  %2027 = vmatprep.subr.bf16.mxu0 0
  %2028 = vmatpush1.bf16.msra.mxu0 %v1497
  %2029 = vmatprep.subr.bf16.mxu0 0
  %2030 = vmatpush1.bf16.msra.mxu0 %v1498
  %2031 = vmatprep.mubr.bf16.mxu0 %v672
  %2032 = vmatmul.mubr.bf16.gmra.mrb[0].mxu0 %v671
  %v2033 = vpop.f32.mrb[0].mxu0
  %v2034 = vadd.f32 %v1961, %v2033
  %v2035 = vpop.f32.mrb[0].mxu0
  %v2036 = vpop.f32.mrb[0].mxu0
  %v2037 = vadd.f32 %v1964, %v2036
  %v2038 = vpop.f32.mrb[0].mxu0
  %2039 = vmatprep.mubr.bf16.mxu0 %v690
  %2040 = vmatmul.mubr.bf16.gmra.mrb[0].mxu0 %v689
  %v2041 = vpop.f32.mrb[0].mxu0
  %v2042 = vadd.f32 %v1969, %v2041
  %v2043 = vpop.f32.mrb[0].mxu0
  %v2044 = vpop.f32.mrb[0].mxu0
  %v2045 = vadd.f32 %v1972, %v2044
  %v2046 = vpop.f32.mrb[0].mxu0
  %2047 = vmatprep.mubr.bf16.mxu0 %v708
  %2048 = vmatmul.mubr.bf16.gmra.mrb[0].mxu0 %v707
  %v2049 = vpop.f32.mrb[0].mxu0
  %v2050 = vadd.f32 %v1977, %v2049
  %v2051 = vpop.f32.mrb[0].mxu0
  %v2052 = vpop.f32.mrb[0].mxu0
  %v2053 = vadd.f32 %v1980, %v2052
  %v2054 = vpop.f32.mrb[0].mxu0
  %2055 = vmatprep.mubr.bf16.mxu0 %v726
  %2056 = vmatmul.mubr.bf16.gmra.mrb[0].mxu0 %v725
  %v2057 = vpop.f32.mrb[0].mxu0
  %v2058 = vadd.f32 %v1985, %v2057
  %v2059 = vpop.f32.mrb[0].mxu0
  %v2060 = vpop.f32.mrb[0].mxu0
  %v2061 = vadd.f32 %v1988, %v2060
  %v2062 = vpop.f32.mrb[0].mxu0
  %2063 = vmatprep.mubr.bf16.mxu0 %v744
  %2064 = vmatmul.mubr.bf16.gmra.mrb[0].mxu0 %v743
  %v2065 = vpop.f32.mrb[0].mxu0
  %v2066 = vadd.f32 %v1993, %v2065
  %v2067 = vpop.f32.mrb[0].mxu0
  %v2068 = vpop.f32.mrb[0].mxu0
  %v2069 = vadd.f32 %v1996, %v2068
  %v2070 = vpop.f32.mrb[0].mxu0
  %2071 = vdwg.mxu0
  %2072 = vmatprep.subr.bf16.mxu0 0
  %2073 = vmatpush1.bf16.msra.mxu0 %v1499
  %2074 = vmatprep.subr.bf16.mxu0 0
  %2075 = vmatpush1.bf16.msra.mxu0 %v1500
  %2076 = vmatprep.subr.bf16.mxu0 0
  %2077 = vmatpush1.bf16.msra.mxu0 %v1501
  %2078 = vmatprep.subr.bf16.mxu0 0
  %2079 = vmatpush1.bf16.msra.mxu0 %v1502
  %2080 = vmatprep.subr.bf16.mxu0 0
  %2081 = vmatpush1.bf16.msra.mxu0 %v1503
  %2082 = vmatprep.subr.bf16.mxu0 0
  %2083 = vmatpush1.bf16.msra.mxu0 %v1504
  %2084 = vmatprep.subr.bf16.mxu0 0
  %2085 = vmatpush1.bf16.msra.mxu0 %v1505
  %2086 = vmatprep.subr.bf16.mxu0 0
  %2087 = vmatpush1.bf16.msra.mxu0 %v1506
  %2088 = vmatprep.subr.bf16.mxu0 0
  %2089 = vmatpush1.bf16.msra.mxu0 %v1507
  %2090 = vmatprep.subr.bf16.mxu0 0
  %2091 = vmatpush1.bf16.msra.mxu0 %v1508
  %2092 = vmatprep.subr.bf16.mxu0 0
  %2093 = vmatpush1.bf16.msra.mxu0 %v1509
  %2094 = vmatprep.subr.bf16.mxu0 0
  %2095 = vmatpush1.bf16.msra.mxu0 %v1510
  %2096 = vmatprep.subr.bf16.mxu0 0
  %2097 = vmatpush1.bf16.msra.mxu0 %v1511
  %2098 = vmatprep.subr.bf16.mxu0 0
  %2099 = vmatpush1.bf16.msra.mxu0 %v1512
  %2100 = vmatprep.subr.bf16.mxu0 0
  %2101 = vmatpush1.bf16.msra.mxu0 %v1513
  %2102 = vmatprep.subr.bf16.mxu0 0
  %2103 = vmatpush1.bf16.msra.mxu0 %v1514
  %2104 = vmatprep.mubr.bf16.mxu0 %v674
  %2105 = vmatmul.mubr.bf16.gmra.mrb[0].mxu0 %v673
  %v2106 = vpop.f32.mrb[0].mxu0
  %v2107 = vadd.f32 %v2034, %v2106
  %v2108 = vpop.f32.mrb[0].mxu0
  %v2109 = vpop.f32.mrb[0].mxu0
  %v2110 = vadd.f32 %v2037, %v2109
  %v2111 = vpop.f32.mrb[0].mxu0
  %2112 = vmatprep.mubr.bf16.mxu0 %v692
  %2113 = vmatmul.mubr.bf16.gmra.mrb[0].mxu0 %v691
  %v2114 = vpop.f32.mrb[0].mxu0
  %v2115 = vadd.f32 %v2042, %v2114
  %v2116 = vpop.f32.mrb[0].mxu0
  %v2117 = vpop.f32.mrb[0].mxu0
  %v2118 = vadd.f32 %v2045, %v2117
  %v2119 = vpop.f32.mrb[0].mxu0
  %2120 = vmatprep.mubr.bf16.mxu0 %v710
  %2121 = vmatmul.mubr.bf16.gmra.mrb[0].mxu0 %v709
  %v2122 = vpop.f32.mrb[0].mxu0
  %v2123 = vadd.f32 %v2050, %v2122
  %v2124 = vpop.f32.mrb[0].mxu0
  %v2125 = vpop.f32.mrb[0].mxu0
  %v2126 = vadd.f32 %v2053, %v2125
  %v2127 = vpop.f32.mrb[0].mxu0
  %2128 = vmatprep.mubr.bf16.mxu0 %v728
  %2129 = vmatmul.mubr.bf16.gmra.mrb[0].mxu0 %v727
  %v2130 = vpop.f32.mrb[0].mxu0
  %v2131 = vadd.f32 %v2058, %v2130
  %v2132 = vpop.f32.mrb[0].mxu0
  %v2133 = vpop.f32.mrb[0].mxu0
  %v2134 = vadd.f32 %v2061, %v2133
  %v2135 = vpop.f32.mrb[0].mxu0
  %2136 = vmatprep.mubr.bf16.mxu0 %v746
  %2137 = vmatmul.mubr.bf16.gmra.mrb[0].mxu0 %v745
  %v2138 = vpop.f32.mrb[0].mxu0
  %v2139 = vadd.f32 %v2066, %v2138
  %v2140 = vpop.f32.mrb[0].mxu0
  %v2141 = vpop.f32.mrb[0].mxu0
  %v2142 = vadd.f32 %v2069, %v2141
  %v2143 = vpop.f32.mrb[0].mxu0
  %2144 = vdwg.mxu0
  %2145 = vmatprep.subr.bf16.mxu0 0
  %2146 = vmatpush1.bf16.msra.mxu0 %v1515
  %2147 = vmatprep.subr.bf16.mxu0 0
  %2148 = vmatpush1.bf16.msra.mxu0 %v1516
  %2149 = vmatprep.subr.bf16.mxu0 0
  %2150 = vmatpush1.bf16.msra.mxu0 %v1517
  %2151 = vmatprep.subr.bf16.mxu0 0
  %2152 = vmatpush1.bf16.msra.mxu0 %v1518
  %2153 = vmatprep.subr.bf16.mxu0 0
  %2154 = vmatpush1.bf16.msra.mxu0 %v1519
  %2155 = vmatprep.subr.bf16.mxu0 0
  %2156 = vmatpush1.bf16.msra.mxu0 %v1520
  %2157 = vmatprep.subr.bf16.mxu0 0
  %2158 = vmatpush1.bf16.msra.mxu0 %v1521
  %2159 = vmatprep.subr.bf16.mxu0 0
  %2160 = vmatpush1.bf16.msra.mxu0 %v1522
  %2161 = vmatprep.subr.bf16.mxu0 0
  %2162 = vmatpush1.bf16.msra.mxu0 %v1523
  %2163 = vmatprep.subr.bf16.mxu0 0
  %2164 = vmatpush1.bf16.msra.mxu0 %v1524
  %2165 = vmatprep.subr.bf16.mxu0 0
  %2166 = vmatpush1.bf16.msra.mxu0 %v1525
  %2167 = vmatprep.subr.bf16.mxu0 0
  %2168 = vmatpush1.bf16.msra.mxu0 %v1526
  %2169 = vmatprep.subr.bf16.mxu0 0
  %2170 = vmatpush1.bf16.msra.mxu0 %v1527
  %2171 = vmatprep.subr.bf16.mxu0 0
  %2172 = vmatpush1.bf16.msra.mxu0 %v1528
  %2173 = vmatprep.subr.bf16.mxu0 0
  %2174 = vmatpush1.bf16.msra.mxu0 %v1529
  %2175 = vmatprep.subr.bf16.mxu0 0
  %2176 = vmatpush1.bf16.msra.mxu0 %v1530
  %2177 = vmatprep.mubr.bf16.mxu0 %v676
  %2178 = vmatmul.mubr.bf16.gmra.mrb[0].mxu0 %v675
  %v2179 = vpop.f32.mrb[0].mxu0
  %v2180 = vadd.f32 %v2107, %v2179
  %v2181 = vpop.f32.mrb[0].mxu0
  %v2182 = vpop.f32.mrb[0].mxu0
  %v2183 = vadd.f32 %v2110, %v2182
  %v2184 = vpop.f32.mrb[0].mxu0
  %2185 = vmatprep.mubr.bf16.mxu0 %v694
  %2186 = vmatmul.mubr.bf16.gmra.mrb[0].mxu0 %v693
  %v2187 = vpop.f32.mrb[0].mxu0
  %v2188 = vadd.f32 %v2115, %v2187
  %v2189 = vpop.f32.mrb[0].mxu0
  %v2190 = vpop.f32.mrb[0].mxu0
  %v2191 = vadd.f32 %v2118, %v2190
  %v2192 = vpop.f32.mrb[0].mxu0
  %2193 = vmatprep.mubr.bf16.mxu0 %v712
  %2194 = vmatmul.mubr.bf16.gmra.mrb[0].mxu0 %v711
  %v2195 = vpop.f32.mrb[0].mxu0
  %v2196 = vadd.f32 %v2123, %v2195
  %v2197 = vpop.f32.mrb[0].mxu0
  %v2198 = vpop.f32.mrb[0].mxu0
  %v2199 = vadd.f32 %v2126, %v2198
  %v2200 = vpop.f32.mrb[0].mxu0
  %2201 = vmatprep.mubr.bf16.mxu0 %v730
  %2202 = vmatmul.mubr.bf16.gmra.mrb[0].mxu0 %v729
  %v2203 = vpop.f32.mrb[0].mxu0
  %v2204 = vadd.f32 %v2131, %v2203
  %v2205 = vpop.f32.mrb[0].mxu0
  %v2206 = vpop.f32.mrb[0].mxu0
  %v2207 = vadd.f32 %v2134, %v2206
  %v2208 = vpop.f32.mrb[0].mxu0
  %2209 = vmatprep.mubr.bf16.mxu0 %v748
  %2210 = vmatmul.mubr.bf16.gmra.mrb[0].mxu0 %v747
  %v2211 = vpop.f32.mrb[0].mxu0
  %v2212 = vadd.f32 %v2139, %v2211
  %v2213 = vpop.f32.mrb[0].mxu0
  %v2214 = vpop.f32.mrb[0].mxu0
  %v2215 = vadd.f32 %v2142, %v2214
  %v2216 = vpop.f32.mrb[0].mxu0
  %2217 = vdwg.mxu0
  %2218 = vmatprep.subr.bf16.mxu0 0
  %2219 = vmatpush1.bf16.msra.mxu0 %v1531
  %2220 = vmatprep.subr.bf16.mxu0 0
  %2221 = vmatpush1.bf16.msra.mxu0 %v1532
  %2222 = vmatprep.subr.bf16.mxu0 0
  %2223 = vmatpush1.bf16.msra.mxu0 %v1533
  %2224 = vmatprep.subr.bf16.mxu0 0
  %2225 = vmatpush1.bf16.msra.mxu0 %v1534
  %2226 = vmatprep.subr.bf16.mxu0 0
  %2227 = vmatpush1.bf16.msra.mxu0 %v1535
  %2228 = vmatprep.subr.bf16.mxu0 0
  %2229 = vmatpush1.bf16.msra.mxu0 %v1536
  %2230 = vmatprep.subr.bf16.mxu0 0
  %2231 = vmatpush1.bf16.msra.mxu0 %v1537
  %2232 = vmatprep.subr.bf16.mxu0 0
  %2233 = vmatpush1.bf16.msra.mxu0 %v1538
  %2234 = vmatprep.subr.bf16.mxu0 0
  %2235 = vmatpush1.bf16.msra.mxu0 %v1539
  %2236 = vmatprep.subr.bf16.mxu0 0
  %2237 = vmatpush1.bf16.msra.mxu0 %v1540
  %2238 = vmatprep.subr.bf16.mxu0 0
  %2239 = vmatpush1.bf16.msra.mxu0 %v1541
  %2240 = vmatprep.subr.bf16.mxu0 0
  %2241 = vmatpush1.bf16.msra.mxu0 %v1542
  %2242 = vmatprep.subr.bf16.mxu0 0
  %2243 = vmatpush1.bf16.msra.mxu0 %v1543
  %2244 = vmatprep.subr.bf16.mxu0 0
  %2245 = vmatpush1.bf16.msra.mxu0 %v1544
  %2246 = vmatprep.subr.bf16.mxu0 0
  %2247 = vmatpush1.bf16.msra.mxu0 %v1545
  %2248 = vmatprep.subr.bf16.mxu0 0
  %2249 = vmatpush1.bf16.msra.mxu0 %v1546
  %2250 = vmatprep.mubr.bf16.mxu0 %v678
  %2251 = vmatmul.mubr.bf16.gmra.mrb[0].mxu0 %v677
  %v2252 = vpop.f32.mrb[0].mxu0
  %v2253 = vadd.f32 %v2180, %v2252
  %v2254 = vpop.f32.mrb[0].mxu0
  %v2255 = vpop.f32.mrb[0].mxu0
  %v2256 = vadd.f32 %v2183, %v2255
  %v2257 = vpop.f32.mrb[0].mxu0
  %2258 = vmatprep.mubr.bf16.mxu0 %v696
  %2259 = vmatmul.mubr.bf16.gmra.mrb[0].mxu0 %v695
  %v2260 = vpop.f32.mrb[0].mxu0
  %v2261 = vadd.f32 %v2188, %v2260
  %v2262 = vpop.f32.mrb[0].mxu0
  %v2263 = vpop.f32.mrb[0].mxu0
  %v2264 = vadd.f32 %v2191, %v2263
  %v2265 = vpop.f32.mrb[0].mxu0
  %2266 = vmatprep.mubr.bf16.mxu0 %v714
  %2267 = vmatmul.mubr.bf16.gmra.mrb[0].mxu0 %v713
  %v2268 = vpop.f32.mrb[0].mxu0
  %v2269 = vadd.f32 %v2196, %v2268
  %v2270 = vpop.f32.mrb[0].mxu0
  %v2271 = vpop.f32.mrb[0].mxu0
  %v2272 = vadd.f32 %v2199, %v2271
  %v2273 = vpop.f32.mrb[0].mxu0
  %2274 = vmatprep.mubr.bf16.mxu0 %v732
  %2275 = vmatmul.mubr.bf16.gmra.mrb[0].mxu0 %v731
  %v2276 = vpop.f32.mrb[0].mxu0
  %v2277 = vadd.f32 %v2204, %v2276
  %v2278 = vpop.f32.mrb[0].mxu0
  %v2279 = vpop.f32.mrb[0].mxu0
  %v2280 = vadd.f32 %v2207, %v2279
  %v2281 = vpop.f32.mrb[0].mxu0
  %2282 = vmatprep.mubr.bf16.mxu0 %v750
  %2283 = vmatmul.mubr.bf16.gmra.mrb[0].mxu0 %v749
  %v2284 = vpop.f32.mrb[0].mxu0
  %v2285 = vadd.f32 %v2212, %v2284
  %v2286 = vpop.f32.mrb[0].mxu0
  %v2287 = vpop.f32.mrb[0].mxu0
  %v2288 = vadd.f32 %v2215, %v2287
  %v2289 = vpop.f32.mrb[0].mxu0
  %2290 = vdwg.mxu0
  %2291 = vmatprep.subr.bf16.mxu0 0
  %2292 = vmatpush1.bf16.msra.mxu0 %v1547
  %2293 = vmatprep.subr.bf16.mxu0 0
  %2294 = vmatpush1.bf16.msra.mxu0 %v1548
  %2295 = vmatprep.subr.bf16.mxu0 0
  %2296 = vmatpush1.bf16.msra.mxu0 %v1549
  %2297 = vmatprep.subr.bf16.mxu0 0
  %2298 = vmatpush1.bf16.msra.mxu0 %v1550
  %2299 = vmatprep.subr.bf16.mxu0 0
  %2300 = vmatpush1.bf16.msra.mxu0 %v1551
  %2301 = vmatprep.subr.bf16.mxu0 0
  %2302 = vmatpush1.bf16.msra.mxu0 %v1552
  %2303 = vmatprep.subr.bf16.mxu0 0
  %2304 = vmatpush1.bf16.msra.mxu0 %v1553
  %2305 = vmatprep.subr.bf16.mxu0 0
  %2306 = vmatpush1.bf16.msra.mxu0 %v1554
  %2307 = vmatprep.subr.bf16.mxu0 0
  %2308 = vmatpush1.bf16.msra.mxu0 %v1555
  %2309 = vmatprep.subr.bf16.mxu0 0
  %2310 = vmatpush1.bf16.msra.mxu0 %v1556
  %2311 = vmatprep.subr.bf16.mxu0 0
  %2312 = vmatpush1.bf16.msra.mxu0 %v1557
  %2313 = vmatprep.subr.bf16.mxu0 0
  %2314 = vmatpush1.bf16.msra.mxu0 %v1558
  %2315 = vmatprep.subr.bf16.mxu0 0
  %2316 = vmatpush1.bf16.msra.mxu0 %v1559
  %2317 = vmatprep.subr.bf16.mxu0 0
  %2318 = vmatpush1.bf16.msra.mxu0 %v1560
  %2319 = vmatprep.subr.bf16.mxu0 0
  %2320 = vmatpush1.bf16.msra.mxu0 %v1561
  %2321 = vmatprep.subr.bf16.mxu0 0
  %2322 = vmatpush1.bf16.msra.mxu0 %v1562
  %2323 = vmatprep.mubr.bf16.mxu0 %v680
  %2324 = vmatmul.mubr.bf16.gmra.mrb[0].mxu0 %v679
  %v2325 = vpop.f32.mrb[0].mxu0
  %v2326 = vadd.f32 %v2253, %v2325
  %v2327 = vpop.f32.mrb[0].mxu0
  %v2328 = vpop.f32.mrb[0].mxu0
  %v2329 = vadd.f32 %v2256, %v2328
  %v2330 = vpop.f32.mrb[0].mxu0
  %2331 = vmatprep.mubr.bf16.mxu0 %v698
  %2332 = vmatmul.mubr.bf16.gmra.mrb[0].mxu0 %v697
  %v2333 = vpop.f32.mrb[0].mxu0
  %v2334 = vadd.f32 %v2261, %v2333
  %v2335 = vpop.f32.mrb[0].mxu0
  %v2336 = vpop.f32.mrb[0].mxu0
  %v2337 = vadd.f32 %v2264, %v2336
  %v2338 = vpop.f32.mrb[0].mxu0
  %2339 = vmatprep.mubr.bf16.mxu0 %v716
  %2340 = vmatmul.mubr.bf16.gmra.mrb[0].mxu0 %v715
  %v2341 = vpop.f32.mrb[0].mxu0
  %v2342 = vadd.f32 %v2269, %v2341
  %v2343 = vpop.f32.mrb[0].mxu0
  %v2344 = vpop.f32.mrb[0].mxu0
  %v2345 = vadd.f32 %v2272, %v2344
  %v2346 = vpop.f32.mrb[0].mxu0
  %2347 = vmatprep.mubr.bf16.mxu0 %v734
  %2348 = vmatmul.mubr.bf16.gmra.mrb[0].mxu0 %v733
  %v2349 = vpop.f32.mrb[0].mxu0
  %v2350 = vadd.f32 %v2277, %v2349
  %v2351 = vpop.f32.mrb[0].mxu0
  %v2352 = vpop.f32.mrb[0].mxu0
  %v2353 = vadd.f32 %v2280, %v2352
  %v2354 = vpop.f32.mrb[0].mxu0
  %2355 = vmatprep.mubr.bf16.mxu0 %v752
  %2356 = vmatmul.mubr.bf16.gmra.mrb[0].mxu0 %v751
  %v2357 = vpop.f32.mrb[0].mxu0
  %v2358 = vadd.f32 %v2285, %v2357
  %v2359 = vpop.f32.mrb[0].mxu0
  %v2360 = vpop.f32.mrb[0].mxu0
  %v2361 = vadd.f32 %v2288, %v2360
  %v2362 = vpop.f32.mrb[0].mxu0
  %2363 = vdwg.mxu0
  %v2364 = vld [vmem:[%s2] sm:$0xff]
  %v2365 = vld [vmem:[%s2 + $0x8] sm:$0xff]
  %v2366 = vld [vmem:[%s2 + $0x10] sm:$0xff]
  %v2367 = vld [vmem:[%s2 + $0x18] sm:$0xff]
  %v2368 = vld [vmem:[%s2 + $0x20] sm:$0xff]
  %v2369 = vld [vmem:[%s2 + $0x28] sm:$0xff]
  %v2370 = vld [vmem:[%s2 + $0x30] sm:$0xff]
  %v2371 = vld [vmem:[%s2 + $0x38] sm:$0xff]
  %v2372 = vld [vmem:[%s2 + $0x40] sm:$0xff]
  %v2373 = vld [vmem:[%s2 + $0x48] sm:$0xff]
  %2375 = vset.pattern.permute.xlu0 0
  %2376 = vperm.xlu0 %2375, %v2364
  %v2377 = vpop.permute.xlu0 %2376
  %2380 = vset.pattern.permute.xlu0 0
  %2381 = vperm.xlu0 %2380, %v2365
  %v2382 = vpop.permute.xlu0 %2381
  %2385 = vset.pattern.permute.xlu0 0
  %2386 = vperm.xlu0 %2385, %v2366
  %v2387 = vpop.permute.xlu0 %2386
  %2390 = vset.pattern.permute.xlu0 0
  %2391 = vperm.xlu0 %2390, %v2367
  %v2392 = vpop.permute.xlu0 %2391
  %2395 = vset.pattern.permute.xlu0 0
  %2396 = vperm.xlu0 %2395, %v2368
  %v2397 = vpop.permute.xlu0 %2396
  %2400 = vset.pattern.permute.xlu0 0
  %2401 = vperm.xlu0 %2400, %v2369
  %v2402 = vpop.permute.xlu0 %2401
  %2405 = vset.pattern.permute.xlu0 0
  %2406 = vperm.xlu0 %2405, %v2370
  %v2407 = vpop.permute.xlu0 %2406
  %2410 = vset.pattern.permute.xlu0 0
  %2411 = vperm.xlu0 %2410, %v2371
  %v2412 = vpop.permute.xlu0 %2411
  %2415 = vset.pattern.permute.xlu0 0
  %2416 = vperm.xlu0 %2415, %v2372
  %v2417 = vpop.permute.xlu0 %2416
  %2420 = vset.pattern.permute.xlu0 0
  %2421 = vperm.xlu0 %2420, %v2373
  %v2422 = vpop.permute.xlu0 %2421
  %v2424 = vmul.f32 %v2326, %v2377
  %v2425 = vmul.f32 %v2329, %v2382
  %v2426 = vmul.f32 %v2334, %v2387
  %v2427 = vmul.f32 %v2337, %v2392
  %v2428 = vmul.f32 %v2342, %v2397
  %v2429 = vmul.f32 %v2345, %v2402
  %v2430 = vmul.f32 %v2350, %v2407
  %v2431 = vmul.f32 %v2353, %v2412
  %v2432 = vmul.f32 %v2358, %v2417
  %v2433 = vmul.f32 %v2361, %v2422
  %2434 = vset.pattern.permute.xlu0 1
  %2435 = vperm.xlu0 %2434, %v2364
  %v2436 = vpop.permute.xlu0 %2435
  %2438 = vset.pattern.permute.xlu0 1
  %2439 = vperm.xlu0 %2438, %v2365
  %v2440 = vpop.permute.xlu0 %2439
  %2442 = vset.pattern.permute.xlu0 1
  %2443 = vperm.xlu0 %2442, %v2366
  %v2444 = vpop.permute.xlu0 %2443
  %2446 = vset.pattern.permute.xlu0 1
  %2447 = vperm.xlu0 %2446, %v2367
  %v2448 = vpop.permute.xlu0 %2447
  %2450 = vset.pattern.permute.xlu0 1
  %2451 = vperm.xlu0 %2450, %v2368
  %v2452 = vpop.permute.xlu0 %2451
  %2454 = vset.pattern.permute.xlu0 1
  %2455 = vperm.xlu0 %2454, %v2369
  %v2456 = vpop.permute.xlu0 %2455
  %2458 = vset.pattern.permute.xlu0 1
  %2459 = vperm.xlu0 %2458, %v2370
  %v2460 = vpop.permute.xlu0 %2459
  %2462 = vset.pattern.permute.xlu0 1
  %2463 = vperm.xlu0 %2462, %v2371
  %v2464 = vpop.permute.xlu0 %2463
  %2466 = vset.pattern.permute.xlu0 1
  %2467 = vperm.xlu0 %2466, %v2372
  %v2468 = vpop.permute.xlu0 %2467
  %2470 = vset.pattern.permute.xlu0 1
  %2471 = vperm.xlu0 %2470, %v2373
  %v2472 = vpop.permute.xlu0 %2471
  %v2474 = vadd.f32 %v2424, %v2436
  %v2475 = vadd.f32 %v2425, %v2440
  %v2476 = vadd.f32 %v2426, %v2444
  %v2477 = vadd.f32 %v2427, %v2448
  %v2478 = vadd.f32 %v2428, %v2452
  %v2479 = vadd.f32 %v2429, %v2456
  %v2480 = vadd.f32 %v2430, %v2460
  %v2481 = vadd.f32 %v2431, %v2464
  %v2482 = vadd.f32 %v2432, %v2468
  %v2483 = vadd.f32 %v2433, %v2472
  %vm2484 = vcmp.ge.f32.partialorder %v2474, 0.0
  %vm2485 = vcmp.ge.f32.partialorder %v2475, 0.0
  %vm2486 = vcmp.ge.f32.partialorder %v2476, 0.0
  %vm2487 = vcmp.ge.f32.partialorder %v2477, 0.0
  %vm2488 = vcmp.ge.f32.partialorder %v2478, 0.0
  %vm2489 = vcmp.ge.f32.partialorder %v2479, 0.0
  %vm2490 = vcmp.ge.f32.partialorder %v2480, 0.0
  %vm2491 = vcmp.ge.f32.partialorder %v2481, 0.0
  %vm2492 = vcmp.ge.f32.partialorder %v2482, 0.0
  %vm2493 = vcmp.ge.f32.partialorder %v2483, 0.0
  %v2494 = vmul.f32 %v2474, 0.2
  %v2495 = vmul.f32 %v2475, 0.2
  %v2496 = vmul.f32 %v2476, 0.2
  %v2497 = vmul.f32 %v2477, 0.2
  %v2498 = vmul.f32 %v2478, 0.2
  %v2499 = vmul.f32 %v2479, 0.2
  %v2500 = vmul.f32 %v2480, 0.2
  %v2501 = vmul.f32 %v2481, 0.2
  %v2502 = vmul.f32 %v2482, 0.2
  %v2503 = vmul.f32 %v2483, 0.2
  %v2504 = vsel %vm2484, %v2474, %v2494
  %v2505 = vsel %vm2485, %v2475, %v2495
  %v2506 = vsel %vm2486, %v2476, %v2496
  %v2507 = vsel %vm2487, %v2477, %v2497
  %v2508 = vsel %vm2488, %v2478, %v2498
  %v2509 = vsel %vm2489, %v2479, %v2499
  %v2510 = vsel %vm2490, %v2480, %v2500
  %v2511 = vsel %vm2491, %v2481, %v2501
  %v2512 = vsel %vm2492, %v2482, %v2502
  %v2513 = vsel %vm2493, %v2483, %v2503
  %v2514 = vpack.c.bf16 %v2505, %v2504
  %v2515 = vpack.c.bf16 %v2507, %v2506
  %v2516 = vpack.c.bf16 %v2509, %v2508
  %v2517 = vpack.c.bf16 %v2511, %v2510
  %v2518 = vpack.c.bf16 %v2513, %v2512
  %v2524 = vunpack.c.l.b16 %v2514
  %v2525 = vunpack.c.h.b16 %v2514
  %v2526 = vunpack.c.l.b16 %v2515
  %v2527 = vunpack.c.h.b16 %v2515
  %v2528 = vunpack.c.l.b16 %v2516
  %v2529 = vunpack.c.h.b16 %v2516
  %v2530 = vunpack.c.l.b16 %v2517
  %v2531 = vunpack.c.h.b16 %v2517
  %v2532 = vunpack.c.l.b16 %v2518
  %v2533 = vunpack.c.h.b16 %v2518
  %v2534 = vpack.c.b16 %v2524, %v2524
  %v2535 = vpack.c.b16 %v2525, %v2525
  %v2536 = vpack.c.b16 %v2526, %v2526
  %v2537 = vpack.c.b16 %v2527, %v2527
  %v2538 = vpack.c.b16 %v2528, %v2528
  %v2539 = vpack.c.b16 %v2529, %v2529
  %v2540 = vpack.c.b16 %v2530, %v2530
  %v2541 = vpack.c.b16 %v2531, %v2531
  %v2542 = vpack.c.b16 %v2532, %v2532
  %v2543 = vpack.c.b16 %v2533, %v2533
  %vm2554 = vcmask 257024
  %2555 = vst.msk [vmem:[%s3] sm:$0xf] %vm2554, %v2534
  %2556 = vst.msk [vmem:[%s3 + $0x4] sm:$0xf] %vm2554, %v2535
  %2557 = vst.msk [vmem:[%s3 + $0x8] sm:$0xf] %vm2554, %v2536
  %2558 = vst.msk [vmem:[%s3 + $0xc] sm:$0xf] %vm2554, %v2537
  %2559 = vst.msk [vmem:[%s3 + $0x10] sm:$0xf] %vm2554, %v2538
  %2560 = vst.msk [vmem:[%s3 + $0x14] sm:$0xf] %vm2554, %v2539
  %2561 = vst.msk [vmem:[%s3 + $0x18] sm:$0xf] %vm2554, %v2540
  %2562 = vst.msk [vmem:[%s3 + $0x1c] sm:$0xf] %vm2554, %v2541
  %2563 = vst.msk [vmem:[%s3 + $0x20] sm:$0xf] %vm2554, %v2542
  %2564 = vst.msk [vmem:[%s3 + $0x24] sm:$0xf] %vm2554, %v2543
  // Predicated region
  $region14: #{_lambda_.10} parent=0 // pred_check
    _
  $region15: #{_lambda_.10} parent=0 // pred_check_branch
    %2566 = sbr.rel (0) target = $region17
  $region16: #{_lambda_.10} parent=0 // pred_region
    _
  $region17: #{_lambda_.10} parent=0 // pred_fallthru
    _
  // Predicated region
  $region18: #{_lambda_.10} parent=0 // pred_check
    _
  $region19: #{_lambda_.10} parent=0 // pred_check_branch
    %2568 = sbr.rel (0) target = $region21
  $region20: #{_lambda_.10} parent=0 // pred_region
    _
  $region21: #{_lambda_.10} parent=0 // pred_fallthru
    _

</llo_original>
